<compile_context>
chip_gen: v6e
topology: v6e:2x2x1
jax: 0.10.0
libtpu: 0.0.40
codegen_flags: <defaults>
</compile_context>

<pallas_src>
import numpy as np
import jax
import jax.numpy as jnp
from jax.experimental import pallas as pl
from jax.experimental.pallas import tpu as pltpu


# -----------------------------------------------------------------------------
# Kernels
# -----------------------------------------------------------------------------
def _conv1_att_fuse_kernel(x_ref, y_ref, w1_ref, b1_ref, wax_ref, way_ref,
                           ba_ref, out_ref):
    """1x1 conv (BN scale folded into weight) + attention gates + fusion.

    x_ref:   (TM, Cin)   bf16 input pixels (one M-tile)
    y_ref:   (TM, Cmid)  bf16 residual pixels (already nearest-resized)
    w1_ref:  (Cin, Cmid) bf16 conv1 weight * BN1 scale
    b1_ref:  (1, Cmid)   f32  BN1 bias
    wax_ref: (2, Cmid)   f32  att_conv weight rows acting on x
    way_ref: (2, Cmid)   f32  att_conv weight rows acting on y
    ba_ref:  (2,)        f32  att_conv bias (SMEM)
    out_ref: (TM, Cmid)  bf16 fused feature (second module output)
    """
    xm = jnp.dot(x_ref[...], w1_ref[...],
                 preferred_element_type=jnp.float32) + b1_ref[...]
    y = y_ref[...].astype(jnp.float32)
    # 2-wide attention logits: VPU multiply + channel (lane) reduce instead of
    # an MXU matmul whose N-dim is 2 (>90% of the MXU would be idle).
    l0 = jnp.sum(xm * wax_ref[0:1, :] + y * way_ref[0:1, :],
                 axis=-1, keepdims=True) + ba_ref[0]
    l1 = jnp.sum(xm * wax_ref[1:2, :] + y * way_ref[1:2, :],
                 axis=-1, keepdims=True) + ba_ref[1]
    z0 = jax.nn.sigmoid(l0)
    z1 = jax.nn.sigmoid(l1)
    out_ref[...] = (xm * z0 + y * z1).astype(out_ref.dtype)


def _conv1_bn_kernel(x_ref, w1_ref, b1_ref, out_ref):
    """1x1 conv + folded BN (fuse=False path), one M-tile per step."""
    xm = jnp.dot(x_ref[...], w1_ref[...],
                 preferred_element_type=jnp.float32) + b1_ref[...]
    out_ref[...] = xm.astype(out_ref.dtype)


# Left padding columns in the conv3x3 scratch: keeps the big interior store
# sublane-aligned when W % 8 == 0 (the image column j lives at scratch column
# _PADL + j; columns _PADL-1 and _PADL+W hold the conv zero padding).
_PADL = 8


def _conv3x3_bn_kernel(xm_ref, top_ref, bot_ref, w2_ref, b2_ref, o_ref,
                       xpad_ref):
    """3x3 conv (pad=1, BN scale folded into weight) over one (TH, W) row tile.

    xm_ref:  (TH, W, C)      bf16 current row-tile of the fused feature
    top_ref: (1, W, C)       bf16 row above the tile (clamped; masked at border)
    bot_ref: (1, W, C)       bf16 row below the tile (clamped; masked at border)
    w2_ref:  (3, 3, C, Cout) bf16 conv2 weight * BN2 scale
    b2_ref:  (1, Cout)       f32  BN2 bias
    o_ref:   (TH, W, Cout)   f32
    xpad_ref: VMEM scratch (TH+2, W+_PADL+1, C) bf16
    """
    t = pl.program_id(1)
    TH, W, C = xm_ref.shape
    Cout = o_ref.shape[-1]
    dt = xm_ref.dtype

    # Assemble the zero-padded tile in VMEM (replaces the jnp.pad HBM round
    # trip).  Only the border cells that are actually read are (re)zeroed.
    top_ok = (t > 0).astype(dt)
    bot_ok = (t < pl.num_programs(1) - 1).astype(dt)
    xpad_ref[:, _PADL - 1:_PADL, :] = jnp.zeros((TH + 2, 1, C), dt)
    xpad_ref[:, _PADL + W:_PADL + W + 1, :] = jnp.zeros((TH + 2, 1, C), dt)
    xpad_ref[0:1, _PADL:_PADL + W, :] = top_ref[...] * top_ok
    xpad_ref[TH + 1:TH + 2, _PADL:_PADL + W, :] = bot_ref[...] * bot_ok
    xpad_ref[1:TH + 1, _PADL:_PADL + W, :] = xm_ref[...]

    # Three W-shifted planes sliced once (3 relayouts instead of 9
    # slice+reshape pairs); the per-kh row slices below are plain row offsets.
    acc = jnp.zeros((TH * W, Cout), jnp.float32)
    for kw in range(3):
        plane = xpad_ref[:, _PADL - 1 + kw:_PADL - 1 + kw + W, :]  # (TH+2,W,C)
        for kh in range(3):
            tap = plane[kh:kh + TH].reshape(TH * W, C)
            acc = acc + jnp.dot(tap, w2_ref[kh, kw],
                                preferred_element_type=jnp.float32)
    o_ref[...] = (acc + b2_ref[...]).reshape(TH, W, Cout)


# -----------------------------------------------------------------------------
# Wrapper
# -----------------------------------------------------------------------------
def _nearest_resize_rows(y_nhwc, H, W):
    """PyTorch F.interpolate(mode='nearest'): src = floor(dst * in / out).
    Implemented as a single gather over flattened spatial dims (one HBM pass
    instead of the previous double fancy-index)."""
    N, Hy, Wy, C = y_nhwc.shape
    hi = (jnp.arange(H) * Hy) // H
    wi = (jnp.arange(W) * Wy) // W
    flat = (hi[:, None] * Wy + wi[None, :]).reshape(-1)          # (H*W,)
    return jnp.take(y_nhwc.reshape(N, Hy * Wy, C), flat, axis=1)  # (N, H*W, C)


def abf_forward(x_nchw, y_nchw, params, fuse):
    # TODO(synk): keep activations NHWC end-to-end in the surrounding model to
    # drop these boundary transposes (each is a full HBM pass).
    x = jnp.transpose(x_nchw, (0, 2, 3, 1)).astype(jnp.bfloat16)  # NHWC, bf16
    N, H, W, Cin = x.shape
    Cmid = params["w1"].shape[1]
    Cout = params["w2"].shape[3]
    M = N * H * W
    x_flat = x.reshape(M, Cin)

    # ---- kernel 1: 1x1 conv + BN (+ attention fuse), tiled over pixels -----
    TM = min(1024, M)  # rows / tile (multiple of 8 or the full array)
    # If M % TM != 0 the ragged tail is handled by Pallas block padding; the
    # op is purely row-wise so padded rows never pollute valid ones.
    grid_m = pl.cdiv(M, TM)
    cp1 = pltpu.CompilerParams(dimension_semantics=("parallel",),
                               vmem_limit_bytes=32 * 1024 * 1024)
    if fuse:
        y = jnp.transpose(y_nchw, (0, 2, 3, 1)).astype(jnp.bfloat16)
        y_flat = _nearest_resize_rows(y, H, W).reshape(M, Cmid)
        x_mid_flat = pl.pallas_call(
            _conv1_att_fuse_kernel,
            out_shape=jax.ShapeDtypeStruct((M, Cmid), jnp.bfloat16),
            grid=(grid_m,),
            in_specs=[
                pl.BlockSpec((TM, Cin), lambda i: (i, 0)),
                pl.BlockSpec((TM, Cmid), lambda i: (i, 0)),
                pl.BlockSpec((Cin, Cmid), lambda i: (0, 0)),
                pl.BlockSpec((1, Cmid), lambda i: (0, 0)),
                pl.BlockSpec((2, Cmid), lambda i: (0, 0)),
                pl.BlockSpec((2, Cmid), lambda i: (0, 0)),
                pl.BlockSpec(memory_space=pltpu.MemorySpace.SMEM),
            ],
            out_specs=pl.BlockSpec((TM, Cmid), lambda i: (i, 0)),
            compiler_params=cp1,
        )(x_flat, y_flat, params["w1"], params["b1"],
          params["wax_t"], params["way_t"], params["ba"])
    else:
        x_mid_flat = pl.pallas_call(
            _conv1_bn_kernel,
            out_shape=jax.ShapeDtypeStruct((M, Cmid), jnp.bfloat16),
            grid=(grid_m,),
            in_specs=[
                pl.BlockSpec((TM, Cin), lambda i: (i, 0)),
                pl.BlockSpec((Cin, Cmid), lambda i: (0, 0)),
                pl.BlockSpec((1, Cmid), lambda i: (0, 0)),
            ],
            out_specs=pl.BlockSpec((TM, Cmid), lambda i: (i, 0)),
            compiler_params=cp1,
        )(x_flat, params["w1"], params["b1"])

    x_mid = x_mid_flat.reshape(N, H, W, Cmid)       # metadata-only reshape

    # ---- kernel 2: 3x3 conv + BN, H-tiled with 1-row halos, no pre-pad -----
    TH = 8 if H % 8 == 0 else H
    nT = H // TH
    y_out = pl.pallas_call(
        _conv3x3_bn_kernel,
        out_shape=jax.ShapeDtypeStruct((N, H, W, Cout), jnp.float32),
        grid=(N, nT),
        in_specs=[
            pl.BlockSpec((None, TH, W, Cmid), lambda n, t: (n, t, 0, 0)),
            pl.BlockSpec((None, 1, W, Cmid),
                         lambda n, t: (n, jnp.maximum(t * TH - 1, 0), 0, 0)),
            pl.BlockSpec((None, 1, W, Cmid),
                         lambda n, t: (n, jnp.minimum(t * TH + TH, H - 1), 0, 0)),
            pl.BlockSpec((3, 3, Cmid, Cout), lambda n, t: (0, 0, 0, 0)),
            pl.BlockSpec((1, Cout), lambda n, t: (0, 0)),
        ],
        out_specs=pl.BlockSpec((None, TH, W, Cout), lambda n, t: (n, t, 0, 0)),
        scratch_shapes=[pltpu.VMEM((TH + 2, W + _PADL + 1, Cmid),
                                   jnp.bfloat16)],
        compiler_params=pltpu.CompilerParams(
            dimension_semantics=("parallel", "parallel"),
            vmem_limit_bytes=32 * 1024 * 1024),
    )(x_mid, x_mid, x_mid, params["w2"], params["b2"])

    # Back to NCHW like the PyTorch module (the casts fuse into the transposes).
    return (jnp.transpose(y_out, (0, 3, 1, 2)),
            jnp.transpose(x_mid, (0, 3, 1, 2)).astype(jnp.float32))


# -----------------------------------------------------------------------------
# Deterministic parameter init (shapes follow ABF.__init__), BN scale folded.
# -----------------------------------------------------------------------------
def init_abf_params(key, in_ch, mid_ch, out_ch, fuse):
    ks = jax.random.split(key, 8)
    eps = 1e-5
    # conv1/conv2: kaiming_uniform_(a=1) -> U(-sqrt(3/fan_in), +sqrt(3/fan_in))
    b1w = (3.0 / in_ch) ** 0.5
    w1 = jax.random.uniform(ks[0], (in_ch, mid_ch), jnp.float32, -b1w, b1w)
    b2w = (3.0 / (mid_ch * 9)) ** 0.5
    w2 = jax.random.uniform(ks[1], (3, 3, mid_ch, out_ch), jnp.float32, -b2w, b2w)
    # Inference BN folded to per-channel scale/bias (running stats at init:
    # mean=0, var=1); gamma/beta perturbed deterministically to exercise the fold.
    g1 = 1.0 + 0.1 * jax.random.uniform(ks[2], (mid_ch,), jnp.float32, -1.0, 1.0)
    be1 = 0.1 * jax.random.uniform(ks[3], (mid_ch,), jnp.float32, -1.0, 1.0)
    g2 = 1.0 + 0.1 * jax.random.uniform(ks[4], (out_ch,), jnp.float32, -1.0, 1.0)
    be2 = 0.1 * jax.random.uniform(ks[5], (out_ch,), jnp.float32, -1.0, 1.0)
    s1 = g1 / jnp.sqrt(1.0 + eps)
    s2 = g2 / jnp.sqrt(1.0 + eps)
    params = dict(
        # BN scales folded into the conv weights (one-time host-side precompute);
        # matmul operands stored bf16, biases stay f32.
        w1=(w1 * s1[None, :]).astype(jnp.bfloat16),
        b1=be1.reshape(1, mid_ch),
        w2=(w2 * s2[None, None, None, :]).astype(jnp.bfloat16),
        b2=be2.reshape(1, out_ch),
    )
    if fuse:
        # att_conv: nn.Conv2d(2*mid, 2, 1) with bias (PyTorch default init scale)
        baw = (1.0 / (2 * mid_ch)) ** 0.5
        watt = jax.random.uniform(ks[6], (2 * mid_ch, 2), jnp.float32, -baw, baw)
        batt = jax.random.uniform(ks[7], (2,), jnp.float32, -baw, baw)
        params.update(
            wax_t=jnp.transpose(watt[:mid_ch]),   # (2, mid): rows acting on x
            way_t=jnp.transpose(watt[mid_ch:]),   # (2, mid): rows acting on y
            ba=batt,                              # (2,) -> SMEM
        )
    return params


# -----------------------------------------------------------------------------
# Pure-JAX reference (mirrors the kernel's bf16 operand handling)
# -----------------------------------------------------------------------------
def abf_reference(x_nchw, y_nchw, p, fuse):
    x = jnp.transpose(x_nchw, (0, 2, 3, 1)).astype(jnp.bfloat16)
    N, H, W, _ = x.shape
    Cmid = p["w1"].shape[1]
    xm = jnp.einsum("nhwc,cm->nhwm", x.astype(jnp.float32),
                    p["w1"].astype(jnp.float32)) + p["b1"][0]
    if fuse:
        y = jnp.transpose(y_nchw, (0, 2, 3, 1)).astype(jnp.bfloat16)
        y = _nearest_resize_rows(y, H, W).reshape(N, H, W, Cmid)
        y = y.astype(jnp.float32)
        l0 = jnp.sum(xm * p["wax_t"][0] + y * p["way_t"][0],
                     axis=-1, keepdims=True) + p["ba"][0]
        l1 = jnp.sum(xm * p["wax_t"][1] + y * p["way_t"][1],
                     axis=-1, keepdims=True) + p["ba"][1]
        xm = xm * jax.nn.sigmoid(l0) + y * jax.nn.sigmoid(l1)
    xm_bf = xm.astype(jnp.bfloat16)
    out = jax.lax.conv_general_dilated(
        xm_bf.astype(jnp.float32), p["w2"].astype(jnp.float32),
        window_strides=(1, 1), padding="SAME",
        dimension_numbers=("NHWC", "HWIO", "NHWC"))
    out = out + p["b2"][0]
    return (jnp.transpose(out, (0, 3, 1, 2)),
            jnp.transpose(xm_bf.astype(jnp.float32), (0, 3, 1, 2)))


# -----------------------------------------------------------------------------
if __name__ == "__main__":
    key = jax.random.PRNGKey(0)
    kx, ky, kp = jax.random.split(key, 3)

    # Lane-dense channels: Cmid/Cout multiples of 128 keep every vreg store
    # unmasked (real ReviewKD channels are 128-512).  Spatial 32 exercises the
    # multi-tile M grid and the H-tiled/halo path of the 3x3 conv.
    N, Cin, Cmid, Cout, H, W = 2, 64, 128, 128, 32, 32
    x = jax.random.normal(kx, (N, Cin, H, W), jnp.float32)      # NCHW like PyTorch
    y = jax.random.normal(ky, (N, Cmid, 16, 16), jnp.float32)   # lower-res residual
    params = init_abf_params(kp, Cin, Cmid, Cout, fuse=True)

    fwd = jax.jit(abf_forward, static_argnums=(3,))

    # fuse=True path
    y_out, x_mid = fwd(x, y, params, True)
    jax.block_until_ready((y_out, x_mid))
    y_ref, x_ref = abf_reference(x, y, params, True)
    # Tolerance is bounded by ~1 bf16 ulp (0.8%) on the bf16-stored intermediate
    # plus f32 accumulation-order noise, not f32 roundoff.
    np.testing.assert_allclose(np.asarray(y_out), np.asarray(y_ref), rtol=2e-2, atol=2e-2)
    np.testing.assert_allclose(np.asarray(x_mid), np.asarray(x_ref), rtol=2e-2, atol=2e-2)

    # fuse=False path (att_conv is None)
    y2, x2 = fwd(x, None, params, False)
    jax.block_until_ready((y2, x2))
    y2_ref, x2_ref = abf_reference(x, None, params, False)
    np.testing.assert_allclose(np.asarray(y2), np.asarray(y2_ref), rtol=2e-2, atol=2e-2)
    np.testing.assert_allclose(np.asarray(x2), np.asarray(x2_ref), rtol=2e-2, atol=2e-2)

    print("KERNEL_OK")
</pallas_src>

<mosaic_0001>
module attributes {stable_mosaic.version = 11 : i64} {
  func.func @_conv1_att_fuse_kernel(%arg0: i32, %arg1: memref<1024x64xbf16, #tpu.memory_space<vmem>>, %arg2: memref<1024x128xbf16, #tpu.memory_space<vmem>>, %arg3: memref<64x128xbf16, #tpu.memory_space<vmem>>, %arg4: memref<1x128xf32, #tpu.memory_space<vmem>>, %arg5: memref<2x128xf32, #tpu.memory_space<vmem>>, %arg6: memref<2x128xf32, #tpu.memory_space<vmem>>, %arg7: memref<2xf32, #tpu.memory_space<smem>>, %arg8: memref<1024x128xbf16, #tpu.memory_space<vmem>>) attributes {dimension_semantics = [#tpu.dimension_semantics<parallel>], iteration_bounds = array<i64: 2>, scalar_prefetch = 0 : i64, scratch_operands = 0 : i64, tpu.core_type = #tpu.core_type<tc>, window_params = [{transform_indices = @transform_0, window_bounds = array<i64: 1024, 64>}, {transform_indices = @transform_1, window_bounds = array<i64: 1024, 128>}, {pipeline_mode = #tpu.pipeline_mode<synchronous>, transform_indices = @transform_2, window_bounds = array<i64: 64, 128>}, {pipeline_mode = #tpu.pipeline_mode<synchronous>, transform_indices = @transform_3, window_bounds = array<i64: 1, 128>}, {pipeline_mode = #tpu.pipeline_mode<synchronous>, transform_indices = @transform_4, window_bounds = array<i64: 2, 128>}, {pipeline_mode = #tpu.pipeline_mode<synchronous>, transform_indices = @transform_5, window_bounds = array<i64: 2, 128>}, {transform_indices = @transform_6, window_bounds = array<i64: 2>}, {transform_indices = @transform_7, window_bounds = array<i64: 1024, 128>}]} {
    %c0 = arith.constant 0 : index
    %c0_0 = arith.constant 0 : index
    %0 = vector.load %arg1[%c0, %c0_0] : memref<1024x64xbf16, #tpu.memory_space<vmem>>, vector<1024x64xbf16>
    %c0_1 = arith.constant 0 : index
    %c0_2 = arith.constant 0 : index
    %1 = vector.load %arg3[%c0_1, %c0_2] : memref<64x128xbf16, #tpu.memory_space<vmem>>, vector<64x128xbf16>
    %cst = arith.constant dense<0.000000e+00> : vector<1024x128xf32>
    %2 = tpu.matmul %0, %1, %cst {dimension_numbers = #tpu.dot_dimension_numbers<[1], [0], [0], [1], [0, 0, 1, 1], [], []>} : vector<1024x64xbf16>, vector<64x128xbf16>, vector<1024x128xf32> -> vector<1024x128xf32>
    %c0_3 = arith.constant 0 : index
    %c0_4 = arith.constant 0 : index
    %3 = vector.load %arg4[%c0_3, %c0_4] : memref<1x128xf32, #tpu.memory_space<vmem>>, vector<1x128xf32>
    %4 = vector.broadcast %3 : vector<1x128xf32> to vector<1024x128xf32>
    %5 = arith.addf %2, %4 : vector<1024x128xf32>
    %c0_5 = arith.constant 0 : index
    %c0_6 = arith.constant 0 : index
    %6 = vector.load %arg2[%c0_5, %c0_6] : memref<1024x128xbf16, #tpu.memory_space<vmem>>, vector<1024x128xbf16>
    %7 = arith.extf %6 : vector<1024x128xbf16> to vector<1024x128xf32>
    %c0_7 = arith.constant 0 : index
    %c0_8 = arith.constant 0 : index
    %8 = vector.load %arg5[%c0_7, %c0_8] : memref<2x128xf32, #tpu.memory_space<vmem>>, vector<1x128xf32>
    %9 = vector.broadcast %8 : vector<1x128xf32> to vector<1024x128xf32>
    %10 = arith.mulf %5, %9 : vector<1024x128xf32>
    %c0_9 = arith.constant 0 : index
    %c0_10 = arith.constant 0 : index
    %11 = vector.load %arg6[%c0_9, %c0_10] : memref<2x128xf32, #tpu.memory_space<vmem>>, vector<1x128xf32>
    %12 = vector.broadcast %11 : vector<1x128xf32> to vector<1024x128xf32>
    %13 = arith.mulf %7, %12 : vector<1024x128xf32>
    %14 = arith.addf %10, %13 : vector<1024x128xf32>
    %cst_11 = arith.constant dense<0.000000e+00> : vector<1024xf32>
    %15 = vector.multi_reduction <add>, %14, %cst_11 [1] : vector<1024x128xf32> to vector<1024xf32>
    %16 = vector.shape_cast %15 : vector<1024xf32> to vector<1024x1xf32>
    %c0_12 = arith.constant 0 : index
    %17 = memref.load %arg7[%c0_12] : memref<2xf32, #tpu.memory_space<smem>>
    %18 = vector.broadcast %17 : f32 to vector<1024x1xf32>
    %19 = arith.addf %16, %18 : vector<1024x1xf32>
    %c1 = arith.constant 1 : index
    %c0_13 = arith.constant 0 : index
    %20 = vector.load %arg5[%c1, %c0_13] : memref<2x128xf32, #tpu.memory_space<vmem>>, vector<1x128xf32>
    %21 = vector.broadcast %20 : vector<1x128xf32> to vector<1024x128xf32>
    %22 = arith.mulf %5, %21 : vector<1024x128xf32>
    %c1_14 = arith.constant 1 : index
    %c0_15 = arith.constant 0 : index
    %23 = vector.load %arg6[%c1_14, %c0_15] : memref<2x128xf32, #tpu.memory_space<vmem>>, vector<1x128xf32>
    %24 = vector.broadcast %23 : vector<1x128xf32> to vector<1024x128xf32>
    %25 = arith.mulf %7, %24 : vector<1024x128xf32>
    %26 = arith.addf %22, %25 : vector<1024x128xf32>
    %cst_16 = arith.constant dense<0.000000e+00> : vector<1024xf32>
    %27 = vector.multi_reduction <add>, %26, %cst_16 [1] : vector<1024x128xf32> to vector<1024xf32>
    %28 = vector.shape_cast %27 : vector<1024xf32> to vector<1024x1xf32>
    %c1_17 = arith.constant 1 : index
    %29 = memref.load %arg7[%c1_17] : memref<2xf32, #tpu.memory_space<smem>>
    %30 = vector.broadcast %29 : f32 to vector<1024x1xf32>
    %31 = arith.addf %28, %30 : vector<1024x1xf32>
    %32 = arith.negf %19 : vector<1024x1xf32>
    %33 = math.exp %32 : vector<1024x1xf32>
    %cst_18 = arith.constant 1.000000e+00 : f32
    %34 = vector.broadcast %cst_18 : f32 to vector<1024x1xf32>
    %35 = arith.addf %34, %33 : vector<1024x1xf32>
    %36 = arith.divf %34, %35 : vector<1024x1xf32>
    %37 = arith.negf %31 : vector<1024x1xf32>
    %38 = math.exp %37 : vector<1024x1xf32>
    %cst_19 = arith.constant 1.000000e+00 : f32
    %39 = vector.broadcast %cst_19 : f32 to vector<1024x1xf32>
    %40 = arith.addf %39, %38 : vector<1024x1xf32>
    %41 = arith.divf %39, %40 : vector<1024x1xf32>
    %42 = vector.broadcast %36 : vector<1024x1xf32> to vector<1024x128xf32>
    %43 = arith.mulf %5, %42 : vector<1024x128xf32>
    %44 = vector.broadcast %41 : vector<1024x1xf32> to vector<1024x128xf32>
    %45 = arith.mulf %7, %44 : vector<1024x128xf32>
    %46 = arith.addf %43, %45 : vector<1024x128xf32>
    %47 = arith.truncf %46 : vector<1024x128xf32> to vector<1024x128xbf16>
    %c0_20 = arith.constant 0 : index
    %c0_21 = arith.constant 0 : index
    %48 = vector.load %arg8[%c0_20, %c0_21] : memref<1024x128xbf16, #tpu.memory_space<vmem>>, vector<1024x128xbf16>
    tpu.vector_store %arg8[%c0_20, %c0_21], %47 {strides = array<i32>} : memref<1024x128xbf16, #tpu.memory_space<vmem>>, vector<1024x128xbf16>,
    return
  }
  func.func @transform_0(%arg0: i32) -> (i32, i32) {
    %c0_i32 = arith.constant 0 : i32
    %c0_i32_0 = arith.constant 0 : i32
    return %arg0, %c0_i32 : i32, i32
  }
  func.func @transform_1(%arg0: i32) -> (i32, i32) {
    %c0_i32 = arith.constant 0 : i32
    %c0_i32_0 = arith.constant 0 : i32
    return %arg0, %c0_i32 : i32, i32
  }
  func.func @transform_2(%arg0: i32) -> (i32, i32) {
    %c0_i32 = arith.constant 0 : i32
    %c0_i32_0 = arith.constant 0 : i32
    %c0_i32_1 = arith.constant 0 : i32
    return %c0_i32, %c0_i32_0 : i32, i32
  }
  func.func @transform_3(%arg0: i32) -> (i32, i32) {
    %c0_i32 = arith.constant 0 : i32
    %c0_i32_0 = arith.constant 0 : i32
    %c0_i32_1 = arith.constant 0 : i32
    return %c0_i32, %c0_i32_0 : i32, i32
  }
  func.func @transform_4(%arg0: i32) -> (i32, i32) {
    %c0_i32 = arith.constant 0 : i32
    %c0_i32_0 = arith.constant 0 : i32
    %c0_i32_1 = arith.constant 0 : i32
    return %c0_i32, %c0_i32_0 : i32, i32
  }
  func.func @transform_5(%arg0: i32) -> (i32, i32) {
    %c0_i32 = arith.constant 0 : i32
    %c0_i32_0 = arith.constant 0 : i32
    %c0_i32_1 = arith.constant 0 : i32
    return %c0_i32, %c0_i32_0 : i32, i32
  }
  func.func @transform_6(%arg0: i32) -> i32 {
    %c0_i32 = arith.constant 0 : i32
    %c0_i32_0 = arith.constant 0 : i32
    return %c0_i32 : i32
  }
  func.func @transform_7(%arg0: i32) -> (i32, i32) {
    %c0_i32 = arith.constant 0 : i32
    %c0_i32_0 = arith.constant 0 : i32
    return %arg0, %c0_i32 : i32, i32
  }
}

module attributes {stable_mosaic.version = 11 : i64} {
  func.func @_conv3x3_bn_kernel(%arg0: i32, %arg1: i32, %arg2: memref<1x8x32x128xbf16, #tpu.memory_space<vmem>>, %arg3: memref<1x1x32x128xbf16, #tpu.memory_space<vmem>>, %arg4: memref<1x1x32x128xbf16, #tpu.memory_space<vmem>>, %arg5: memref<3x3x128x128xbf16, #tpu.memory_space<vmem>>, %arg6: memref<1x128xf32, #tpu.memory_space<vmem>>, %arg7: memref<1x8x32x128xf32, #tpu.memory_space<vmem>>, %arg8: memref<10x41x128xbf16, #tpu.memory_space<vmem>>) attributes {dimension_semantics = [#tpu.dimension_semantics<parallel>, #tpu.dimension_semantics<parallel>], iteration_bounds = array<i64: 2, 4>, scalar_prefetch = 0 : i64, scratch_operands = 1 : i64, tpu.core_type = #tpu.core_type<tc>, window_params = [{transform_indices = @transform_0, window_bounds = array<i64: 1, 8, 32, 128>}, {transform_indices = @transform_1, window_bounds = array<i64: 1, 1, 32, 128>}, {transform_indices = @transform_2, window_bounds = array<i64: 1, 1, 32, 128>}, {pipeline_mode = #tpu.pipeline_mode<synchronous>, transform_indices = @transform_3, window_bounds = array<i64: 3, 3, 128, 128>}, {pipeline_mode = #tpu.pipeline_mode<synchronous>, transform_indices = @transform_4, window_bounds = array<i64: 1, 128>}, {transform_indices = @transform_5, window_bounds = array<i64: 1, 8, 32, 128>}]} {
    %c0_i32 = arith.constant 0 : i32
    %0 = arith.cmpi sgt, %arg1, %c0_i32 : i32
    %1 = arith.extui %0 : i1 to i32
    %2 = arith.sitofp %1 : i32 to f32
    %3 = arith.truncf %2 : f32 to bf16
    %c3_i32 = arith.constant 3 : i32
    %4 = arith.cmpi slt, %arg1, %c3_i32 : i32
    %5 = arith.extui %4 : i1 to i32
    %6 = arith.sitofp %5 : i32 to f32
    %7 = arith.truncf %6 : f32 to bf16
    %cst = arith.constant 0.000000e+00 : bf16
    %8 = vector.broadcast %cst : bf16 to vector<10x1x128xbf16>
    %c0 = arith.constant 0 : index
    %c7 = arith.constant 7 : index
    %c0_0 = arith.constant 0 : index
    %9 = vector.load %arg8[%c0, %c7, %c0_0] : memref<10x41x128xbf16, #tpu.memory_space<vmem>>, vector<10x1x128xbf16>
    tpu.vector_store %arg8[%c0, %c7, %c0_0], %8 {strides = array<i32>} : memref<10x41x128xbf16, #tpu.memory_space<vmem>>, vector<10x1x128xbf16>,
    %cst_1 = arith.constant 0.000000e+00 : bf16
    %10 = vector.broadcast %cst_1 : bf16 to vector<10x1x128xbf16>
    %c0_2 = arith.constant 0 : index
    %c40 = arith.constant 40 : index
    %c0_3 = arith.constant 0 : index
    %11 = vector.load %arg8[%c0_2, %c40, %c0_3] : memref<10x41x128xbf16, #tpu.memory_space<vmem>>, vector<10x1x128xbf16>
    tpu.vector_store %arg8[%c0_2, %c40, %c0_3], %10 {strides = array<i32>} : memref<10x41x128xbf16, #tpu.memory_space<vmem>>, vector<10x1x128xbf16>,
    %c0_4 = arith.constant 0 : index
    %c0_5 = arith.constant 0 : index
    %c0_6 = arith.constant 0 : index
    %c0_7 = arith.constant 0 : index
    %12 = vector.load %arg3[%c0_4, %c0_5, %c0_6, %c0_7] : memref<1x1x32x128xbf16, #tpu.memory_space<vmem>>, vector<1x1x32x128xbf16>
    %13 = vector.shape_cast %12 : vector<1x1x32x128xbf16> to vector<1x32x128xbf16>
    %14 = vector.broadcast %3 : bf16 to vector<1x32x128xbf16>
    %15 = arith.mulf %13, %14 : vector<1x32x128xbf16>
    %c0_8 = arith.constant 0 : index
    %c8 = arith.constant 8 : index
    %c0_9 = arith.constant 0 : index
    %16 = vector.load %arg8[%c0_8, %c8, %c0_9] : memref<10x41x128xbf16, #tpu.memory_space<vmem>>, vector<1x32x128xbf16>
    tpu.vector_store %arg8[%c0_8, %c8, %c0_9], %15 {strides = array<i32>} : memref<10x41x128xbf16, #tpu.memory_space<vmem>>, vector<1x32x128xbf16>,
    %c0_10 = arith.constant 0 : index
    %c0_11 = arith.constant 0 : index
    %c0_12 = arith.constant 0 : index
    %c0_13 = arith.constant 0 : index
    %17 = vector.load %arg4[%c0_10, %c0_11, %c0_12, %c0_13] : memref<1x1x32x128xbf16, #tpu.memory_space<vmem>>, vector<1x1x32x128xbf16>
    %18 = vector.shape_cast %17 : vector<1x1x32x128xbf16> to vector<1x32x128xbf16>
    %19 = vector.broadcast %7 : bf16 to vector<1x32x128xbf16>
    %20 = arith.mulf %18, %19 : vector<1x32x128xbf16>
    %c9 = arith.constant 9 : index
    %c8_14 = arith.constant 8 : index
    %c0_15 = arith.constant 0 : index
    %21 = vector.load %arg8[%c9, %c8_14, %c0_15] : memref<10x41x128xbf16, #tpu.memory_space<vmem>>, vector<1x32x128xbf16>
    tpu.vector_store %arg8[%c9, %c8_14, %c0_15], %20 {strides = array<i32>} : memref<10x41x128xbf16, #tpu.memory_space<vmem>>, vector<1x32x128xbf16>,
    %c0_16 = arith.constant 0 : index
    %c0_17 = arith.constant 0 : index
    %c0_18 = arith.constant 0 : index
    %c0_19 = arith.constant 0 : index
    %22 = vector.load %arg2[%c0_16, %c0_17, %c0_18, %c0_19] : memref<1x8x32x128xbf16, #tpu.memory_space<vmem>>, vector<1x8x32x128xbf16>
    %23 = vector.shape_cast %22 : vector<1x8x32x128xbf16> to vector<8x32x128xbf16>
    %c1 = arith.constant 1 : index
    %c8_20 = arith.constant 8 : index
    %c0_21 = arith.constant 0 : index
    %24 = vector.load %arg8[%c1, %c8_20, %c0_21] : memref<10x41x128xbf16, #tpu.memory_space<vmem>>, vector<8x32x128xbf16>
    tpu.vector_store %arg8[%c1, %c8_20, %c0_21], %23 {strides = array<i32>} : memref<10x41x128xbf16, #tpu.memory_space<vmem>>, vector<8x32x128xbf16>,
    %cst_22 = arith.constant 0.000000e+00 : f32
    %25 = vector.broadcast %cst_22 : f32 to vector<256x128xf32>
    %c0_23 = arith.constant 0 : index
    %c7_24 = arith.constant 7 : index
    %c0_25 = arith.constant 0 : index
    %26 = vector.load %arg8[%c0_23, %c7_24, %c0_25] : memref<10x41x128xbf16, #tpu.memory_space<vmem>>, vector<10x32x128xbf16>
    %27 = vector.extract_strided_slice %26 {offsets = [0, 0, 0], sizes = [8, 32, 128], strides = [1, 1, 1]} : vector<10x32x128xbf16> to vector<8x32x128xbf16>
    %28 = vector.shape_cast %27 : vector<8x32x128xbf16> to vector<256x128xbf16>
    %c0_26 = arith.constant 0 : index
    %c0_27 = arith.constant 0 : index
    %c0_28 = arith.constant 0 : index
    %c0_29 = arith.constant 0 : index
    %29 = vector.load %arg5[%c0_26, %c0_27, %c0_28, %c0_29] : memref<3x3x128x128xbf16, #tpu.memory_space<vmem>>, vector<1x1x128x128xbf16>
    %30 = vector.shape_cast %29 : vector<1x1x128x128xbf16> to vector<128x128xbf16>
    %cst_30 = arith.constant dense<0.000000e+00> : vector<256x128xf32>
    %31 = tpu.matmul %28, %30, %cst_30 {dimension_numbers = #tpu.dot_dimension_numbers<[1], [0], [0], [1], [0, 0, 1, 1], [], []>} : vector<256x128xbf16>, vector<128x128xbf16>, vector<256x128xf32> -> vector<256x128xf32>
    %32 = arith.addf %25, %31 : vector<256x128xf32>
    %33 = vector.extract_strided_slice %26 {offsets = [1, 0, 0], sizes = [8, 32, 128], strides = [1, 1, 1]} : vector<10x32x128xbf16> to vector<8x32x128xbf16>
    %34 = vector.shape_cast %33 : vector<8x32x128xbf16> to vector<256x128xbf16>
    %c1_31 = arith.constant 1 : index
    %c0_32 = arith.constant 0 : index
    %c0_33 = arith.constant 0 : index
    %c0_34 = arith.constant 0 : index
    %35 = vector.load %arg5[%c1_31, %c0_32, %c0_33, %c0_34] : memref<3x3x128x128xbf16, #tpu.memory_space<vmem>>, vector<1x1x128x128xbf16>
    %36 = vector.shape_cast %35 : vector<1x1x128x128xbf16> to vector<128x128xbf16>
    %cst_35 = arith.constant dense<0.000000e+00> : vector<256x128xf32>
    %37 = tpu.matmul %34, %36, %cst_35 {dimension_numbers = #tpu.dot_dimension_numbers<[1], [0], [0], [1], [0, 0, 1, 1], [], []>} : vector<256x128xbf16>, vector<128x128xbf16>, vector<256x128xf32> -> vector<256x128xf32>
    %38 = arith.addf %32, %37 : vector<256x128xf32>
    %39 = vector.extract_strided_slice %26 {offsets = [2, 0, 0], sizes = [8, 32, 128], strides = [1, 1, 1]} : vector<10x32x128xbf16> to vector<8x32x128xbf16>
    %40 = vector.shape_cast %39 : vector<8x32x128xbf16> to vector<256x128xbf16>
    %c2 = arith.constant 2 : index
    %c0_36 = arith.constant 0 : index
    %c0_37 = arith.constant 0 : index
    %c0_38 = arith.constant 0 : index
    %41 = vector.load %arg5[%c2, %c0_36, %c0_37, %c0_38] : memref<3x3x128x128xbf16, #tpu.memory_space<vmem>>, vector<1x1x128x128xbf16>
    %42 = vector.shape_cast %41 : vector<1x1x128x128xbf16> to vector<128x128xbf16>
    %cst_39 = arith.constant dense<0.000000e+00> : vector<256x128xf32>
    %43 = tpu.matmul %40, %42, %cst_39 {dimension_numbers = #tpu.dot_dimension_numbers<[1], [0], [0], [1], [0, 0, 1, 1], [], []>} : vector<256x128xbf16>, vector<128x128xbf16>, vector<256x128xf32> -> vector<256x128xf32>
    %44 = arith.addf %38, %43 : vector<256x128xf32>
    %c0_40 = arith.constant 0 : index
    %c8_41 = arith.constant 8 : index
    %c0_42 = arith.constant 0 : index
    %45 = vector.load %arg8[%c0_40, %c8_41, %c0_42] : memref<10x41x128xbf16, #tpu.memory_space<vmem>>, vector<10x32x128xbf16>
    %46 = vector.extract_strided_slice %45 {offsets = [0, 0, 0], sizes = [8, 32, 128], strides = [1, 1, 1]} : vector<10x32x128xbf16> to vector<8x32x128xbf16>
    %47 = vector.shape_cast %46 : vector<8x32x128xbf16> to vector<256x128xbf16>
    %c0_43 = arith.constant 0 : index
    %c1_44 = arith.constant 1 : index
    %c0_45 = arith.constant 0 : index
    %c0_46 = arith.constant 0 : index
    %48 = vector.load %arg5[%c0_43, %c1_44, %c0_45, %c0_46] : memref<3x3x128x128xbf16, #tpu.memory_space<vmem>>, vector<1x1x128x128xbf16>
    %49 = vector.shape_cast %48 : vector<1x1x128x128xbf16> to vector<128x128xbf16>
    %cst_47 = arith.constant dense<0.000000e+00> : vector<256x128xf32>
    %50 = tpu.matmul %47, %49, %cst_47 {dimension_numbers = #tpu.dot_dimension_numbers<[1], [0], [0], [1], [0, 0, 1, 1], [], []>} : vector<256x128xbf16>, vector<128x128xbf16>, vector<256x128xf32> -> vector<256x128xf32>
    %51 = arith.addf %44, %50 : vector<256x128xf32>
    %52 = vector.extract_strided_slice %45 {offsets = [1, 0, 0], sizes = [8, 32, 128], strides = [1, 1, 1]} : vector<10x32x128xbf16> to vector<8x32x128xbf16>
    %53 = vector.shape_cast %52 : vector<8x32x128xbf16> to vector<256x128xbf16>
    %c1_48 = arith.constant 1 : index
    %c1_49 = arith.constant 1 : index
    %c0_50 = arith.constant 0 : index
    %c0_51 = arith.constant 0 : index
    %54 = vector.load %arg5[%c1_48, %c1_49, %c0_50, %c0_51] : memref<3x3x128x128xbf16, #tpu.memory_space<vmem>>, vector<1x1x128x128xbf16>
    %55 = vector.shape_cast %54 : vector<1x1x128x128xbf16> to vector<128x128xbf16>
    %cst_52 = arith.constant dense<0.000000e+00> : vector<256x128xf32>
    %56 = tpu.matmul %53, %55, %cst_52 {dimension_numbers = #tpu.dot_dimension_numbers<[1], [0], [0], [1], [0, 0, 1, 1], [], []>} : vector<256x128xbf16>, vector<128x128xbf16>, vector<256x128xf32> -> vector<256x128xf32>
    %57 = arith.addf %51, %56 : vector<256x128xf32>
    %58 = vector.extract_strided_slice %45 {offsets = [2, 0, 0], sizes = [8, 32, 128], strides = [1, 1, 1]} : vector<10x32x128xbf16> to vector<8x32x128xbf16>
    %59 = vector.shape_cast %58 : vector<8x32x128xbf16> to vector<256x128xbf16>
    %c2_53 = arith.constant 2 : index
    %c1_54 = arith.constant 1 : index
    %c0_55 = arith.constant 0 : index
    %c0_56 = arith.constant 0 : index
    %60 = vector.load %arg5[%c2_53, %c1_54, %c0_55, %c0_56] : memref<3x3x128x128xbf16, #tpu.memory_space<vmem>>, vector<1x1x128x128xbf16>
    %61 = vector.shape_cast %60 : vector<1x1x128x128xbf16> to vector<128x128xbf16>
    %cst_57 = arith.constant dense<0.000000e+00> : vector<256x128xf32>
    %62 = tpu.matmul %59, %61, %cst_57 {dimension_numbers = #tpu.dot_dimension_numbers<[1], [0], [0], [1], [0, 0, 1, 1], [], []>} : vector<256x128xbf16>, vector<128x128xbf16>, vector<256x128xf32> -> vector<256x128xf32>
    %63 = arith.addf %57, %62 : vector<256x128xf32>
    %c0_58 = arith.constant 0 : index
    %c9_59 = arith.constant 9 : index
    %c0_60 = arith.constant 0 : index
    %64 = vector.load %arg8[%c0_58, %c9_59, %c0_60] : memref<10x41x128xbf16, #tpu.memory_space<vmem>>, vector<10x32x128xbf16>
    %65 = vector.extract_strided_slice %64 {offsets = [0, 0, 0], sizes = [8, 32, 128], strides = [1, 1, 1]} : vector<10x32x128xbf16> to vector<8x32x128xbf16>
    %66 = vector.shape_cast %65 : vector<8x32x128xbf16> to vector<256x128xbf16>
    %c0_61 = arith.constant 0 : index
    %c2_62 = arith.constant 2 : index
    %c0_63 = arith.constant 0 : index
    %c0_64 = arith.constant 0 : index
    %67 = vector.load %arg5[%c0_61, %c2_62, %c0_63, %c0_64] : memref<3x3x128x128xbf16, #tpu.memory_space<vmem>>, vector<1x1x128x128xbf16>
    %68 = vector.shape_cast %67 : vector<1x1x128x128xbf16> to vector<128x128xbf16>
    %cst_65 = arith.constant dense<0.000000e+00> : vector<256x128xf32>
    %69 = tpu.matmul %66, %68, %cst_65 {dimension_numbers = #tpu.dot_dimension_numbers<[1], [0], [0], [1], [0, 0, 1, 1], [], []>} : vector<256x128xbf16>, vector<128x128xbf16>, vector<256x128xf32> -> vector<256x128xf32>
    %70 = arith.addf %63, %69 : vector<256x128xf32>
    %71 = vector.extract_strided_slice %64 {offsets = [1, 0, 0], sizes = [8, 32, 128], strides = [1, 1, 1]} : vector<10x32x128xbf16> to vector<8x32x128xbf16>
    %72 = vector.shape_cast %71 : vector<8x32x128xbf16> to vector<256x128xbf16>
    %c1_66 = arith.constant 1 : index
    %c2_67 = arith.constant 2 : index
    %c0_68 = arith.constant 0 : index
    %c0_69 = arith.constant 0 : index
    %73 = vector.load %arg5[%c1_66, %c2_67, %c0_68, %c0_69] : memref<3x3x128x128xbf16, #tpu.memory_space<vmem>>, vector<1x1x128x128xbf16>
    %74 = vector.shape_cast %73 : vector<1x1x128x128xbf16> to vector<128x128xbf16>
    %cst_70 = arith.constant dense<0.000000e+00> : vector<256x128xf32>
    %75 = tpu.matmul %72, %74, %cst_70 {dimension_numbers = #tpu.dot_dimension_numbers<[1], [0], [0], [1], [0, 0, 1, 1], [], []>} : vector<256x128xbf16>, vector<128x128xbf16>, vector<256x128xf32> -> vector<256x128xf32>
    %76 = arith.addf %70, %75 : vector<256x128xf32>
    %77 = vector.extract_strided_slice %64 {offsets = [2, 0, 0], sizes = [8, 32, 128], strides = [1, 1, 1]} : vector<10x32x128xbf16> to vector<8x32x128xbf16>
    %78 = vector.shape_cast %77 : vector<8x32x128xbf16> to vector<256x128xbf16>
    %c2_71 = arith.constant 2 : index
    %c2_72 = arith.constant 2 : index
    %c0_73 = arith.constant 0 : index
    %c0_74 = arith.constant 0 : index
    %79 = vector.load %arg5[%c2_71, %c2_72, %c0_73, %c0_74] : memref<3x3x128x128xbf16, #tpu.memory_space<vmem>>, vector<1x1x128x128xbf16>
    %80 = vector.shape_cast %79 : vector<1x1x128x128xbf16> to vector<128x128xbf16>
    %cst_75 = arith.constant dense<0.000000e+00> : vector<256x128xf32>
    %81 = tpu.matmul %78, %80, %cst_75 {dimension_numbers = #tpu.dot_dimension_numbers<[1], [0], [0], [1], [0, 0, 1, 1], [], []>} : vector<256x128xbf16>, vector<128x128xbf16>, vector<256x128xf32> -> vector<256x128xf32>
    %82 = arith.addf %76, %81 : vector<256x128xf32>
    %c0_76 = arith.constant 0 : index
    %c0_77 = arith.constant 0 : index
    %83 = vector.load %arg6[%c0_76, %c0_77] : memref<1x128xf32, #tpu.memory_space<vmem>>, vector<1x128xf32>
    %84 = vector.broadcast %83 : vector<1x128xf32> to vector<256x128xf32>
    %85 = arith.addf %82, %84 : vector<256x128xf32>
    %86 = vector.shape_cast %85 : vector<256x128xf32> to vector<8x32x128xf32>
    %c0_78 = arith.constant 0 : index
    %c0_79 = arith.constant 0 : index
    %c0_80 = arith.constant 0 : index
    %c0_81 = arith.constant 0 : index
    %87 = vector.load %arg7[%c0_78, %c0_79, %c0_80, %c0_81] : memref<1x8x32x128xf32, #tpu.memory_space<vmem>>, vector<1x8x32x128xf32>
    %88 = vector.shape_cast %87 : vector<1x8x32x128xf32> to vector<8x32x128xf32>
    %89 = vector.shape_cast %86 : vector<8x32x128xf32> to vector<1x8x32x128xf32>
    tpu.vector_store %arg7[%c0_78, %c0_79, %c0_80, %c0_81], %89 {strides = array<i32>} : memref<1x8x32x128xf32, #tpu.memory_space<vmem>>, vector<1x8x32x128xf32>,
    return
  }
  func.func @transform_0(%arg0: i32, %arg1: i32) -> (i32, i32, i32, i32) {
    %c0_i32 = arith.constant 0 : i32
    %c0_i32_0 = arith.constant 0 : i32
    %c0_i32_1 = arith.constant 0 : i32
    return %arg0, %arg1, %c0_i32, %c0_i32_0 : i32, i32, i32, i32
  }
  func.func @transform_1(%arg0: i32, %arg1: i32) -> (i32, i32, i32, i32) {
    %c8_i32 = arith.constant 8 : i32
    %0 = arith.muli %arg1, %c8_i32 : i32
    %c1_i32 = arith.constant 1 : i32
    %1 = arith.subi %0, %c1_i32 : i32
    %c0_i32 = arith.constant 0 : i32
    %2 = arith.maxsi %1, %c0_i32 : i32
    %c0_i32_0 = arith.constant 0 : i32
    %c0_i32_1 = arith.constant 0 : i32
    %c0_i32_2 = arith.constant 0 : i32
    return %arg0, %2, %c0_i32_0, %c0_i32_1 : i32, i32, i32, i32
  }
  func.func @transform_2(%arg0: i32, %arg1: i32) -> (i32, i32, i32, i32) {
    %c8_i32 = arith.constant 8 : i32
    %0 = arith.muli %arg1, %c8_i32 : i32
    %c8_i32_0 = arith.constant 8 : i32
    %1 = arith.addi %0, %c8_i32_0 : i32
    %c31_i32 = arith.constant 31 : i32
    %2 = arith.minsi %1, %c31_i32 : i32
    %c0_i32 = arith.constant 0 : i32
    %c0_i32_1 = arith.constant 0 : i32
    %c0_i32_2 = arith.constant 0 : i32
    return %arg0, %2, %c0_i32, %c0_i32_1 : i32, i32, i32, i32
  }
  func.func @transform_3(%arg0: i32, %arg1: i32) -> (i32, i32, i32, i32) {
    %c0_i32 = arith.constant 0 : i32
    %c0_i32_0 = arith.constant 0 : i32
    %c0_i32_1 = arith.constant 0 : i32
    %c0_i32_2 = arith.constant 0 : i32
    %c0_i32_3 = arith.constant 0 : i32
    return %c0_i32, %c0_i32_0, %c0_i32_1, %c0_i32_2 : i32, i32, i32, i32
  }
  func.func @transform_4(%arg0: i32, %arg1: i32) -> (i32, i32) {
    %c0_i32 = arith.constant 0 : i32
    %c0_i32_0 = arith.constant 0 : i32
    %c0_i32_1 = arith.constant 0 : i32
    return %c0_i32, %c0_i32_0 : i32, i32
  }
  func.func @transform_5(%arg0: i32, %arg1: i32) -> (i32, i32, i32, i32) {
    %c0_i32 = arith.constant 0 : i32
    %c0_i32_0 = arith.constant 0 : i32
    %c0_i32_1 = arith.constant 0 : i32
    return %arg0, %arg1, %c0_i32, %c0_i32_0 : i32, i32, i32, i32
  }
}

</mosaic_0001>

<llo_original>
// kernel: abf_forward.2
$region0: #{abf_forward.2}
  #allocation0 [shape = 'u32[]', space=smem, size = 0x4, offset = 0x4, fixed_abs, tag = 'smem constant byte address 0x4 - core index']
  #allocation1 [shape = 'u32[144,128]{1,0:T(1,128)}', space=vmem, size = 0x12000, scoped, tag = 'internal scratch']
  %s0 = inlined_call_operand.vmem [shape: bf16[2048,64], index: 0, kind: input, shape index: {}]
  %s1 = inlined_call_operand.vmem [shape: bf16[2048,128], index: 1, kind: input, shape index: {}]
  %s2 = inlined_call_operand.vmem [shape: bf16[64,128], index: 2, kind: input, shape index: {}]
  %s3 = inlined_call_operand.vmem [shape: f32[1,128], index: 3, kind: input, shape index: {}]
  %s4 = inlined_call_operand.vmem [shape: f32[2,128], index: 4, kind: input, shape index: {}]
  %s5 = inlined_call_operand.vmem [shape: f32[2,128], index: 5, kind: input, shape index: {}]
  %s6 = inlined_call_operand.vmem [shape: f32[2], index: 6, kind: input, shape index: {}]
  %s7 = inlined_call_operand.vmem [shape: bf16[2048,128], index: 7, kind: output, shape index: {}]
  %s8 = sld [smem:[#allocation0]]
  $region65: #{abf_forward.2} parent=0
    _
  %s10 = ssub.s32 1, %s8
  %s11 = scalar_select 0, %s10, %s8
  $region1: #{abf_forward.2} parent=0
    #allocation2 [shape = 'u8[512]{0}', space=smem, size = 0x200, scoped, tag = 'input window, operand 6, single buffered']
    #allocation3 [shape = 's32[2]{0}', space=sflag, size = 0x8, scoped, tag = 'scoped memory for abf_forward.2']
    %12 = vsyncpa [#allocation3], 0
    loop: start=0, step=1, limit=4
    $region2: #{abf_forward.2} parent=1 // loop_pre_header
      _
    $region3: #{abf_forward.2} parent=1 // loop_header
      %s14 = sphi 0, %s18
      %p15 = scmp.ge.s32.totalorder %s14, 4
      %s24 = sphi 0, %s26
      %s27 = sphi 0, %s24
      %s28 = sphi 0, %s27
      %s44 = sphi 0, %s28
      %s50 = sphi 0, %s52
      %s53 = sphi 0, %s50
      %s54 = sphi 0, %s53
      %s70 = sphi 0, %s54
      %s74 = sphi 0, %s74
      %s76 = sphi 0, %s74
      %s77 = sphi 0, %s76
      %s91 = sphi 0, %s77
      %s95 = sphi 0, %s95
      %s97 = sphi 0, %s95
      %s98 = sphi 0, %s97
      %s112 = sphi 0, %s98
      %s116 = sphi 0, %s116
      %s118 = sphi 0, %s116
      %s119 = sphi 0, %s118
      %s133 = sphi 0, %s119
      %s137 = sphi 0, %s137
      %s139 = sphi 0, %s137
      %s140 = sphi 0, %s139
      %s154 = sphi 0, %s140
      %s158 = sphi 0, %s158
      %s160 = sphi 0, %s158
      %s161 = sphi 0, %s160
      %s175 = sphi 0, %s161
      %s181 = sphi 0, %s183
      %s184 = sphi 0, %s181
      %s185 = sphi 0, %s184
      %s201 = sphi 0, %s185
    $region4: #{abf_forward.2} parent=1 // loop_header_branch
      %17 = sbr.rel (%p15) target = $region8
    $region5: #{abf_forward.2} parent=1 // loop_body
      %s19 = ssub.s32 %s14, 1
      %s20 = ssub.s32 %s14, 2
      %s21 = sadd.s32 %s14, 1
      %s22 = ssub.s32 %s14, %s21
      %p23 = scmp.eq.s32.totalorder %s22, 0
      %s25 = sadd.s32 %s24, 1
      %s26 = scalar_select %p23, %s24, %s25
      %p29 = pneg %p23
      %p30 = scmp.eq.s32.totalorder %s14, 1
      %p31 = por %p29, %p30
      %p32 = scmp.ne.s32.totalorder %s24, %s27
      %p33 = scmp.eq.s32.totalorder %s14, 0
      %p34 = por %p32, %p33
      %p35 = scmp.ne.s32.totalorder %s24, %s27
      %p36 = scmp.eq.s32.totalorder %s19, 1
      %p37 = por %p35, %p36
      %p38 = scmp.ne.s32.totalorder %s27, %s28
      %p39 = scmp.eq.s32.totalorder %s19, 0
      %p40 = por %p38, %p39
      %p41 = scmp.ne.s32.totalorder %s27, %s28
      %p42 = scmp.eq.s32.totalorder %s20, 1
      %p43 = por %p41, %p42
      %p45 = scmp.ne.s32.totalorder %s28, %s44
      %p46 = scmp.eq.s32.totalorder %s20, 0
      %p47 = por %p45, %p46
      %s48 = ssub.s32 %s14, %s21
      %p49 = scmp.eq.s32.totalorder %s48, 0
      %s51 = sadd.s32 %s50, 1
      %s52 = scalar_select %p49, %s50, %s51
      %p55 = pneg %p49
      %p56 = scmp.eq.s32.totalorder %s14, 1
      %p57 = por %p55, %p56
      %p58 = scmp.ne.s32.totalorder %s50, %s53
      %p59 = scmp.eq.s32.totalorder %s14, 0
      %p60 = por %p58, %p59
      %p61 = scmp.ne.s32.totalorder %s50, %s53
      %p62 = scmp.eq.s32.totalorder %s19, 1
      %p63 = por %p61, %p62
      %p64 = scmp.ne.s32.totalorder %s53, %s54
      %p65 = scmp.eq.s32.totalorder %s19, 0
      %p66 = por %p64, %p65
      %p67 = scmp.ne.s32.totalorder %s53, %s54
      %p68 = scmp.eq.s32.totalorder %s20, 1
      %p69 = por %p67, %p68
      %p71 = scmp.ne.s32.totalorder %s54, %s70
      %p72 = scmp.eq.s32.totalorder %s20, 0
      %p73 = por %p71, %p72
      %s75 = sadd.s32 %s74, 1
      %p78 = scmp.eq.s32.totalorder %s14, 1
      %p79 = scmp.ne.s32.totalorder %s74, %s76
      %p80 = scmp.eq.s32.totalorder %s14, 0
      %p81 = por %p79, %p80
      %p82 = scmp.ne.s32.totalorder %s74, %s76
      %p83 = scmp.eq.s32.totalorder %s19, 1
      %p84 = por %p82, %p83
      %p85 = scmp.ne.s32.totalorder %s76, %s77
      %p86 = scmp.eq.s32.totalorder %s19, 0
      %p87 = por %p85, %p86
      %p88 = scmp.ne.s32.totalorder %s76, %s77
      %p89 = scmp.eq.s32.totalorder %s20, 1
      %p90 = por %p88, %p89
      %p92 = scmp.ne.s32.totalorder %s77, %s91
      %p93 = scmp.eq.s32.totalorder %s20, 0
      %p94 = por %p92, %p93
      %s96 = sadd.s32 %s95, 1
      %p99 = scmp.eq.s32.totalorder %s14, 1
      %p100 = scmp.ne.s32.totalorder %s95, %s97
      %p101 = scmp.eq.s32.totalorder %s14, 0
      %p102 = por %p100, %p101
      %p103 = scmp.ne.s32.totalorder %s95, %s97
      %p104 = scmp.eq.s32.totalorder %s19, 1
      %p105 = por %p103, %p104
      %p106 = scmp.ne.s32.totalorder %s97, %s98
      %p107 = scmp.eq.s32.totalorder %s19, 0
      %p108 = por %p106, %p107
      %p109 = scmp.ne.s32.totalorder %s97, %s98
      %p110 = scmp.eq.s32.totalorder %s20, 1
      %p111 = por %p109, %p110
      %p113 = scmp.ne.s32.totalorder %s98, %s112
      %p114 = scmp.eq.s32.totalorder %s20, 0
      %p115 = por %p113, %p114
      %s117 = sadd.s32 %s116, 1
      %p120 = scmp.eq.s32.totalorder %s14, 1
      %p121 = scmp.ne.s32.totalorder %s116, %s118
      %p122 = scmp.eq.s32.totalorder %s14, 0
      %p123 = por %p121, %p122
      %p124 = scmp.ne.s32.totalorder %s116, %s118
      %p125 = scmp.eq.s32.totalorder %s19, 1
      %p126 = por %p124, %p125
      %p127 = scmp.ne.s32.totalorder %s118, %s119
      %p128 = scmp.eq.s32.totalorder %s19, 0
      %p129 = por %p127, %p128
      %p130 = scmp.ne.s32.totalorder %s118, %s119
      %p131 = scmp.eq.s32.totalorder %s20, 1
      %p132 = por %p130, %p131
      %p134 = scmp.ne.s32.totalorder %s119, %s133
      %p135 = scmp.eq.s32.totalorder %s20, 0
      %p136 = por %p134, %p135
      %s138 = sadd.s32 %s137, 1
      %p141 = scmp.eq.s32.totalorder %s14, 1
      %p142 = scmp.ne.s32.totalorder %s137, %s139
      %p143 = scmp.eq.s32.totalorder %s14, 0
      %p144 = por %p142, %p143
      %p145 = scmp.ne.s32.totalorder %s137, %s139
      %p146 = scmp.eq.s32.totalorder %s19, 1
      %p147 = por %p145, %p146
      %p148 = scmp.ne.s32.totalorder %s139, %s140
      %p149 = scmp.eq.s32.totalorder %s19, 0
      %p150 = por %p148, %p149
      %p151 = scmp.ne.s32.totalorder %s139, %s140
      %p152 = scmp.eq.s32.totalorder %s20, 1
      %p153 = por %p151, %p152
      %p155 = scmp.ne.s32.totalorder %s140, %s154
      %p156 = scmp.eq.s32.totalorder %s20, 0
      %p157 = por %p155, %p156
      %s159 = sadd.s32 %s158, 1
      %p162 = scmp.eq.s32.totalorder %s14, 1
      %p163 = scmp.ne.s32.totalorder %s158, %s160
      %p164 = scmp.eq.s32.totalorder %s14, 0
      %p165 = por %p163, %p164
      %p166 = scmp.ne.s32.totalorder %s158, %s160
      %p167 = scmp.eq.s32.totalorder %s19, 1
      %p168 = por %p166, %p167
      %p169 = scmp.ne.s32.totalorder %s160, %s161
      %p170 = scmp.eq.s32.totalorder %s19, 0
      %p171 = por %p169, %p170
      %p172 = scmp.ne.s32.totalorder %s160, %s161
      %p173 = scmp.eq.s32.totalorder %s20, 1
      %p174 = por %p172, %p173
      %p176 = scmp.ne.s32.totalorder %s161, %s175
      %p177 = scmp.eq.s32.totalorder %s20, 0
      %p178 = por %p176, %p177
      %s179 = ssub.s32 %s14, %s21
      %p180 = scmp.eq.s32.totalorder %s179, 0
      %s182 = sadd.s32 %s181, 1
      %s183 = scalar_select %p180, %s181, %s182
      %p186 = pneg %p180
      %p187 = scmp.eq.s32.totalorder %s14, 1
      %p188 = por %p186, %p187
      %p189 = scmp.ne.s32.totalorder %s181, %s184
      %p190 = scmp.eq.s32.totalorder %s14, 0
      %p191 = por %p189, %p190
      %p192 = scmp.ne.s32.totalorder %s181, %s184
      %p193 = scmp.eq.s32.totalorder %s19, 1
      %p194 = por %p192, %p193
      %p195 = scmp.ne.s32.totalorder %s184, %s185
      %p196 = scmp.eq.s32.totalorder %s19, 0
      %p197 = por %p195, %p196
      %p198 = scmp.ne.s32.totalorder %s184, %s185
      %p199 = scmp.eq.s32.totalorder %s20, 1
      %p200 = por %p198, %p199
      %p202 = scmp.ne.s32.totalorder %s185, %s201
      %p203 = scmp.eq.s32.totalorder %s20, 0
      %p204 = por %p202, %p203
      %p205 = scmp.le.s32.totalorder 1, %s14
      %p206 = scmp.lt.s32.totalorder %s14, 3
      %p207 = pnand %p205, %p206
      %p208 = pneg %p207
      // Predicated region
      $region9: #{abf_forward.2} parent=5 // pred_check
        _
      $region10: #{abf_forward.2} parent=5 // pred_check_branch
        %210 = sbr.rel (%p207) target = $region12
      $region11: #{abf_forward.2} parent=5 // pred_region
        %s211 = ssub.s32 %s14, 1
        // Predicated region
        $region13: #{abf_forward.2} parent=11 // pred_check
          %p212 = pneg %p87
        $region14: #{abf_forward.2} parent=11 // pred_check_branch
          %214 = sbr.rel (%p212) target = $region16
        $region15: #{abf_forward.2} parent=11 // pred_region
          _
        $region16: #{abf_forward.2} parent=11 // pred_fallthru
          _
        // Predicated region
        $region17: #{abf_forward.2} parent=11 // pred_check
          %p215 = pneg %p108
        $region18: #{abf_forward.2} parent=11 // pred_check_branch
          %217 = sbr.rel (%p215) target = $region20
        $region19: #{abf_forward.2} parent=11 // pred_region
          _
        $region20: #{abf_forward.2} parent=11 // pred_fallthru
          _
        // Predicated region
        $region21: #{abf_forward.2} parent=11 // pred_check
          %p218 = pneg %p129
        $region22: #{abf_forward.2} parent=11 // pred_check_branch
          %220 = sbr.rel (%p218) target = $region24
        $region23: #{abf_forward.2} parent=11 // pred_region
          _
        $region24: #{abf_forward.2} parent=11 // pred_fallthru
          _
        // Predicated region
        $region25: #{abf_forward.2} parent=11 // pred_check
          %p221 = pneg %p150
        $region26: #{abf_forward.2} parent=11 // pred_check_branch
          %223 = sbr.rel (%p221) target = $region28
        $region27: #{abf_forward.2} parent=11 // pred_region
          _
        $region28: #{abf_forward.2} parent=11 // pred_fallthru
          _
        // Predicated region
        $region29: #{abf_forward.2} parent=11 // pred_check
          %p224 = pneg %p171
        $region30: #{abf_forward.2} parent=11 // pred_check_branch
          %226 = sbr.rel (%p224) target = $region32
        $region31: #{abf_forward.2} parent=11 // pred_region
          %s228 = ssub.s32 16, 16
          %229 = vsyncadd [#allocation3], %s228
          %s231 = sshll.u32 %s6, 4
          %s232 = int_to_ptr.vmem [resolvable:$true] %s231
          %234 = dma.vmem_to_smem %s232, 16, [#allocation2], [#allocation3]
        $region32: #{abf_forward.2} parent=11 // pred_fallthru
          _
      $region12: #{abf_forward.2} parent=5 // pred_fallthru
        _
      %p235 = scmp.lt.s32.totalorder %s14, 2
      // Predicated region
      $region33: #{abf_forward.2} parent=5 // pred_check
        %p236 = pneg %p235
      $region34: #{abf_forward.2} parent=5 // pred_check_branch
        %238 = sbr.rel (%p236) target = $region36
      $region35: #{abf_forward.2} parent=5 // pred_region
        // Predicated region
        $region37: #{abf_forward.2} parent=35 // pred_check
          %p239 = pneg %p34
        $region38: #{abf_forward.2} parent=35 // pred_check_branch
          %241 = sbr.rel (%p239) target = $region40
        $region39: #{abf_forward.2} parent=35 // pred_region
          %s242 = smul.u32 128, %s14
          %p243 = scmp.lt.s32.totalorder %s242, 255
          %s244 = scalar_select %p243, %s242, 255
          %s245 = smul.addr %s244, 4
          %s246 = scalar_lea.vmem %s0, %s245
          %s247 = smul.u32 128, %s14
        $region40: #{abf_forward.2} parent=35 // pred_fallthru
          _
        // Predicated region
        $region41: #{abf_forward.2} parent=35 // pred_check
          %p248 = pneg %p60
        $region42: #{abf_forward.2} parent=35 // pred_check_branch
          %250 = sbr.rel (%p248) target = $region44
        $region43: #{abf_forward.2} parent=35 // pred_region
          %s251 = smul.u32 128, %s14
          %p252 = scmp.lt.s32.totalorder %s251, 255
          %s253 = scalar_select %p252, %s251, 255
          %s254 = smul.addr %s253, 4
          %s255 = scalar_lea.vmem %s1, %s254
          %s256 = smul.u32 128, %s14
        $region44: #{abf_forward.2} parent=35 // pred_fallthru
          _
      $region36: #{abf_forward.2} parent=5 // pred_fallthru
        _
      %p257 = scmp.le.s32.totalorder 1, %s14
      %p258 = scmp.lt.s32.totalorder %s14, 3
      %p259 = pnand %p257, %p258
      %p260 = pneg %p259
      // Predicated region
      $region45: #{abf_forward.2} parent=5 // pred_check
        _
      $region46: #{abf_forward.2} parent=5 // pred_check_branch
        %262 = sbr.rel (%p259) target = $region48
      $region47: #{abf_forward.2} parent=5 // pred_region
        %s263 = ssub.s32 %s14, 1
        // Predicated region
        $region49: #{abf_forward.2} parent=47 // pred_check
          %p264 = pneg %p171
        $region50: #{abf_forward.2} parent=47 // pred_check_branch
          %266 = sbr.rel (%p264) target = $region52
        $region51: #{abf_forward.2} parent=47 // pred_region
          %267 = dma.done [#allocation3], 16
        $region52: #{abf_forward.2} parent=47 // pred_fallthru
          _
        %268 = sfence
        %s269 = smul.u32 128, %s19
        %p270 = scmp.lt.s32.totalorder %s269, 255
        %s271 = scalar_select %p270, %s269, 255
        %s272 = smul.addr %s271, 4
        %s273 = scalar_lea.vmem %s0, %s272
        %p274 = pneg %p40
        %p275 = pneg %p37
        %s276 = smul.u32 128, %s19
        %p277 = scmp.lt.s32.totalorder %s276, 255
        %s278 = scalar_select %p277, %s276, 255
        %s279 = smul.addr %s278, 4
        %s280 = scalar_lea.vmem %s1, %s279
        %p281 = pneg %p66
        %p282 = pneg %p63
        %p283 = pneg %p87
        %p284 = pneg %p84
        %p285 = pneg %p108
        %p286 = pneg %p105
        %p287 = pneg %p129
        %p288 = pneg %p126
        %p289 = pneg %p150
        %p290 = pneg %p147
        %p291 = pneg %p171
        %p292 = pneg %p168
        %p293 = pneg %p197
        %p294 = pneg %p194
        %s295 = smul.u32 128, %s19
        %p296 = scmp.lt.s32.totalorder %s295, 255
        %s297 = scalar_select %p296, %s295, 255
        %s298 = smul.addr %s297, 4
        %s299 = scalar_lea.vmem %s7, %s298
        %s300 = smul.u32 128, %s19
        %p301 = scmp.lt.s32.totalorder %s300, 255
        %s302 = scalar_select %p301, %s300, 255
        %s303 = smul.addr %s302, 4
        %s304 = scalar_lea.vmem %s0, %s303
        %s305 = smul.u32 128, %s19
        %s306 = smul.u32 128, %s19
        %p307 = scmp.lt.s32.totalorder %s306, 255
        %s308 = scalar_select %p307, %s306, 255
        %s309 = smul.addr %s308, 4
        %s310 = scalar_lea.vmem %s1, %s309
        %s311 = smul.u32 128, %s19
        %s312 = smul.u32 128, %s19
        %p313 = scmp.lt.s32.totalorder %s312, 255
        %s314 = scalar_select %p313, %s312, 255
        %s315 = smul.addr %s314, 4
        %s316 = scalar_lea.vmem %s7, %s315
        %s317 = smul.u32 128, %s19
        %v319 = vld [vmem:[%s304] sm:$0xf]
        %v320 = vld [vmem:[%s304 + $0x4] sm:$0xf]
        %v321 = vld [vmem:[%s304 + $0x8] sm:$0xf]
        %v322 = vld [vmem:[%s304 + $0xc] sm:$0xf]
        %v323 = vld [vmem:[%s304 + $0x10] sm:$0xf]
        %v324 = vld [vmem:[%s304 + $0x14] sm:$0xf]
        %v325 = vld [vmem:[%s304 + $0x18] sm:$0xf]
        %v326 = vld [vmem:[%s304 + $0x1c] sm:$0xf]
        %v327 = vld [vmem:[%s304 + $0x20] sm:$0xf]
        %v328 = vld [vmem:[%s304 + $0x24] sm:$0xf]
        %v329 = vld [vmem:[%s304 + $0x28] sm:$0xf]
        %v330 = vld [vmem:[%s304 + $0x2c] sm:$0xf]
        %v331 = vld [vmem:[%s304 + $0x30] sm:$0xf]
        %v332 = vld [vmem:[%s304 + $0x34] sm:$0xf]
        %v333 = vld [vmem:[%s304 + $0x38] sm:$0xf]
        %v334 = vld [vmem:[%s304 + $0x3c] sm:$0xf]
        %v335 = vld [vmem:[%s304 + $0x40] sm:$0xf]
        %v336 = vld [vmem:[%s304 + $0x44] sm:$0xf]
        %v337 = vld [vmem:[%s304 + $0x48] sm:$0xf]
        %v338 = vld [vmem:[%s304 + $0x4c] sm:$0xf]
        %v339 = vld [vmem:[%s304 + $0x50] sm:$0xf]
        %v340 = vld [vmem:[%s304 + $0x54] sm:$0xf]
        %v341 = vld [vmem:[%s304 + $0x58] sm:$0xf]
        %v342 = vld [vmem:[%s304 + $0x5c] sm:$0xf]
        %v343 = vld [vmem:[%s304 + $0x60] sm:$0xf]
        %v344 = vld [vmem:[%s304 + $0x64] sm:$0xf]
        %v345 = vld [vmem:[%s304 + $0x68] sm:$0xf]
        %v346 = vld [vmem:[%s304 + $0x6c] sm:$0xf]
        %v347 = vld [vmem:[%s304 + $0x70] sm:$0xf]
        %v348 = vld [vmem:[%s304 + $0x74] sm:$0xf]
        %v349 = vld [vmem:[%s304 + $0x78] sm:$0xf]
        %v350 = vld [vmem:[%s304 + $0x7c] sm:$0xf]
        %v351 = vld [vmem:[%s304 + $0x80] sm:$0xf]
        %v352 = vld [vmem:[%s304 + $0x84] sm:$0xf]
        %v353 = vld [vmem:[%s304 + $0x88] sm:$0xf]
        %v354 = vld [vmem:[%s304 + $0x8c] sm:$0xf]
        %v355 = vld [vmem:[%s304 + $0x90] sm:$0xf]
        %v356 = vld [vmem:[%s304 + $0x94] sm:$0xf]
        %v357 = vld [vmem:[%s304 + $0x98] sm:$0xf]
        %v358 = vld [vmem:[%s304 + $0x9c] sm:$0xf]
        %v359 = vld [vmem:[%s304 + $0xa0] sm:$0xf]
        %v360 = vld [vmem:[%s304 + $0xa4] sm:$0xf]
        %v361 = vld [vmem:[%s304 + $0xa8] sm:$0xf]
        %v362 = vld [vmem:[%s304 + $0xac] sm:$0xf]
        %v363 = vld [vmem:[%s304 + $0xb0] sm:$0xf]
        %v364 = vld [vmem:[%s304 + $0xb4] sm:$0xf]
        %v365 = vld [vmem:[%s304 + $0xb8] sm:$0xf]
        %v366 = vld [vmem:[%s304 + $0xbc] sm:$0xf]
        %v367 = vld [vmem:[%s304 + $0xc0] sm:$0xf]
        %v368 = vld [vmem:[%s304 + $0xc4] sm:$0xf]
        %v369 = vld [vmem:[%s304 + $0xc8] sm:$0xf]
        %v370 = vld [vmem:[%s304 + $0xcc] sm:$0xf]
        %v371 = vld [vmem:[%s304 + $0xd0] sm:$0xf]
        %v372 = vld [vmem:[%s304 + $0xd4] sm:$0xf]
        %v373 = vld [vmem:[%s304 + $0xd8] sm:$0xf]
        %v374 = vld [vmem:[%s304 + $0xdc] sm:$0xf]
        %v375 = vld [vmem:[%s304 + $0xe0] sm:$0xf]
        %v376 = vld [vmem:[%s304 + $0xe4] sm:$0xf]
        %v377 = vld [vmem:[%s304 + $0xe8] sm:$0xf]
        %v378 = vld [vmem:[%s304 + $0xec] sm:$0xf]
        %v379 = vld [vmem:[%s304 + $0xf0] sm:$0xf]
        %v380 = vld [vmem:[%s304 + $0xf4] sm:$0xf]
        %v381 = vld [vmem:[%s304 + $0xf8] sm:$0xf]
        %v382 = vld [vmem:[%s304 + $0xfc] sm:$0xf]
        %v383 = vld [vmem:[%s304 + $0x100] sm:$0xf]
        %v384 = vld [vmem:[%s304 + $0x104] sm:$0xf]
        %v385 = vld [vmem:[%s304 + $0x108] sm:$0xf]
        %v386 = vld [vmem:[%s304 + $0x10c] sm:$0xf]
        %v387 = vld [vmem:[%s304 + $0x110] sm:$0xf]
        %v388 = vld [vmem:[%s304 + $0x114] sm:$0xf]
        %v389 = vld [vmem:[%s304 + $0x118] sm:$0xf]
        %v390 = vld [vmem:[%s304 + $0x11c] sm:$0xf]
        %v391 = vld [vmem:[%s304 + $0x120] sm:$0xf]
        %v392 = vld [vmem:[%s304 + $0x124] sm:$0xf]
        %v393 = vld [vmem:[%s304 + $0x128] sm:$0xf]
        %v394 = vld [vmem:[%s304 + $0x12c] sm:$0xf]
        %v395 = vld [vmem:[%s304 + $0x130] sm:$0xf]
        %v396 = vld [vmem:[%s304 + $0x134] sm:$0xf]
        %v397 = vld [vmem:[%s304 + $0x138] sm:$0xf]
        %v398 = vld [vmem:[%s304 + $0x13c] sm:$0xf]
        %v399 = vld [vmem:[%s304 + $0x140] sm:$0xf]
        %v400 = vld [vmem:[%s304 + $0x144] sm:$0xf]
        %v401 = vld [vmem:[%s304 + $0x148] sm:$0xf]
        %v402 = vld [vmem:[%s304 + $0x14c] sm:$0xf]
        %v403 = vld [vmem:[%s304 + $0x150] sm:$0xf]
        %v404 = vld [vmem:[%s304 + $0x154] sm:$0xf]
        %v405 = vld [vmem:[%s304 + $0x158] sm:$0xf]
        %v406 = vld [vmem:[%s304 + $0x15c] sm:$0xf]
        %v407 = vld [vmem:[%s304 + $0x160] sm:$0xf]
        %v408 = vld [vmem:[%s304 + $0x164] sm:$0xf]
        %v409 = vld [vmem:[%s304 + $0x168] sm:$0xf]
        %v410 = vld [vmem:[%s304 + $0x16c] sm:$0xf]
        %v411 = vld [vmem:[%s304 + $0x170] sm:$0xf]
        %v412 = vld [vmem:[%s304 + $0x174] sm:$0xf]
        %v413 = vld [vmem:[%s304 + $0x178] sm:$0xf]
        %v414 = vld [vmem:[%s304 + $0x17c] sm:$0xf]
        %v415 = vld [vmem:[%s304 + $0x180] sm:$0xf]
        %v416 = vld [vmem:[%s304 + $0x184] sm:$0xf]
        %v417 = vld [vmem:[%s304 + $0x188] sm:$0xf]
        %v418 = vld [vmem:[%s304 + $0x18c] sm:$0xf]
        %v419 = vld [vmem:[%s304 + $0x190] sm:$0xf]
        %v420 = vld [vmem:[%s304 + $0x194] sm:$0xf]
        %v421 = vld [vmem:[%s304 + $0x198] sm:$0xf]
        %v422 = vld [vmem:[%s304 + $0x19c] sm:$0xf]
        %v423 = vld [vmem:[%s304 + $0x1a0] sm:$0xf]
        %v424 = vld [vmem:[%s304 + $0x1a4] sm:$0xf]
        %v425 = vld [vmem:[%s304 + $0x1a8] sm:$0xf]
        %v426 = vld [vmem:[%s304 + $0x1ac] sm:$0xf]
        %v427 = vld [vmem:[%s304 + $0x1b0] sm:$0xf]
        %v428 = vld [vmem:[%s304 + $0x1b4] sm:$0xf]
        %v429 = vld [vmem:[%s304 + $0x1b8] sm:$0xf]
        %v430 = vld [vmem:[%s304 + $0x1bc] sm:$0xf]
        %v431 = vld [vmem:[%s304 + $0x1c0] sm:$0xf]
        %v432 = vld [vmem:[%s304 + $0x1c4] sm:$0xf]
        %v433 = vld [vmem:[%s304 + $0x1c8] sm:$0xf]
        %v434 = vld [vmem:[%s304 + $0x1cc] sm:$0xf]
        %v435 = vld [vmem:[%s304 + $0x1d0] sm:$0xf]
        %v436 = vld [vmem:[%s304 + $0x1d4] sm:$0xf]
        %v437 = vld [vmem:[%s304 + $0x1d8] sm:$0xf]
        %v438 = vld [vmem:[%s304 + $0x1dc] sm:$0xf]
        %v439 = vld [vmem:[%s304 + $0x1e0] sm:$0xf]
        %v440 = vld [vmem:[%s304 + $0x1e4] sm:$0xf]
        %v441 = vld [vmem:[%s304 + $0x1e8] sm:$0xf]
        %v442 = vld [vmem:[%s304 + $0x1ec] sm:$0xf]
        %v443 = vld [vmem:[%s304 + $0x1f0] sm:$0xf]
        %v444 = vld [vmem:[%s304 + $0x1f4] sm:$0xf]
        %v445 = vld [vmem:[%s304 + $0x1f8] sm:$0xf]
        %v446 = vld [vmem:[%s304 + $0x1fc] sm:$0xf]
        %v447 = vld [vmem:[%s2] sm:$0xf]
        %v448 = vld [vmem:[%s2 + $0x4] sm:$0xf]
        %v449 = vld [vmem:[%s2 + $0x8] sm:$0xf]
        %v450 = vld [vmem:[%s2 + $0xc] sm:$0xf]
        %v451 = vld [vmem:[%s2 + $0x10] sm:$0xf]
        %v452 = vld [vmem:[%s2 + $0x14] sm:$0xf]
        %v453 = vld [vmem:[%s2 + $0x18] sm:$0xf]
        %v454 = vld [vmem:[%s2 + $0x1c] sm:$0xf]
        %v455 = vld [vmem:[%s3] sm:$0x1]
        %v457 = vlaneseq
        %v458 = vshrl.u32 %v457, 7
        %v459 = vsub.s32 0, %v458
        %v460 = vrot.slane %v455, %v459
        %v590 = vunpack.c.l.b16 %v319
        %v591 = vunpack.c.l.b16 %v320
        %v592 = vunpack.c.l.b16 %v321
        %v593 = vunpack.c.l.b16 %v322
        %v594 = vunpack.c.l.b16 %v323
        %v595 = vunpack.c.l.b16 %v324
        %v596 = vunpack.c.l.b16 %v325
        %v597 = vunpack.c.l.b16 %v326
        %v598 = vunpack.c.l.b16 %v327
        %v599 = vunpack.c.l.b16 %v328
        %v600 = vunpack.c.l.b16 %v329
        %v601 = vunpack.c.l.b16 %v330
        %v602 = vunpack.c.l.b16 %v331
        %v603 = vunpack.c.l.b16 %v332
        %v604 = vunpack.c.l.b16 %v333
        %v605 = vunpack.c.l.b16 %v334
        %v606 = vunpack.c.l.b16 %v335
        %v607 = vunpack.c.l.b16 %v336
        %v608 = vunpack.c.l.b16 %v337
        %v609 = vunpack.c.l.b16 %v338
        %v610 = vunpack.c.l.b16 %v339
        %v611 = vunpack.c.l.b16 %v340
        %v612 = vunpack.c.l.b16 %v341
        %v613 = vunpack.c.l.b16 %v342
        %v614 = vunpack.c.l.b16 %v343
        %v615 = vunpack.c.l.b16 %v344
        %v616 = vunpack.c.l.b16 %v345
        %v617 = vunpack.c.l.b16 %v346
        %v618 = vunpack.c.l.b16 %v347
        %v619 = vunpack.c.l.b16 %v348
        %v620 = vunpack.c.l.b16 %v349
        %v621 = vunpack.c.l.b16 %v350
        %v622 = vunpack.c.l.b16 %v351
        %v623 = vunpack.c.l.b16 %v352
        %v624 = vunpack.c.l.b16 %v353
        %v625 = vunpack.c.l.b16 %v354
        %v626 = vunpack.c.l.b16 %v355
        %v627 = vunpack.c.l.b16 %v356
        %v628 = vunpack.c.l.b16 %v357
        %v629 = vunpack.c.l.b16 %v358
        %v630 = vunpack.c.l.b16 %v359
        %v631 = vunpack.c.l.b16 %v360
        %v632 = vunpack.c.l.b16 %v361
        %v633 = vunpack.c.l.b16 %v362
        %v634 = vunpack.c.l.b16 %v363
        %v635 = vunpack.c.l.b16 %v364
        %v636 = vunpack.c.l.b16 %v365
        %v637 = vunpack.c.l.b16 %v366
        %v638 = vunpack.c.l.b16 %v367
        %v639 = vunpack.c.l.b16 %v368
        %v640 = vunpack.c.l.b16 %v369
        %v641 = vunpack.c.l.b16 %v370
        %v642 = vunpack.c.l.b16 %v371
        %v643 = vunpack.c.l.b16 %v372
        %v644 = vunpack.c.l.b16 %v373
        %v645 = vunpack.c.l.b16 %v374
        %v646 = vunpack.c.l.b16 %v375
        %v647 = vunpack.c.l.b16 %v376
        %v648 = vunpack.c.l.b16 %v377
        %v649 = vunpack.c.l.b16 %v378
        %v650 = vunpack.c.l.b16 %v379
        %v651 = vunpack.c.l.b16 %v380
        %v652 = vunpack.c.l.b16 %v381
        %v653 = vunpack.c.l.b16 %v382
        %v654 = vunpack.c.l.b16 %v383
        %v655 = vunpack.c.l.b16 %v384
        %v656 = vunpack.c.l.b16 %v385
        %v657 = vunpack.c.l.b16 %v386
        %v658 = vunpack.c.l.b16 %v387
        %v659 = vunpack.c.l.b16 %v388
        %v660 = vunpack.c.l.b16 %v389
        %v661 = vunpack.c.l.b16 %v390
        %v662 = vunpack.c.l.b16 %v391
        %v663 = vunpack.c.l.b16 %v392
        %v664 = vunpack.c.l.b16 %v393
        %v665 = vunpack.c.l.b16 %v394
        %v666 = vunpack.c.l.b16 %v395
        %v667 = vunpack.c.l.b16 %v396
        %v668 = vunpack.c.l.b16 %v397
        %v669 = vunpack.c.l.b16 %v398
        %v670 = vunpack.c.l.b16 %v399
        %v671 = vunpack.c.l.b16 %v400
        %v672 = vunpack.c.l.b16 %v401
        %v673 = vunpack.c.l.b16 %v402
        %v674 = vunpack.c.l.b16 %v403
        %v675 = vunpack.c.l.b16 %v404
        %v676 = vunpack.c.l.b16 %v405
        %v677 = vunpack.c.l.b16 %v406
        %v678 = vunpack.c.l.b16 %v407
        %v679 = vunpack.c.l.b16 %v408
        %v680 = vunpack.c.l.b16 %v409
        %v681 = vunpack.c.l.b16 %v410
        %v682 = vunpack.c.l.b16 %v411
        %v683 = vunpack.c.l.b16 %v412
        %v684 = vunpack.c.l.b16 %v413
        %v685 = vunpack.c.l.b16 %v414
        %v686 = vunpack.c.l.b16 %v415
        %v687 = vunpack.c.l.b16 %v416
        %v688 = vunpack.c.l.b16 %v417
        %v689 = vunpack.c.l.b16 %v418
        %v690 = vunpack.c.l.b16 %v419
        %v691 = vunpack.c.l.b16 %v420
        %v692 = vunpack.c.l.b16 %v421
        %v693 = vunpack.c.l.b16 %v422
        %v694 = vunpack.c.l.b16 %v423
        %v695 = vunpack.c.l.b16 %v424
        %v696 = vunpack.c.l.b16 %v425
        %v697 = vunpack.c.l.b16 %v426
        %v698 = vunpack.c.l.b16 %v427
        %v699 = vunpack.c.l.b16 %v428
        %v700 = vunpack.c.l.b16 %v429
        %v701 = vunpack.c.l.b16 %v430
        %v702 = vunpack.c.l.b16 %v431
        %v703 = vunpack.c.l.b16 %v432
        %v704 = vunpack.c.l.b16 %v433
        %v705 = vunpack.c.l.b16 %v434
        %v706 = vunpack.c.l.b16 %v435
        %v707 = vunpack.c.l.b16 %v436
        %v708 = vunpack.c.l.b16 %v437
        %v709 = vunpack.c.l.b16 %v438
        %v710 = vunpack.c.l.b16 %v439
        %v711 = vunpack.c.l.b16 %v440
        %v712 = vunpack.c.l.b16 %v441
        %v713 = vunpack.c.l.b16 %v442
        %v714 = vunpack.c.l.b16 %v443
        %v715 = vunpack.c.l.b16 %v444
        %v716 = vunpack.c.l.b16 %v445
        %v717 = vunpack.c.l.b16 %v446
        %v718 = vpack.c.b16 %v591, %v590
        %v719 = vpack.c.b16 %v593, %v592
        %v720 = vpack.c.b16 %v595, %v594
        %v721 = vpack.c.b16 %v597, %v596
        %v722 = vpack.c.b16 %v599, %v598
        %v723 = vpack.c.b16 %v601, %v600
        %v724 = vpack.c.b16 %v603, %v602
        %v725 = vpack.c.b16 %v605, %v604
        %v726 = vpack.c.b16 %v607, %v606
        %v727 = vpack.c.b16 %v609, %v608
        %v728 = vpack.c.b16 %v611, %v610
        %v729 = vpack.c.b16 %v613, %v612
        %v730 = vpack.c.b16 %v615, %v614
        %v731 = vpack.c.b16 %v617, %v616
        %v732 = vpack.c.b16 %v619, %v618
        %v733 = vpack.c.b16 %v621, %v620
        %v734 = vpack.c.b16 %v623, %v622
        %v735 = vpack.c.b16 %v625, %v624
        %v736 = vpack.c.b16 %v627, %v626
        %v737 = vpack.c.b16 %v629, %v628
        %v738 = vpack.c.b16 %v631, %v630
        %v739 = vpack.c.b16 %v633, %v632
        %v740 = vpack.c.b16 %v635, %v634
        %v741 = vpack.c.b16 %v637, %v636
        %v742 = vpack.c.b16 %v639, %v638
        %v743 = vpack.c.b16 %v641, %v640
        %v744 = vpack.c.b16 %v643, %v642
        %v745 = vpack.c.b16 %v645, %v644
        %v746 = vpack.c.b16 %v647, %v646
        %v747 = vpack.c.b16 %v649, %v648
        %v748 = vpack.c.b16 %v651, %v650
        %v749 = vpack.c.b16 %v653, %v652
        %v750 = vpack.c.b16 %v655, %v654
        %v751 = vpack.c.b16 %v657, %v656
        %v752 = vpack.c.b16 %v659, %v658
        %v753 = vpack.c.b16 %v661, %v660
        %v754 = vpack.c.b16 %v663, %v662
        %v755 = vpack.c.b16 %v665, %v664
        %v756 = vpack.c.b16 %v667, %v666
        %v757 = vpack.c.b16 %v669, %v668
        %v758 = vpack.c.b16 %v671, %v670
        %v759 = vpack.c.b16 %v673, %v672
        %v760 = vpack.c.b16 %v675, %v674
        %v761 = vpack.c.b16 %v677, %v676
        %v762 = vpack.c.b16 %v679, %v678
        %v763 = vpack.c.b16 %v681, %v680
        %v764 = vpack.c.b16 %v683, %v682
        %v765 = vpack.c.b16 %v685, %v684
        %v766 = vpack.c.b16 %v687, %v686
        %v767 = vpack.c.b16 %v689, %v688
        %v768 = vpack.c.b16 %v691, %v690
        %v769 = vpack.c.b16 %v693, %v692
        %v770 = vpack.c.b16 %v695, %v694
        %v771 = vpack.c.b16 %v697, %v696
        %v772 = vpack.c.b16 %v699, %v698
        %v773 = vpack.c.b16 %v701, %v700
        %v774 = vpack.c.b16 %v703, %v702
        %v775 = vpack.c.b16 %v705, %v704
        %v776 = vpack.c.b16 %v707, %v706
        %v777 = vpack.c.b16 %v709, %v708
        %v778 = vpack.c.b16 %v711, %v710
        %v779 = vpack.c.b16 %v713, %v712
        %v780 = vpack.c.b16 %v715, %v714
        %v781 = vpack.c.b16 %v717, %v716
        %v790 = vunpack.c.l.b16 %v447
        %v791 = vunpack.c.l.b16 %v448
        %v792 = vunpack.c.l.b16 %v449
        %v793 = vunpack.c.l.b16 %v450
        %v794 = vunpack.c.l.b16 %v451
        %v795 = vunpack.c.l.b16 %v452
        %v796 = vunpack.c.l.b16 %v453
        %v797 = vunpack.c.l.b16 %v454
        %v798 = vpack.c.b16 %v791, %v790
        %v799 = vpack.c.b16 %v793, %v792
        %v800 = vpack.c.b16 %v795, %v794
        %v801 = vpack.c.b16 %v797, %v796
        %vm806 = vcmask 523264
        %v808 = vsel %vm806, %v718, 0
        %v811 = vsel %vm806, %v719, 0
        %v814 = vsel %vm806, %v720, 0
        %v817 = vsel %vm806, %v721, 0
        %v820 = vsel %vm806, %v722, 0
        %v823 = vsel %vm806, %v723, 0
        %v826 = vsel %vm806, %v724, 0
        %v829 = vsel %vm806, %v725, 0
        %v832 = vsel %vm806, %v726, 0
        %v835 = vsel %vm806, %v727, 0
        %v838 = vsel %vm806, %v728, 0
        %v841 = vsel %vm806, %v729, 0
        %v844 = vsel %vm806, %v730, 0
        %v847 = vsel %vm806, %v731, 0
        %v850 = vsel %vm806, %v732, 0
        %v853 = vsel %vm806, %v733, 0
        %v856 = vsel %vm806, %v734, 0
        %v859 = vsel %vm806, %v735, 0
        %v862 = vsel %vm806, %v736, 0
        %v865 = vsel %vm806, %v737, 0
        %v868 = vsel %vm806, %v738, 0
        %v871 = vsel %vm806, %v739, 0
        %v874 = vsel %vm806, %v740, 0
        %v877 = vsel %vm806, %v741, 0
        %v880 = vsel %vm806, %v742, 0
        %v883 = vsel %vm806, %v743, 0
        %v886 = vsel %vm806, %v744, 0
        %v889 = vsel %vm806, %v745, 0
        %v892 = vsel %vm806, %v746, 0
        %v895 = vsel %vm806, %v747, 0
        %v898 = vsel %vm806, %v748, 0
        %v901 = vsel %vm806, %v749, 0
        %v904 = vsel %vm806, %v750, 0
        %v907 = vsel %vm806, %v751, 0
        %v910 = vsel %vm806, %v752, 0
        %v913 = vsel %vm806, %v753, 0
        %v916 = vsel %vm806, %v754, 0
        %v919 = vsel %vm806, %v755, 0
        %v922 = vsel %vm806, %v756, 0
        %v925 = vsel %vm806, %v757, 0
        %v928 = vsel %vm806, %v758, 0
        %v931 = vsel %vm806, %v759, 0
        %v934 = vsel %vm806, %v760, 0
        %v937 = vsel %vm806, %v761, 0
        %v940 = vsel %vm806, %v762, 0
        %v943 = vsel %vm806, %v763, 0
        %v946 = vsel %vm806, %v764, 0
        %v949 = vsel %vm806, %v765, 0
        %v952 = vsel %vm806, %v766, 0
        %v955 = vsel %vm806, %v767, 0
        %v958 = vsel %vm806, %v768, 0
        %v961 = vsel %vm806, %v769, 0
        %v964 = vsel %vm806, %v770, 0
        %v967 = vsel %vm806, %v771, 0
        %v970 = vsel %vm806, %v772, 0
        %v973 = vsel %vm806, %v773, 0
        %v976 = vsel %vm806, %v774, 0
        %v979 = vsel %vm806, %v775, 0
        %v982 = vsel %vm806, %v776, 0
        %v985 = vsel %vm806, %v777, 0
        %v988 = vsel %vm806, %v778, 0
        %v991 = vsel %vm806, %v779, 0
        %v994 = vsel %vm806, %v780, 0
        %v997 = vsel %vm806, %v781, 0
        %999 = vmatprep.subr.bf16.mxu0 0
        %1000 = vmatpush1.bf16.msra.mxu0 0
        %1001 = vmatprep.subr.bf16.mxu0 0
        %1002 = vmatpush1.bf16.msra.mxu0 0
        %1003 = vmatprep.subr.bf16.mxu0 0
        %1004 = vmatpush1.bf16.msra.mxu0 0
        %1005 = vmatprep.subr.bf16.mxu0 0
        %1006 = vmatpush1.bf16.msra.mxu0 0
        %1007 = vmatprep.subr.bf16.mxu0 0
        %1008 = vmatpush1.bf16.msra.mxu0 %v801
        %1009 = vmatprep.subr.bf16.mxu0 0
        %1010 = vmatpush1.bf16.msra.mxu0 %v800
        %1011 = vmatprep.subr.bf16.mxu0 0
        %1012 = vmatpush1.bf16.msra.mxu0 %v799
        %1013 = vmatprep.subr.bf16.mxu0 0
        %1014 = vmatpush1.bf16.msra.mxu0 %v798
        %1015 = vmatprep.subr.bf16.mxu0 0
        %1016 = vmatpush2.bf16.msra.mxu0 0
        %1017 = vmatprep.subr.bf16.mxu0 0
        %1018 = vmatpush2.bf16.msra.mxu0 0
        %1019 = vmatprep.subr.bf16.mxu0 0
        %1020 = vmatpush2.bf16.msra.mxu0 0
        %1021 = vmatprep.subr.bf16.mxu0 0
        %1022 = vmatpush2.bf16.msra.mxu0 0
        %1023 = vmatprep.subr.bf16.mxu0 0
        %1024 = vmatpush2.bf16.msra.mxu0 0
        %1025 = vmatprep.subr.bf16.mxu0 0
        %1026 = vmatpush2.bf16.msra.mxu0 0
        %1027 = vmatprep.subr.bf16.mxu0 0
        %1028 = vmatpush2.bf16.msra.mxu0 0
        %1029 = vmatprep.subr.bf16.mxu0 0
        %1030 = vmatpush2.bf16.msra.mxu0 0
        %1031 = vmatprep.mubr.bf16.mxu0 0
        %1032 = vmatmul.mubr.bf16.gmra.mxu0 %v808
        %v1033 = vpop.f32.mrf.mxu0
        %v1034 = vadd.f32 %v460, %v1033
        %v1035 = vpop.f32.mrf.mxu0
        %v1036 = vpop.f32.mrf.mxu0
        %v1037 = vadd.f32 %v460, %v1036
        %v1038 = vpop.f32.mrf.mxu0
        %1039 = vmatprep.mubr.bf16.mxu0 0
        %1040 = vmatmul.mubr.bf16.gmra.mxu0 %v811
        %v1041 = vpop.f32.mrf.mxu0
        %v1042 = vadd.f32 %v460, %v1041
        %v1043 = vpop.f32.mrf.mxu0
        %v1044 = vpop.f32.mrf.mxu0
        %v1045 = vadd.f32 %v460, %v1044
        %v1046 = vpop.f32.mrf.mxu0
        %1047 = vmatprep.mubr.bf16.mxu0 0
        %1048 = vmatmul.mubr.bf16.gmra.mxu0 %v814
        %v1049 = vpop.f32.mrf.mxu0
        %v1050 = vadd.f32 %v460, %v1049
        %v1051 = vpop.f32.mrf.mxu0
        %v1052 = vpop.f32.mrf.mxu0
        %v1053 = vadd.f32 %v460, %v1052
        %v1054 = vpop.f32.mrf.mxu0
        %1055 = vmatprep.mubr.bf16.mxu0 0
        %1056 = vmatmul.mubr.bf16.gmra.mxu0 %v817
        %v1057 = vpop.f32.mrf.mxu0
        %v1058 = vadd.f32 %v460, %v1057
        %v1059 = vpop.f32.mrf.mxu0
        %v1060 = vpop.f32.mrf.mxu0
        %v1061 = vadd.f32 %v460, %v1060
        %v1062 = vpop.f32.mrf.mxu0
        %1063 = vmatprep.mubr.bf16.mxu0 0
        %1064 = vmatmul.mubr.bf16.gmra.mxu0 %v820
        %v1065 = vpop.f32.mrf.mxu0
        %v1066 = vadd.f32 %v460, %v1065
        %v1067 = vpop.f32.mrf.mxu0
        %v1068 = vpop.f32.mrf.mxu0
        %v1069 = vadd.f32 %v460, %v1068
        %v1070 = vpop.f32.mrf.mxu0
        %1071 = vmatprep.mubr.bf16.mxu0 0
        %1072 = vmatmul.mubr.bf16.gmra.mxu0 %v823
        %v1073 = vpop.f32.mrf.mxu0
        %v1074 = vadd.f32 %v460, %v1073
        %v1075 = vpop.f32.mrf.mxu0
        %v1076 = vpop.f32.mrf.mxu0
        %v1077 = vadd.f32 %v460, %v1076
        %v1078 = vpop.f32.mrf.mxu0
        %1079 = vmatprep.mubr.bf16.mxu0 0
        %1080 = vmatmul.mubr.bf16.gmra.mxu0 %v826
        %v1081 = vpop.f32.mrf.mxu0
        %v1082 = vadd.f32 %v460, %v1081
        %v1083 = vpop.f32.mrf.mxu0
        %v1084 = vpop.f32.mrf.mxu0
        %v1085 = vadd.f32 %v460, %v1084
        %v1086 = vpop.f32.mrf.mxu0
        %1087 = vmatprep.mubr.bf16.mxu0 0
        %1088 = vmatmul.mubr.bf16.gmra.mxu0 %v829
        %v1089 = vpop.f32.mrf.mxu0
        %v1090 = vadd.f32 %v460, %v1089
        %v1091 = vpop.f32.mrf.mxu0
        %v1092 = vpop.f32.mrf.mxu0
        %v1093 = vadd.f32 %v460, %v1092
        %v1094 = vpop.f32.mrf.mxu0
        %1095 = vmatprep.mubr.bf16.mxu0 0
        %1096 = vmatmul.mubr.bf16.gmra.mxu0 %v832
        %v1097 = vpop.f32.mrf.mxu0
        %v1098 = vadd.f32 %v460, %v1097
        %v1099 = vpop.f32.mrf.mxu0
        %v1100 = vpop.f32.mrf.mxu0
        %v1101 = vadd.f32 %v460, %v1100
        %v1102 = vpop.f32.mrf.mxu0
        %1103 = vmatprep.mubr.bf16.mxu0 0
        %1104 = vmatmul.mubr.bf16.gmra.mxu0 %v835
        %v1105 = vpop.f32.mrf.mxu0
        %v1106 = vadd.f32 %v460, %v1105
        %v1107 = vpop.f32.mrf.mxu0
        %v1108 = vpop.f32.mrf.mxu0
        %v1109 = vadd.f32 %v460, %v1108
        %v1110 = vpop.f32.mrf.mxu0
        %1111 = vmatprep.mubr.bf16.mxu0 0
        %1112 = vmatmul.mubr.bf16.gmra.mxu0 %v838
        %v1113 = vpop.f32.mrf.mxu0
        %v1114 = vadd.f32 %v460, %v1113
        %v1115 = vpop.f32.mrf.mxu0
        %v1116 = vpop.f32.mrf.mxu0
        %v1117 = vadd.f32 %v460, %v1116
        %v1118 = vpop.f32.mrf.mxu0
        %1119 = vmatprep.mubr.bf16.mxu0 0
        %1120 = vmatmul.mubr.bf16.gmra.mxu0 %v841
        %v1121 = vpop.f32.mrf.mxu0
        %v1122 = vadd.f32 %v460, %v1121
        %v1123 = vpop.f32.mrf.mxu0
        %v1124 = vpop.f32.mrf.mxu0
        %v1125 = vadd.f32 %v460, %v1124
        %v1126 = vpop.f32.mrf.mxu0
        %1127 = vmatprep.mubr.bf16.mxu0 0
        %1128 = vmatmul.mubr.bf16.gmra.mxu0 %v844
        %v1129 = vpop.f32.mrf.mxu0
        %v1130 = vadd.f32 %v460, %v1129
        %v1131 = vpop.f32.mrf.mxu0
        %v1132 = vpop.f32.mrf.mxu0
        %v1133 = vadd.f32 %v460, %v1132
        %v1134 = vpop.f32.mrf.mxu0
        %1135 = vmatprep.mubr.bf16.mxu0 0
        %1136 = vmatmul.mubr.bf16.gmra.mxu0 %v847
        %v1137 = vpop.f32.mrf.mxu0
        %v1138 = vadd.f32 %v460, %v1137
        %v1139 = vpop.f32.mrf.mxu0
        %v1140 = vpop.f32.mrf.mxu0
        %v1141 = vadd.f32 %v460, %v1140
        %v1142 = vpop.f32.mrf.mxu0
        %1143 = vmatprep.mubr.bf16.mxu0 0
        %1144 = vmatmul.mubr.bf16.gmra.mxu0 %v850
        %v1145 = vpop.f32.mrf.mxu0
        %v1146 = vadd.f32 %v460, %v1145
        %v1147 = vpop.f32.mrf.mxu0
        %v1148 = vpop.f32.mrf.mxu0
        %v1149 = vadd.f32 %v460, %v1148
        %v1150 = vpop.f32.mrf.mxu0
        %1151 = vmatprep.mubr.bf16.mxu0 0
        %1152 = vmatmul.mubr.bf16.gmra.mxu0 %v853
        %v1153 = vpop.f32.mrf.mxu0
        %v1154 = vadd.f32 %v460, %v1153
        %v1155 = vpop.f32.mrf.mxu0
        %v1156 = vpop.f32.mrf.mxu0
        %v1157 = vadd.f32 %v460, %v1156
        %v1158 = vpop.f32.mrf.mxu0
        %1159 = vmatprep.mubr.bf16.mxu0 0
        %1160 = vmatmul.mubr.bf16.gmra.mxu0 %v856
        %v1161 = vpop.f32.mrf.mxu0
        %v1162 = vadd.f32 %v460, %v1161
        %v1163 = vpop.f32.mrf.mxu0
        %v1164 = vpop.f32.mrf.mxu0
        %v1165 = vadd.f32 %v460, %v1164
        %v1166 = vpop.f32.mrf.mxu0
        %1167 = vmatprep.mubr.bf16.mxu0 0
        %1168 = vmatmul.mubr.bf16.gmra.mxu0 %v859
        %v1169 = vpop.f32.mrf.mxu0
        %v1170 = vadd.f32 %v460, %v1169
        %v1171 = vpop.f32.mrf.mxu0
        %v1172 = vpop.f32.mrf.mxu0
        %v1173 = vadd.f32 %v460, %v1172
        %v1174 = vpop.f32.mrf.mxu0
        %1175 = vmatprep.mubr.bf16.mxu0 0
        %1176 = vmatmul.mubr.bf16.gmra.mxu0 %v862
        %v1177 = vpop.f32.mrf.mxu0
        %v1178 = vadd.f32 %v460, %v1177
        %v1179 = vpop.f32.mrf.mxu0
        %v1180 = vpop.f32.mrf.mxu0
        %v1181 = vadd.f32 %v460, %v1180
        %v1182 = vpop.f32.mrf.mxu0
        %1183 = vmatprep.mubr.bf16.mxu0 0
        %1184 = vmatmul.mubr.bf16.gmra.mxu0 %v865
        %v1185 = vpop.f32.mrf.mxu0
        %v1186 = vadd.f32 %v460, %v1185
        %v1187 = vpop.f32.mrf.mxu0
        %v1188 = vpop.f32.mrf.mxu0
        %v1189 = vadd.f32 %v460, %v1188
        %v1190 = vpop.f32.mrf.mxu0
        %1191 = vmatprep.mubr.bf16.mxu0 0
        %1192 = vmatmul.mubr.bf16.gmra.mxu0 %v868
        %v1193 = vpop.f32.mrf.mxu0
        %v1194 = vadd.f32 %v460, %v1193
        %v1195 = vpop.f32.mrf.mxu0
        %v1196 = vpop.f32.mrf.mxu0
        %v1197 = vadd.f32 %v460, %v1196
        %v1198 = vpop.f32.mrf.mxu0
        %1199 = vmatprep.mubr.bf16.mxu0 0
        %1200 = vmatmul.mubr.bf16.gmra.mxu0 %v871
        %v1201 = vpop.f32.mrf.mxu0
        %v1202 = vadd.f32 %v460, %v1201
        %v1203 = vpop.f32.mrf.mxu0
        %v1204 = vpop.f32.mrf.mxu0
        %v1205 = vadd.f32 %v460, %v1204
        %v1206 = vpop.f32.mrf.mxu0
        %1207 = vmatprep.mubr.bf16.mxu0 0
        %1208 = vmatmul.mubr.bf16.gmra.mxu0 %v874
        %v1209 = vpop.f32.mrf.mxu0
        %v1210 = vadd.f32 %v460, %v1209
        %v1211 = vpop.f32.mrf.mxu0
        %v1212 = vpop.f32.mrf.mxu0
        %v1213 = vadd.f32 %v460, %v1212
        %v1214 = vpop.f32.mrf.mxu0
        %1215 = vmatprep.mubr.bf16.mxu0 0
        %1216 = vmatmul.mubr.bf16.gmra.mxu0 %v877
        %v1217 = vpop.f32.mrf.mxu0
        %v1218 = vadd.f32 %v460, %v1217
        %v1219 = vpop.f32.mrf.mxu0
        %v1220 = vpop.f32.mrf.mxu0
        %v1221 = vadd.f32 %v460, %v1220
        %v1222 = vpop.f32.mrf.mxu0
        %1223 = vmatprep.mubr.bf16.mxu0 0
        %1224 = vmatmul.mubr.bf16.gmra.mxu0 %v880
        %v1225 = vpop.f32.mrf.mxu0
        %v1226 = vadd.f32 %v460, %v1225
        %v1227 = vpop.f32.mrf.mxu0
        %v1228 = vpop.f32.mrf.mxu0
        %v1229 = vadd.f32 %v460, %v1228
        %v1230 = vpop.f32.mrf.mxu0
        %1231 = vmatprep.mubr.bf16.mxu0 0
        %1232 = vmatmul.mubr.bf16.gmra.mxu0 %v883
        %v1233 = vpop.f32.mrf.mxu0
        %v1234 = vadd.f32 %v460, %v1233
        %v1235 = vpop.f32.mrf.mxu0
        %v1236 = vpop.f32.mrf.mxu0
        %v1237 = vadd.f32 %v460, %v1236
        %v1238 = vpop.f32.mrf.mxu0
        %1239 = vmatprep.mubr.bf16.mxu0 0
        %1240 = vmatmul.mubr.bf16.gmra.mxu0 %v886
        %v1241 = vpop.f32.mrf.mxu0
        %v1242 = vadd.f32 %v460, %v1241
        %v1243 = vpop.f32.mrf.mxu0
        %v1244 = vpop.f32.mrf.mxu0
        %v1245 = vadd.f32 %v460, %v1244
        %v1246 = vpop.f32.mrf.mxu0
        %1247 = vmatprep.mubr.bf16.mxu0 0
        %1248 = vmatmul.mubr.bf16.gmra.mxu0 %v889
        %v1249 = vpop.f32.mrf.mxu0
        %v1250 = vadd.f32 %v460, %v1249
        %v1251 = vpop.f32.mrf.mxu0
        %v1252 = vpop.f32.mrf.mxu0
        %v1253 = vadd.f32 %v460, %v1252
        %v1254 = vpop.f32.mrf.mxu0
        %1255 = vmatprep.mubr.bf16.mxu0 0
        %1256 = vmatmul.mubr.bf16.gmra.mxu0 %v892
        %v1257 = vpop.f32.mrf.mxu0
        %v1258 = vadd.f32 %v460, %v1257
        %v1259 = vpop.f32.mrf.mxu0
        %v1260 = vpop.f32.mrf.mxu0
        %v1261 = vadd.f32 %v460, %v1260
        %v1262 = vpop.f32.mrf.mxu0
        %1263 = vmatprep.mubr.bf16.mxu0 0
        %1264 = vmatmul.mubr.bf16.gmra.mxu0 %v895
        %v1265 = vpop.f32.mrf.mxu0
        %v1266 = vadd.f32 %v460, %v1265
        %v1267 = vpop.f32.mrf.mxu0
        %v1268 = vpop.f32.mrf.mxu0
        %v1269 = vadd.f32 %v460, %v1268
        %v1270 = vpop.f32.mrf.mxu0
        %1271 = vmatprep.mubr.bf16.mxu0 0
        %1272 = vmatmul.mubr.bf16.gmra.mxu0 %v898
        %v1273 = vpop.f32.mrf.mxu0
        %v1274 = vadd.f32 %v460, %v1273
        %v1275 = vpop.f32.mrf.mxu0
        %v1276 = vpop.f32.mrf.mxu0
        %v1277 = vadd.f32 %v460, %v1276
        %v1278 = vpop.f32.mrf.mxu0
        %1279 = vmatprep.mubr.bf16.mxu0 0
        %1280 = vmatmul.mubr.bf16.gmra.mxu0 %v901
        %v1281 = vpop.f32.mrf.mxu0
        %v1282 = vadd.f32 %v460, %v1281
        %v1283 = vpop.f32.mrf.mxu0
        %v1284 = vpop.f32.mrf.mxu0
        %v1285 = vadd.f32 %v460, %v1284
        %v1286 = vpop.f32.mrf.mxu0
        %1287 = vmatprep.mubr.bf16.mxu0 0
        %1288 = vmatmul.mubr.bf16.gmra.mxu0 %v904
        %v1289 = vpop.f32.mrf.mxu0
        %v1290 = vadd.f32 %v460, %v1289
        %v1291 = vpop.f32.mrf.mxu0
        %v1292 = vpop.f32.mrf.mxu0
        %v1293 = vadd.f32 %v460, %v1292
        %v1294 = vpop.f32.mrf.mxu0
        %1295 = vmatprep.mubr.bf16.mxu0 0
        %1296 = vmatmul.mubr.bf16.gmra.mxu0 %v907
        %v1297 = vpop.f32.mrf.mxu0
        %v1298 = vadd.f32 %v460, %v1297
        %v1299 = vpop.f32.mrf.mxu0
        %v1300 = vpop.f32.mrf.mxu0
        %v1301 = vadd.f32 %v460, %v1300
        %v1302 = vpop.f32.mrf.mxu0
        %1303 = vmatprep.mubr.bf16.mxu0 0
        %1304 = vmatmul.mubr.bf16.gmra.mxu0 %v910
        %v1305 = vpop.f32.mrf.mxu0
        %v1306 = vadd.f32 %v460, %v1305
        %v1307 = vpop.f32.mrf.mxu0
        %v1308 = vpop.f32.mrf.mxu0
        %v1309 = vadd.f32 %v460, %v1308
        %v1310 = vpop.f32.mrf.mxu0
        %1311 = vmatprep.mubr.bf16.mxu0 0
        %1312 = vmatmul.mubr.bf16.gmra.mxu0 %v913
        %v1313 = vpop.f32.mrf.mxu0
        %v1314 = vadd.f32 %v460, %v1313
        %v1315 = vpop.f32.mrf.mxu0
        %v1316 = vpop.f32.mrf.mxu0
        %v1317 = vadd.f32 %v460, %v1316
        %v1318 = vpop.f32.mrf.mxu0
        %1319 = vmatprep.mubr.bf16.mxu0 0
        %1320 = vmatmul.mubr.bf16.gmra.mxu0 %v916
        %v1321 = vpop.f32.mrf.mxu0
        %v1322 = vadd.f32 %v460, %v1321
        %v1323 = vpop.f32.mrf.mxu0
        %v1324 = vpop.f32.mrf.mxu0
        %v1325 = vadd.f32 %v460, %v1324
        %v1326 = vpop.f32.mrf.mxu0
        %1327 = vmatprep.mubr.bf16.mxu0 0
        %1328 = vmatmul.mubr.bf16.gmra.mxu0 %v919
        %v1329 = vpop.f32.mrf.mxu0
        %v1330 = vadd.f32 %v460, %v1329
        %v1331 = vpop.f32.mrf.mxu0
        %v1332 = vpop.f32.mrf.mxu0
        %v1333 = vadd.f32 %v460, %v1332
        %v1334 = vpop.f32.mrf.mxu0
        %1335 = vmatprep.mubr.bf16.mxu0 0
        %1336 = vmatmul.mubr.bf16.gmra.mxu0 %v922
        %v1337 = vpop.f32.mrf.mxu0
        %v1338 = vadd.f32 %v460, %v1337
        %v1339 = vpop.f32.mrf.mxu0
        %v1340 = vpop.f32.mrf.mxu0
        %v1341 = vadd.f32 %v460, %v1340
        %v1342 = vpop.f32.mrf.mxu0
        %1343 = vmatprep.mubr.bf16.mxu0 0
        %1344 = vmatmul.mubr.bf16.gmra.mxu0 %v925
        %v1345 = vpop.f32.mrf.mxu0
        %v1346 = vadd.f32 %v460, %v1345
        %v1347 = vpop.f32.mrf.mxu0
        %v1348 = vpop.f32.mrf.mxu0
        %v1349 = vadd.f32 %v460, %v1348
        %v1350 = vpop.f32.mrf.mxu0
        %1351 = vmatprep.mubr.bf16.mxu0 0
        %1352 = vmatmul.mubr.bf16.gmra.mxu0 %v928
        %v1353 = vpop.f32.mrf.mxu0
        %v1354 = vadd.f32 %v460, %v1353
        %v1355 = vpop.f32.mrf.mxu0
        %v1356 = vpop.f32.mrf.mxu0
        %v1357 = vadd.f32 %v460, %v1356
        %v1358 = vpop.f32.mrf.mxu0
        %1359 = vmatprep.mubr.bf16.mxu0 0
        %1360 = vmatmul.mubr.bf16.gmra.mxu0 %v931
        %v1361 = vpop.f32.mrf.mxu0
        %v1362 = vadd.f32 %v460, %v1361
        %v1363 = vpop.f32.mrf.mxu0
        %v1364 = vpop.f32.mrf.mxu0
        %v1365 = vadd.f32 %v460, %v1364
        %v1366 = vpop.f32.mrf.mxu0
        %1367 = vmatprep.mubr.bf16.mxu0 0
        %1368 = vmatmul.mubr.bf16.gmra.mxu0 %v934
        %v1369 = vpop.f32.mrf.mxu0
        %v1370 = vadd.f32 %v460, %v1369
        %v1371 = vpop.f32.mrf.mxu0
        %v1372 = vpop.f32.mrf.mxu0
        %v1373 = vadd.f32 %v460, %v1372
        %v1374 = vpop.f32.mrf.mxu0
        %1375 = vmatprep.mubr.bf16.mxu0 0
        %1376 = vmatmul.mubr.bf16.gmra.mxu0 %v937
        %v1377 = vpop.f32.mrf.mxu0
        %v1378 = vadd.f32 %v460, %v1377
        %v1379 = vpop.f32.mrf.mxu0
        %v1380 = vpop.f32.mrf.mxu0
        %v1381 = vadd.f32 %v460, %v1380
        %v1382 = vpop.f32.mrf.mxu0
        %1383 = vmatprep.mubr.bf16.mxu0 0
        %1384 = vmatmul.mubr.bf16.gmra.mxu0 %v940
        %v1385 = vpop.f32.mrf.mxu0
        %v1386 = vadd.f32 %v460, %v1385
        %v1387 = vpop.f32.mrf.mxu0
        %v1388 = vpop.f32.mrf.mxu0
        %v1389 = vadd.f32 %v460, %v1388
        %v1390 = vpop.f32.mrf.mxu0
        %1391 = vmatprep.mubr.bf16.mxu0 0
        %1392 = vmatmul.mubr.bf16.gmra.mxu0 %v943
        %v1393 = vpop.f32.mrf.mxu0
        %v1394 = vadd.f32 %v460, %v1393
        %v1395 = vpop.f32.mrf.mxu0
        %v1396 = vpop.f32.mrf.mxu0
        %v1397 = vadd.f32 %v460, %v1396
        %v1398 = vpop.f32.mrf.mxu0
        %1399 = vmatprep.mubr.bf16.mxu0 0
        %1400 = vmatmul.mubr.bf16.gmra.mxu0 %v946
        %v1401 = vpop.f32.mrf.mxu0
        %v1402 = vadd.f32 %v460, %v1401
        %v1403 = vpop.f32.mrf.mxu0
        %v1404 = vpop.f32.mrf.mxu0
        %v1405 = vadd.f32 %v460, %v1404
        %v1406 = vpop.f32.mrf.mxu0
        %1407 = vmatprep.mubr.bf16.mxu0 0
        %1408 = vmatmul.mubr.bf16.gmra.mxu0 %v949
        %v1409 = vpop.f32.mrf.mxu0
        %v1410 = vadd.f32 %v460, %v1409
        %v1411 = vpop.f32.mrf.mxu0
        %v1412 = vpop.f32.mrf.mxu0
        %v1413 = vadd.f32 %v460, %v1412
        %v1414 = vpop.f32.mrf.mxu0
        %1415 = vmatprep.mubr.bf16.mxu0 0
        %1416 = vmatmul.mubr.bf16.gmra.mxu0 %v952
        %v1417 = vpop.f32.mrf.mxu0
        %v1418 = vadd.f32 %v460, %v1417
        %v1419 = vpop.f32.mrf.mxu0
        %v1420 = vpop.f32.mrf.mxu0
        %v1421 = vadd.f32 %v460, %v1420
        %v1422 = vpop.f32.mrf.mxu0
        %1423 = vmatprep.mubr.bf16.mxu0 0
        %1424 = vmatmul.mubr.bf16.gmra.mxu0 %v955
        %v1425 = vpop.f32.mrf.mxu0
        %v1426 = vadd.f32 %v460, %v1425
        %v1427 = vpop.f32.mrf.mxu0
        %v1428 = vpop.f32.mrf.mxu0
        %v1429 = vadd.f32 %v460, %v1428
        %v1430 = vpop.f32.mrf.mxu0
        %1431 = vmatprep.mubr.bf16.mxu0 0
        %1432 = vmatmul.mubr.bf16.gmra.mxu0 %v958
        %v1433 = vpop.f32.mrf.mxu0
        %v1434 = vadd.f32 %v460, %v1433
        %v1435 = vpop.f32.mrf.mxu0
        %v1436 = vpop.f32.mrf.mxu0
        %v1437 = vadd.f32 %v460, %v1436
        %v1438 = vpop.f32.mrf.mxu0
        %1439 = vmatprep.mubr.bf16.mxu0 0
        %1440 = vmatmul.mubr.bf16.gmra.mxu0 %v961
        %v1441 = vpop.f32.mrf.mxu0
        %v1442 = vadd.f32 %v460, %v1441
        %v1443 = vpop.f32.mrf.mxu0
        %v1444 = vpop.f32.mrf.mxu0
        %v1445 = vadd.f32 %v460, %v1444
        %v1446 = vpop.f32.mrf.mxu0
        %1447 = vmatprep.mubr.bf16.mxu0 0
        %1448 = vmatmul.mubr.bf16.gmra.mxu0 %v964
        %v1449 = vpop.f32.mrf.mxu0
        %v1450 = vadd.f32 %v460, %v1449
        %v1451 = vpop.f32.mrf.mxu0
        %v1452 = vpop.f32.mrf.mxu0
        %v1453 = vadd.f32 %v460, %v1452
        %v1454 = vpop.f32.mrf.mxu0
        %1455 = vmatprep.mubr.bf16.mxu0 0
        %1456 = vmatmul.mubr.bf16.gmra.mxu0 %v967
        %v1457 = vpop.f32.mrf.mxu0
        %v1458 = vadd.f32 %v460, %v1457
        %v1459 = vpop.f32.mrf.mxu0
        %v1460 = vpop.f32.mrf.mxu0
        %v1461 = vadd.f32 %v460, %v1460
        %v1462 = vpop.f32.mrf.mxu0
        %1463 = vmatprep.mubr.bf16.mxu0 0
        %1464 = vmatmul.mubr.bf16.gmra.mxu0 %v970
        %v1465 = vpop.f32.mrf.mxu0
        %v1466 = vadd.f32 %v460, %v1465
        %v1467 = vpop.f32.mrf.mxu0
        %v1468 = vpop.f32.mrf.mxu0
        %v1469 = vadd.f32 %v460, %v1468
        %v1470 = vpop.f32.mrf.mxu0
        %1471 = vmatprep.mubr.bf16.mxu0 0
        %1472 = vmatmul.mubr.bf16.gmra.mxu0 %v973
        %v1473 = vpop.f32.mrf.mxu0
        %v1474 = vadd.f32 %v460, %v1473
        %v1475 = vpop.f32.mrf.mxu0
        %v1476 = vpop.f32.mrf.mxu0
        %v1477 = vadd.f32 %v460, %v1476
        %v1478 = vpop.f32.mrf.mxu0
        %1479 = vmatprep.mubr.bf16.mxu0 0
        %1480 = vmatmul.mubr.bf16.gmra.mxu0 %v976
        %v1481 = vpop.f32.mrf.mxu0
        %v1482 = vadd.f32 %v460, %v1481
        %v1483 = vpop.f32.mrf.mxu0
        %v1484 = vpop.f32.mrf.mxu0
        %v1485 = vadd.f32 %v460, %v1484
        %v1486 = vpop.f32.mrf.mxu0
        %1487 = vmatprep.mubr.bf16.mxu0 0
        %1488 = vmatmul.mubr.bf16.gmra.mxu0 %v979
        %v1489 = vpop.f32.mrf.mxu0
        %v1490 = vadd.f32 %v460, %v1489
        %v1491 = vpop.f32.mrf.mxu0
        %v1492 = vpop.f32.mrf.mxu0
        %v1493 = vadd.f32 %v460, %v1492
        %v1494 = vpop.f32.mrf.mxu0
        %1495 = vmatprep.mubr.bf16.mxu0 0
        %1496 = vmatmul.mubr.bf16.gmra.mxu0 %v982
        %v1497 = vpop.f32.mrf.mxu0
        %v1498 = vadd.f32 %v460, %v1497
        %v1499 = vpop.f32.mrf.mxu0
        %v1500 = vpop.f32.mrf.mxu0
        %v1501 = vadd.f32 %v460, %v1500
        %v1502 = vpop.f32.mrf.mxu0
        %1503 = vmatprep.mubr.bf16.mxu0 0
        %1504 = vmatmul.mubr.bf16.gmra.mxu0 %v985
        %v1505 = vpop.f32.mrf.mxu0
        %v1506 = vadd.f32 %v460, %v1505
        %v1507 = vpop.f32.mrf.mxu0
        %v1508 = vpop.f32.mrf.mxu0
        %v1509 = vadd.f32 %v460, %v1508
        %v1510 = vpop.f32.mrf.mxu0
        %1511 = vmatprep.mubr.bf16.mxu0 0
        %1512 = vmatmul.mubr.bf16.gmra.mxu0 %v988
        %v1513 = vpop.f32.mrf.mxu0
        %v1514 = vadd.f32 %v460, %v1513
        %v1515 = vpop.f32.mrf.mxu0
        %v1516 = vpop.f32.mrf.mxu0
        %v1517 = vadd.f32 %v460, %v1516
        %v1518 = vpop.f32.mrf.mxu0
        %1519 = vmatprep.mubr.bf16.mxu0 0
        %1520 = vmatmul.mubr.bf16.gmra.mxu0 %v991
        %v1521 = vpop.f32.mrf.mxu0
        %v1522 = vadd.f32 %v460, %v1521
        %v1523 = vpop.f32.mrf.mxu0
        %v1524 = vpop.f32.mrf.mxu0
        %v1525 = vadd.f32 %v460, %v1524
        %v1526 = vpop.f32.mrf.mxu0
        %1527 = vmatprep.mubr.bf16.mxu0 0
        %1528 = vmatmul.mubr.bf16.gmra.mxu0 %v994
        %v1529 = vpop.f32.mrf.mxu0
        %v1530 = vadd.f32 %v460, %v1529
        %v1531 = vpop.f32.mrf.mxu0
        %v1532 = vpop.f32.mrf.mxu0
        %v1533 = vadd.f32 %v460, %v1532
        %v1534 = vpop.f32.mrf.mxu0
        %1535 = vmatprep.mubr.bf16.mxu0 0
        %1536 = vmatmul.mubr.bf16.gmra.mxu0 %v997
        %v1537 = vpop.f32.mrf.mxu0
        %v1538 = vadd.f32 %v460, %v1537
        %v1539 = vpop.f32.mrf.mxu0
        %v1540 = vpop.f32.mrf.mxu0
        %v1541 = vadd.f32 %v460, %v1540
        %v1542 = vpop.f32.mrf.mxu0
        %1543 = vdwg.mxu0
        %v1544 = vld [vmem:[%s310] sm:$0xf]
        %v1545 = vld [vmem:[%s310 + $0x4] sm:$0xf]
        %v1546 = vld [vmem:[%s310 + $0x8] sm:$0xf]
        %v1547 = vld [vmem:[%s310 + $0xc] sm:$0xf]
        %v1548 = vld [vmem:[%s310 + $0x10] sm:$0xf]
        %v1549 = vld [vmem:[%s310 + $0x14] sm:$0xf]
        %v1550 = vld [vmem:[%s310 + $0x18] sm:$0xf]
        %v1551 = vld [vmem:[%s310 + $0x1c] sm:$0xf]
        %v1552 = vld [vmem:[%s310 + $0x20] sm:$0xf]
        %v1553 = vld [vmem:[%s310 + $0x24] sm:$0xf]
        %v1554 = vld [vmem:[%s310 + $0x28] sm:$0xf]
        %v1555 = vld [vmem:[%s310 + $0x2c] sm:$0xf]
        %v1556 = vld [vmem:[%s310 + $0x30] sm:$0xf]
        %v1557 = vld [vmem:[%s310 + $0x34] sm:$0xf]
        %v1558 = vld [vmem:[%s310 + $0x38] sm:$0xf]
        %v1559 = vld [vmem:[%s310 + $0x3c] sm:$0xf]
        %v1560 = vld [vmem:[%s310 + $0x40] sm:$0xf]
        %v1561 = vld [vmem:[%s310 + $0x44] sm:$0xf]
        %v1562 = vld [vmem:[%s310 + $0x48] sm:$0xf]
        %v1563 = vld [vmem:[%s310 + $0x4c] sm:$0xf]
        %v1564 = vld [vmem:[%s310 + $0x50] sm:$0xf]
        %v1565 = vld [vmem:[%s310 + $0x54] sm:$0xf]
        %v1566 = vld [vmem:[%s310 + $0x58] sm:$0xf]
        %v1567 = vld [vmem:[%s310 + $0x5c] sm:$0xf]
        %v1568 = vld [vmem:[%s310 + $0x60] sm:$0xf]
        %v1569 = vld [vmem:[%s310 + $0x64] sm:$0xf]
        %v1570 = vld [vmem:[%s310 + $0x68] sm:$0xf]
        %v1571 = vld [vmem:[%s310 + $0x6c] sm:$0xf]
        %v1572 = vld [vmem:[%s310 + $0x70] sm:$0xf]
        %v1573 = vld [vmem:[%s310 + $0x74] sm:$0xf]
        %v1574 = vld [vmem:[%s310 + $0x78] sm:$0xf]
        %v1575 = vld [vmem:[%s310 + $0x7c] sm:$0xf]
        %v1576 = vld [vmem:[%s310 + $0x80] sm:$0xf]
        %v1577 = vld [vmem:[%s310 + $0x84] sm:$0xf]
        %v1578 = vld [vmem:[%s310 + $0x88] sm:$0xf]
        %v1579 = vld [vmem:[%s310 + $0x8c] sm:$0xf]
        %v1580 = vld [vmem:[%s310 + $0x90] sm:$0xf]
        %v1581 = vld [vmem:[%s310 + $0x94] sm:$0xf]
        %v1582 = vld [vmem:[%s310 + $0x98] sm:$0xf]
        %v1583 = vld [vmem:[%s310 + $0x9c] sm:$0xf]
        %v1584 = vld [vmem:[%s310 + $0xa0] sm:$0xf]
        %v1585 = vld [vmem:[%s310 + $0xa4] sm:$0xf]
        %v1586 = vld [vmem:[%s310 + $0xa8] sm:$0xf]
        %v1587 = vld [vmem:[%s310 + $0xac] sm:$0xf]
        %v1588 = vld [vmem:[%s310 + $0xb0] sm:$0xf]
        %v1589 = vld [vmem:[%s310 + $0xb4] sm:$0xf]
        %v1590 = vld [vmem:[%s310 + $0xb8] sm:$0xf]
        %v1591 = vld [vmem:[%s310 + $0xbc] sm:$0xf]
        %v1592 = vld [vmem:[%s310 + $0xc0] sm:$0xf]
        %v1593 = vld [vmem:[%s310 + $0xc4] sm:$0xf]
        %v1594 = vld [vmem:[%s310 + $0xc8] sm:$0xf]
        %v1595 = vld [vmem:[%s310 + $0xcc] sm:$0xf]
        %v1596 = vld [vmem:[%s310 + $0xd0] sm:$0xf]
        %v1597 = vld [vmem:[%s310 + $0xd4] sm:$0xf]
        %v1598 = vld [vmem:[%s310 + $0xd8] sm:$0xf]
        %v1599 = vld [vmem:[%s310 + $0xdc] sm:$0xf]
        %v1600 = vld [vmem:[%s310 + $0xe0] sm:$0xf]
        %v1601 = vld [vmem:[%s310 + $0xe4] sm:$0xf]
        %v1602 = vld [vmem:[%s310 + $0xe8] sm:$0xf]
        %v1603 = vld [vmem:[%s310 + $0xec] sm:$0xf]
        %v1604 = vld [vmem:[%s310 + $0xf0] sm:$0xf]
        %v1605 = vld [vmem:[%s310 + $0xf4] sm:$0xf]
        %v1606 = vld [vmem:[%s310 + $0xf8] sm:$0xf]
        %v1607 = vld [vmem:[%s310 + $0xfc] sm:$0xf]
        %v1608 = vld [vmem:[%s310 + $0x100] sm:$0xf]
        %v1609 = vld [vmem:[%s310 + $0x104] sm:$0xf]
        %v1610 = vld [vmem:[%s310 + $0x108] sm:$0xf]
        %v1611 = vld [vmem:[%s310 + $0x10c] sm:$0xf]
        %v1612 = vld [vmem:[%s310 + $0x110] sm:$0xf]
        %v1613 = vld [vmem:[%s310 + $0x114] sm:$0xf]
        %v1614 = vld [vmem:[%s310 + $0x118] sm:$0xf]
        %v1615 = vld [vmem:[%s310 + $0x11c] sm:$0xf]
        %v1616 = vld [vmem:[%s310 + $0x120] sm:$0xf]
        %v1617 = vld [vmem:[%s310 + $0x124] sm:$0xf]
        %v1618 = vld [vmem:[%s310 + $0x128] sm:$0xf]
        %v1619 = vld [vmem:[%s310 + $0x12c] sm:$0xf]
        %v1620 = vld [vmem:[%s310 + $0x130] sm:$0xf]
        %v1621 = vld [vmem:[%s310 + $0x134] sm:$0xf]
        %v1622 = vld [vmem:[%s310 + $0x138] sm:$0xf]
        %v1623 = vld [vmem:[%s310 + $0x13c] sm:$0xf]
        %v1624 = vld [vmem:[%s310 + $0x140] sm:$0xf]
        %v1625 = vld [vmem:[%s310 + $0x144] sm:$0xf]
        %v1626 = vld [vmem:[%s310 + $0x148] sm:$0xf]
        %v1627 = vld [vmem:[%s310 + $0x14c] sm:$0xf]
        %v1628 = vld [vmem:[%s310 + $0x150] sm:$0xf]
        %v1629 = vld [vmem:[%s310 + $0x154] sm:$0xf]
        %v1630 = vld [vmem:[%s310 + $0x158] sm:$0xf]
        %v1631 = vld [vmem:[%s310 + $0x15c] sm:$0xf]
        %v1632 = vld [vmem:[%s310 + $0x160] sm:$0xf]
        %v1633 = vld [vmem:[%s310 + $0x164] sm:$0xf]
        %v1634 = vld [vmem:[%s310 + $0x168] sm:$0xf]
        %v1635 = vld [vmem:[%s310 + $0x16c] sm:$0xf]
        %v1636 = vld [vmem:[%s310 + $0x170] sm:$0xf]
        %v1637 = vld [vmem:[%s310 + $0x174] sm:$0xf]
        %v1638 = vld [vmem:[%s310 + $0x178] sm:$0xf]
        %v1639 = vld [vmem:[%s310 + $0x17c] sm:$0xf]
        %v1640 = vld [vmem:[%s310 + $0x180] sm:$0xf]
        %v1641 = vld [vmem:[%s310 + $0x184] sm:$0xf]
        %v1642 = vld [vmem:[%s310 + $0x188] sm:$0xf]
        %v1643 = vld [vmem:[%s310 + $0x18c] sm:$0xf]
        %v1644 = vld [vmem:[%s310 + $0x190] sm:$0xf]
        %v1645 = vld [vmem:[%s310 + $0x194] sm:$0xf]
        %v1646 = vld [vmem:[%s310 + $0x198] sm:$0xf]
        %v1647 = vld [vmem:[%s310 + $0x19c] sm:$0xf]
        %v1648 = vld [vmem:[%s310 + $0x1a0] sm:$0xf]
        %v1649 = vld [vmem:[%s310 + $0x1a4] sm:$0xf]
        %v1650 = vld [vmem:[%s310 + $0x1a8] sm:$0xf]
        %v1651 = vld [vmem:[%s310 + $0x1ac] sm:$0xf]
        %v1652 = vld [vmem:[%s310 + $0x1b0] sm:$0xf]
        %v1653 = vld [vmem:[%s310 + $0x1b4] sm:$0xf]
        %v1654 = vld [vmem:[%s310 + $0x1b8] sm:$0xf]
        %v1655 = vld [vmem:[%s310 + $0x1bc] sm:$0xf]
        %v1656 = vld [vmem:[%s310 + $0x1c0] sm:$0xf]
        %v1657 = vld [vmem:[%s310 + $0x1c4] sm:$0xf]
        %v1658 = vld [vmem:[%s310 + $0x1c8] sm:$0xf]
        %v1659 = vld [vmem:[%s310 + $0x1cc] sm:$0xf]
        %v1660 = vld [vmem:[%s310 + $0x1d0] sm:$0xf]
        %v1661 = vld [vmem:[%s310 + $0x1d4] sm:$0xf]
        %v1662 = vld [vmem:[%s310 + $0x1d8] sm:$0xf]
        %v1663 = vld [vmem:[%s310 + $0x1dc] sm:$0xf]
        %v1664 = vld [vmem:[%s310 + $0x1e0] sm:$0xf]
        %v1665 = vld [vmem:[%s310 + $0x1e4] sm:$0xf]
        %v1666 = vld [vmem:[%s310 + $0x1e8] sm:$0xf]
        %v1667 = vld [vmem:[%s310 + $0x1ec] sm:$0xf]
        %v1668 = vld [vmem:[%s310 + $0x1f0] sm:$0xf]
        %v1669 = vld [vmem:[%s310 + $0x1f4] sm:$0xf]
        %v1670 = vld [vmem:[%s310 + $0x1f8] sm:$0xf]
        %v1671 = vld [vmem:[%s310 + $0x1fc] sm:$0xf]
        %v1672 = vunpack.c.l.bf16 %v1544
        %v1673 = vunpack.c.l.bf16 %v1545
        %v1674 = vunpack.c.l.bf16 %v1546
        %v1675 = vunpack.c.l.bf16 %v1547
        %v1676 = vunpack.c.l.bf16 %v1548
        %v1677 = vunpack.c.l.bf16 %v1549
        %v1678 = vunpack.c.l.bf16 %v1550
        %v1679 = vunpack.c.l.bf16 %v1551
        %v1680 = vunpack.c.l.bf16 %v1552
        %v1681 = vunpack.c.l.bf16 %v1553
        %v1682 = vunpack.c.l.bf16 %v1554
        %v1683 = vunpack.c.l.bf16 %v1555
        %v1684 = vunpack.c.l.bf16 %v1556
        %v1685 = vunpack.c.l.bf16 %v1557
        %v1686 = vunpack.c.l.bf16 %v1558
        %v1687 = vunpack.c.l.bf16 %v1559
        %v1688 = vunpack.c.l.bf16 %v1560
        %v1689 = vunpack.c.l.bf16 %v1561
        %v1690 = vunpack.c.l.bf16 %v1562
        %v1691 = vunpack.c.l.bf16 %v1563
        %v1692 = vunpack.c.l.bf16 %v1564
        %v1693 = vunpack.c.l.bf16 %v1565
        %v1694 = vunpack.c.l.bf16 %v1566
        %v1695 = vunpack.c.l.bf16 %v1567
        %v1696 = vunpack.c.l.bf16 %v1568
        %v1697 = vunpack.c.l.bf16 %v1569
        %v1698 = vunpack.c.l.bf16 %v1570
        %v1699 = vunpack.c.l.bf16 %v1571
        %v1700 = vunpack.c.l.bf16 %v1572
        %v1701 = vunpack.c.l.bf16 %v1573
        %v1702 = vunpack.c.l.bf16 %v1574
        %v1703 = vunpack.c.l.bf16 %v1575
        %v1704 = vunpack.c.l.bf16 %v1576
        %v1705 = vunpack.c.l.bf16 %v1577
        %v1706 = vunpack.c.l.bf16 %v1578
        %v1707 = vunpack.c.l.bf16 %v1579
        %v1708 = vunpack.c.l.bf16 %v1580
        %v1709 = vunpack.c.l.bf16 %v1581
        %v1710 = vunpack.c.l.bf16 %v1582
        %v1711 = vunpack.c.l.bf16 %v1583
        %v1712 = vunpack.c.l.bf16 %v1584
        %v1713 = vunpack.c.l.bf16 %v1585
        %v1714 = vunpack.c.l.bf16 %v1586
        %v1715 = vunpack.c.l.bf16 %v1587
        %v1716 = vunpack.c.l.bf16 %v1588
        %v1717 = vunpack.c.l.bf16 %v1589
        %v1718 = vunpack.c.l.bf16 %v1590
        %v1719 = vunpack.c.l.bf16 %v1591
        %v1720 = vunpack.c.l.bf16 %v1592
        %v1721 = vunpack.c.l.bf16 %v1593
        %v1722 = vunpack.c.l.bf16 %v1594
        %v1723 = vunpack.c.l.bf16 %v1595
        %v1724 = vunpack.c.l.bf16 %v1596
        %v1725 = vunpack.c.l.bf16 %v1597
        %v1726 = vunpack.c.l.bf16 %v1598
        %v1727 = vunpack.c.l.bf16 %v1599
        %v1728 = vunpack.c.l.bf16 %v1600
        %v1729 = vunpack.c.l.bf16 %v1601
        %v1730 = vunpack.c.l.bf16 %v1602
        %v1731 = vunpack.c.l.bf16 %v1603
        %v1732 = vunpack.c.l.bf16 %v1604
        %v1733 = vunpack.c.l.bf16 %v1605
        %v1734 = vunpack.c.l.bf16 %v1606
        %v1735 = vunpack.c.l.bf16 %v1607
        %v1736 = vunpack.c.l.bf16 %v1608
        %v1737 = vunpack.c.l.bf16 %v1609
        %v1738 = vunpack.c.l.bf16 %v1610
        %v1739 = vunpack.c.l.bf16 %v1611
        %v1740 = vunpack.c.l.bf16 %v1612
        %v1741 = vunpack.c.l.bf16 %v1613
        %v1742 = vunpack.c.l.bf16 %v1614
        %v1743 = vunpack.c.l.bf16 %v1615
        %v1744 = vunpack.c.l.bf16 %v1616
        %v1745 = vunpack.c.l.bf16 %v1617
        %v1746 = vunpack.c.l.bf16 %v1618
        %v1747 = vunpack.c.l.bf16 %v1619
        %v1748 = vunpack.c.l.bf16 %v1620
        %v1749 = vunpack.c.l.bf16 %v1621
        %v1750 = vunpack.c.l.bf16 %v1622
        %v1751 = vunpack.c.l.bf16 %v1623
        %v1752 = vunpack.c.l.bf16 %v1624
        %v1753 = vunpack.c.l.bf16 %v1625
        %v1754 = vunpack.c.l.bf16 %v1626
        %v1755 = vunpack.c.l.bf16 %v1627
        %v1756 = vunpack.c.l.bf16 %v1628
        %v1757 = vunpack.c.l.bf16 %v1629
        %v1758 = vunpack.c.l.bf16 %v1630
        %v1759 = vunpack.c.l.bf16 %v1631
        %v1760 = vunpack.c.l.bf16 %v1632
        %v1761 = vunpack.c.l.bf16 %v1633
        %v1762 = vunpack.c.l.bf16 %v1634
        %v1763 = vunpack.c.l.bf16 %v1635
        %v1764 = vunpack.c.l.bf16 %v1636
        %v1765 = vunpack.c.l.bf16 %v1637
        %v1766 = vunpack.c.l.bf16 %v1638
        %v1767 = vunpack.c.l.bf16 %v1639
        %v1768 = vunpack.c.l.bf16 %v1640
        %v1769 = vunpack.c.l.bf16 %v1641
        %v1770 = vunpack.c.l.bf16 %v1642
        %v1771 = vunpack.c.l.bf16 %v1643
        %v1772 = vunpack.c.l.bf16 %v1644
        %v1773 = vunpack.c.l.bf16 %v1645
        %v1774 = vunpack.c.l.bf16 %v1646
        %v1775 = vunpack.c.l.bf16 %v1647
        %v1776 = vunpack.c.l.bf16 %v1648
        %v1777 = vunpack.c.l.bf16 %v1649
        %v1778 = vunpack.c.l.bf16 %v1650
        %v1779 = vunpack.c.l.bf16 %v1651
        %v1780 = vunpack.c.l.bf16 %v1652
        %v1781 = vunpack.c.l.bf16 %v1653
        %v1782 = vunpack.c.l.bf16 %v1654
        %v1783 = vunpack.c.l.bf16 %v1655
        %v1784 = vunpack.c.l.bf16 %v1656
        %v1785 = vunpack.c.l.bf16 %v1657
        %v1786 = vunpack.c.l.bf16 %v1658
        %v1787 = vunpack.c.l.bf16 %v1659
        %v1788 = vunpack.c.l.bf16 %v1660
        %v1789 = vunpack.c.l.bf16 %v1661
        %v1790 = vunpack.c.l.bf16 %v1662
        %v1791 = vunpack.c.l.bf16 %v1663
        %v1792 = vunpack.c.l.bf16 %v1664
        %v1793 = vunpack.c.l.bf16 %v1665
        %v1794 = vunpack.c.l.bf16 %v1666
        %v1795 = vunpack.c.l.bf16 %v1667
        %v1796 = vunpack.c.l.bf16 %v1668
        %v1797 = vunpack.c.l.bf16 %v1669
        %v1798 = vunpack.c.l.bf16 %v1670
        %v1799 = vunpack.c.l.bf16 %v1671
        %v1800 = vld [vmem:[%s4] sm:$0x1]
        %v1801 = vlaneseq
        %v1802 = vshrl.u32 %v1801, 7
        %v1803 = vsub.s32 0, %v1802
        %v1804 = vrot.slane %v1800, %v1803
        %v1805 = vmul.f32 %v1034, %v1804
        %v1806 = vmul.f32 %v1037, %v1804
        %v1807 = vmul.f32 %v1042, %v1804
        %v1808 = vmul.f32 %v1045, %v1804
        %v1809 = vmul.f32 %v1050, %v1804
        %v1810 = vmul.f32 %v1053, %v1804
        %v1811 = vmul.f32 %v1058, %v1804
        %v1812 = vmul.f32 %v1061, %v1804
        %v1813 = vmul.f32 %v1066, %v1804
        %v1814 = vmul.f32 %v1069, %v1804
        %v1815 = vmul.f32 %v1074, %v1804
        %v1816 = vmul.f32 %v1077, %v1804
        %v1817 = vmul.f32 %v1082, %v1804
        %v1818 = vmul.f32 %v1085, %v1804
        %v1819 = vmul.f32 %v1090, %v1804
        %v1820 = vmul.f32 %v1093, %v1804
        %v1821 = vmul.f32 %v1098, %v1804
        %v1822 = vmul.f32 %v1101, %v1804
        %v1823 = vmul.f32 %v1106, %v1804
        %v1824 = vmul.f32 %v1109, %v1804
        %v1825 = vmul.f32 %v1114, %v1804
        %v1826 = vmul.f32 %v1117, %v1804
        %v1827 = vmul.f32 %v1122, %v1804
        %v1828 = vmul.f32 %v1125, %v1804
        %v1829 = vmul.f32 %v1130, %v1804
        %v1830 = vmul.f32 %v1133, %v1804
        %v1831 = vmul.f32 %v1138, %v1804
        %v1832 = vmul.f32 %v1141, %v1804
        %v1833 = vmul.f32 %v1146, %v1804
        %v1834 = vmul.f32 %v1149, %v1804
        %v1835 = vmul.f32 %v1154, %v1804
        %v1836 = vmul.f32 %v1157, %v1804
        %v1837 = vmul.f32 %v1162, %v1804
        %v1838 = vmul.f32 %v1165, %v1804
        %v1839 = vmul.f32 %v1170, %v1804
        %v1840 = vmul.f32 %v1173, %v1804
        %v1841 = vmul.f32 %v1178, %v1804
        %v1842 = vmul.f32 %v1181, %v1804
        %v1843 = vmul.f32 %v1186, %v1804
        %v1844 = vmul.f32 %v1189, %v1804
        %v1845 = vmul.f32 %v1194, %v1804
        %v1846 = vmul.f32 %v1197, %v1804
        %v1847 = vmul.f32 %v1202, %v1804
        %v1848 = vmul.f32 %v1205, %v1804
        %v1849 = vmul.f32 %v1210, %v1804
        %v1850 = vmul.f32 %v1213, %v1804
        %v1851 = vmul.f32 %v1218, %v1804
        %v1852 = vmul.f32 %v1221, %v1804
        %v1853 = vmul.f32 %v1226, %v1804
        %v1854 = vmul.f32 %v1229, %v1804
        %v1855 = vmul.f32 %v1234, %v1804
        %v1856 = vmul.f32 %v1237, %v1804
        %v1857 = vmul.f32 %v1242, %v1804
        %v1858 = vmul.f32 %v1245, %v1804
        %v1859 = vmul.f32 %v1250, %v1804
        %v1860 = vmul.f32 %v1253, %v1804
        %v1861 = vmul.f32 %v1258, %v1804
        %v1862 = vmul.f32 %v1261, %v1804
        %v1863 = vmul.f32 %v1266, %v1804
        %v1864 = vmul.f32 %v1269, %v1804
        %v1865 = vmul.f32 %v1274, %v1804
        %v1866 = vmul.f32 %v1277, %v1804
        %v1867 = vmul.f32 %v1282, %v1804
        %v1868 = vmul.f32 %v1285, %v1804
        %v1869 = vmul.f32 %v1290, %v1804
        %v1870 = vmul.f32 %v1293, %v1804
        %v1871 = vmul.f32 %v1298, %v1804
        %v1872 = vmul.f32 %v1301, %v1804
        %v1873 = vmul.f32 %v1306, %v1804
        %v1874 = vmul.f32 %v1309, %v1804
        %v1875 = vmul.f32 %v1314, %v1804
        %v1876 = vmul.f32 %v1317, %v1804
        %v1877 = vmul.f32 %v1322, %v1804
        %v1878 = vmul.f32 %v1325, %v1804
        %v1879 = vmul.f32 %v1330, %v1804
        %v1880 = vmul.f32 %v1333, %v1804
        %v1881 = vmul.f32 %v1338, %v1804
        %v1882 = vmul.f32 %v1341, %v1804
        %v1883 = vmul.f32 %v1346, %v1804
        %v1884 = vmul.f32 %v1349, %v1804
        %v1885 = vmul.f32 %v1354, %v1804
        %v1886 = vmul.f32 %v1357, %v1804
        %v1887 = vmul.f32 %v1362, %v1804
        %v1888 = vmul.f32 %v1365, %v1804
        %v1889 = vmul.f32 %v1370, %v1804
        %v1890 = vmul.f32 %v1373, %v1804
        %v1891 = vmul.f32 %v1378, %v1804
        %v1892 = vmul.f32 %v1381, %v1804
        %v1893 = vmul.f32 %v1386, %v1804
        %v1894 = vmul.f32 %v1389, %v1804
        %v1895 = vmul.f32 %v1394, %v1804
        %v1896 = vmul.f32 %v1397, %v1804
        %v1897 = vmul.f32 %v1402, %v1804
        %v1898 = vmul.f32 %v1405, %v1804
        %v1899 = vmul.f32 %v1410, %v1804
        %v1900 = vmul.f32 %v1413, %v1804
        %v1901 = vmul.f32 %v1418, %v1804
        %v1902 = vmul.f32 %v1421, %v1804
        %v1903 = vmul.f32 %v1426, %v1804
        %v1904 = vmul.f32 %v1429, %v1804
        %v1905 = vmul.f32 %v1434, %v1804
        %v1906 = vmul.f32 %v1437, %v1804
        %v1907 = vmul.f32 %v1442, %v1804
        %v1908 = vmul.f32 %v1445, %v1804
        %v1909 = vmul.f32 %v1450, %v1804
        %v1910 = vmul.f32 %v1453, %v1804
        %v1911 = vmul.f32 %v1458, %v1804
        %v1912 = vmul.f32 %v1461, %v1804
        %v1913 = vmul.f32 %v1466, %v1804
        %v1914 = vmul.f32 %v1469, %v1804
        %v1915 = vmul.f32 %v1474, %v1804
        %v1916 = vmul.f32 %v1477, %v1804
        %v1917 = vmul.f32 %v1482, %v1804
        %v1918 = vmul.f32 %v1485, %v1804
        %v1919 = vmul.f32 %v1490, %v1804
        %v1920 = vmul.f32 %v1493, %v1804
        %v1921 = vmul.f32 %v1498, %v1804
        %v1922 = vmul.f32 %v1501, %v1804
        %v1923 = vmul.f32 %v1506, %v1804
        %v1924 = vmul.f32 %v1509, %v1804
        %v1925 = vmul.f32 %v1514, %v1804
        %v1926 = vmul.f32 %v1517, %v1804
        %v1927 = vmul.f32 %v1522, %v1804
        %v1928 = vmul.f32 %v1525, %v1804
        %v1929 = vmul.f32 %v1530, %v1804
        %v1930 = vmul.f32 %v1533, %v1804
        %v1931 = vmul.f32 %v1538, %v1804
        %v1932 = vmul.f32 %v1541, %v1804
        %v1933 = vld [vmem:[%s5] sm:$0x1]
        %v1934 = vlaneseq
        %v1935 = vshrl.u32 %v1934, 7
        %v1936 = vsub.s32 0, %v1935
        %v1937 = vrot.slane %v1933, %v1936
        %v1938 = vmul.f32 %v1672, %v1937
        %v1939 = vmul.f32 %v1673, %v1937
        %v1940 = vmul.f32 %v1674, %v1937
        %v1941 = vmul.f32 %v1675, %v1937
        %v1942 = vmul.f32 %v1676, %v1937
        %v1943 = vmul.f32 %v1677, %v1937
        %v1944 = vmul.f32 %v1678, %v1937
        %v1945 = vmul.f32 %v1679, %v1937
        %v1946 = vmul.f32 %v1680, %v1937
        %v1947 = vmul.f32 %v1681, %v1937
        %v1948 = vmul.f32 %v1682, %v1937
        %v1949 = vmul.f32 %v1683, %v1937
        %v1950 = vmul.f32 %v1684, %v1937
        %v1951 = vmul.f32 %v1685, %v1937
        %v1952 = vmul.f32 %v1686, %v1937
        %v1953 = vmul.f32 %v1687, %v1937
        %v1954 = vmul.f32 %v1688, %v1937
        %v1955 = vmul.f32 %v1689, %v1937
        %v1956 = vmul.f32 %v1690, %v1937
        %v1957 = vmul.f32 %v1691, %v1937
        %v1958 = vmul.f32 %v1692, %v1937
        %v1959 = vmul.f32 %v1693, %v1937
        %v1960 = vmul.f32 %v1694, %v1937
        %v1961 = vmul.f32 %v1695, %v1937
        %v1962 = vmul.f32 %v1696, %v1937
        %v1963 = vmul.f32 %v1697, %v1937
        %v1964 = vmul.f32 %v1698, %v1937
        %v1965 = vmul.f32 %v1699, %v1937
        %v1966 = vmul.f32 %v1700, %v1937
        %v1967 = vmul.f32 %v1701, %v1937
        %v1968 = vmul.f32 %v1702, %v1937
        %v1969 = vmul.f32 %v1703, %v1937
        %v1970 = vmul.f32 %v1704, %v1937
        %v1971 = vmul.f32 %v1705, %v1937
        %v1972 = vmul.f32 %v1706, %v1937
        %v1973 = vmul.f32 %v1707, %v1937
        %v1974 = vmul.f32 %v1708, %v1937
        %v1975 = vmul.f32 %v1709, %v1937
        %v1976 = vmul.f32 %v1710, %v1937
        %v1977 = vmul.f32 %v1711, %v1937
        %v1978 = vmul.f32 %v1712, %v1937
        %v1979 = vmul.f32 %v1713, %v1937
        %v1980 = vmul.f32 %v1714, %v1937
        %v1981 = vmul.f32 %v1715, %v1937
        %v1982 = vmul.f32 %v1716, %v1937
        %v1983 = vmul.f32 %v1717, %v1937
        %v1984 = vmul.f32 %v1718, %v1937
        %v1985 = vmul.f32 %v1719, %v1937
        %v1986 = vmul.f32 %v1720, %v1937
        %v1987 = vmul.f32 %v1721, %v1937
        %v1988 = vmul.f32 %v1722, %v1937
        %v1989 = vmul.f32 %v1723, %v1937
        %v1990 = vmul.f32 %v1724, %v1937
        %v1991 = vmul.f32 %v1725, %v1937
        %v1992 = vmul.f32 %v1726, %v1937
        %v1993 = vmul.f32 %v1727, %v1937
        %v1994 = vmul.f32 %v1728, %v1937
        %v1995 = vmul.f32 %v1729, %v1937
        %v1996 = vmul.f32 %v1730, %v1937
        %v1997 = vmul.f32 %v1731, %v1937
        %v1998 = vmul.f32 %v1732, %v1937
        %v1999 = vmul.f32 %v1733, %v1937
        %v2000 = vmul.f32 %v1734, %v1937
        %v2001 = vmul.f32 %v1735, %v1937
        %v2002 = vmul.f32 %v1736, %v1937
        %v2003 = vmul.f32 %v1737, %v1937
        %v2004 = vmul.f32 %v1738, %v1937
        %v2005 = vmul.f32 %v1739, %v1937
        %v2006 = vmul.f32 %v1740, %v1937
        %v2007 = vmul.f32 %v1741, %v1937
        %v2008 = vmul.f32 %v1742, %v1937
        %v2009 = vmul.f32 %v1743, %v1937
        %v2010 = vmul.f32 %v1744, %v1937
        %v2011 = vmul.f32 %v1745, %v1937
        %v2012 = vmul.f32 %v1746, %v1937
        %v2013 = vmul.f32 %v1747, %v1937
        %v2014 = vmul.f32 %v1748, %v1937
        %v2015 = vmul.f32 %v1749, %v1937
        %v2016 = vmul.f32 %v1750, %v1937
        %v2017 = vmul.f32 %v1751, %v1937
        %v2018 = vmul.f32 %v1752, %v1937
        %v2019 = vmul.f32 %v1753, %v1937
        %v2020 = vmul.f32 %v1754, %v1937
        %v2021 = vmul.f32 %v1755, %v1937
        %v2022 = vmul.f32 %v1756, %v1937
        %v2023 = vmul.f32 %v1757, %v1937
        %v2024 = vmul.f32 %v1758, %v1937
        %v2025 = vmul.f32 %v1759, %v1937
        %v2026 = vmul.f32 %v1760, %v1937
        %v2027 = vmul.f32 %v1761, %v1937
        %v2028 = vmul.f32 %v1762, %v1937
        %v2029 = vmul.f32 %v1763, %v1937
        %v2030 = vmul.f32 %v1764, %v1937
        %v2031 = vmul.f32 %v1765, %v1937
        %v2032 = vmul.f32 %v1766, %v1937
        %v2033 = vmul.f32 %v1767, %v1937
        %v2034 = vmul.f32 %v1768, %v1937
        %v2035 = vmul.f32 %v1769, %v1937
        %v2036 = vmul.f32 %v1770, %v1937
        %v2037 = vmul.f32 %v1771, %v1937
        %v2038 = vmul.f32 %v1772, %v1937
        %v2039 = vmul.f32 %v1773, %v1937
        %v2040 = vmul.f32 %v1774, %v1937
        %v2041 = vmul.f32 %v1775, %v1937
        %v2042 = vmul.f32 %v1776, %v1937
        %v2043 = vmul.f32 %v1777, %v1937
        %v2044 = vmul.f32 %v1778, %v1937
        %v2045 = vmul.f32 %v1779, %v1937
        %v2046 = vmul.f32 %v1780, %v1937
        %v2047 = vmul.f32 %v1781, %v1937
        %v2048 = vmul.f32 %v1782, %v1937
        %v2049 = vmul.f32 %v1783, %v1937
        %v2050 = vmul.f32 %v1784, %v1937
        %v2051 = vmul.f32 %v1785, %v1937
        %v2052 = vmul.f32 %v1786, %v1937
        %v2053 = vmul.f32 %v1787, %v1937
        %v2054 = vmul.f32 %v1788, %v1937
        %v2055 = vmul.f32 %v1789, %v1937
        %v2056 = vmul.f32 %v1790, %v1937
        %v2057 = vmul.f32 %v1791, %v1937
        %v2058 = vmul.f32 %v1792, %v1937
        %v2059 = vmul.f32 %v1793, %v1937
        %v2060 = vmul.f32 %v1794, %v1937
        %v2061 = vmul.f32 %v1795, %v1937
        %v2062 = vmul.f32 %v1796, %v1937
        %v2063 = vmul.f32 %v1797, %v1937
        %v2064 = vmul.f32 %v1798, %v1937
        %v2065 = vmul.f32 %v1799, %v1937
        %v2066 = vadd.f32 %v1805, %v1938
        %v2067 = vadd.f32 %v1806, %v1939
        %v2068 = vadd.f32 %v1807, %v1940
        %v2069 = vadd.f32 %v1808, %v1941
        %v2070 = vadd.f32 %v1809, %v1942
        %v2071 = vadd.f32 %v1810, %v1943
        %v2072 = vadd.f32 %v1811, %v1944
        %v2073 = vadd.f32 %v1812, %v1945
        %v2074 = vadd.f32 %v1813, %v1946
        %v2075 = vadd.f32 %v1814, %v1947
        %v2076 = vadd.f32 %v1815, %v1948
        %v2077 = vadd.f32 %v1816, %v1949
        %v2078 = vadd.f32 %v1817, %v1950
        %v2079 = vadd.f32 %v1818, %v1951
        %v2080 = vadd.f32 %v1819, %v1952
        %v2081 = vadd.f32 %v1820, %v1953
        %v2082 = vadd.f32 %v1821, %v1954
        %v2083 = vadd.f32 %v1822, %v1955
        %v2084 = vadd.f32 %v1823, %v1956
        %v2085 = vadd.f32 %v1824, %v1957
        %v2086 = vadd.f32 %v1825, %v1958
        %v2087 = vadd.f32 %v1826, %v1959
        %v2088 = vadd.f32 %v1827, %v1960
        %v2089 = vadd.f32 %v1828, %v1961
        %v2090 = vadd.f32 %v1829, %v1962
        %v2091 = vadd.f32 %v1830, %v1963
        %v2092 = vadd.f32 %v1831, %v1964
        %v2093 = vadd.f32 %v1832, %v1965
        %v2094 = vadd.f32 %v1833, %v1966
        %v2095 = vadd.f32 %v1834, %v1967
        %v2096 = vadd.f32 %v1835, %v1968
        %v2097 = vadd.f32 %v1836, %v1969
        %v2098 = vadd.f32 %v1837, %v1970
        %v2099 = vadd.f32 %v1838, %v1971
        %v2100 = vadd.f32 %v1839, %v1972
        %v2101 = vadd.f32 %v1840, %v1973
        %v2102 = vadd.f32 %v1841, %v1974
        %v2103 = vadd.f32 %v1842, %v1975
        %v2104 = vadd.f32 %v1843, %v1976
        %v2105 = vadd.f32 %v1844, %v1977
        %v2106 = vadd.f32 %v1845, %v1978
        %v2107 = vadd.f32 %v1846, %v1979
        %v2108 = vadd.f32 %v1847, %v1980
        %v2109 = vadd.f32 %v1848, %v1981
        %v2110 = vadd.f32 %v1849, %v1982
        %v2111 = vadd.f32 %v1850, %v1983
        %v2112 = vadd.f32 %v1851, %v1984
        %v2113 = vadd.f32 %v1852, %v1985
        %v2114 = vadd.f32 %v1853, %v1986
        %v2115 = vadd.f32 %v1854, %v1987
        %v2116 = vadd.f32 %v1855, %v1988
        %v2117 = vadd.f32 %v1856, %v1989
        %v2118 = vadd.f32 %v1857, %v1990
        %v2119 = vadd.f32 %v1858, %v1991
        %v2120 = vadd.f32 %v1859, %v1992
        %v2121 = vadd.f32 %v1860, %v1993
        %v2122 = vadd.f32 %v1861, %v1994
        %v2123 = vadd.f32 %v1862, %v1995
        %v2124 = vadd.f32 %v1863, %v1996
        %v2125 = vadd.f32 %v1864, %v1997
        %v2126 = vadd.f32 %v1865, %v1998
        %v2127 = vadd.f32 %v1866, %v1999
        %v2128 = vadd.f32 %v1867, %v2000
        %v2129 = vadd.f32 %v1868, %v2001
        %v2130 = vadd.f32 %v1869, %v2002
        %v2131 = vadd.f32 %v1870, %v2003
        %v2132 = vadd.f32 %v1871, %v2004
        %v2133 = vadd.f32 %v1872, %v2005
        %v2134 = vadd.f32 %v1873, %v2006
        %v2135 = vadd.f32 %v1874, %v2007
        %v2136 = vadd.f32 %v1875, %v2008
        %v2137 = vadd.f32 %v1876, %v2009
        %v2138 = vadd.f32 %v1877, %v2010
        %v2139 = vadd.f32 %v1878, %v2011
        %v2140 = vadd.f32 %v1879, %v2012
        %v2141 = vadd.f32 %v1880, %v2013
        %v2142 = vadd.f32 %v1881, %v2014
        %v2143 = vadd.f32 %v1882, %v2015
        %v2144 = vadd.f32 %v1883, %v2016
        %v2145 = vadd.f32 %v1884, %v2017
        %v2146 = vadd.f32 %v1885, %v2018
        %v2147 = vadd.f32 %v1886, %v2019
        %v2148 = vadd.f32 %v1887, %v2020
        %v2149 = vadd.f32 %v1888, %v2021
        %v2150 = vadd.f32 %v1889, %v2022
        %v2151 = vadd.f32 %v1890, %v2023
        %v2152 = vadd.f32 %v1891, %v2024
        %v2153 = vadd.f32 %v1892, %v2025
        %v2154 = vadd.f32 %v1893, %v2026
        %v2155 = vadd.f32 %v1894, %v2027
        %v2156 = vadd.f32 %v1895, %v2028
        %v2157 = vadd.f32 %v1896, %v2029
        %v2158 = vadd.f32 %v1897, %v2030
        %v2159 = vadd.f32 %v1898, %v2031
        %v2160 = vadd.f32 %v1899, %v2032
        %v2161 = vadd.f32 %v1900, %v2033
        %v2162 = vadd.f32 %v1901, %v2034
        %v2163 = vadd.f32 %v1902, %v2035
        %v2164 = vadd.f32 %v1903, %v2036
        %v2165 = vadd.f32 %v1904, %v2037
        %v2166 = vadd.f32 %v1905, %v2038
        %v2167 = vadd.f32 %v1906, %v2039
        %v2168 = vadd.f32 %v1907, %v2040
        %v2169 = vadd.f32 %v1908, %v2041
        %v2170 = vadd.f32 %v1909, %v2042
        %v2171 = vadd.f32 %v1910, %v2043
        %v2172 = vadd.f32 %v1911, %v2044
        %v2173 = vadd.f32 %v1912, %v2045
        %v2174 = vadd.f32 %v1913, %v2046
        %v2175 = vadd.f32 %v1914, %v2047
        %v2176 = vadd.f32 %v1915, %v2048
        %v2177 = vadd.f32 %v1916, %v2049
        %v2178 = vadd.f32 %v1917, %v2050
        %v2179 = vadd.f32 %v1918, %v2051
        %v2180 = vadd.f32 %v1919, %v2052
        %v2181 = vadd.f32 %v1920, %v2053
        %v2182 = vadd.f32 %v1921, %v2054
        %v2183 = vadd.f32 %v1922, %v2055
        %v2184 = vadd.f32 %v1923, %v2056
        %v2185 = vadd.f32 %v1924, %v2057
        %v2186 = vadd.f32 %v1925, %v2058
        %v2187 = vadd.f32 %v1926, %v2059
        %v2188 = vadd.f32 %v1927, %v2060
        %v2189 = vadd.f32 %v1928, %v2061
        %v2190 = vadd.f32 %v1929, %v2062
        %v2191 = vadd.f32 %v1930, %v2063
        %v2192 = vadd.f32 %v1931, %v2064
        %v2193 = vadd.f32 %v1932, %v2065
        %2194 = vadd.xlane.f32.xlu0 %v2066
        %v2195 = vpop.xlane.xlu0 %2194
        %2196 = vadd.xlane.f32.xlu0 %v2067
        %v2197 = vpop.xlane.xlu0 %2196
        %2198 = vadd.xlane.f32.xlu0 %v2068
        %v2199 = vpop.xlane.xlu0 %2198
        %2200 = vadd.xlane.f32.xlu0 %v2069
        %v2201 = vpop.xlane.xlu0 %2200
        %2202 = vadd.xlane.f32.xlu0 %v2070
        %v2203 = vpop.xlane.xlu0 %2202
        %2204 = vadd.xlane.f32.xlu0 %v2071
        %v2205 = vpop.xlane.xlu0 %2204
        %2206 = vadd.xlane.f32.xlu0 %v2072
        %v2207 = vpop.xlane.xlu0 %2206
        %2208 = vadd.xlane.f32.xlu0 %v2073
        %v2209 = vpop.xlane.xlu0 %2208
        %2210 = vadd.xlane.f32.xlu0 %v2074
        %v2211 = vpop.xlane.xlu0 %2210
        %2212 = vadd.xlane.f32.xlu0 %v2075
        %v2213 = vpop.xlane.xlu0 %2212
        %2214 = vadd.xlane.f32.xlu0 %v2076
        %v2215 = vpop.xlane.xlu0 %2214
        %2216 = vadd.xlane.f32.xlu0 %v2077
        %v2217 = vpop.xlane.xlu0 %2216
        %2218 = vadd.xlane.f32.xlu0 %v2078
        %v2219 = vpop.xlane.xlu0 %2218
        %2220 = vadd.xlane.f32.xlu0 %v2079
        %v2221 = vpop.xlane.xlu0 %2220
        %2222 = vadd.xlane.f32.xlu0 %v2080
        %v2223 = vpop.xlane.xlu0 %2222
        %2224 = vadd.xlane.f32.xlu0 %v2081
        %v2225 = vpop.xlane.xlu0 %2224
        %2226 = vadd.xlane.f32.xlu0 %v2082
        %v2227 = vpop.xlane.xlu0 %2226
        %2228 = vadd.xlane.f32.xlu0 %v2083
        %v2229 = vpop.xlane.xlu0 %2228
        %2230 = vadd.xlane.f32.xlu0 %v2084
        %v2231 = vpop.xlane.xlu0 %2230
        %2232 = vadd.xlane.f32.xlu0 %v2085
        %v2233 = vpop.xlane.xlu0 %2232
        %2234 = vadd.xlane.f32.xlu0 %v2086
        %v2235 = vpop.xlane.xlu0 %2234
        %2236 = vadd.xlane.f32.xlu0 %v2087
        %v2237 = vpop.xlane.xlu0 %2236
        %2238 = vadd.xlane.f32.xlu0 %v2088
        %v2239 = vpop.xlane.xlu0 %2238
        %2240 = vadd.xlane.f32.xlu0 %v2089
        %v2241 = vpop.xlane.xlu0 %2240
        %2242 = vadd.xlane.f32.xlu0 %v2090
        %v2243 = vpop.xlane.xlu0 %2242
        %2244 = vadd.xlane.f32.xlu0 %v2091
        %v2245 = vpop.xlane.xlu0 %2244
        %2246 = vadd.xlane.f32.xlu0 %v2092
        %v2247 = vpop.xlane.xlu0 %2246
        %2248 = vadd.xlane.f32.xlu0 %v2093
        %v2249 = vpop.xlane.xlu0 %2248
        %2250 = vadd.xlane.f32.xlu0 %v2094
        %v2251 = vpop.xlane.xlu0 %2250
        %2252 = vadd.xlane.f32.xlu0 %v2095
        %v2253 = vpop.xlane.xlu0 %2252
        %2254 = vadd.xlane.f32.xlu0 %v2096
        %v2255 = vpop.xlane.xlu0 %2254
        %2256 = vadd.xlane.f32.xlu0 %v2097
        %v2257 = vpop.xlane.xlu0 %2256
        %2258 = vadd.xlane.f32.xlu0 %v2098
        %v2259 = vpop.xlane.xlu0 %2258
        %2260 = vadd.xlane.f32.xlu0 %v2099
        %v2261 = vpop.xlane.xlu0 %2260
        %2262 = vadd.xlane.f32.xlu0 %v2100
        %v2263 = vpop.xlane.xlu0 %2262
        %2264 = vadd.xlane.f32.xlu0 %v2101
        %v2265 = vpop.xlane.xlu0 %2264
        %2266 = vadd.xlane.f32.xlu0 %v2102
        %v2267 = vpop.xlane.xlu0 %2266
        %2268 = vadd.xlane.f32.xlu0 %v2103
        %v2269 = vpop.xlane.xlu0 %2268
        %2270 = vadd.xlane.f32.xlu0 %v2104
        %v2271 = vpop.xlane.xlu0 %2270
        %2272 = vadd.xlane.f32.xlu0 %v2105
        %v2273 = vpop.xlane.xlu0 %2272
        %2274 = vadd.xlane.f32.xlu0 %v2106
        %v2275 = vpop.xlane.xlu0 %2274
        %2276 = vadd.xlane.f32.xlu0 %v2107
        %v2277 = vpop.xlane.xlu0 %2276
        %2278 = vadd.xlane.f32.xlu0 %v2108
        %v2279 = vpop.xlane.xlu0 %2278
        %2280 = vadd.xlane.f32.xlu0 %v2109
        %v2281 = vpop.xlane.xlu0 %2280
        %2282 = vadd.xlane.f32.xlu0 %v2110
        %v2283 = vpop.xlane.xlu0 %2282
        %2284 = vadd.xlane.f32.xlu0 %v2111
        %v2285 = vpop.xlane.xlu0 %2284
        %2286 = vadd.xlane.f32.xlu0 %v2112
        %v2287 = vpop.xlane.xlu0 %2286
        %2288 = vadd.xlane.f32.xlu0 %v2113
        %v2289 = vpop.xlane.xlu0 %2288
        %2290 = vadd.xlane.f32.xlu0 %v2114
        %v2291 = vpop.xlane.xlu0 %2290
        %2292 = vadd.xlane.f32.xlu0 %v2115
        %v2293 = vpop.xlane.xlu0 %2292
        %2294 = vadd.xlane.f32.xlu0 %v2116
        %v2295 = vpop.xlane.xlu0 %2294
        %2296 = vadd.xlane.f32.xlu0 %v2117
        %v2297 = vpop.xlane.xlu0 %2296
        %2298 = vadd.xlane.f32.xlu0 %v2118
        %v2299 = vpop.xlane.xlu0 %2298
        %2300 = vadd.xlane.f32.xlu0 %v2119
        %v2301 = vpop.xlane.xlu0 %2300
        %2302 = vadd.xlane.f32.xlu0 %v2120
        %v2303 = vpop.xlane.xlu0 %2302
        %2304 = vadd.xlane.f32.xlu0 %v2121
        %v2305 = vpop.xlane.xlu0 %2304
        %2306 = vadd.xlane.f32.xlu0 %v2122
        %v2307 = vpop.xlane.xlu0 %2306
        %2308 = vadd.xlane.f32.xlu0 %v2123
        %v2309 = vpop.xlane.xlu0 %2308
        %2310 = vadd.xlane.f32.xlu0 %v2124
        %v2311 = vpop.xlane.xlu0 %2310
        %2312 = vadd.xlane.f32.xlu0 %v2125
        %v2313 = vpop.xlane.xlu0 %2312
        %2314 = vadd.xlane.f32.xlu0 %v2126
        %v2315 = vpop.xlane.xlu0 %2314
        %2316 = vadd.xlane.f32.xlu0 %v2127
        %v2317 = vpop.xlane.xlu0 %2316
        %2318 = vadd.xlane.f32.xlu0 %v2128
        %v2319 = vpop.xlane.xlu0 %2318
        %2320 = vadd.xlane.f32.xlu0 %v2129
        %v2321 = vpop.xlane.xlu0 %2320
        %2322 = vadd.xlane.f32.xlu0 %v2130
        %v2323 = vpop.xlane.xlu0 %2322
        %2324 = vadd.xlane.f32.xlu0 %v2131
        %v2325 = vpop.xlane.xlu0 %2324
        %2326 = vadd.xlane.f32.xlu0 %v2132
        %v2327 = vpop.xlane.xlu0 %2326
        %2328 = vadd.xlane.f32.xlu0 %v2133
        %v2329 = vpop.xlane.xlu0 %2328
        %2330 = vadd.xlane.f32.xlu0 %v2134
        %v2331 = vpop.xlane.xlu0 %2330
        %2332 = vadd.xlane.f32.xlu0 %v2135
        %v2333 = vpop.xlane.xlu0 %2332
        %2334 = vadd.xlane.f32.xlu0 %v2136
        %v2335 = vpop.xlane.xlu0 %2334
        %2336 = vadd.xlane.f32.xlu0 %v2137
        %v2337 = vpop.xlane.xlu0 %2336
        %2338 = vadd.xlane.f32.xlu0 %v2138
        %v2339 = vpop.xlane.xlu0 %2338
        %2340 = vadd.xlane.f32.xlu0 %v2139
        %v2341 = vpop.xlane.xlu0 %2340
        %2342 = vadd.xlane.f32.xlu0 %v2140
        %v2343 = vpop.xlane.xlu0 %2342
        %2344 = vadd.xlane.f32.xlu0 %v2141
        %v2345 = vpop.xlane.xlu0 %2344
        %2346 = vadd.xlane.f32.xlu0 %v2142
        %v2347 = vpop.xlane.xlu0 %2346
        %2348 = vadd.xlane.f32.xlu0 %v2143
        %v2349 = vpop.xlane.xlu0 %2348
        %2350 = vadd.xlane.f32.xlu0 %v2144
        %v2351 = vpop.xlane.xlu0 %2350
        %2352 = vadd.xlane.f32.xlu0 %v2145
        %v2353 = vpop.xlane.xlu0 %2352
        %2354 = vadd.xlane.f32.xlu0 %v2146
        %v2355 = vpop.xlane.xlu0 %2354
        %2356 = vadd.xlane.f32.xlu0 %v2147
        %v2357 = vpop.xlane.xlu0 %2356
        %2358 = vadd.xlane.f32.xlu0 %v2148
        %v2359 = vpop.xlane.xlu0 %2358
        %2360 = vadd.xlane.f32.xlu0 %v2149
        %v2361 = vpop.xlane.xlu0 %2360
        %2362 = vadd.xlane.f32.xlu0 %v2150
        %v2363 = vpop.xlane.xlu0 %2362
        %2364 = vadd.xlane.f32.xlu0 %v2151
        %v2365 = vpop.xlane.xlu0 %2364
        %2366 = vadd.xlane.f32.xlu0 %v2152
        %v2367 = vpop.xlane.xlu0 %2366
        %2368 = vadd.xlane.f32.xlu0 %v2153
        %v2369 = vpop.xlane.xlu0 %2368
        %2370 = vadd.xlane.f32.xlu0 %v2154
        %v2371 = vpop.xlane.xlu0 %2370
        %2372 = vadd.xlane.f32.xlu0 %v2155
        %v2373 = vpop.xlane.xlu0 %2372
        %2374 = vadd.xlane.f32.xlu0 %v2156
        %v2375 = vpop.xlane.xlu0 %2374
        %2376 = vadd.xlane.f32.xlu0 %v2157
        %v2377 = vpop.xlane.xlu0 %2376
        %2378 = vadd.xlane.f32.xlu0 %v2158
        %v2379 = vpop.xlane.xlu0 %2378
        %2380 = vadd.xlane.f32.xlu0 %v2159
        %v2381 = vpop.xlane.xlu0 %2380
        %2382 = vadd.xlane.f32.xlu0 %v2160
        %v2383 = vpop.xlane.xlu0 %2382
        %2384 = vadd.xlane.f32.xlu0 %v2161
        %v2385 = vpop.xlane.xlu0 %2384
        %2386 = vadd.xlane.f32.xlu0 %v2162
        %v2387 = vpop.xlane.xlu0 %2386
        %2388 = vadd.xlane.f32.xlu0 %v2163
        %v2389 = vpop.xlane.xlu0 %2388
        %2390 = vadd.xlane.f32.xlu0 %v2164
        %v2391 = vpop.xlane.xlu0 %2390
        %2392 = vadd.xlane.f32.xlu0 %v2165
        %v2393 = vpop.xlane.xlu0 %2392
        %2394 = vadd.xlane.f32.xlu0 %v2166
        %v2395 = vpop.xlane.xlu0 %2394
        %2396 = vadd.xlane.f32.xlu0 %v2167
        %v2397 = vpop.xlane.xlu0 %2396
        %2398 = vadd.xlane.f32.xlu0 %v2168
        %v2399 = vpop.xlane.xlu0 %2398
        %2400 = vadd.xlane.f32.xlu0 %v2169
        %v2401 = vpop.xlane.xlu0 %2400
        %2402 = vadd.xlane.f32.xlu0 %v2170
        %v2403 = vpop.xlane.xlu0 %2402
        %2404 = vadd.xlane.f32.xlu0 %v2171
        %v2405 = vpop.xlane.xlu0 %2404
        %2406 = vadd.xlane.f32.xlu0 %v2172
        %v2407 = vpop.xlane.xlu0 %2406
        %2408 = vadd.xlane.f32.xlu0 %v2173
        %v2409 = vpop.xlane.xlu0 %2408
        %2410 = vadd.xlane.f32.xlu0 %v2174
        %v2411 = vpop.xlane.xlu0 %2410
        %2412 = vadd.xlane.f32.xlu0 %v2175
        %v2413 = vpop.xlane.xlu0 %2412
        %2414 = vadd.xlane.f32.xlu0 %v2176
        %v2415 = vpop.xlane.xlu0 %2414
        %2416 = vadd.xlane.f32.xlu0 %v2177
        %v2417 = vpop.xlane.xlu0 %2416
        %2418 = vadd.xlane.f32.xlu0 %v2178
        %v2419 = vpop.xlane.xlu0 %2418
        %2420 = vadd.xlane.f32.xlu0 %v2179
        %v2421 = vpop.xlane.xlu0 %2420
        %2422 = vadd.xlane.f32.xlu0 %v2180
        %v2423 = vpop.xlane.xlu0 %2422
        %2424 = vadd.xlane.f32.xlu0 %v2181
        %v2425 = vpop.xlane.xlu0 %2424
        %2426 = vadd.xlane.f32.xlu0 %v2182
        %v2427 = vpop.xlane.xlu0 %2426
        %2428 = vadd.xlane.f32.xlu0 %v2183
        %v2429 = vpop.xlane.xlu0 %2428
        %2430 = vadd.xlane.f32.xlu0 %v2184
        %v2431 = vpop.xlane.xlu0 %2430
        %2432 = vadd.xlane.f32.xlu0 %v2185
        %v2433 = vpop.xlane.xlu0 %2432
        %2434 = vadd.xlane.f32.xlu0 %v2186
        %v2435 = vpop.xlane.xlu0 %2434
        %2436 = vadd.xlane.f32.xlu0 %v2187
        %v2437 = vpop.xlane.xlu0 %2436
        %2438 = vadd.xlane.f32.xlu0 %v2188
        %v2439 = vpop.xlane.xlu0 %2438
        %2440 = vadd.xlane.f32.xlu0 %v2189
        %v2441 = vpop.xlane.xlu0 %2440
        %2442 = vadd.xlane.f32.xlu0 %v2190
        %v2443 = vpop.xlane.xlu0 %2442
        %2444 = vadd.xlane.f32.xlu0 %v2191
        %v2445 = vpop.xlane.xlu0 %2444
        %2446 = vadd.xlane.f32.xlu0 %v2192
        %v2447 = vpop.xlane.xlu0 %2446
        %2448 = vadd.xlane.f32.xlu0 %v2193
        %v2449 = vpop.xlane.xlu0 %2448
        %s2450 = sld [smem:[#allocation2]]
        %v2451 = vstv %s2450
        %v2452 = vadd.f32 %v2195, %v2451
        %v2453 = vadd.f32 %v2197, %v2451
        %v2454 = vadd.f32 %v2199, %v2451
        %v2455 = vadd.f32 %v2201, %v2451
        %v2456 = vadd.f32 %v2203, %v2451
        %v2457 = vadd.f32 %v2205, %v2451
        %v2458 = vadd.f32 %v2207, %v2451
        %v2459 = vadd.f32 %v2209, %v2451
        %v2460 = vadd.f32 %v2211, %v2451
        %v2461 = vadd.f32 %v2213, %v2451
        %v2462 = vadd.f32 %v2215, %v2451
        %v2463 = vadd.f32 %v2217, %v2451
        %v2464 = vadd.f32 %v2219, %v2451
        %v2465 = vadd.f32 %v2221, %v2451
        %v2466 = vadd.f32 %v2223, %v2451
        %v2467 = vadd.f32 %v2225, %v2451
        %v2468 = vadd.f32 %v2227, %v2451
        %v2469 = vadd.f32 %v2229, %v2451
        %v2470 = vadd.f32 %v2231, %v2451
        %v2471 = vadd.f32 %v2233, %v2451
        %v2472 = vadd.f32 %v2235, %v2451
        %v2473 = vadd.f32 %v2237, %v2451
        %v2474 = vadd.f32 %v2239, %v2451
        %v2475 = vadd.f32 %v2241, %v2451
        %v2476 = vadd.f32 %v2243, %v2451
        %v2477 = vadd.f32 %v2245, %v2451
        %v2478 = vadd.f32 %v2247, %v2451
        %v2479 = vadd.f32 %v2249, %v2451
        %v2480 = vadd.f32 %v2251, %v2451
        %v2481 = vadd.f32 %v2253, %v2451
        %v2482 = vadd.f32 %v2255, %v2451
        %v2483 = vadd.f32 %v2257, %v2451
        %v2484 = vadd.f32 %v2259, %v2451
        %v2485 = vadd.f32 %v2261, %v2451
        %v2486 = vadd.f32 %v2263, %v2451
        %v2487 = vadd.f32 %v2265, %v2451
        %v2488 = vadd.f32 %v2267, %v2451
        %v2489 = vadd.f32 %v2269, %v2451
        %v2490 = vadd.f32 %v2271, %v2451
        %v2491 = vadd.f32 %v2273, %v2451
        %v2492 = vadd.f32 %v2275, %v2451
        %v2493 = vadd.f32 %v2277, %v2451
        %v2494 = vadd.f32 %v2279, %v2451
        %v2495 = vadd.f32 %v2281, %v2451
        %v2496 = vadd.f32 %v2283, %v2451
        %v2497 = vadd.f32 %v2285, %v2451
        %v2498 = vadd.f32 %v2287, %v2451
        %v2499 = vadd.f32 %v2289, %v2451
        %v2500 = vadd.f32 %v2291, %v2451
        %v2501 = vadd.f32 %v2293, %v2451
        %v2502 = vadd.f32 %v2295, %v2451
        %v2503 = vadd.f32 %v2297, %v2451
        %v2504 = vadd.f32 %v2299, %v2451
        %v2505 = vadd.f32 %v2301, %v2451
        %v2506 = vadd.f32 %v2303, %v2451
        %v2507 = vadd.f32 %v2305, %v2451
        %v2508 = vadd.f32 %v2307, %v2451
        %v2509 = vadd.f32 %v2309, %v2451
        %v2510 = vadd.f32 %v2311, %v2451
        %v2511 = vadd.f32 %v2313, %v2451
        %v2512 = vadd.f32 %v2315, %v2451
        %v2513 = vadd.f32 %v2317, %v2451
        %v2514 = vadd.f32 %v2319, %v2451
        %v2515 = vadd.f32 %v2321, %v2451
        %v2516 = vadd.f32 %v2323, %v2451
        %v2517 = vadd.f32 %v2325, %v2451
        %v2518 = vadd.f32 %v2327, %v2451
        %v2519 = vadd.f32 %v2329, %v2451
        %v2520 = vadd.f32 %v2331, %v2451
        %v2521 = vadd.f32 %v2333, %v2451
        %v2522 = vadd.f32 %v2335, %v2451
        %v2523 = vadd.f32 %v2337, %v2451
        %v2524 = vadd.f32 %v2339, %v2451
        %v2525 = vadd.f32 %v2341, %v2451
        %v2526 = vadd.f32 %v2343, %v2451
        %v2527 = vadd.f32 %v2345, %v2451
        %v2528 = vadd.f32 %v2347, %v2451
        %v2529 = vadd.f32 %v2349, %v2451
        %v2530 = vadd.f32 %v2351, %v2451
        %v2531 = vadd.f32 %v2353, %v2451
        %v2532 = vadd.f32 %v2355, %v2451
        %v2533 = vadd.f32 %v2357, %v2451
        %v2534 = vadd.f32 %v2359, %v2451
        %v2535 = vadd.f32 %v2361, %v2451
        %v2536 = vadd.f32 %v2363, %v2451
        %v2537 = vadd.f32 %v2365, %v2451
        %v2538 = vadd.f32 %v2367, %v2451
        %v2539 = vadd.f32 %v2369, %v2451
        %v2540 = vadd.f32 %v2371, %v2451
        %v2541 = vadd.f32 %v2373, %v2451
        %v2542 = vadd.f32 %v2375, %v2451
        %v2543 = vadd.f32 %v2377, %v2451
        %v2544 = vadd.f32 %v2379, %v2451
        %v2545 = vadd.f32 %v2381, %v2451
        %v2546 = vadd.f32 %v2383, %v2451
        %v2547 = vadd.f32 %v2385, %v2451
        %v2548 = vadd.f32 %v2387, %v2451
        %v2549 = vadd.f32 %v2389, %v2451
        %v2550 = vadd.f32 %v2391, %v2451
        %v2551 = vadd.f32 %v2393, %v2451
        %v2552 = vadd.f32 %v2395, %v2451
        %v2553 = vadd.f32 %v2397, %v2451
        %v2554 = vadd.f32 %v2399, %v2451
        %v2555 = vadd.f32 %v2401, %v2451
        %v2556 = vadd.f32 %v2403, %v2451
        %v2557 = vadd.f32 %v2405, %v2451
        %v2558 = vadd.f32 %v2407, %v2451
        %v2559 = vadd.f32 %v2409, %v2451
        %v2560 = vadd.f32 %v2411, %v2451
        %v2561 = vadd.f32 %v2413, %v2451
        %v2562 = vadd.f32 %v2415, %v2451
        %v2563 = vadd.f32 %v2417, %v2451
        %v2564 = vadd.f32 %v2419, %v2451
        %v2565 = vadd.f32 %v2421, %v2451
        %v2566 = vadd.f32 %v2423, %v2451
        %v2567 = vadd.f32 %v2425, %v2451
        %v2568 = vadd.f32 %v2427, %v2451
        %v2569 = vadd.f32 %v2429, %v2451
        %v2570 = vadd.f32 %v2431, %v2451
        %v2571 = vadd.f32 %v2433, %v2451
        %v2572 = vadd.f32 %v2435, %v2451
        %v2573 = vadd.f32 %v2437, %v2451
        %v2574 = vadd.f32 %v2439, %v2451
        %v2575 = vadd.f32 %v2441, %v2451
        %v2576 = vadd.f32 %v2443, %v2451
        %v2577 = vadd.f32 %v2445, %v2451
        %v2578 = vadd.f32 %v2447, %v2451
        %v2579 = vadd.f32 %v2449, %v2451
        %v2580 = vld [vmem:[%s4 + $0x1] sm:$0x1]
        %v2581 = vlaneseq
        %v2582 = vshrl.u32 %v2581, 7
        %v2583 = vsub.s32 0, %v2582
        %v2584 = vrot.slane %v2580, %v2583
        %v2585 = vmul.f32 %v1034, %v2584
        %v2586 = vmul.f32 %v1037, %v2584
        %v2587 = vmul.f32 %v1042, %v2584
        %v2588 = vmul.f32 %v1045, %v2584
        %v2589 = vmul.f32 %v1050, %v2584
        %v2590 = vmul.f32 %v1053, %v2584
        %v2591 = vmul.f32 %v1058, %v2584
        %v2592 = vmul.f32 %v1061, %v2584
        %v2593 = vmul.f32 %v1066, %v2584
        %v2594 = vmul.f32 %v1069, %v2584
        %v2595 = vmul.f32 %v1074, %v2584
        %v2596 = vmul.f32 %v1077, %v2584
        %v2597 = vmul.f32 %v1082, %v2584
        %v2598 = vmul.f32 %v1085, %v2584
        %v2599 = vmul.f32 %v1090, %v2584
        %v2600 = vmul.f32 %v1093, %v2584
        %v2601 = vmul.f32 %v1098, %v2584
        %v2602 = vmul.f32 %v1101, %v2584
        %v2603 = vmul.f32 %v1106, %v2584
        %v2604 = vmul.f32 %v1109, %v2584
        %v2605 = vmul.f32 %v1114, %v2584
        %v2606 = vmul.f32 %v1117, %v2584
        %v2607 = vmul.f32 %v1122, %v2584
        %v2608 = vmul.f32 %v1125, %v2584
        %v2609 = vmul.f32 %v1130, %v2584
        %v2610 = vmul.f32 %v1133, %v2584
        %v2611 = vmul.f32 %v1138, %v2584
        %v2612 = vmul.f32 %v1141, %v2584
        %v2613 = vmul.f32 %v1146, %v2584
        %v2614 = vmul.f32 %v1149, %v2584
        %v2615 = vmul.f32 %v1154, %v2584
        %v2616 = vmul.f32 %v1157, %v2584
        %v2617 = vmul.f32 %v1162, %v2584
        %v2618 = vmul.f32 %v1165, %v2584
        %v2619 = vmul.f32 %v1170, %v2584
        %v2620 = vmul.f32 %v1173, %v2584
        %v2621 = vmul.f32 %v1178, %v2584
        %v2622 = vmul.f32 %v1181, %v2584
        %v2623 = vmul.f32 %v1186, %v2584
        %v2624 = vmul.f32 %v1189, %v2584
        %v2625 = vmul.f32 %v1194, %v2584
        %v2626 = vmul.f32 %v1197, %v2584
        %v2627 = vmul.f32 %v1202, %v2584
        %v2628 = vmul.f32 %v1205, %v2584
        %v2629 = vmul.f32 %v1210, %v2584
        %v2630 = vmul.f32 %v1213, %v2584
        %v2631 = vmul.f32 %v1218, %v2584
        %v2632 = vmul.f32 %v1221, %v2584
        %v2633 = vmul.f32 %v1226, %v2584
        %v2634 = vmul.f32 %v1229, %v2584
        %v2635 = vmul.f32 %v1234, %v2584
        %v2636 = vmul.f32 %v1237, %v2584
        %v2637 = vmul.f32 %v1242, %v2584
        %v2638 = vmul.f32 %v1245, %v2584
        %v2639 = vmul.f32 %v1250, %v2584
        %v2640 = vmul.f32 %v1253, %v2584
        %v2641 = vmul.f32 %v1258, %v2584
        %v2642 = vmul.f32 %v1261, %v2584
        %v2643 = vmul.f32 %v1266, %v2584
        %v2644 = vmul.f32 %v1269, %v2584
        %v2645 = vmul.f32 %v1274, %v2584
        %v2646 = vmul.f32 %v1277, %v2584
        %v2647 = vmul.f32 %v1282, %v2584
        %v2648 = vmul.f32 %v1285, %v2584
        %v2649 = vmul.f32 %v1290, %v2584
        %v2650 = vmul.f32 %v1293, %v2584
        %v2651 = vmul.f32 %v1298, %v2584
        %v2652 = vmul.f32 %v1301, %v2584
        %v2653 = vmul.f32 %v1306, %v2584
        %v2654 = vmul.f32 %v1309, %v2584
        %v2655 = vmul.f32 %v1314, %v2584
        %v2656 = vmul.f32 %v1317, %v2584
        %v2657 = vmul.f32 %v1322, %v2584
        %v2658 = vmul.f32 %v1325, %v2584
        %v2659 = vmul.f32 %v1330, %v2584
        %v2660 = vmul.f32 %v1333, %v2584
        %v2661 = vmul.f32 %v1338, %v2584
        %v2662 = vmul.f32 %v1341, %v2584
        %v2663 = vmul.f32 %v1346, %v2584
        %v2664 = vmul.f32 %v1349, %v2584
        %v2665 = vmul.f32 %v1354, %v2584
        %v2666 = vmul.f32 %v1357, %v2584
        %v2667 = vmul.f32 %v1362, %v2584
        %v2668 = vmul.f32 %v1365, %v2584
        %v2669 = vmul.f32 %v1370, %v2584
        %v2670 = vmul.f32 %v1373, %v2584
        %v2671 = vmul.f32 %v1378, %v2584
        %v2672 = vmul.f32 %v1381, %v2584
        %v2673 = vmul.f32 %v1386, %v2584
        %v2674 = vmul.f32 %v1389, %v2584
        %v2675 = vmul.f32 %v1394, %v2584
        %v2676 = vmul.f32 %v1397, %v2584
        %v2677 = vmul.f32 %v1402, %v2584
        %v2678 = vmul.f32 %v1405, %v2584
        %v2679 = vmul.f32 %v1410, %v2584
        %v2680 = vmul.f32 %v1413, %v2584
        %v2681 = vmul.f32 %v1418, %v2584
        %v2682 = vmul.f32 %v1421, %v2584
        %v2683 = vmul.f32 %v1426, %v2584
        %v2684 = vmul.f32 %v1429, %v2584
        %v2685 = vmul.f32 %v1434, %v2584
        %v2686 = vmul.f32 %v1437, %v2584
        %v2687 = vmul.f32 %v1442, %v2584
        %v2688 = vmul.f32 %v1445, %v2584
        %v2689 = vmul.f32 %v1450, %v2584
        %v2690 = vmul.f32 %v1453, %v2584
        %v2691 = vmul.f32 %v1458, %v2584
        %v2692 = vmul.f32 %v1461, %v2584
        %v2693 = vmul.f32 %v1466, %v2584
        %v2694 = vmul.f32 %v1469, %v2584
        %v2695 = vmul.f32 %v1474, %v2584
        %v2696 = vmul.f32 %v1477, %v2584
        %v2697 = vmul.f32 %v1482, %v2584
        %v2698 = vmul.f32 %v1485, %v2584
        %v2699 = vmul.f32 %v1490, %v2584
        %v2700 = vmul.f32 %v1493, %v2584
        %v2701 = vmul.f32 %v1498, %v2584
        %v2702 = vmul.f32 %v1501, %v2584
        %v2703 = vmul.f32 %v1506, %v2584
        %v2704 = vmul.f32 %v1509, %v2584
        %v2705 = vmul.f32 %v1514, %v2584
        %v2706 = vmul.f32 %v1517, %v2584
        %v2707 = vmul.f32 %v1522, %v2584
        %v2708 = vmul.f32 %v1525, %v2584
        %v2709 = vmul.f32 %v1530, %v2584
        %v2710 = vmul.f32 %v1533, %v2584
        %v2711 = vmul.f32 %v1538, %v2584
        %v2712 = vmul.f32 %v1541, %v2584
        %v2713 = vld [vmem:[%s5 + $0x1] sm:$0x1]
        %v2714 = vlaneseq
        %v2715 = vshrl.u32 %v2714, 7
        %v2716 = vsub.s32 0, %v2715
        %v2717 = vrot.slane %v2713, %v2716
        %v2718 = vmul.f32 %v1672, %v2717
        %v2719 = vmul.f32 %v1673, %v2717
        %v2720 = vmul.f32 %v1674, %v2717
        %v2721 = vmul.f32 %v1675, %v2717
        %v2722 = vmul.f32 %v1676, %v2717
        %v2723 = vmul.f32 %v1677, %v2717
        %v2724 = vmul.f32 %v1678, %v2717
        %v2725 = vmul.f32 %v1679, %v2717
        %v2726 = vmul.f32 %v1680, %v2717
        %v2727 = vmul.f32 %v1681, %v2717
        %v2728 = vmul.f32 %v1682, %v2717
        %v2729 = vmul.f32 %v1683, %v2717
        %v2730 = vmul.f32 %v1684, %v2717
        %v2731 = vmul.f32 %v1685, %v2717
        %v2732 = vmul.f32 %v1686, %v2717
        %v2733 = vmul.f32 %v1687, %v2717
        %v2734 = vmul.f32 %v1688, %v2717
        %v2735 = vmul.f32 %v1689, %v2717
        %v2736 = vmul.f32 %v1690, %v2717
        %v2737 = vmul.f32 %v1691, %v2717
        %v2738 = vmul.f32 %v1692, %v2717
        %v2739 = vmul.f32 %v1693, %v2717
        %v2740 = vmul.f32 %v1694, %v2717
        %v2741 = vmul.f32 %v1695, %v2717
        %v2742 = vmul.f32 %v1696, %v2717
        %v2743 = vmul.f32 %v1697, %v2717
        %v2744 = vmul.f32 %v1698, %v2717
        %v2745 = vmul.f32 %v1699, %v2717
        %v2746 = vmul.f32 %v1700, %v2717
        %v2747 = vmul.f32 %v1701, %v2717
        %v2748 = vmul.f32 %v1702, %v2717
        %v2749 = vmul.f32 %v1703, %v2717
        %v2750 = vmul.f32 %v1704, %v2717
        %v2751 = vmul.f32 %v1705, %v2717
        %v2752 = vmul.f32 %v1706, %v2717
        %v2753 = vmul.f32 %v1707, %v2717
        %v2754 = vmul.f32 %v1708, %v2717
        %v2755 = vmul.f32 %v1709, %v2717
        %v2756 = vmul.f32 %v1710, %v2717
        %v2757 = vmul.f32 %v1711, %v2717
        %v2758 = vmul.f32 %v1712, %v2717
        %v2759 = vmul.f32 %v1713, %v2717
        %v2760 = vmul.f32 %v1714, %v2717
        %v2761 = vmul.f32 %v1715, %v2717
        %v2762 = vmul.f32 %v1716, %v2717
        %v2763 = vmul.f32 %v1717, %v2717
        %v2764 = vmul.f32 %v1718, %v2717
        %v2765 = vmul.f32 %v1719, %v2717
        %v2766 = vmul.f32 %v1720, %v2717
        %v2767 = vmul.f32 %v1721, %v2717
        %v2768 = vmul.f32 %v1722, %v2717
        %v2769 = vmul.f32 %v1723, %v2717
        %v2770 = vmul.f32 %v1724, %v2717
        %v2771 = vmul.f32 %v1725, %v2717
        %v2772 = vmul.f32 %v1726, %v2717
        %v2773 = vmul.f32 %v1727, %v2717
        %v2774 = vmul.f32 %v1728, %v2717
        %v2775 = vmul.f32 %v1729, %v2717
        %v2776 = vmul.f32 %v1730, %v2717
        %v2777 = vmul.f32 %v1731, %v2717
        %v2778 = vmul.f32 %v1732, %v2717
        %v2779 = vmul.f32 %v1733, %v2717
        %v2780 = vmul.f32 %v1734, %v2717
        %v2781 = vmul.f32 %v1735, %v2717
        %v2782 = vmul.f32 %v1736, %v2717
        %v2783 = vmul.f32 %v1737, %v2717
        %v2784 = vmul.f32 %v1738, %v2717
        %v2785 = vmul.f32 %v1739, %v2717
        %v2786 = vmul.f32 %v1740, %v2717
        %v2787 = vmul.f32 %v1741, %v2717
        %v2788 = vmul.f32 %v1742, %v2717
        %v2789 = vmul.f32 %v1743, %v2717
        %v2790 = vmul.f32 %v1744, %v2717
        %v2791 = vmul.f32 %v1745, %v2717
        %v2792 = vmul.f32 %v1746, %v2717
        %v2793 = vmul.f32 %v1747, %v2717
        %v2794 = vmul.f32 %v1748, %v2717
        %v2795 = vmul.f32 %v1749, %v2717
        %v2796 = vmul.f32 %v1750, %v2717
        %v2797 = vmul.f32 %v1751, %v2717
        %v2798 = vmul.f32 %v1752, %v2717
        %v2799 = vmul.f32 %v1753, %v2717
        %v2800 = vmul.f32 %v1754, %v2717
        %v2801 = vmul.f32 %v1755, %v2717
        %v2802 = vmul.f32 %v1756, %v2717
        %v2803 = vmul.f32 %v1757, %v2717
        %v2804 = vmul.f32 %v1758, %v2717
        %v2805 = vmul.f32 %v1759, %v2717
        %v2806 = vmul.f32 %v1760, %v2717
        %v2807 = vmul.f32 %v1761, %v2717
        %v2808 = vmul.f32 %v1762, %v2717
        %v2809 = vmul.f32 %v1763, %v2717
        %v2810 = vmul.f32 %v1764, %v2717
        %v2811 = vmul.f32 %v1765, %v2717
        %v2812 = vmul.f32 %v1766, %v2717
        %v2813 = vmul.f32 %v1767, %v2717
        %v2814 = vmul.f32 %v1768, %v2717
        %v2815 = vmul.f32 %v1769, %v2717
        %v2816 = vmul.f32 %v1770, %v2717
        %v2817 = vmul.f32 %v1771, %v2717
        %v2818 = vmul.f32 %v1772, %v2717
        %v2819 = vmul.f32 %v1773, %v2717
        %v2820 = vmul.f32 %v1774, %v2717
        %v2821 = vmul.f32 %v1775, %v2717
        %v2822 = vmul.f32 %v1776, %v2717
        %v2823 = vmul.f32 %v1777, %v2717
        %v2824 = vmul.f32 %v1778, %v2717
        %v2825 = vmul.f32 %v1779, %v2717
        %v2826 = vmul.f32 %v1780, %v2717
        %v2827 = vmul.f32 %v1781, %v2717
        %v2828 = vmul.f32 %v1782, %v2717
        %v2829 = vmul.f32 %v1783, %v2717
        %v2830 = vmul.f32 %v1784, %v2717
        %v2831 = vmul.f32 %v1785, %v2717
        %v2832 = vmul.f32 %v1786, %v2717
        %v2833 = vmul.f32 %v1787, %v2717
        %v2834 = vmul.f32 %v1788, %v2717
        %v2835 = vmul.f32 %v1789, %v2717
        %v2836 = vmul.f32 %v1790, %v2717
        %v2837 = vmul.f32 %v1791, %v2717
        %v2838 = vmul.f32 %v1792, %v2717
        %v2839 = vmul.f32 %v1793, %v2717
        %v2840 = vmul.f32 %v1794, %v2717
        %v2841 = vmul.f32 %v1795, %v2717
        %v2842 = vmul.f32 %v1796, %v2717
        %v2843 = vmul.f32 %v1797, %v2717
        %v2844 = vmul.f32 %v1798, %v2717
        %v2845 = vmul.f32 %v1799, %v2717
        %v2846 = vadd.f32 %v2585, %v2718
        %v2847 = vadd.f32 %v2586, %v2719
        %v2848 = vadd.f32 %v2587, %v2720
        %v2849 = vadd.f32 %v2588, %v2721
        %v2850 = vadd.f32 %v2589, %v2722
        %v2851 = vadd.f32 %v2590, %v2723
        %v2852 = vadd.f32 %v2591, %v2724
        %v2853 = vadd.f32 %v2592, %v2725
        %v2854 = vadd.f32 %v2593, %v2726
        %v2855 = vadd.f32 %v2594, %v2727
        %v2856 = vadd.f32 %v2595, %v2728
        %v2857 = vadd.f32 %v2596, %v2729
        %v2858 = vadd.f32 %v2597, %v2730
        %v2859 = vadd.f32 %v2598, %v2731
        %v2860 = vadd.f32 %v2599, %v2732
        %v2861 = vadd.f32 %v2600, %v2733
        %v2862 = vadd.f32 %v2601, %v2734
        %v2863 = vadd.f32 %v2602, %v2735
        %v2864 = vadd.f32 %v2603, %v2736
        %v2865 = vadd.f32 %v2604, %v2737
        %v2866 = vadd.f32 %v2605, %v2738
        %v2867 = vadd.f32 %v2606, %v2739
        %v2868 = vadd.f32 %v2607, %v2740
        %v2869 = vadd.f32 %v2608, %v2741
        %v2870 = vadd.f32 %v2609, %v2742
        %v2871 = vadd.f32 %v2610, %v2743
        %v2872 = vadd.f32 %v2611, %v2744
        %v2873 = vadd.f32 %v2612, %v2745
        %v2874 = vadd.f32 %v2613, %v2746
        %v2875 = vadd.f32 %v2614, %v2747
        %v2876 = vadd.f32 %v2615, %v2748
        %v2877 = vadd.f32 %v2616, %v2749
        %v2878 = vadd.f32 %v2617, %v2750
        %v2879 = vadd.f32 %v2618, %v2751
        %v2880 = vadd.f32 %v2619, %v2752
        %v2881 = vadd.f32 %v2620, %v2753
        %v2882 = vadd.f32 %v2621, %v2754
        %v2883 = vadd.f32 %v2622, %v2755
        %v2884 = vadd.f32 %v2623, %v2756
        %v2885 = vadd.f32 %v2624, %v2757
        %v2886 = vadd.f32 %v2625, %v2758
        %v2887 = vadd.f32 %v2626, %v2759
        %v2888 = vadd.f32 %v2627, %v2760
        %v2889 = vadd.f32 %v2628, %v2761
        %v2890 = vadd.f32 %v2629, %v2762
        %v2891 = vadd.f32 %v2630, %v2763
        %v2892 = vadd.f32 %v2631, %v2764
        %v2893 = vadd.f32 %v2632, %v2765
        %v2894 = vadd.f32 %v2633, %v2766
        %v2895 = vadd.f32 %v2634, %v2767
        %v2896 = vadd.f32 %v2635, %v2768
        %v2897 = vadd.f32 %v2636, %v2769
        %v2898 = vadd.f32 %v2637, %v2770
        %v2899 = vadd.f32 %v2638, %v2771
        %v2900 = vadd.f32 %v2639, %v2772
        %v2901 = vadd.f32 %v2640, %v2773
        %v2902 = vadd.f32 %v2641, %v2774
        %v2903 = vadd.f32 %v2642, %v2775
        %v2904 = vadd.f32 %v2643, %v2776
        %v2905 = vadd.f32 %v2644, %v2777
        %v2906 = vadd.f32 %v2645, %v2778
        %v2907 = vadd.f32 %v2646, %v2779
        %v2908 = vadd.f32 %v2647, %v2780
        %v2909 = vadd.f32 %v2648, %v2781
        %v2910 = vadd.f32 %v2649, %v2782
        %v2911 = vadd.f32 %v2650, %v2783
        %v2912 = vadd.f32 %v2651, %v2784
        %v2913 = vadd.f32 %v2652, %v2785
        %v2914 = vadd.f32 %v2653, %v2786
        %v2915 = vadd.f32 %v2654, %v2787
        %v2916 = vadd.f32 %v2655, %v2788
        %v2917 = vadd.f32 %v2656, %v2789
        %v2918 = vadd.f32 %v2657, %v2790
        %v2919 = vadd.f32 %v2658, %v2791
        %v2920 = vadd.f32 %v2659, %v2792
        %v2921 = vadd.f32 %v2660, %v2793
        %v2922 = vadd.f32 %v2661, %v2794
        %v2923 = vadd.f32 %v2662, %v2795
        %v2924 = vadd.f32 %v2663, %v2796
        %v2925 = vadd.f32 %v2664, %v2797
        %v2926 = vadd.f32 %v2665, %v2798
        %v2927 = vadd.f32 %v2666, %v2799
        %v2928 = vadd.f32 %v2667, %v2800
        %v2929 = vadd.f32 %v2668, %v2801
        %v2930 = vadd.f32 %v2669, %v2802
        %v2931 = vadd.f32 %v2670, %v2803
        %v2932 = vadd.f32 %v2671, %v2804
        %v2933 = vadd.f32 %v2672, %v2805
        %v2934 = vadd.f32 %v2673, %v2806
        %v2935 = vadd.f32 %v2674, %v2807
        %v2936 = vadd.f32 %v2675, %v2808
        %v2937 = vadd.f32 %v2676, %v2809
        %v2938 = vadd.f32 %v2677, %v2810
        %v2939 = vadd.f32 %v2678, %v2811
        %v2940 = vadd.f32 %v2679, %v2812
        %v2941 = vadd.f32 %v2680, %v2813
        %v2942 = vadd.f32 %v2681, %v2814
        %v2943 = vadd.f32 %v2682, %v2815
        %v2944 = vadd.f32 %v2683, %v2816
        %v2945 = vadd.f32 %v2684, %v2817
        %v2946 = vadd.f32 %v2685, %v2818
        %v2947 = vadd.f32 %v2686, %v2819
        %v2948 = vadd.f32 %v2687, %v2820
        %v2949 = vadd.f32 %v2688, %v2821
        %v2950 = vadd.f32 %v2689, %v2822
        %v2951 = vadd.f32 %v2690, %v2823
        %v2952 = vadd.f32 %v2691, %v2824
        %v2953 = vadd.f32 %v2692, %v2825
        %v2954 = vadd.f32 %v2693, %v2826
        %v2955 = vadd.f32 %v2694, %v2827
        %v2956 = vadd.f32 %v2695, %v2828
        %v2957 = vadd.f32 %v2696, %v2829
        %v2958 = vadd.f32 %v2697, %v2830
        %v2959 = vadd.f32 %v2698, %v2831
        %v2960 = vadd.f32 %v2699, %v2832
        %v2961 = vadd.f32 %v2700, %v2833
        %v2962 = vadd.f32 %v2701, %v2834
        %v2963 = vadd.f32 %v2702, %v2835
        %v2964 = vadd.f32 %v2703, %v2836
        %v2965 = vadd.f32 %v2704, %v2837
        %v2966 = vadd.f32 %v2705, %v2838
        %v2967 = vadd.f32 %v2706, %v2839
        %v2968 = vadd.f32 %v2707, %v2840
        %v2969 = vadd.f32 %v2708, %v2841
        %v2970 = vadd.f32 %v2709, %v2842
        %v2971 = vadd.f32 %v2710, %v2843
        %v2972 = vadd.f32 %v2711, %v2844
        %v2973 = vadd.f32 %v2712, %v2845
        %2974 = vadd.xlane.f32.xlu0 %v2846
        %v2975 = vpop.xlane.xlu0 %2974
        %2976 = vadd.xlane.f32.xlu0 %v2847
        %v2977 = vpop.xlane.xlu0 %2976
        %2978 = vadd.xlane.f32.xlu0 %v2848
        %v2979 = vpop.xlane.xlu0 %2978
        %2980 = vadd.xlane.f32.xlu0 %v2849
        %v2981 = vpop.xlane.xlu0 %2980
        %2982 = vadd.xlane.f32.xlu0 %v2850
        %v2983 = vpop.xlane.xlu0 %2982
        %2984 = vadd.xlane.f32.xlu0 %v2851
        %v2985 = vpop.xlane.xlu0 %2984
        %2986 = vadd.xlane.f32.xlu0 %v2852
        %v2987 = vpop.xlane.xlu0 %2986
        %2988 = vadd.xlane.f32.xlu0 %v2853
        %v2989 = vpop.xlane.xlu0 %2988
        %2990 = vadd.xlane.f32.xlu0 %v2854
        %v2991 = vpop.xlane.xlu0 %2990
        %2992 = vadd.xlane.f32.xlu0 %v2855
        %v2993 = vpop.xlane.xlu0 %2992
        %2994 = vadd.xlane.f32.xlu0 %v2856
        %v2995 = vpop.xlane.xlu0 %2994
        %2996 = vadd.xlane.f32.xlu0 %v2857
        %v2997 = vpop.xlane.xlu0 %2996
        %2998 = vadd.xlane.f32.xlu0 %v2858
        %v2999 = vpop.xlane.xlu0 %2998
        %3000 = vadd.xlane.f32.xlu0 %v2859
        %v3001 = vpop.xlane.xlu0 %3000
        %3002 = vadd.xlane.f32.xlu0 %v2860
        %v3003 = vpop.xlane.xlu0 %3002
        %3004 = vadd.xlane.f32.xlu0 %v2861
        %v3005 = vpop.xlane.xlu0 %3004
        %3006 = vadd.xlane.f32.xlu0 %v2862
        %v3007 = vpop.xlane.xlu0 %3006
        %3008 = vadd.xlane.f32.xlu0 %v2863
        %v3009 = vpop.xlane.xlu0 %3008
        %3010 = vadd.xlane.f32.xlu0 %v2864
        %v3011 = vpop.xlane.xlu0 %3010
        %3012 = vadd.xlane.f32.xlu0 %v2865
        %v3013 = vpop.xlane.xlu0 %3012
        %3014 = vadd.xlane.f32.xlu0 %v2866
        %v3015 = vpop.xlane.xlu0 %3014
        %3016 = vadd.xlane.f32.xlu0 %v2867
        %v3017 = vpop.xlane.xlu0 %3016
        %3018 = vadd.xlane.f32.xlu0 %v2868
        %v3019 = vpop.xlane.xlu0 %3018
        %3020 = vadd.xlane.f32.xlu0 %v2869
        %v3021 = vpop.xlane.xlu0 %3020
        %3022 = vadd.xlane.f32.xlu0 %v2870
        %v3023 = vpop.xlane.xlu0 %3022
        %3024 = vadd.xlane.f32.xlu0 %v2871
        %v3025 = vpop.xlane.xlu0 %3024
        %3026 = vadd.xlane.f32.xlu0 %v2872
        %v3027 = vpop.xlane.xlu0 %3026
        %3028 = vadd.xlane.f32.xlu0 %v2873
        %v3029 = vpop.xlane.xlu0 %3028
        %3030 = vadd.xlane.f32.xlu0 %v2874
        %v3031 = vpop.xlane.xlu0 %3030
        %3032 = vadd.xlane.f32.xlu0 %v2875
        %v3033 = vpop.xlane.xlu0 %3032
        %3034 = vadd.xlane.f32.xlu0 %v2876
        %v3035 = vpop.xlane.xlu0 %3034
        %3036 = vadd.xlane.f32.xlu0 %v2877
        %v3037 = vpop.xlane.xlu0 %3036
        %3038 = vadd.xlane.f32.xlu0 %v2878
        %v3039 = vpop.xlane.xlu0 %3038
        %3040 = vadd.xlane.f32.xlu0 %v2879
        %v3041 = vpop.xlane.xlu0 %3040
        %3042 = vadd.xlane.f32.xlu0 %v2880
        %v3043 = vpop.xlane.xlu0 %3042
        %3044 = vadd.xlane.f32.xlu0 %v2881
        %v3045 = vpop.xlane.xlu0 %3044
        %3046 = vadd.xlane.f32.xlu0 %v2882
        %v3047 = vpop.xlane.xlu0 %3046
        %3048 = vadd.xlane.f32.xlu0 %v2883
        %v3049 = vpop.xlane.xlu0 %3048
        %3050 = vadd.xlane.f32.xlu0 %v2884
        %v3051 = vpop.xlane.xlu0 %3050
        %3052 = vadd.xlane.f32.xlu0 %v2885
        %v3053 = vpop.xlane.xlu0 %3052
        %3054 = vadd.xlane.f32.xlu0 %v2886
        %v3055 = vpop.xlane.xlu0 %3054
        %3056 = vadd.xlane.f32.xlu0 %v2887
        %v3057 = vpop.xlane.xlu0 %3056
        %3058 = vadd.xlane.f32.xlu0 %v2888
        %v3059 = vpop.xlane.xlu0 %3058
        %3060 = vadd.xlane.f32.xlu0 %v2889
        %v3061 = vpop.xlane.xlu0 %3060
        %3062 = vadd.xlane.f32.xlu0 %v2890
        %v3063 = vpop.xlane.xlu0 %3062
        %3064 = vadd.xlane.f32.xlu0 %v2891
        %v3065 = vpop.xlane.xlu0 %3064
        %3066 = vadd.xlane.f32.xlu0 %v2892
        %v3067 = vpop.xlane.xlu0 %3066
        %3068 = vadd.xlane.f32.xlu0 %v2893
        %v3069 = vpop.xlane.xlu0 %3068
        %3070 = vadd.xlane.f32.xlu0 %v2894
        %v3071 = vpop.xlane.xlu0 %3070
        %3072 = vadd.xlane.f32.xlu0 %v2895
        %v3073 = vpop.xlane.xlu0 %3072
        %3074 = vadd.xlane.f32.xlu0 %v2896
        %v3075 = vpop.xlane.xlu0 %3074
        %3076 = vadd.xlane.f32.xlu0 %v2897
        %v3077 = vpop.xlane.xlu0 %3076
        %3078 = vadd.xlane.f32.xlu0 %v2898
        %v3079 = vpop.xlane.xlu0 %3078
        %3080 = vadd.xlane.f32.xlu0 %v2899
        %v3081 = vpop.xlane.xlu0 %3080
        %3082 = vadd.xlane.f32.xlu0 %v2900
        %v3083 = vpop.xlane.xlu0 %3082
        %3084 = vadd.xlane.f32.xlu0 %v2901
        %v3085 = vpop.xlane.xlu0 %3084
        %3086 = vadd.xlane.f32.xlu0 %v2902
        %v3087 = vpop.xlane.xlu0 %3086
        %3088 = vadd.xlane.f32.xlu0 %v2903
        %v3089 = vpop.xlane.xlu0 %3088
        %3090 = vadd.xlane.f32.xlu0 %v2904
        %v3091 = vpop.xlane.xlu0 %3090
        %3092 = vadd.xlane.f32.xlu0 %v2905
        %v3093 = vpop.xlane.xlu0 %3092
        %3094 = vadd.xlane.f32.xlu0 %v2906
        %v3095 = vpop.xlane.xlu0 %3094
        %3096 = vadd.xlane.f32.xlu0 %v2907
        %v3097 = vpop.xlane.xlu0 %3096
        %3098 = vadd.xlane.f32.xlu0 %v2908
        %v3099 = vpop.xlane.xlu0 %3098
        %3100 = vadd.xlane.f32.xlu0 %v2909
        %v3101 = vpop.xlane.xlu0 %3100
        %3102 = vadd.xlane.f32.xlu0 %v2910
        %v3103 = vpop.xlane.xlu0 %3102
        %3104 = vadd.xlane.f32.xlu0 %v2911
        %v3105 = vpop.xlane.xlu0 %3104
        %3106 = vadd.xlane.f32.xlu0 %v2912
        %v3107 = vpop.xlane.xlu0 %3106
        %3108 = vadd.xlane.f32.xlu0 %v2913
        %v3109 = vpop.xlane.xlu0 %3108
        %3110 = vadd.xlane.f32.xlu0 %v2914
        %v3111 = vpop.xlane.xlu0 %3110
        %3112 = vadd.xlane.f32.xlu0 %v2915
        %v3113 = vpop.xlane.xlu0 %3112
        %3114 = vadd.xlane.f32.xlu0 %v2916
        %v3115 = vpop.xlane.xlu0 %3114
        %3116 = vadd.xlane.f32.xlu0 %v2917
        %v3117 = vpop.xlane.xlu0 %3116
        %3118 = vadd.xlane.f32.xlu0 %v2918
        %v3119 = vpop.xlane.xlu0 %3118
        %3120 = vadd.xlane.f32.xlu0 %v2919
        %v3121 = vpop.xlane.xlu0 %3120
        %3122 = vadd.xlane.f32.xlu0 %v2920
        %v3123 = vpop.xlane.xlu0 %3122
        %3124 = vadd.xlane.f32.xlu0 %v2921
        %v3125 = vpop.xlane.xlu0 %3124
        %3126 = vadd.xlane.f32.xlu0 %v2922
        %v3127 = vpop.xlane.xlu0 %3126
        %3128 = vadd.xlane.f32.xlu0 %v2923
        %v3129 = vpop.xlane.xlu0 %3128
        %3130 = vadd.xlane.f32.xlu0 %v2924
        %v3131 = vpop.xlane.xlu0 %3130
        %3132 = vadd.xlane.f32.xlu0 %v2925
        %v3133 = vpop.xlane.xlu0 %3132
        %3134 = vadd.xlane.f32.xlu0 %v2926
        %v3135 = vpop.xlane.xlu0 %3134
        %3136 = vadd.xlane.f32.xlu0 %v2927
        %v3137 = vpop.xlane.xlu0 %3136
        %3138 = vadd.xlane.f32.xlu0 %v2928
        %v3139 = vpop.xlane.xlu0 %3138
        %3140 = vadd.xlane.f32.xlu0 %v2929
        %v3141 = vpop.xlane.xlu0 %3140
        %3142 = vadd.xlane.f32.xlu0 %v2930
        %v3143 = vpop.xlane.xlu0 %3142
        %3144 = vadd.xlane.f32.xlu0 %v2931
        %v3145 = vpop.xlane.xlu0 %3144
        %3146 = vadd.xlane.f32.xlu0 %v2932
        %v3147 = vpop.xlane.xlu0 %3146
        %3148 = vadd.xlane.f32.xlu0 %v2933
        %v3149 = vpop.xlane.xlu0 %3148
        %3150 = vadd.xlane.f32.xlu0 %v2934
        %v3151 = vpop.xlane.xlu0 %3150
        %3152 = vadd.xlane.f32.xlu0 %v2935
        %v3153 = vpop.xlane.xlu0 %3152
        %3154 = vadd.xlane.f32.xlu0 %v2936
        %v3155 = vpop.xlane.xlu0 %3154
        %3156 = vadd.xlane.f32.xlu0 %v2937
        %v3157 = vpop.xlane.xlu0 %3156
        %3158 = vadd.xlane.f32.xlu0 %v2938
        %v3159 = vpop.xlane.xlu0 %3158
        %3160 = vadd.xlane.f32.xlu0 %v2939
        %v3161 = vpop.xlane.xlu0 %3160
        %3162 = vadd.xlane.f32.xlu0 %v2940
        %v3163 = vpop.xlane.xlu0 %3162
        %3164 = vadd.xlane.f32.xlu0 %v2941
        %v3165 = vpop.xlane.xlu0 %3164
        %3166 = vadd.xlane.f32.xlu0 %v2942
        %v3167 = vpop.xlane.xlu0 %3166
        %3168 = vadd.xlane.f32.xlu0 %v2943
        %v3169 = vpop.xlane.xlu0 %3168
        %3170 = vadd.xlane.f32.xlu0 %v2944
        %v3171 = vpop.xlane.xlu0 %3170
        %3172 = vadd.xlane.f32.xlu0 %v2945
        %v3173 = vpop.xlane.xlu0 %3172
        %3174 = vadd.xlane.f32.xlu0 %v2946
        %v3175 = vpop.xlane.xlu0 %3174
        %3176 = vadd.xlane.f32.xlu0 %v2947
        %v3177 = vpop.xlane.xlu0 %3176
        %3178 = vadd.xlane.f32.xlu0 %v2948
        %v3179 = vpop.xlane.xlu0 %3178
        %3180 = vadd.xlane.f32.xlu0 %v2949
        %v3181 = vpop.xlane.xlu0 %3180
        %3182 = vadd.xlane.f32.xlu0 %v2950
        %v3183 = vpop.xlane.xlu0 %3182
        %3184 = vadd.xlane.f32.xlu0 %v2951
        %v3185 = vpop.xlane.xlu0 %3184
        %3186 = vadd.xlane.f32.xlu0 %v2952
        %v3187 = vpop.xlane.xlu0 %3186
        %3188 = vadd.xlane.f32.xlu0 %v2953
        %v3189 = vpop.xlane.xlu0 %3188
        %3190 = vadd.xlane.f32.xlu0 %v2954
        %v3191 = vpop.xlane.xlu0 %3190
        %3192 = vadd.xlane.f32.xlu0 %v2955
        %v3193 = vpop.xlane.xlu0 %3192
        %3194 = vadd.xlane.f32.xlu0 %v2956
        %v3195 = vpop.xlane.xlu0 %3194
        %3196 = vadd.xlane.f32.xlu0 %v2957
        %v3197 = vpop.xlane.xlu0 %3196
        %3198 = vadd.xlane.f32.xlu0 %v2958
        %v3199 = vpop.xlane.xlu0 %3198
        %3200 = vadd.xlane.f32.xlu0 %v2959
        %v3201 = vpop.xlane.xlu0 %3200
        %3202 = vadd.xlane.f32.xlu0 %v2960
        %v3203 = vpop.xlane.xlu0 %3202
        %3204 = vadd.xlane.f32.xlu0 %v2961
        %v3205 = vpop.xlane.xlu0 %3204
        %3206 = vadd.xlane.f32.xlu0 %v2962
        %v3207 = vpop.xlane.xlu0 %3206
        %3208 = vadd.xlane.f32.xlu0 %v2963
        %v3209 = vpop.xlane.xlu0 %3208
        %3210 = vadd.xlane.f32.xlu0 %v2964
        %v3211 = vpop.xlane.xlu0 %3210
        %3212 = vadd.xlane.f32.xlu0 %v2965
        %v3213 = vpop.xlane.xlu0 %3212
        %3214 = vadd.xlane.f32.xlu0 %v2966
        %v3215 = vpop.xlane.xlu0 %3214
        %3216 = vadd.xlane.f32.xlu0 %v2967
        %v3217 = vpop.xlane.xlu0 %3216
        %3218 = vadd.xlane.f32.xlu0 %v2968
        %v3219 = vpop.xlane.xlu0 %3218
        %3220 = vadd.xlane.f32.xlu0 %v2969
        %v3221 = vpop.xlane.xlu0 %3220
        %3222 = vadd.xlane.f32.xlu0 %v2970
        %v3223 = vpop.xlane.xlu0 %3222
        %3224 = vadd.xlane.f32.xlu0 %v2971
        %v3225 = vpop.xlane.xlu0 %3224
        %3226 = vadd.xlane.f32.xlu0 %v2972
        %v3227 = vpop.xlane.xlu0 %3226
        %3228 = vadd.xlane.f32.xlu0 %v2973
        %v3229 = vpop.xlane.xlu0 %3228
        %s3230 = sld [smem:[#allocation2 + $0x1]]
        %v3231 = vstv %s3230
        %v3232 = vadd.f32 %v2975, %v3231
        %v3233 = vadd.f32 %v2977, %v3231
        %v3234 = vadd.f32 %v2979, %v3231
        %v3235 = vadd.f32 %v2981, %v3231
        %v3236 = vadd.f32 %v2983, %v3231
        %v3237 = vadd.f32 %v2985, %v3231
        %v3238 = vadd.f32 %v2987, %v3231
        %v3239 = vadd.f32 %v2989, %v3231
        %v3240 = vadd.f32 %v2991, %v3231
        %v3241 = vadd.f32 %v2993, %v3231
        %v3242 = vadd.f32 %v2995, %v3231
        %v3243 = vadd.f32 %v2997, %v3231
        %v3244 = vadd.f32 %v2999, %v3231
        %v3245 = vadd.f32 %v3001, %v3231
        %v3246 = vadd.f32 %v3003, %v3231
        %v3247 = vadd.f32 %v3005, %v3231
        %v3248 = vadd.f32 %v3007, %v3231
        %v3249 = vadd.f32 %v3009, %v3231
        %v3250 = vadd.f32 %v3011, %v3231
        %v3251 = vadd.f32 %v3013, %v3231
        %v3252 = vadd.f32 %v3015, %v3231
        %v3253 = vadd.f32 %v3017, %v3231
        %v3254 = vadd.f32 %v3019, %v3231
        %v3255 = vadd.f32 %v3021, %v3231
        %v3256 = vadd.f32 %v3023, %v3231
        %v3257 = vadd.f32 %v3025, %v3231
        %v3258 = vadd.f32 %v3027, %v3231
        %v3259 = vadd.f32 %v3029, %v3231
        %v3260 = vadd.f32 %v3031, %v3231
        %v3261 = vadd.f32 %v3033, %v3231
        %v3262 = vadd.f32 %v3035, %v3231
        %v3263 = vadd.f32 %v3037, %v3231
        %v3264 = vadd.f32 %v3039, %v3231
        %v3265 = vadd.f32 %v3041, %v3231
        %v3266 = vadd.f32 %v3043, %v3231
        %v3267 = vadd.f32 %v3045, %v3231
        %v3268 = vadd.f32 %v3047, %v3231
        %v3269 = vadd.f32 %v3049, %v3231
        %v3270 = vadd.f32 %v3051, %v3231
        %v3271 = vadd.f32 %v3053, %v3231
        %v3272 = vadd.f32 %v3055, %v3231
        %v3273 = vadd.f32 %v3057, %v3231
        %v3274 = vadd.f32 %v3059, %v3231
        %v3275 = vadd.f32 %v3061, %v3231
        %v3276 = vadd.f32 %v3063, %v3231
        %v3277 = vadd.f32 %v3065, %v3231
        %v3278 = vadd.f32 %v3067, %v3231
        %v3279 = vadd.f32 %v3069, %v3231
        %v3280 = vadd.f32 %v3071, %v3231
        %v3281 = vadd.f32 %v3073, %v3231
        %v3282 = vadd.f32 %v3075, %v3231
        %v3283 = vadd.f32 %v3077, %v3231
        %v3284 = vadd.f32 %v3079, %v3231
        %v3285 = vadd.f32 %v3081, %v3231
        %v3286 = vadd.f32 %v3083, %v3231
        %v3287 = vadd.f32 %v3085, %v3231
        %v3288 = vadd.f32 %v3087, %v3231
        %v3289 = vadd.f32 %v3089, %v3231
        %v3290 = vadd.f32 %v3091, %v3231
        %v3291 = vadd.f32 %v3093, %v3231
        %v3292 = vadd.f32 %v3095, %v3231
        %v3293 = vadd.f32 %v3097, %v3231
        %v3294 = vadd.f32 %v3099, %v3231
        %v3295 = vadd.f32 %v3101, %v3231
        %v3296 = vadd.f32 %v3103, %v3231
        %v3297 = vadd.f32 %v3105, %v3231
        %v3298 = vadd.f32 %v3107, %v3231
        %v3299 = vadd.f32 %v3109, %v3231
        %v3300 = vadd.f32 %v3111, %v3231
        %v3301 = vadd.f32 %v3113, %v3231
        %v3302 = vadd.f32 %v3115, %v3231
        %v3303 = vadd.f32 %v3117, %v3231
        %v3304 = vadd.f32 %v3119, %v3231
        %v3305 = vadd.f32 %v3121, %v3231
        %v3306 = vadd.f32 %v3123, %v3231
        %v3307 = vadd.f32 %v3125, %v3231
        %v3308 = vadd.f32 %v3127, %v3231
        %v3309 = vadd.f32 %v3129, %v3231
        %v3310 = vadd.f32 %v3131, %v3231
        %v3311 = vadd.f32 %v3133, %v3231
        %v3312 = vadd.f32 %v3135, %v3231
        %v3313 = vadd.f32 %v3137, %v3231
        %v3314 = vadd.f32 %v3139, %v3231
        %v3315 = vadd.f32 %v3141, %v3231
        %v3316 = vadd.f32 %v3143, %v3231
        %v3317 = vadd.f32 %v3145, %v3231
        %v3318 = vadd.f32 %v3147, %v3231
        %v3319 = vadd.f32 %v3149, %v3231
        %v3320 = vadd.f32 %v3151, %v3231
        %v3321 = vadd.f32 %v3153, %v3231
        %v3322 = vadd.f32 %v3155, %v3231
        %v3323 = vadd.f32 %v3157, %v3231
        %v3324 = vadd.f32 %v3159, %v3231
        %v3325 = vadd.f32 %v3161, %v3231
        %v3326 = vadd.f32 %v3163, %v3231
        %v3327 = vadd.f32 %v3165, %v3231
        %v3328 = vadd.f32 %v3167, %v3231
        %v3329 = vadd.f32 %v3169, %v3231
        %v3330 = vadd.f32 %v3171, %v3231
        %v3331 = vadd.f32 %v3173, %v3231
        %v3332 = vadd.f32 %v3175, %v3231
        %v3333 = vadd.f32 %v3177, %v3231
        %v3334 = vadd.f32 %v3179, %v3231
        %v3335 = vadd.f32 %v3181, %v3231
        %v3336 = vadd.f32 %v3183, %v3231
        %v3337 = vadd.f32 %v3185, %v3231
        %v3338 = vadd.f32 %v3187, %v3231
        %v3339 = vadd.f32 %v3189, %v3231
        %v3340 = vadd.f32 %v3191, %v3231
        %v3341 = vadd.f32 %v3193, %v3231
        %v3342 = vadd.f32 %v3195, %v3231
        %v3343 = vadd.f32 %v3197, %v3231
        %v3344 = vadd.f32 %v3199, %v3231
        %v3345 = vadd.f32 %v3201, %v3231
        %v3346 = vadd.f32 %v3203, %v3231
        %v3347 = vadd.f32 %v3205, %v3231
        %v3348 = vadd.f32 %v3207, %v3231
        %v3349 = vadd.f32 %v3209, %v3231
        %v3350 = vadd.f32 %v3211, %v3231
        %v3351 = vadd.f32 %v3213, %v3231
        %v3352 = vadd.f32 %v3215, %v3231
        %v3353 = vadd.f32 %v3217, %v3231
        %v3354 = vadd.f32 %v3219, %v3231
        %v3355 = vadd.f32 %v3221, %v3231
        %v3356 = vadd.f32 %v3223, %v3231
        %v3357 = vadd.f32 %v3225, %v3231
        %v3358 = vadd.f32 %v3227, %v3231
        %v3359 = vadd.f32 %v3229, %v3231
        %v3360 = vxor.u32 %v2452, 2147483648
        %v3361 = vxor.u32 %v2453, 2147483648
        %v3362 = vxor.u32 %v2454, 2147483648
        %v3363 = vxor.u32 %v2455, 2147483648
        %v3364 = vxor.u32 %v2456, 2147483648
        %v3365 = vxor.u32 %v2457, 2147483648
        %v3366 = vxor.u32 %v2458, 2147483648
        %v3367 = vxor.u32 %v2459, 2147483648
        %v3368 = vxor.u32 %v2460, 2147483648
        %v3369 = vxor.u32 %v2461, 2147483648
        %v3370 = vxor.u32 %v2462, 2147483648
        %v3371 = vxor.u32 %v2463, 2147483648
        %v3372 = vxor.u32 %v2464, 2147483648
        %v3373 = vxor.u32 %v2465, 2147483648
        %v3374 = vxor.u32 %v2466, 2147483648
        %v3375 = vxor.u32 %v2467, 2147483648
        %v3376 = vxor.u32 %v2468, 2147483648
        %v3377 = vxor.u32 %v2469, 2147483648
        %v3378 = vxor.u32 %v2470, 2147483648
        %v3379 = vxor.u32 %v2471, 2147483648
        %v3380 = vxor.u32 %v2472, 2147483648
        %v3381 = vxor.u32 %v2473, 2147483648
        %v3382 = vxor.u32 %v2474, 2147483648
        %v3383 = vxor.u32 %v2475, 2147483648
        %v3384 = vxor.u32 %v2476, 2147483648
        %v3385 = vxor.u32 %v2477, 2147483648
        %v3386 = vxor.u32 %v2478, 2147483648
        %v3387 = vxor.u32 %v2479, 2147483648
        %v3388 = vxor.u32 %v2480, 2147483648
        %v3389 = vxor.u32 %v2481, 2147483648
        %v3390 = vxor.u32 %v2482, 2147483648
        %v3391 = vxor.u32 %v2483, 2147483648
        %v3392 = vxor.u32 %v2484, 2147483648
        %v3393 = vxor.u32 %v2485, 2147483648
        %v3394 = vxor.u32 %v2486, 2147483648
        %v3395 = vxor.u32 %v2487, 2147483648
        %v3396 = vxor.u32 %v2488, 2147483648
        %v3397 = vxor.u32 %v2489, 2147483648
        %v3398 = vxor.u32 %v2490, 2147483648
        %v3399 = vxor.u32 %v2491, 2147483648
        %v3400 = vxor.u32 %v2492, 2147483648
        %v3401 = vxor.u32 %v2493, 2147483648
        %v3402 = vxor.u32 %v2494, 2147483648
        %v3403 = vxor.u32 %v2495, 2147483648
        %v3404 = vxor.u32 %v2496, 2147483648
        %v3405 = vxor.u32 %v2497, 2147483648
        %v3406 = vxor.u32 %v2498, 2147483648
        %v3407 = vxor.u32 %v2499, 2147483648
        %v3408 = vxor.u32 %v2500, 2147483648
        %v3409 = vxor.u32 %v2501, 2147483648
        %v3410 = vxor.u32 %v2502, 2147483648
        %v3411 = vxor.u32 %v2503, 2147483648
        %v3412 = vxor.u32 %v2504, 2147483648
        %v3413 = vxor.u32 %v2505, 2147483648
        %v3414 = vxor.u32 %v2506, 2147483648
        %v3415 = vxor.u32 %v2507, 2147483648
        %v3416 = vxor.u32 %v2508, 2147483648
        %v3417 = vxor.u32 %v2509, 2147483648
        %v3418 = vxor.u32 %v2510, 2147483648
        %v3419 = vxor.u32 %v2511, 2147483648
        %v3420 = vxor.u32 %v2512, 2147483648
        %v3421 = vxor.u32 %v2513, 2147483648
        %v3422 = vxor.u32 %v2514, 2147483648
        %v3423 = vxor.u32 %v2515, 2147483648
        %v3424 = vxor.u32 %v2516, 2147483648
        %v3425 = vxor.u32 %v2517, 2147483648
        %v3426 = vxor.u32 %v2518, 2147483648
        %v3427 = vxor.u32 %v2519, 2147483648
        %v3428 = vxor.u32 %v2520, 2147483648
        %v3429 = vxor.u32 %v2521, 2147483648
        %v3430 = vxor.u32 %v2522, 2147483648
        %v3431 = vxor.u32 %v2523, 2147483648
        %v3432 = vxor.u32 %v2524, 2147483648
        %v3433 = vxor.u32 %v2525, 2147483648
        %v3434 = vxor.u32 %v2526, 2147483648
        %v3435 = vxor.u32 %v2527, 2147483648
        %v3436 = vxor.u32 %v2528, 2147483648
        %v3437 = vxor.u32 %v2529, 2147483648
        %v3438 = vxor.u32 %v2530, 2147483648
        %v3439 = vxor.u32 %v2531, 2147483648
        %v3440 = vxor.u32 %v2532, 2147483648
        %v3441 = vxor.u32 %v2533, 2147483648
        %v3442 = vxor.u32 %v2534, 2147483648
        %v3443 = vxor.u32 %v2535, 2147483648
        %v3444 = vxor.u32 %v2536, 2147483648
        %v3445 = vxor.u32 %v2537, 2147483648
        %v3446 = vxor.u32 %v2538, 2147483648
        %v3447 = vxor.u32 %v2539, 2147483648
        %v3448 = vxor.u32 %v2540, 2147483648
        %v3449 = vxor.u32 %v2541, 2147483648
        %v3450 = vxor.u32 %v2542, 2147483648
        %v3451 = vxor.u32 %v2543, 2147483648
        %v3452 = vxor.u32 %v2544, 2147483648
        %v3453 = vxor.u32 %v2545, 2147483648
        %v3454 = vxor.u32 %v2546, 2147483648
        %v3455 = vxor.u32 %v2547, 2147483648
        %v3456 = vxor.u32 %v2548, 2147483648
        %v3457 = vxor.u32 %v2549, 2147483648
        %v3458 = vxor.u32 %v2550, 2147483648
        %v3459 = vxor.u32 %v2551, 2147483648
        %v3460 = vxor.u32 %v2552, 2147483648
        %v3461 = vxor.u32 %v2553, 2147483648
        %v3462 = vxor.u32 %v2554, 2147483648
        %v3463 = vxor.u32 %v2555, 2147483648
        %v3464 = vxor.u32 %v2556, 2147483648
        %v3465 = vxor.u32 %v2557, 2147483648
        %v3466 = vxor.u32 %v2558, 2147483648
        %v3467 = vxor.u32 %v2559, 2147483648
        %v3468 = vxor.u32 %v2560, 2147483648
        %v3469 = vxor.u32 %v2561, 2147483648
        %v3470 = vxor.u32 %v2562, 2147483648
        %v3471 = vxor.u32 %v2563, 2147483648
        %v3472 = vxor.u32 %v2564, 2147483648
        %v3473 = vxor.u32 %v2565, 2147483648
        %v3474 = vxor.u32 %v2566, 2147483648
        %v3475 = vxor.u32 %v2567, 2147483648
        %v3476 = vxor.u32 %v2568, 2147483648
        %v3477 = vxor.u32 %v2569, 2147483648
        %v3478 = vxor.u32 %v2570, 2147483648
        %v3479 = vxor.u32 %v2571, 2147483648
        %v3480 = vxor.u32 %v2572, 2147483648
        %v3481 = vxor.u32 %v2573, 2147483648
        %v3482 = vxor.u32 %v2574, 2147483648
        %v3483 = vxor.u32 %v2575, 2147483648
        %v3484 = vxor.u32 %v2576, 2147483648
        %v3485 = vxor.u32 %v2577, 2147483648
        %v3486 = vxor.u32 %v2578, 2147483648
        %v3487 = vxor.u32 %v2579, 2147483648
        %v3488 = vmul.f32 %v3360, 1.442695
        %v3489 = vpow.pop %v3488
        %v3490 = vmul.f32 %v3361, 1.442695
        %v3491 = vpow.pop %v3490
        %v3492 = vmul.f32 %v3362, 1.442695
        %v3493 = vpow.pop %v3492
        %v3494 = vmul.f32 %v3363, 1.442695
        %v3495 = vpow.pop %v3494
        %v3496 = vmul.f32 %v3364, 1.442695
        %v3497 = vpow.pop %v3496
        %v3498 = vmul.f32 %v3365, 1.442695
        %v3499 = vpow.pop %v3498
        %v3500 = vmul.f32 %v3366, 1.442695
        %v3501 = vpow.pop %v3500
        %v3502 = vmul.f32 %v3367, 1.442695
        %v3503 = vpow.pop %v3502
        %v3504 = vmul.f32 %v3368, 1.442695
        %v3505 = vpow.pop %v3504
        %v3506 = vmul.f32 %v3369, 1.442695
        %v3507 = vpow.pop %v3506
        %v3508 = vmul.f32 %v3370, 1.442695
        %v3509 = vpow.pop %v3508
        %v3510 = vmul.f32 %v3371, 1.442695
        %v3511 = vpow.pop %v3510
        %v3512 = vmul.f32 %v3372, 1.442695
        %v3513 = vpow.pop %v3512
        %v3514 = vmul.f32 %v3373, 1.442695
        %v3515 = vpow.pop %v3514
        %v3516 = vmul.f32 %v3374, 1.442695
        %v3517 = vpow.pop %v3516
        %v3518 = vmul.f32 %v3375, 1.442695
        %v3519 = vpow.pop %v3518
        %v3520 = vmul.f32 %v3376, 1.442695
        %v3521 = vpow.pop %v3520
        %v3522 = vmul.f32 %v3377, 1.442695
        %v3523 = vpow.pop %v3522
        %v3524 = vmul.f32 %v3378, 1.442695
        %v3525 = vpow.pop %v3524
        %v3526 = vmul.f32 %v3379, 1.442695
        %v3527 = vpow.pop %v3526
        %v3528 = vmul.f32 %v3380, 1.442695
        %v3529 = vpow.pop %v3528
        %v3530 = vmul.f32 %v3381, 1.442695
        %v3531 = vpow.pop %v3530
        %v3532 = vmul.f32 %v3382, 1.442695
        %v3533 = vpow.pop %v3532
        %v3534 = vmul.f32 %v3383, 1.442695
        %v3535 = vpow.pop %v3534
        %v3536 = vmul.f32 %v3384, 1.442695
        %v3537 = vpow.pop %v3536
        %v3538 = vmul.f32 %v3385, 1.442695
        %v3539 = vpow.pop %v3538
        %v3540 = vmul.f32 %v3386, 1.442695
        %v3541 = vpow.pop %v3540
        %v3542 = vmul.f32 %v3387, 1.442695
        %v3543 = vpow.pop %v3542
        %v3544 = vmul.f32 %v3388, 1.442695
        %v3545 = vpow.pop %v3544
        %v3546 = vmul.f32 %v3389, 1.442695
        %v3547 = vpow.pop %v3546
        %v3548 = vmul.f32 %v3390, 1.442695
        %v3549 = vpow.pop %v3548
        %v3550 = vmul.f32 %v3391, 1.442695
        %v3551 = vpow.pop %v3550
        %v3552 = vmul.f32 %v3392, 1.442695
        %v3553 = vpow.pop %v3552
        %v3554 = vmul.f32 %v3393, 1.442695
        %v3555 = vpow.pop %v3554
        %v3556 = vmul.f32 %v3394, 1.442695
        %v3557 = vpow.pop %v3556
        %v3558 = vmul.f32 %v3395, 1.442695
        %v3559 = vpow.pop %v3558
        %v3560 = vmul.f32 %v3396, 1.442695
        %v3561 = vpow.pop %v3560
        %v3562 = vmul.f32 %v3397, 1.442695
        %v3563 = vpow.pop %v3562
        %v3564 = vmul.f32 %v3398, 1.442695
        %v3565 = vpow.pop %v3564
        %v3566 = vmul.f32 %v3399, 1.442695
        %v3567 = vpow.pop %v3566
        %v3568 = vmul.f32 %v3400, 1.442695
        %v3569 = vpow.pop %v3568
        %v3570 = vmul.f32 %v3401, 1.442695
        %v3571 = vpow.pop %v3570
        %v3572 = vmul.f32 %v3402, 1.442695
        %v3573 = vpow.pop %v3572
        %v3574 = vmul.f32 %v3403, 1.442695
        %v3575 = vpow.pop %v3574
        %v3576 = vmul.f32 %v3404, 1.442695
        %v3577 = vpow.pop %v3576
        %v3578 = vmul.f32 %v3405, 1.442695
        %v3579 = vpow.pop %v3578
        %v3580 = vmul.f32 %v3406, 1.442695
        %v3581 = vpow.pop %v3580
        %v3582 = vmul.f32 %v3407, 1.442695
        %v3583 = vpow.pop %v3582
        %v3584 = vmul.f32 %v3408, 1.442695
        %v3585 = vpow.pop %v3584
        %v3586 = vmul.f32 %v3409, 1.442695
        %v3587 = vpow.pop %v3586
        %v3588 = vmul.f32 %v3410, 1.442695
        %v3589 = vpow.pop %v3588
        %v3590 = vmul.f32 %v3411, 1.442695
        %v3591 = vpow.pop %v3590
        %v3592 = vmul.f32 %v3412, 1.442695
        %v3593 = vpow.pop %v3592
        %v3594 = vmul.f32 %v3413, 1.442695
        %v3595 = vpow.pop %v3594
        %v3596 = vmul.f32 %v3414, 1.442695
        %v3597 = vpow.pop %v3596
        %v3598 = vmul.f32 %v3415, 1.442695
        %v3599 = vpow.pop %v3598
        %v3600 = vmul.f32 %v3416, 1.442695
        %v3601 = vpow.pop %v3600
        %v3602 = vmul.f32 %v3417, 1.442695
        %v3603 = vpow.pop %v3602
        %v3604 = vmul.f32 %v3418, 1.442695
        %v3605 = vpow.pop %v3604
        %v3606 = vmul.f32 %v3419, 1.442695
        %v3607 = vpow.pop %v3606
        %v3608 = vmul.f32 %v3420, 1.442695
        %v3609 = vpow.pop %v3608
        %v3610 = vmul.f32 %v3421, 1.442695
        %v3611 = vpow.pop %v3610
        %v3612 = vmul.f32 %v3422, 1.442695
        %v3613 = vpow.pop %v3612
        %v3614 = vmul.f32 %v3423, 1.442695
        %v3615 = vpow.pop %v3614
        %v3616 = vmul.f32 %v3424, 1.442695
        %v3617 = vpow.pop %v3616
        %v3618 = vmul.f32 %v3425, 1.442695
        %v3619 = vpow.pop %v3618
        %v3620 = vmul.f32 %v3426, 1.442695
        %v3621 = vpow.pop %v3620
        %v3622 = vmul.f32 %v3427, 1.442695
        %v3623 = vpow.pop %v3622
        %v3624 = vmul.f32 %v3428, 1.442695
        %v3625 = vpow.pop %v3624
        %v3626 = vmul.f32 %v3429, 1.442695
        %v3627 = vpow.pop %v3626
        %v3628 = vmul.f32 %v3430, 1.442695
        %v3629 = vpow.pop %v3628
        %v3630 = vmul.f32 %v3431, 1.442695
        %v3631 = vpow.pop %v3630
        %v3632 = vmul.f32 %v3432, 1.442695
        %v3633 = vpow.pop %v3632
        %v3634 = vmul.f32 %v3433, 1.442695
        %v3635 = vpow.pop %v3634
        %v3636 = vmul.f32 %v3434, 1.442695
        %v3637 = vpow.pop %v3636
        %v3638 = vmul.f32 %v3435, 1.442695
        %v3639 = vpow.pop %v3638
        %v3640 = vmul.f32 %v3436, 1.442695
        %v3641 = vpow.pop %v3640
        %v3642 = vmul.f32 %v3437, 1.442695
        %v3643 = vpow.pop %v3642
        %v3644 = vmul.f32 %v3438, 1.442695
        %v3645 = vpow.pop %v3644
        %v3646 = vmul.f32 %v3439, 1.442695
        %v3647 = vpow.pop %v3646
        %v3648 = vmul.f32 %v3440, 1.442695
        %v3649 = vpow.pop %v3648
        %v3650 = vmul.f32 %v3441, 1.442695
        %v3651 = vpow.pop %v3650
        %v3652 = vmul.f32 %v3442, 1.442695
        %v3653 = vpow.pop %v3652
        %v3654 = vmul.f32 %v3443, 1.442695
        %v3655 = vpow.pop %v3654
        %v3656 = vmul.f32 %v3444, 1.442695
        %v3657 = vpow.pop %v3656
        %v3658 = vmul.f32 %v3445, 1.442695
        %v3659 = vpow.pop %v3658
        %v3660 = vmul.f32 %v3446, 1.442695
        %v3661 = vpow.pop %v3660
        %v3662 = vmul.f32 %v3447, 1.442695
        %v3663 = vpow.pop %v3662
        %v3664 = vmul.f32 %v3448, 1.442695
        %v3665 = vpow.pop %v3664
        %v3666 = vmul.f32 %v3449, 1.442695
        %v3667 = vpow.pop %v3666
        %v3668 = vmul.f32 %v3450, 1.442695
        %v3669 = vpow.pop %v3668
        %v3670 = vmul.f32 %v3451, 1.442695
        %v3671 = vpow.pop %v3670
        %v3672 = vmul.f32 %v3452, 1.442695
        %v3673 = vpow.pop %v3672
        %v3674 = vmul.f32 %v3453, 1.442695
        %v3675 = vpow.pop %v3674
        %v3676 = vmul.f32 %v3454, 1.442695
        %v3677 = vpow.pop %v3676
        %v3678 = vmul.f32 %v3455, 1.442695
        %v3679 = vpow.pop %v3678
        %v3680 = vmul.f32 %v3456, 1.442695
        %v3681 = vpow.pop %v3680
        %v3682 = vmul.f32 %v3457, 1.442695
        %v3683 = vpow.pop %v3682
        %v3684 = vmul.f32 %v3458, 1.442695
        %v3685 = vpow.pop %v3684
        %v3686 = vmul.f32 %v3459, 1.442695
        %v3687 = vpow.pop %v3686
        %v3688 = vmul.f32 %v3460, 1.442695
        %v3689 = vpow.pop %v3688
        %v3690 = vmul.f32 %v3461, 1.442695
        %v3691 = vpow.pop %v3690
        %v3692 = vmul.f32 %v3462, 1.442695
        %v3693 = vpow.pop %v3692
        %v3694 = vmul.f32 %v3463, 1.442695
        %v3695 = vpow.pop %v3694
        %v3696 = vmul.f32 %v3464, 1.442695
        %v3697 = vpow.pop %v3696
        %v3698 = vmul.f32 %v3465, 1.442695
        %v3699 = vpow.pop %v3698
        %v3700 = vmul.f32 %v3466, 1.442695
        %v3701 = vpow.pop %v3700
        %v3702 = vmul.f32 %v3467, 1.442695
        %v3703 = vpow.pop %v3702
        %v3704 = vmul.f32 %v3468, 1.442695
        %v3705 = vpow.pop %v3704
        %v3706 = vmul.f32 %v3469, 1.442695
        %v3707 = vpow.pop %v3706
        %v3708 = vmul.f32 %v3470, 1.442695
        %v3709 = vpow.pop %v3708
        %v3710 = vmul.f32 %v3471, 1.442695
        %v3711 = vpow.pop %v3710
        %v3712 = vmul.f32 %v3472, 1.442695
        %v3713 = vpow.pop %v3712
        %v3714 = vmul.f32 %v3473, 1.442695
        %v3715 = vpow.pop %v3714
        %v3716 = vmul.f32 %v3474, 1.442695
        %v3717 = vpow.pop %v3716
        %v3718 = vmul.f32 %v3475, 1.442695
        %v3719 = vpow.pop %v3718
        %v3720 = vmul.f32 %v3476, 1.442695
        %v3721 = vpow.pop %v3720
        %v3722 = vmul.f32 %v3477, 1.442695
        %v3723 = vpow.pop %v3722
        %v3724 = vmul.f32 %v3478, 1.442695
        %v3725 = vpow.pop %v3724
        %v3726 = vmul.f32 %v3479, 1.442695
        %v3727 = vpow.pop %v3726
        %v3728 = vmul.f32 %v3480, 1.442695
        %v3729 = vpow.pop %v3728
        %v3730 = vmul.f32 %v3481, 1.442695
        %v3731 = vpow.pop %v3730
        %v3732 = vmul.f32 %v3482, 1.442695
        %v3733 = vpow.pop %v3732
        %v3734 = vmul.f32 %v3483, 1.442695
        %v3735 = vpow.pop %v3734
        %v3736 = vmul.f32 %v3484, 1.442695
        %v3737 = vpow.pop %v3736
        %v3738 = vmul.f32 %v3485, 1.442695
        %v3739 = vpow.pop %v3738
        %v3740 = vmul.f32 %v3486, 1.442695
        %v3741 = vpow.pop %v3740
        %v3742 = vmul.f32 %v3487, 1.442695
        %v3743 = vpow.pop %v3742
        %v3744 = vadd.f32 %v3489, 1.0
        %v3745 = vadd.f32 %v3491, 1.0
        %v3746 = vadd.f32 %v3493, 1.0
        %v3747 = vadd.f32 %v3495, 1.0
        %v3748 = vadd.f32 %v3497, 1.0
        %v3749 = vadd.f32 %v3499, 1.0
        %v3750 = vadd.f32 %v3501, 1.0
        %v3751 = vadd.f32 %v3503, 1.0
        %v3752 = vadd.f32 %v3505, 1.0
        %v3753 = vadd.f32 %v3507, 1.0
        %v3754 = vadd.f32 %v3509, 1.0
        %v3755 = vadd.f32 %v3511, 1.0
        %v3756 = vadd.f32 %v3513, 1.0
        %v3757 = vadd.f32 %v3515, 1.0
        %v3758 = vadd.f32 %v3517, 1.0
        %v3759 = vadd.f32 %v3519, 1.0
        %v3760 = vadd.f32 %v3521, 1.0
        %v3761 = vadd.f32 %v3523, 1.0
        %v3762 = vadd.f32 %v3525, 1.0
        %v3763 = vadd.f32 %v3527, 1.0
        %v3764 = vadd.f32 %v3529, 1.0
        %v3765 = vadd.f32 %v3531, 1.0
        %v3766 = vadd.f32 %v3533, 1.0
        %v3767 = vadd.f32 %v3535, 1.0
        %v3768 = vadd.f32 %v3537, 1.0
        %v3769 = vadd.f32 %v3539, 1.0
        %v3770 = vadd.f32 %v3541, 1.0
        %v3771 = vadd.f32 %v3543, 1.0
        %v3772 = vadd.f32 %v3545, 1.0
        %v3773 = vadd.f32 %v3547, 1.0
        %v3774 = vadd.f32 %v3549, 1.0
        %v3775 = vadd.f32 %v3551, 1.0
        %v3776 = vadd.f32 %v3553, 1.0
        %v3777 = vadd.f32 %v3555, 1.0
        %v3778 = vadd.f32 %v3557, 1.0
        %v3779 = vadd.f32 %v3559, 1.0
        %v3780 = vadd.f32 %v3561, 1.0
        %v3781 = vadd.f32 %v3563, 1.0
        %v3782 = vadd.f32 %v3565, 1.0
        %v3783 = vadd.f32 %v3567, 1.0
        %v3784 = vadd.f32 %v3569, 1.0
        %v3785 = vadd.f32 %v3571, 1.0
        %v3786 = vadd.f32 %v3573, 1.0
        %v3787 = vadd.f32 %v3575, 1.0
        %v3788 = vadd.f32 %v3577, 1.0
        %v3789 = vadd.f32 %v3579, 1.0
        %v3790 = vadd.f32 %v3581, 1.0
        %v3791 = vadd.f32 %v3583, 1.0
        %v3792 = vadd.f32 %v3585, 1.0
        %v3793 = vadd.f32 %v3587, 1.0
        %v3794 = vadd.f32 %v3589, 1.0
        %v3795 = vadd.f32 %v3591, 1.0
        %v3796 = vadd.f32 %v3593, 1.0
        %v3797 = vadd.f32 %v3595, 1.0
        %v3798 = vadd.f32 %v3597, 1.0
        %v3799 = vadd.f32 %v3599, 1.0
        %v3800 = vadd.f32 %v3601, 1.0
        %v3801 = vadd.f32 %v3603, 1.0
        %v3802 = vadd.f32 %v3605, 1.0
        %v3803 = vadd.f32 %v3607, 1.0
        %v3804 = vadd.f32 %v3609, 1.0
        %v3805 = vadd.f32 %v3611, 1.0
        %v3806 = vadd.f32 %v3613, 1.0
        %v3807 = vadd.f32 %v3615, 1.0
        %v3808 = vadd.f32 %v3617, 1.0
        %v3809 = vadd.f32 %v3619, 1.0
        %v3810 = vadd.f32 %v3621, 1.0
        %v3811 = vadd.f32 %v3623, 1.0
        %v3812 = vadd.f32 %v3625, 1.0
        %v3813 = vadd.f32 %v3627, 1.0
        %v3814 = vadd.f32 %v3629, 1.0
        %v3815 = vadd.f32 %v3631, 1.0
        %v3816 = vadd.f32 %v3633, 1.0
        %v3817 = vadd.f32 %v3635, 1.0
        %v3818 = vadd.f32 %v3637, 1.0
        %v3819 = vadd.f32 %v3639, 1.0
        %v3820 = vadd.f32 %v3641, 1.0
        %v3821 = vadd.f32 %v3643, 1.0
        %v3822 = vadd.f32 %v3645, 1.0
        %v3823 = vadd.f32 %v3647, 1.0
        %v3824 = vadd.f32 %v3649, 1.0
        %v3825 = vadd.f32 %v3651, 1.0
        %v3826 = vadd.f32 %v3653, 1.0
        %v3827 = vadd.f32 %v3655, 1.0
        %v3828 = vadd.f32 %v3657, 1.0
        %v3829 = vadd.f32 %v3659, 1.0
        %v3830 = vadd.f32 %v3661, 1.0
        %v3831 = vadd.f32 %v3663, 1.0
        %v3832 = vadd.f32 %v3665, 1.0
        %v3833 = vadd.f32 %v3667, 1.0
        %v3834 = vadd.f32 %v3669, 1.0
        %v3835 = vadd.f32 %v3671, 1.0
        %v3836 = vadd.f32 %v3673, 1.0
        %v3837 = vadd.f32 %v3675, 1.0
        %v3838 = vadd.f32 %v3677, 1.0
        %v3839 = vadd.f32 %v3679, 1.0
        %v3840 = vadd.f32 %v3681, 1.0
        %v3841 = vadd.f32 %v3683, 1.0
        %v3842 = vadd.f32 %v3685, 1.0
        %v3843 = vadd.f32 %v3687, 1.0
        %v3844 = vadd.f32 %v3689, 1.0
        %v3845 = vadd.f32 %v3691, 1.0
        %v3846 = vadd.f32 %v3693, 1.0
        %v3847 = vadd.f32 %v3695, 1.0
        %v3848 = vadd.f32 %v3697, 1.0
        %v3849 = vadd.f32 %v3699, 1.0
        %v3850 = vadd.f32 %v3701, 1.0
        %v3851 = vadd.f32 %v3703, 1.0
        %v3852 = vadd.f32 %v3705, 1.0
        %v3853 = vadd.f32 %v3707, 1.0
        %v3854 = vadd.f32 %v3709, 1.0
        %v3855 = vadd.f32 %v3711, 1.0
        %v3856 = vadd.f32 %v3713, 1.0
        %v3857 = vadd.f32 %v3715, 1.0
        %v3858 = vadd.f32 %v3717, 1.0
        %v3859 = vadd.f32 %v3719, 1.0
        %v3860 = vadd.f32 %v3721, 1.0
        %v3861 = vadd.f32 %v3723, 1.0
        %v3862 = vadd.f32 %v3725, 1.0
        %v3863 = vadd.f32 %v3727, 1.0
        %v3864 = vadd.f32 %v3729, 1.0
        %v3865 = vadd.f32 %v3731, 1.0
        %v3866 = vadd.f32 %v3733, 1.0
        %v3867 = vadd.f32 %v3735, 1.0
        %v3868 = vadd.f32 %v3737, 1.0
        %v3869 = vadd.f32 %v3739, 1.0
        %v3870 = vadd.f32 %v3741, 1.0
        %v3871 = vadd.f32 %v3743, 1.0
        %v3872 = vrcp.pop %v3744
        %v3873 = vmul.f32 1.0, %v3872
        %v3874 = vrcp.pop %v3745
        %v3875 = vmul.f32 1.0, %v3874
        %v3876 = vrcp.pop %v3746
        %v3877 = vmul.f32 1.0, %v3876
        %v3878 = vrcp.pop %v3747
        %v3879 = vmul.f32 1.0, %v3878
        %v3880 = vrcp.pop %v3748
        %v3881 = vmul.f32 1.0, %v3880
        %v3882 = vrcp.pop %v3749
        %v3883 = vmul.f32 1.0, %v3882
        %v3884 = vrcp.pop %v3750
        %v3885 = vmul.f32 1.0, %v3884
        %v3886 = vrcp.pop %v3751
        %v3887 = vmul.f32 1.0, %v3886
        %v3888 = vrcp.pop %v3752
        %v3889 = vmul.f32 1.0, %v3888
        %v3890 = vrcp.pop %v3753
        %v3891 = vmul.f32 1.0, %v3890
        %v3892 = vrcp.pop %v3754
        %v3893 = vmul.f32 1.0, %v3892
        %v3894 = vrcp.pop %v3755
        %v3895 = vmul.f32 1.0, %v3894
        %v3896 = vrcp.pop %v3756
        %v3897 = vmul.f32 1.0, %v3896
        %v3898 = vrcp.pop %v3757
        %v3899 = vmul.f32 1.0, %v3898
        %v3900 = vrcp.pop %v3758
        %v3901 = vmul.f32 1.0, %v3900
        %v3902 = vrcp.pop %v3759
        %v3903 = vmul.f32 1.0, %v3902
        %v3904 = vrcp.pop %v3760
        %v3905 = vmul.f32 1.0, %v3904
        %v3906 = vrcp.pop %v3761
        %v3907 = vmul.f32 1.0, %v3906
        %v3908 = vrcp.pop %v3762
        %v3909 = vmul.f32 1.0, %v3908
        %v3910 = vrcp.pop %v3763
        %v3911 = vmul.f32 1.0, %v3910
        %v3912 = vrcp.pop %v3764
        %v3913 = vmul.f32 1.0, %v3912
        %v3914 = vrcp.pop %v3765
        %v3915 = vmul.f32 1.0, %v3914
        %v3916 = vrcp.pop %v3766
        %v3917 = vmul.f32 1.0, %v3916
        %v3918 = vrcp.pop %v3767
        %v3919 = vmul.f32 1.0, %v3918
        %v3920 = vrcp.pop %v3768
        %v3921 = vmul.f32 1.0, %v3920
        %v3922 = vrcp.pop %v3769
        %v3923 = vmul.f32 1.0, %v3922
        %v3924 = vrcp.pop %v3770
        %v3925 = vmul.f32 1.0, %v3924
        %v3926 = vrcp.pop %v3771
        %v3927 = vmul.f32 1.0, %v3926
        %v3928 = vrcp.pop %v3772
        %v3929 = vmul.f32 1.0, %v3928
        %v3930 = vrcp.pop %v3773
        %v3931 = vmul.f32 1.0, %v3930
        %v3932 = vrcp.pop %v3774
        %v3933 = vmul.f32 1.0, %v3932
        %v3934 = vrcp.pop %v3775
        %v3935 = vmul.f32 1.0, %v3934
        %v3936 = vrcp.pop %v3776
        %v3937 = vmul.f32 1.0, %v3936
        %v3938 = vrcp.pop %v3777
        %v3939 = vmul.f32 1.0, %v3938
        %v3940 = vrcp.pop %v3778
        %v3941 = vmul.f32 1.0, %v3940
        %v3942 = vrcp.pop %v3779
        %v3943 = vmul.f32 1.0, %v3942
        %v3944 = vrcp.pop %v3780
        %v3945 = vmul.f32 1.0, %v3944
        %v3946 = vrcp.pop %v3781
        %v3947 = vmul.f32 1.0, %v3946
        %v3948 = vrcp.pop %v3782
        %v3949 = vmul.f32 1.0, %v3948
        %v3950 = vrcp.pop %v3783
        %v3951 = vmul.f32 1.0, %v3950
        %v3952 = vrcp.pop %v3784
        %v3953 = vmul.f32 1.0, %v3952
        %v3954 = vrcp.pop %v3785
        %v3955 = vmul.f32 1.0, %v3954
        %v3956 = vrcp.pop %v3786
        %v3957 = vmul.f32 1.0, %v3956
        %v3958 = vrcp.pop %v3787
        %v3959 = vmul.f32 1.0, %v3958
        %v3960 = vrcp.pop %v3788
        %v3961 = vmul.f32 1.0, %v3960
        %v3962 = vrcp.pop %v3789
        %v3963 = vmul.f32 1.0, %v3962
        %v3964 = vrcp.pop %v3790
        %v3965 = vmul.f32 1.0, %v3964
        %v3966 = vrcp.pop %v3791
        %v3967 = vmul.f32 1.0, %v3966
        %v3968 = vrcp.pop %v3792
        %v3969 = vmul.f32 1.0, %v3968
        %v3970 = vrcp.pop %v3793
        %v3971 = vmul.f32 1.0, %v3970
        %v3972 = vrcp.pop %v3794
        %v3973 = vmul.f32 1.0, %v3972
        %v3974 = vrcp.pop %v3795
        %v3975 = vmul.f32 1.0, %v3974
        %v3976 = vrcp.pop %v3796
        %v3977 = vmul.f32 1.0, %v3976
        %v3978 = vrcp.pop %v3797
        %v3979 = vmul.f32 1.0, %v3978
        %v3980 = vrcp.pop %v3798
        %v3981 = vmul.f32 1.0, %v3980
        %v3982 = vrcp.pop %v3799
        %v3983 = vmul.f32 1.0, %v3982
        %v3984 = vrcp.pop %v3800
        %v3985 = vmul.f32 1.0, %v3984
        %v3986 = vrcp.pop %v3801
        %v3987 = vmul.f32 1.0, %v3986
        %v3988 = vrcp.pop %v3802
        %v3989 = vmul.f32 1.0, %v3988
        %v3990 = vrcp.pop %v3803
        %v3991 = vmul.f32 1.0, %v3990
        %v3992 = vrcp.pop %v3804
        %v3993 = vmul.f32 1.0, %v3992
        %v3994 = vrcp.pop %v3805
        %v3995 = vmul.f32 1.0, %v3994
        %v3996 = vrcp.pop %v3806
        %v3997 = vmul.f32 1.0, %v3996
        %v3998 = vrcp.pop %v3807
        %v3999 = vmul.f32 1.0, %v3998
        %v4000 = vrcp.pop %v3808
        %v4001 = vmul.f32 1.0, %v4000
        %v4002 = vrcp.pop %v3809
        %v4003 = vmul.f32 1.0, %v4002
        %v4004 = vrcp.pop %v3810
        %v4005 = vmul.f32 1.0, %v4004
        %v4006 = vrcp.pop %v3811
        %v4007 = vmul.f32 1.0, %v4006
        %v4008 = vrcp.pop %v3812
        %v4009 = vmul.f32 1.0, %v4008
        %v4010 = vrcp.pop %v3813
        %v4011 = vmul.f32 1.0, %v4010
        %v4012 = vrcp.pop %v3814
        %v4013 = vmul.f32 1.0, %v4012
        %v4014 = vrcp.pop %v3815
        %v4015 = vmul.f32 1.0, %v4014
        %v4016 = vrcp.pop %v3816
        %v4017 = vmul.f32 1.0, %v4016
        %v4018 = vrcp.pop %v3817
        %v4019 = vmul.f32 1.0, %v4018
        %v4020 = vrcp.pop %v3818
        %v4021 = vmul.f32 1.0, %v4020
        %v4022 = vrcp.pop %v3819
        %v4023 = vmul.f32 1.0, %v4022
        %v4024 = vrcp.pop %v3820
        %v4025 = vmul.f32 1.0, %v4024
        %v4026 = vrcp.pop %v3821
        %v4027 = vmul.f32 1.0, %v4026
        %v4028 = vrcp.pop %v3822
        %v4029 = vmul.f32 1.0, %v4028
        %v4030 = vrcp.pop %v3823
        %v4031 = vmul.f32 1.0, %v4030
        %v4032 = vrcp.pop %v3824
        %v4033 = vmul.f32 1.0, %v4032
        %v4034 = vrcp.pop %v3825
        %v4035 = vmul.f32 1.0, %v4034
        %v4036 = vrcp.pop %v3826
        %v4037 = vmul.f32 1.0, %v4036
        %v4038 = vrcp.pop %v3827
        %v4039 = vmul.f32 1.0, %v4038
        %v4040 = vrcp.pop %v3828
        %v4041 = vmul.f32 1.0, %v4040
        %v4042 = vrcp.pop %v3829
        %v4043 = vmul.f32 1.0, %v4042
        %v4044 = vrcp.pop %v3830
        %v4045 = vmul.f32 1.0, %v4044
        %v4046 = vrcp.pop %v3831
        %v4047 = vmul.f32 1.0, %v4046
        %v4048 = vrcp.pop %v3832
        %v4049 = vmul.f32 1.0, %v4048
        %v4050 = vrcp.pop %v3833
        %v4051 = vmul.f32 1.0, %v4050
        %v4052 = vrcp.pop %v3834
        %v4053 = vmul.f32 1.0, %v4052
        %v4054 = vrcp.pop %v3835
        %v4055 = vmul.f32 1.0, %v4054
        %v4056 = vrcp.pop %v3836
        %v4057 = vmul.f32 1.0, %v4056
        %v4058 = vrcp.pop %v3837
        %v4059 = vmul.f32 1.0, %v4058
        %v4060 = vrcp.pop %v3838
        %v4061 = vmul.f32 1.0, %v4060
        %v4062 = vrcp.pop %v3839
        %v4063 = vmul.f32 1.0, %v4062
        %v4064 = vrcp.pop %v3840
        %v4065 = vmul.f32 1.0, %v4064
        %v4066 = vrcp.pop %v3841
        %v4067 = vmul.f32 1.0, %v4066
        %v4068 = vrcp.pop %v3842
        %v4069 = vmul.f32 1.0, %v4068
        %v4070 = vrcp.pop %v3843
        %v4071 = vmul.f32 1.0, %v4070
        %v4072 = vrcp.pop %v3844
        %v4073 = vmul.f32 1.0, %v4072
        %v4074 = vrcp.pop %v3845
        %v4075 = vmul.f32 1.0, %v4074
        %v4076 = vrcp.pop %v3846
        %v4077 = vmul.f32 1.0, %v4076
        %v4078 = vrcp.pop %v3847
        %v4079 = vmul.f32 1.0, %v4078
        %v4080 = vrcp.pop %v3848
        %v4081 = vmul.f32 1.0, %v4080
        %v4082 = vrcp.pop %v3849
        %v4083 = vmul.f32 1.0, %v4082
        %v4084 = vrcp.pop %v3850
        %v4085 = vmul.f32 1.0, %v4084
        %v4086 = vrcp.pop %v3851
        %v4087 = vmul.f32 1.0, %v4086
        %v4088 = vrcp.pop %v3852
        %v4089 = vmul.f32 1.0, %v4088
        %v4090 = vrcp.pop %v3853
        %v4091 = vmul.f32 1.0, %v4090
        %v4092 = vrcp.pop %v3854
        %v4093 = vmul.f32 1.0, %v4092
        %v4094 = vrcp.pop %v3855
        %v4095 = vmul.f32 1.0, %v4094
        %v4096 = vrcp.pop %v3856
        %v4097 = vmul.f32 1.0, %v4096
        %v4098 = vrcp.pop %v3857
        %v4099 = vmul.f32 1.0, %v4098
        %v4100 = vrcp.pop %v3858
        %v4101 = vmul.f32 1.0, %v4100
        %v4102 = vrcp.pop %v3859
        %v4103 = vmul.f32 1.0, %v4102
        %v4104 = vrcp.pop %v3860
        %v4105 = vmul.f32 1.0, %v4104
        %v4106 = vrcp.pop %v3861
        %v4107 = vmul.f32 1.0, %v4106
        %v4108 = vrcp.pop %v3862
        %v4109 = vmul.f32 1.0, %v4108
        %v4110 = vrcp.pop %v3863
        %v4111 = vmul.f32 1.0, %v4110
        %v4112 = vrcp.pop %v3864
        %v4113 = vmul.f32 1.0, %v4112
        %v4114 = vrcp.pop %v3865
        %v4115 = vmul.f32 1.0, %v4114
        %v4116 = vrcp.pop %v3866
        %v4117 = vmul.f32 1.0, %v4116
        %v4118 = vrcp.pop %v3867
        %v4119 = vmul.f32 1.0, %v4118
        %v4120 = vrcp.pop %v3868
        %v4121 = vmul.f32 1.0, %v4120
        %v4122 = vrcp.pop %v3869
        %v4123 = vmul.f32 1.0, %v4122
        %v4124 = vrcp.pop %v3870
        %v4125 = vmul.f32 1.0, %v4124
        %v4126 = vrcp.pop %v3871
        %v4127 = vmul.f32 1.0, %v4126
        %v4128 = vxor.u32 %v3232, 2147483648
        %v4129 = vxor.u32 %v3233, 2147483648
        %v4130 = vxor.u32 %v3234, 2147483648
        %v4131 = vxor.u32 %v3235, 2147483648
        %v4132 = vxor.u32 %v3236, 2147483648
        %v4133 = vxor.u32 %v3237, 2147483648
        %v4134 = vxor.u32 %v3238, 2147483648
        %v4135 = vxor.u32 %v3239, 2147483648
        %v4136 = vxor.u32 %v3240, 2147483648
        %v4137 = vxor.u32 %v3241, 2147483648
        %v4138 = vxor.u32 %v3242, 2147483648
        %v4139 = vxor.u32 %v3243, 2147483648
        %v4140 = vxor.u32 %v3244, 2147483648
        %v4141 = vxor.u32 %v3245, 2147483648
        %v4142 = vxor.u32 %v3246, 2147483648
        %v4143 = vxor.u32 %v3247, 2147483648
        %v4144 = vxor.u32 %v3248, 2147483648
        %v4145 = vxor.u32 %v3249, 2147483648
        %v4146 = vxor.u32 %v3250, 2147483648
        %v4147 = vxor.u32 %v3251, 2147483648
        %v4148 = vxor.u32 %v3252, 2147483648
        %v4149 = vxor.u32 %v3253, 2147483648
        %v4150 = vxor.u32 %v3254, 2147483648
        %v4151 = vxor.u32 %v3255, 2147483648
        %v4152 = vxor.u32 %v3256, 2147483648
        %v4153 = vxor.u32 %v3257, 2147483648
        %v4154 = vxor.u32 %v3258, 2147483648
        %v4155 = vxor.u32 %v3259, 2147483648
        %v4156 = vxor.u32 %v3260, 2147483648
        %v4157 = vxor.u32 %v3261, 2147483648
        %v4158 = vxor.u32 %v3262, 2147483648
        %v4159 = vxor.u32 %v3263, 2147483648
        %v4160 = vxor.u32 %v3264, 2147483648
        %v4161 = vxor.u32 %v3265, 2147483648
        %v4162 = vxor.u32 %v3266, 2147483648
        %v4163 = vxor.u32 %v3267, 2147483648
        %v4164 = vxor.u32 %v3268, 2147483648
        %v4165 = vxor.u32 %v3269, 2147483648
        %v4166 = vxor.u32 %v3270, 2147483648
        %v4167 = vxor.u32 %v3271, 2147483648
        %v4168 = vxor.u32 %v3272, 2147483648
        %v4169 = vxor.u32 %v3273, 2147483648
        %v4170 = vxor.u32 %v3274, 2147483648
        %v4171 = vxor.u32 %v3275, 2147483648
        %v4172 = vxor.u32 %v3276, 2147483648
        %v4173 = vxor.u32 %v3277, 2147483648
        %v4174 = vxor.u32 %v3278, 2147483648
        %v4175 = vxor.u32 %v3279, 2147483648
        %v4176 = vxor.u32 %v3280, 2147483648
        %v4177 = vxor.u32 %v3281, 2147483648
        %v4178 = vxor.u32 %v3282, 2147483648
        %v4179 = vxor.u32 %v3283, 2147483648
        %v4180 = vxor.u32 %v3284, 2147483648
        %v4181 = vxor.u32 %v3285, 2147483648
        %v4182 = vxor.u32 %v3286, 2147483648
        %v4183 = vxor.u32 %v3287, 2147483648
        %v4184 = vxor.u32 %v3288, 2147483648
        %v4185 = vxor.u32 %v3289, 2147483648
        %v4186 = vxor.u32 %v3290, 2147483648
        %v4187 = vxor.u32 %v3291, 2147483648
        %v4188 = vxor.u32 %v3292, 2147483648
        %v4189 = vxor.u32 %v3293, 2147483648
        %v4190 = vxor.u32 %v3294, 2147483648
        %v4191 = vxor.u32 %v3295, 2147483648
        %v4192 = vxor.u32 %v3296, 2147483648
        %v4193 = vxor.u32 %v3297, 2147483648
        %v4194 = vxor.u32 %v3298, 2147483648
        %v4195 = vxor.u32 %v3299, 2147483648
        %v4196 = vxor.u32 %v3300, 2147483648
        %v4197 = vxor.u32 %v3301, 2147483648
        %v4198 = vxor.u32 %v3302, 2147483648
        %v4199 = vxor.u32 %v3303, 2147483648
        %v4200 = vxor.u32 %v3304, 2147483648
        %v4201 = vxor.u32 %v3305, 2147483648
        %v4202 = vxor.u32 %v3306, 2147483648
        %v4203 = vxor.u32 %v3307, 2147483648
        %v4204 = vxor.u32 %v3308, 2147483648
        %v4205 = vxor.u32 %v3309, 2147483648
        %v4206 = vxor.u32 %v3310, 2147483648
        %v4207 = vxor.u32 %v3311, 2147483648
        %v4208 = vxor.u32 %v3312, 2147483648
        %v4209 = vxor.u32 %v3313, 2147483648
        %v4210 = vxor.u32 %v3314, 2147483648
        %v4211 = vxor.u32 %v3315, 2147483648
        %v4212 = vxor.u32 %v3316, 2147483648
        %v4213 = vxor.u32 %v3317, 2147483648
        %v4214 = vxor.u32 %v3318, 2147483648
        %v4215 = vxor.u32 %v3319, 2147483648
        %v4216 = vxor.u32 %v3320, 2147483648
        %v4217 = vxor.u32 %v3321, 2147483648
        %v4218 = vxor.u32 %v3322, 2147483648
        %v4219 = vxor.u32 %v3323, 2147483648
        %v4220 = vxor.u32 %v3324, 2147483648
        %v4221 = vxor.u32 %v3325, 2147483648
        %v4222 = vxor.u32 %v3326, 2147483648
        %v4223 = vxor.u32 %v3327, 2147483648
        %v4224 = vxor.u32 %v3328, 2147483648
        %v4225 = vxor.u32 %v3329, 2147483648
        %v4226 = vxor.u32 %v3330, 2147483648
        %v4227 = vxor.u32 %v3331, 2147483648
        %v4228 = vxor.u32 %v3332, 2147483648
        %v4229 = vxor.u32 %v3333, 2147483648
        %v4230 = vxor.u32 %v3334, 2147483648
        %v4231 = vxor.u32 %v3335, 2147483648
        %v4232 = vxor.u32 %v3336, 2147483648
        %v4233 = vxor.u32 %v3337, 2147483648
        %v4234 = vxor.u32 %v3338, 2147483648
        %v4235 = vxor.u32 %v3339, 2147483648
        %v4236 = vxor.u32 %v3340, 2147483648
        %v4237 = vxor.u32 %v3341, 2147483648
        %v4238 = vxor.u32 %v3342, 2147483648
        %v4239 = vxor.u32 %v3343, 2147483648
        %v4240 = vxor.u32 %v3344, 2147483648
        %v4241 = vxor.u32 %v3345, 2147483648
        %v4242 = vxor.u32 %v3346, 2147483648
        %v4243 = vxor.u32 %v3347, 2147483648
        %v4244 = vxor.u32 %v3348, 2147483648
        %v4245 = vxor.u32 %v3349, 2147483648
        %v4246 = vxor.u32 %v3350, 2147483648
        %v4247 = vxor.u32 %v3351, 2147483648
        %v4248 = vxor.u32 %v3352, 2147483648
        %v4249 = vxor.u32 %v3353, 2147483648
        %v4250 = vxor.u32 %v3354, 2147483648
        %v4251 = vxor.u32 %v3355, 2147483648
        %v4252 = vxor.u32 %v3356, 2147483648
        %v4253 = vxor.u32 %v3357, 2147483648
        %v4254 = vxor.u32 %v3358, 2147483648
        %v4255 = vxor.u32 %v3359, 2147483648
        %v4256 = vmul.f32 %v4128, 1.442695
        %v4257 = vpow.pop %v4256
        %v4258 = vmul.f32 %v4129, 1.442695
        %v4259 = vpow.pop %v4258
        %v4260 = vmul.f32 %v4130, 1.442695
        %v4261 = vpow.pop %v4260
        %v4262 = vmul.f32 %v4131, 1.442695
        %v4263 = vpow.pop %v4262
        %v4264 = vmul.f32 %v4132, 1.442695
        %v4265 = vpow.pop %v4264
        %v4266 = vmul.f32 %v4133, 1.442695
        %v4267 = vpow.pop %v4266
        %v4268 = vmul.f32 %v4134, 1.442695
        %v4269 = vpow.pop %v4268
        %v4270 = vmul.f32 %v4135, 1.442695
        %v4271 = vpow.pop %v4270
        %v4272 = vmul.f32 %v4136, 1.442695
        %v4273 = vpow.pop %v4272
        %v4274 = vmul.f32 %v4137, 1.442695
        %v4275 = vpow.pop %v4274
        %v4276 = vmul.f32 %v4138, 1.442695
        %v4277 = vpow.pop %v4276
        %v4278 = vmul.f32 %v4139, 1.442695
        %v4279 = vpow.pop %v4278
        %v4280 = vmul.f32 %v4140, 1.442695
        %v4281 = vpow.pop %v4280
        %v4282 = vmul.f32 %v4141, 1.442695
        %v4283 = vpow.pop %v4282
        %v4284 = vmul.f32 %v4142, 1.442695
        %v4285 = vpow.pop %v4284
        %v4286 = vmul.f32 %v4143, 1.442695
        %v4287 = vpow.pop %v4286
        %v4288 = vmul.f32 %v4144, 1.442695
        %v4289 = vpow.pop %v4288
        %v4290 = vmul.f32 %v4145, 1.442695
        %v4291 = vpow.pop %v4290
        %v4292 = vmul.f32 %v4146, 1.442695
        %v4293 = vpow.pop %v4292
        %v4294 = vmul.f32 %v4147, 1.442695
        %v4295 = vpow.pop %v4294
        %v4296 = vmul.f32 %v4148, 1.442695
        %v4297 = vpow.pop %v4296
        %v4298 = vmul.f32 %v4149, 1.442695
        %v4299 = vpow.pop %v4298
        %v4300 = vmul.f32 %v4150, 1.442695
        %v4301 = vpow.pop %v4300
        %v4302 = vmul.f32 %v4151, 1.442695
        %v4303 = vpow.pop %v4302
        %v4304 = vmul.f32 %v4152, 1.442695
        %v4305 = vpow.pop %v4304
        %v4306 = vmul.f32 %v4153, 1.442695
        %v4307 = vpow.pop %v4306
        %v4308 = vmul.f32 %v4154, 1.442695
        %v4309 = vpow.pop %v4308
        %v4310 = vmul.f32 %v4155, 1.442695
        %v4311 = vpow.pop %v4310
        %v4312 = vmul.f32 %v4156, 1.442695
        %v4313 = vpow.pop %v4312
        %v4314 = vmul.f32 %v4157, 1.442695
        %v4315 = vpow.pop %v4314
        %v4316 = vmul.f32 %v4158, 1.442695
        %v4317 = vpow.pop %v4316
        %v4318 = vmul.f32 %v4159, 1.442695
        %v4319 = vpow.pop %v4318
        %v4320 = vmul.f32 %v4160, 1.442695
        %v4321 = vpow.pop %v4320
        %v4322 = vmul.f32 %v4161, 1.442695
        %v4323 = vpow.pop %v4322
        %v4324 = vmul.f32 %v4162, 1.442695
        %v4325 = vpow.pop %v4324
        %v4326 = vmul.f32 %v4163, 1.442695
        %v4327 = vpow.pop %v4326
        %v4328 = vmul.f32 %v4164, 1.442695
        %v4329 = vpow.pop %v4328
        %v4330 = vmul.f32 %v4165, 1.442695
        %v4331 = vpow.pop %v4330
        %v4332 = vmul.f32 %v4166, 1.442695
        %v4333 = vpow.pop %v4332
        %v4334 = vmul.f32 %v4167, 1.442695
        %v4335 = vpow.pop %v4334
        %v4336 = vmul.f32 %v4168, 1.442695
        %v4337 = vpow.pop %v4336
        %v4338 = vmul.f32 %v4169, 1.442695
        %v4339 = vpow.pop %v4338
        %v4340 = vmul.f32 %v4170, 1.442695
        %v4341 = vpow.pop %v4340
        %v4342 = vmul.f32 %v4171, 1.442695
        %v4343 = vpow.pop %v4342
        %v4344 = vmul.f32 %v4172, 1.442695
        %v4345 = vpow.pop %v4344
        %v4346 = vmul.f32 %v4173, 1.442695
        %v4347 = vpow.pop %v4346
        %v4348 = vmul.f32 %v4174, 1.442695
        %v4349 = vpow.pop %v4348
        %v4350 = vmul.f32 %v4175, 1.442695
        %v4351 = vpow.pop %v4350
        %v4352 = vmul.f32 %v4176, 1.442695
        %v4353 = vpow.pop %v4352
        %v4354 = vmul.f32 %v4177, 1.442695
        %v4355 = vpow.pop %v4354
        %v4356 = vmul.f32 %v4178, 1.442695
        %v4357 = vpow.pop %v4356
        %v4358 = vmul.f32 %v4179, 1.442695
        %v4359 = vpow.pop %v4358
        %v4360 = vmul.f32 %v4180, 1.442695
        %v4361 = vpow.pop %v4360
        %v4362 = vmul.f32 %v4181, 1.442695
        %v4363 = vpow.pop %v4362
        %v4364 = vmul.f32 %v4182, 1.442695
        %v4365 = vpow.pop %v4364
        %v4366 = vmul.f32 %v4183, 1.442695
        %v4367 = vpow.pop %v4366
        %v4368 = vmul.f32 %v4184, 1.442695
        %v4369 = vpow.pop %v4368
        %v4370 = vmul.f32 %v4185, 1.442695
        %v4371 = vpow.pop %v4370
        %v4372 = vmul.f32 %v4186, 1.442695
        %v4373 = vpow.pop %v4372
        %v4374 = vmul.f32 %v4187, 1.442695
        %v4375 = vpow.pop %v4374
        %v4376 = vmul.f32 %v4188, 1.442695
        %v4377 = vpow.pop %v4376
        %v4378 = vmul.f32 %v4189, 1.442695
        %v4379 = vpow.pop %v4378
        %v4380 = vmul.f32 %v4190, 1.442695
        %v4381 = vpow.pop %v4380
        %v4382 = vmul.f32 %v4191, 1.442695
        %v4383 = vpow.pop %v4382
        %v4384 = vmul.f32 %v4192, 1.442695
        %v4385 = vpow.pop %v4384
        %v4386 = vmul.f32 %v4193, 1.442695
        %v4387 = vpow.pop %v4386
        %v4388 = vmul.f32 %v4194, 1.442695
        %v4389 = vpow.pop %v4388
        %v4390 = vmul.f32 %v4195, 1.442695
        %v4391 = vpow.pop %v4390
        %v4392 = vmul.f32 %v4196, 1.442695
        %v4393 = vpow.pop %v4392
        %v4394 = vmul.f32 %v4197, 1.442695
        %v4395 = vpow.pop %v4394
        %v4396 = vmul.f32 %v4198, 1.442695
        %v4397 = vpow.pop %v4396
        %v4398 = vmul.f32 %v4199, 1.442695
        %v4399 = vpow.pop %v4398
        %v4400 = vmul.f32 %v4200, 1.442695
        %v4401 = vpow.pop %v4400
        %v4402 = vmul.f32 %v4201, 1.442695
        %v4403 = vpow.pop %v4402
        %v4404 = vmul.f32 %v4202, 1.442695
        %v4405 = vpow.pop %v4404
        %v4406 = vmul.f32 %v4203, 1.442695
        %v4407 = vpow.pop %v4406
        %v4408 = vmul.f32 %v4204, 1.442695
        %v4409 = vpow.pop %v4408
        %v4410 = vmul.f32 %v4205, 1.442695
        %v4411 = vpow.pop %v4410
        %v4412 = vmul.f32 %v4206, 1.442695
        %v4413 = vpow.pop %v4412
        %v4414 = vmul.f32 %v4207, 1.442695
        %v4415 = vpow.pop %v4414
        %v4416 = vmul.f32 %v4208, 1.442695
        %v4417 = vpow.pop %v4416
        %v4418 = vmul.f32 %v4209, 1.442695
        %v4419 = vpow.pop %v4418
        %v4420 = vmul.f32 %v4210, 1.442695
        %v4421 = vpow.pop %v4420
        %v4422 = vmul.f32 %v4211, 1.442695
        %v4423 = vpow.pop %v4422
        %v4424 = vmul.f32 %v4212, 1.442695
        %v4425 = vpow.pop %v4424
        %v4426 = vmul.f32 %v4213, 1.442695
        %v4427 = vpow.pop %v4426
        %v4428 = vmul.f32 %v4214, 1.442695
        %v4429 = vpow.pop %v4428
        %v4430 = vmul.f32 %v4215, 1.442695
        %v4431 = vpow.pop %v4430
        %v4432 = vmul.f32 %v4216, 1.442695
        %v4433 = vpow.pop %v4432
        %v4434 = vmul.f32 %v4217, 1.442695
        %v4435 = vpow.pop %v4434
        %v4436 = vmul.f32 %v4218, 1.442695
        %v4437 = vpow.pop %v4436
        %v4438 = vmul.f32 %v4219, 1.442695
        %v4439 = vpow.pop %v4438
        %v4440 = vmul.f32 %v4220, 1.442695
        %v4441 = vpow.pop %v4440
        %v4442 = vmul.f32 %v4221, 1.442695
        %v4443 = vpow.pop %v4442
        %v4444 = vmul.f32 %v4222, 1.442695
        %v4445 = vpow.pop %v4444
        %v4446 = vmul.f32 %v4223, 1.442695
        %v4447 = vpow.pop %v4446
        %v4448 = vmul.f32 %v4224, 1.442695
        %v4449 = vpow.pop %v4448
        %v4450 = vmul.f32 %v4225, 1.442695
        %v4451 = vpow.pop %v4450
        %v4452 = vmul.f32 %v4226, 1.442695
        %v4453 = vpow.pop %v4452
        %v4454 = vmul.f32 %v4227, 1.442695
        %v4455 = vpow.pop %v4454
        %v4456 = vmul.f32 %v4228, 1.442695
        %v4457 = vpow.pop %v4456
        %v4458 = vmul.f32 %v4229, 1.442695
        %v4459 = vpow.pop %v4458
        %v4460 = vmul.f32 %v4230, 1.442695
        %v4461 = vpow.pop %v4460
        %v4462 = vmul.f32 %v4231, 1.442695
        %v4463 = vpow.pop %v4462
        %v4464 = vmul.f32 %v4232, 1.442695
        %v4465 = vpow.pop %v4464
        %v4466 = vmul.f32 %v4233, 1.442695
        %v4467 = vpow.pop %v4466
        %v4468 = vmul.f32 %v4234, 1.442695
        %v4469 = vpow.pop %v4468
        %v4470 = vmul.f32 %v4235, 1.442695
        %v4471 = vpow.pop %v4470
        %v4472 = vmul.f32 %v4236, 1.442695
        %v4473 = vpow.pop %v4472
        %v4474 = vmul.f32 %v4237, 1.442695
        %v4475 = vpow.pop %v4474
        %v4476 = vmul.f32 %v4238, 1.442695
        %v4477 = vpow.pop %v4476
        %v4478 = vmul.f32 %v4239, 1.442695
        %v4479 = vpow.pop %v4478
        %v4480 = vmul.f32 %v4240, 1.442695
        %v4481 = vpow.pop %v4480
        %v4482 = vmul.f32 %v4241, 1.442695
        %v4483 = vpow.pop %v4482
        %v4484 = vmul.f32 %v4242, 1.442695
        %v4485 = vpow.pop %v4484
        %v4486 = vmul.f32 %v4243, 1.442695
        %v4487 = vpow.pop %v4486
        %v4488 = vmul.f32 %v4244, 1.442695
        %v4489 = vpow.pop %v4488
        %v4490 = vmul.f32 %v4245, 1.442695
        %v4491 = vpow.pop %v4490
        %v4492 = vmul.f32 %v4246, 1.442695
        %v4493 = vpow.pop %v4492
        %v4494 = vmul.f32 %v4247, 1.442695
        %v4495 = vpow.pop %v4494
        %v4496 = vmul.f32 %v4248, 1.442695
        %v4497 = vpow.pop %v4496
        %v4498 = vmul.f32 %v4249, 1.442695
        %v4499 = vpow.pop %v4498
        %v4500 = vmul.f32 %v4250, 1.442695
        %v4501 = vpow.pop %v4500
        %v4502 = vmul.f32 %v4251, 1.442695
        %v4503 = vpow.pop %v4502
        %v4504 = vmul.f32 %v4252, 1.442695
        %v4505 = vpow.pop %v4504
        %v4506 = vmul.f32 %v4253, 1.442695
        %v4507 = vpow.pop %v4506
        %v4508 = vmul.f32 %v4254, 1.442695
        %v4509 = vpow.pop %v4508
        %v4510 = vmul.f32 %v4255, 1.442695
        %v4511 = vpow.pop %v4510
        %v4512 = vadd.f32 %v4257, 1.0
        %v4513 = vadd.f32 %v4259, 1.0
        %v4514 = vadd.f32 %v4261, 1.0
        %v4515 = vadd.f32 %v4263, 1.0
        %v4516 = vadd.f32 %v4265, 1.0
        %v4517 = vadd.f32 %v4267, 1.0
        %v4518 = vadd.f32 %v4269, 1.0
        %v4519 = vadd.f32 %v4271, 1.0
        %v4520 = vadd.f32 %v4273, 1.0
        %v4521 = vadd.f32 %v4275, 1.0
        %v4522 = vadd.f32 %v4277, 1.0
        %v4523 = vadd.f32 %v4279, 1.0
        %v4524 = vadd.f32 %v4281, 1.0
        %v4525 = vadd.f32 %v4283, 1.0
        %v4526 = vadd.f32 %v4285, 1.0
        %v4527 = vadd.f32 %v4287, 1.0
        %v4528 = vadd.f32 %v4289, 1.0
        %v4529 = vadd.f32 %v4291, 1.0
        %v4530 = vadd.f32 %v4293, 1.0
        %v4531 = vadd.f32 %v4295, 1.0
        %v4532 = vadd.f32 %v4297, 1.0
        %v4533 = vadd.f32 %v4299, 1.0
        %v4534 = vadd.f32 %v4301, 1.0
        %v4535 = vadd.f32 %v4303, 1.0
        %v4536 = vadd.f32 %v4305, 1.0
        %v4537 = vadd.f32 %v4307, 1.0
        %v4538 = vadd.f32 %v4309, 1.0
        %v4539 = vadd.f32 %v4311, 1.0
        %v4540 = vadd.f32 %v4313, 1.0
        %v4541 = vadd.f32 %v4315, 1.0
        %v4542 = vadd.f32 %v4317, 1.0
        %v4543 = vadd.f32 %v4319, 1.0
        %v4544 = vadd.f32 %v4321, 1.0
        %v4545 = vadd.f32 %v4323, 1.0
        %v4546 = vadd.f32 %v4325, 1.0
        %v4547 = vadd.f32 %v4327, 1.0
        %v4548 = vadd.f32 %v4329, 1.0
        %v4549 = vadd.f32 %v4331, 1.0
        %v4550 = vadd.f32 %v4333, 1.0
        %v4551 = vadd.f32 %v4335, 1.0
        %v4552 = vadd.f32 %v4337, 1.0
        %v4553 = vadd.f32 %v4339, 1.0
        %v4554 = vadd.f32 %v4341, 1.0
        %v4555 = vadd.f32 %v4343, 1.0
        %v4556 = vadd.f32 %v4345, 1.0
        %v4557 = vadd.f32 %v4347, 1.0
        %v4558 = vadd.f32 %v4349, 1.0
        %v4559 = vadd.f32 %v4351, 1.0
        %v4560 = vadd.f32 %v4353, 1.0
        %v4561 = vadd.f32 %v4355, 1.0
        %v4562 = vadd.f32 %v4357, 1.0
        %v4563 = vadd.f32 %v4359, 1.0
        %v4564 = vadd.f32 %v4361, 1.0
        %v4565 = vadd.f32 %v4363, 1.0
        %v4566 = vadd.f32 %v4365, 1.0
        %v4567 = vadd.f32 %v4367, 1.0
        %v4568 = vadd.f32 %v4369, 1.0
        %v4569 = vadd.f32 %v4371, 1.0
        %v4570 = vadd.f32 %v4373, 1.0
        %v4571 = vadd.f32 %v4375, 1.0
        %v4572 = vadd.f32 %v4377, 1.0
        %v4573 = vadd.f32 %v4379, 1.0
        %v4574 = vadd.f32 %v4381, 1.0
        %v4575 = vadd.f32 %v4383, 1.0
        %v4576 = vadd.f32 %v4385, 1.0
        %v4577 = vadd.f32 %v4387, 1.0
        %v4578 = vadd.f32 %v4389, 1.0
        %v4579 = vadd.f32 %v4391, 1.0
        %v4580 = vadd.f32 %v4393, 1.0
        %v4581 = vadd.f32 %v4395, 1.0
        %v4582 = vadd.f32 %v4397, 1.0
        %v4583 = vadd.f32 %v4399, 1.0
        %v4584 = vadd.f32 %v4401, 1.0
        %v4585 = vadd.f32 %v4403, 1.0
        %v4586 = vadd.f32 %v4405, 1.0
        %v4587 = vadd.f32 %v4407, 1.0
        %v4588 = vadd.f32 %v4409, 1.0
        %v4589 = vadd.f32 %v4411, 1.0
        %v4590 = vadd.f32 %v4413, 1.0
        %v4591 = vadd.f32 %v4415, 1.0
        %v4592 = vadd.f32 %v4417, 1.0
        %v4593 = vadd.f32 %v4419, 1.0
        %v4594 = vadd.f32 %v4421, 1.0
        %v4595 = vadd.f32 %v4423, 1.0
        %v4596 = vadd.f32 %v4425, 1.0
        %v4597 = vadd.f32 %v4427, 1.0
        %v4598 = vadd.f32 %v4429, 1.0
        %v4599 = vadd.f32 %v4431, 1.0
        %v4600 = vadd.f32 %v4433, 1.0
        %v4601 = vadd.f32 %v4435, 1.0
        %v4602 = vadd.f32 %v4437, 1.0
        %v4603 = vadd.f32 %v4439, 1.0
        %v4604 = vadd.f32 %v4441, 1.0
        %v4605 = vadd.f32 %v4443, 1.0
        %v4606 = vadd.f32 %v4445, 1.0
        %v4607 = vadd.f32 %v4447, 1.0
        %v4608 = vadd.f32 %v4449, 1.0
        %v4609 = vadd.f32 %v4451, 1.0
        %v4610 = vadd.f32 %v4453, 1.0
        %v4611 = vadd.f32 %v4455, 1.0
        %v4612 = vadd.f32 %v4457, 1.0
        %v4613 = vadd.f32 %v4459, 1.0
        %v4614 = vadd.f32 %v4461, 1.0
        %v4615 = vadd.f32 %v4463, 1.0
        %v4616 = vadd.f32 %v4465, 1.0
        %v4617 = vadd.f32 %v4467, 1.0
        %v4618 = vadd.f32 %v4469, 1.0
        %v4619 = vadd.f32 %v4471, 1.0
        %v4620 = vadd.f32 %v4473, 1.0
        %v4621 = vadd.f32 %v4475, 1.0
        %v4622 = vadd.f32 %v4477, 1.0
        %v4623 = vadd.f32 %v4479, 1.0
        %v4624 = vadd.f32 %v4481, 1.0
        %v4625 = vadd.f32 %v4483, 1.0
        %v4626 = vadd.f32 %v4485, 1.0
        %v4627 = vadd.f32 %v4487, 1.0
        %v4628 = vadd.f32 %v4489, 1.0
        %v4629 = vadd.f32 %v4491, 1.0
        %v4630 = vadd.f32 %v4493, 1.0
        %v4631 = vadd.f32 %v4495, 1.0
        %v4632 = vadd.f32 %v4497, 1.0
        %v4633 = vadd.f32 %v4499, 1.0
        %v4634 = vadd.f32 %v4501, 1.0
        %v4635 = vadd.f32 %v4503, 1.0
        %v4636 = vadd.f32 %v4505, 1.0
        %v4637 = vadd.f32 %v4507, 1.0
        %v4638 = vadd.f32 %v4509, 1.0
        %v4639 = vadd.f32 %v4511, 1.0
        %v4640 = vrcp.pop %v4512
        %v4641 = vmul.f32 1.0, %v4640
        %v4642 = vrcp.pop %v4513
        %v4643 = vmul.f32 1.0, %v4642
        %v4644 = vrcp.pop %v4514
        %v4645 = vmul.f32 1.0, %v4644
        %v4646 = vrcp.pop %v4515
        %v4647 = vmul.f32 1.0, %v4646
        %v4648 = vrcp.pop %v4516
        %v4649 = vmul.f32 1.0, %v4648
        %v4650 = vrcp.pop %v4517
        %v4651 = vmul.f32 1.0, %v4650
        %v4652 = vrcp.pop %v4518
        %v4653 = vmul.f32 1.0, %v4652
        %v4654 = vrcp.pop %v4519
        %v4655 = vmul.f32 1.0, %v4654
        %v4656 = vrcp.pop %v4520
        %v4657 = vmul.f32 1.0, %v4656
        %v4658 = vrcp.pop %v4521
        %v4659 = vmul.f32 1.0, %v4658
        %v4660 = vrcp.pop %v4522
        %v4661 = vmul.f32 1.0, %v4660
        %v4662 = vrcp.pop %v4523
        %v4663 = vmul.f32 1.0, %v4662
        %v4664 = vrcp.pop %v4524
        %v4665 = vmul.f32 1.0, %v4664
        %v4666 = vrcp.pop %v4525
        %v4667 = vmul.f32 1.0, %v4666
        %v4668 = vrcp.pop %v4526
        %v4669 = vmul.f32 1.0, %v4668
        %v4670 = vrcp.pop %v4527
        %v4671 = vmul.f32 1.0, %v4670
        %v4672 = vrcp.pop %v4528
        %v4673 = vmul.f32 1.0, %v4672
        %v4674 = vrcp.pop %v4529
        %v4675 = vmul.f32 1.0, %v4674
        %v4676 = vrcp.pop %v4530
        %v4677 = vmul.f32 1.0, %v4676
        %v4678 = vrcp.pop %v4531
        %v4679 = vmul.f32 1.0, %v4678
        %v4680 = vrcp.pop %v4532
        %v4681 = vmul.f32 1.0, %v4680
        %v4682 = vrcp.pop %v4533
        %v4683 = vmul.f32 1.0, %v4682
        %v4684 = vrcp.pop %v4534
        %v4685 = vmul.f32 1.0, %v4684
        %v4686 = vrcp.pop %v4535
        %v4687 = vmul.f32 1.0, %v4686
        %v4688 = vrcp.pop %v4536
        %v4689 = vmul.f32 1.0, %v4688
        %v4690 = vrcp.pop %v4537
        %v4691 = vmul.f32 1.0, %v4690
        %v4692 = vrcp.pop %v4538
        %v4693 = vmul.f32 1.0, %v4692
        %v4694 = vrcp.pop %v4539
        %v4695 = vmul.f32 1.0, %v4694
        %v4696 = vrcp.pop %v4540
        %v4697 = vmul.f32 1.0, %v4696
        %v4698 = vrcp.pop %v4541
        %v4699 = vmul.f32 1.0, %v4698
        %v4700 = vrcp.pop %v4542
        %v4701 = vmul.f32 1.0, %v4700
        %v4702 = vrcp.pop %v4543
        %v4703 = vmul.f32 1.0, %v4702
        %v4704 = vrcp.pop %v4544
        %v4705 = vmul.f32 1.0, %v4704
        %v4706 = vrcp.pop %v4545
        %v4707 = vmul.f32 1.0, %v4706
        %v4708 = vrcp.pop %v4546
        %v4709 = vmul.f32 1.0, %v4708
        %v4710 = vrcp.pop %v4547
        %v4711 = vmul.f32 1.0, %v4710
        %v4712 = vrcp.pop %v4548
        %v4713 = vmul.f32 1.0, %v4712
        %v4714 = vrcp.pop %v4549
        %v4715 = vmul.f32 1.0, %v4714
        %v4716 = vrcp.pop %v4550
        %v4717 = vmul.f32 1.0, %v4716
        %v4718 = vrcp.pop %v4551
        %v4719 = vmul.f32 1.0, %v4718
        %v4720 = vrcp.pop %v4552
        %v4721 = vmul.f32 1.0, %v4720
        %v4722 = vrcp.pop %v4553
        %v4723 = vmul.f32 1.0, %v4722
        %v4724 = vrcp.pop %v4554
        %v4725 = vmul.f32 1.0, %v4724
        %v4726 = vrcp.pop %v4555
        %v4727 = vmul.f32 1.0, %v4726
        %v4728 = vrcp.pop %v4556
        %v4729 = vmul.f32 1.0, %v4728
        %v4730 = vrcp.pop %v4557
        %v4731 = vmul.f32 1.0, %v4730
        %v4732 = vrcp.pop %v4558
        %v4733 = vmul.f32 1.0, %v4732
        %v4734 = vrcp.pop %v4559
        %v4735 = vmul.f32 1.0, %v4734
        %v4736 = vrcp.pop %v4560
        %v4737 = vmul.f32 1.0, %v4736
        %v4738 = vrcp.pop %v4561
        %v4739 = vmul.f32 1.0, %v4738
        %v4740 = vrcp.pop %v4562
        %v4741 = vmul.f32 1.0, %v4740
        %v4742 = vrcp.pop %v4563
        %v4743 = vmul.f32 1.0, %v4742
        %v4744 = vrcp.pop %v4564
        %v4745 = vmul.f32 1.0, %v4744
        %v4746 = vrcp.pop %v4565
        %v4747 = vmul.f32 1.0, %v4746
        %v4748 = vrcp.pop %v4566
        %v4749 = vmul.f32 1.0, %v4748
        %v4750 = vrcp.pop %v4567
        %v4751 = vmul.f32 1.0, %v4750
        %v4752 = vrcp.pop %v4568
        %v4753 = vmul.f32 1.0, %v4752
        %v4754 = vrcp.pop %v4569
        %v4755 = vmul.f32 1.0, %v4754
        %v4756 = vrcp.pop %v4570
        %v4757 = vmul.f32 1.0, %v4756
        %v4758 = vrcp.pop %v4571
        %v4759 = vmul.f32 1.0, %v4758
        %v4760 = vrcp.pop %v4572
        %v4761 = vmul.f32 1.0, %v4760
        %v4762 = vrcp.pop %v4573
        %v4763 = vmul.f32 1.0, %v4762
        %v4764 = vrcp.pop %v4574
        %v4765 = vmul.f32 1.0, %v4764
        %v4766 = vrcp.pop %v4575
        %v4767 = vmul.f32 1.0, %v4766
        %v4768 = vrcp.pop %v4576
        %v4769 = vmul.f32 1.0, %v4768
        %v4770 = vrcp.pop %v4577
        %v4771 = vmul.f32 1.0, %v4770
        %v4772 = vrcp.pop %v4578
        %v4773 = vmul.f32 1.0, %v4772
        %v4774 = vrcp.pop %v4579
        %v4775 = vmul.f32 1.0, %v4774
        %v4776 = vrcp.pop %v4580
        %v4777 = vmul.f32 1.0, %v4776
        %v4778 = vrcp.pop %v4581
        %v4779 = vmul.f32 1.0, %v4778
        %v4780 = vrcp.pop %v4582
        %v4781 = vmul.f32 1.0, %v4780
        %v4782 = vrcp.pop %v4583
        %v4783 = vmul.f32 1.0, %v4782
        %v4784 = vrcp.pop %v4584
        %v4785 = vmul.f32 1.0, %v4784
        %v4786 = vrcp.pop %v4585
        %v4787 = vmul.f32 1.0, %v4786
        %v4788 = vrcp.pop %v4586
        %v4789 = vmul.f32 1.0, %v4788
        %v4790 = vrcp.pop %v4587
        %v4791 = vmul.f32 1.0, %v4790
        %v4792 = vrcp.pop %v4588
        %v4793 = vmul.f32 1.0, %v4792
        %v4794 = vrcp.pop %v4589
        %v4795 = vmul.f32 1.0, %v4794
        %v4796 = vrcp.pop %v4590
        %v4797 = vmul.f32 1.0, %v4796
        %v4798 = vrcp.pop %v4591
        %v4799 = vmul.f32 1.0, %v4798
        %v4800 = vrcp.pop %v4592
        %v4801 = vmul.f32 1.0, %v4800
        %v4802 = vrcp.pop %v4593
        %v4803 = vmul.f32 1.0, %v4802
        %v4804 = vrcp.pop %v4594
        %v4805 = vmul.f32 1.0, %v4804
        %v4806 = vrcp.pop %v4595
        %v4807 = vmul.f32 1.0, %v4806
        %v4808 = vrcp.pop %v4596
        %v4809 = vmul.f32 1.0, %v4808
        %v4810 = vrcp.pop %v4597
        %v4811 = vmul.f32 1.0, %v4810
        %v4812 = vrcp.pop %v4598
        %v4813 = vmul.f32 1.0, %v4812
        %v4814 = vrcp.pop %v4599
        %v4815 = vmul.f32 1.0, %v4814
        %v4816 = vrcp.pop %v4600
        %v4817 = vmul.f32 1.0, %v4816
        %v4818 = vrcp.pop %v4601
        %v4819 = vmul.f32 1.0, %v4818
        %v4820 = vrcp.pop %v4602
        %v4821 = vmul.f32 1.0, %v4820
        %v4822 = vrcp.pop %v4603
        %v4823 = vmul.f32 1.0, %v4822
        %v4824 = vrcp.pop %v4604
        %v4825 = vmul.f32 1.0, %v4824
        %v4826 = vrcp.pop %v4605
        %v4827 = vmul.f32 1.0, %v4826
        %v4828 = vrcp.pop %v4606
        %v4829 = vmul.f32 1.0, %v4828
        %v4830 = vrcp.pop %v4607
        %v4831 = vmul.f32 1.0, %v4830
        %v4832 = vrcp.pop %v4608
        %v4833 = vmul.f32 1.0, %v4832
        %v4834 = vrcp.pop %v4609
        %v4835 = vmul.f32 1.0, %v4834
        %v4836 = vrcp.pop %v4610
        %v4837 = vmul.f32 1.0, %v4836
        %v4838 = vrcp.pop %v4611
        %v4839 = vmul.f32 1.0, %v4838
        %v4840 = vrcp.pop %v4612
        %v4841 = vmul.f32 1.0, %v4840
        %v4842 = vrcp.pop %v4613
        %v4843 = vmul.f32 1.0, %v4842
        %v4844 = vrcp.pop %v4614
        %v4845 = vmul.f32 1.0, %v4844
        %v4846 = vrcp.pop %v4615
        %v4847 = vmul.f32 1.0, %v4846
        %v4848 = vrcp.pop %v4616
        %v4849 = vmul.f32 1.0, %v4848
        %v4850 = vrcp.pop %v4617
        %v4851 = vmul.f32 1.0, %v4850
        %v4852 = vrcp.pop %v4618
        %v4853 = vmul.f32 1.0, %v4852
        %v4854 = vrcp.pop %v4619
        %v4855 = vmul.f32 1.0, %v4854
        %v4856 = vrcp.pop %v4620
        %v4857 = vmul.f32 1.0, %v4856
        %v4858 = vrcp.pop %v4621
        %v4859 = vmul.f32 1.0, %v4858
        %v4860 = vrcp.pop %v4622
        %v4861 = vmul.f32 1.0, %v4860
        %v4862 = vrcp.pop %v4623
        %v4863 = vmul.f32 1.0, %v4862
        %v4864 = vrcp.pop %v4624
        %v4865 = vmul.f32 1.0, %v4864
        %v4866 = vrcp.pop %v4625
        %v4867 = vmul.f32 1.0, %v4866
        %v4868 = vrcp.pop %v4626
        %v4869 = vmul.f32 1.0, %v4868
        %v4870 = vrcp.pop %v4627
        %v4871 = vmul.f32 1.0, %v4870
        %v4872 = vrcp.pop %v4628
        %v4873 = vmul.f32 1.0, %v4872
        %v4874 = vrcp.pop %v4629
        %v4875 = vmul.f32 1.0, %v4874
        %v4876 = vrcp.pop %v4630
        %v4877 = vmul.f32 1.0, %v4876
        %v4878 = vrcp.pop %v4631
        %v4879 = vmul.f32 1.0, %v4878
        %v4880 = vrcp.pop %v4632
        %v4881 = vmul.f32 1.0, %v4880
        %v4882 = vrcp.pop %v4633
        %v4883 = vmul.f32 1.0, %v4882
        %v4884 = vrcp.pop %v4634
        %v4885 = vmul.f32 1.0, %v4884
        %v4886 = vrcp.pop %v4635
        %v4887 = vmul.f32 1.0, %v4886
        %v4888 = vrcp.pop %v4636
        %v4889 = vmul.f32 1.0, %v4888
        %v4890 = vrcp.pop %v4637
        %v4891 = vmul.f32 1.0, %v4890
        %v4892 = vrcp.pop %v4638
        %v4893 = vmul.f32 1.0, %v4892
        %v4894 = vrcp.pop %v4639
        %v4895 = vmul.f32 1.0, %v4894
        %v4896 = vmul.f32 %v1034, %v3873
        %v4897 = vmul.f32 %v1037, %v3875
        %v4898 = vmul.f32 %v1042, %v3877
        %v4899 = vmul.f32 %v1045, %v3879
        %v4900 = vmul.f32 %v1050, %v3881
        %v4901 = vmul.f32 %v1053, %v3883
        %v4902 = vmul.f32 %v1058, %v3885
        %v4903 = vmul.f32 %v1061, %v3887
        %v4904 = vmul.f32 %v1066, %v3889
        %v4905 = vmul.f32 %v1069, %v3891
        %v4906 = vmul.f32 %v1074, %v3893
        %v4907 = vmul.f32 %v1077, %v3895
        %v4908 = vmul.f32 %v1082, %v3897
        %v4909 = vmul.f32 %v1085, %v3899
        %v4910 = vmul.f32 %v1090, %v3901
        %v4911 = vmul.f32 %v1093, %v3903
        %v4912 = vmul.f32 %v1098, %v3905
        %v4913 = vmul.f32 %v1101, %v3907
        %v4914 = vmul.f32 %v1106, %v3909
        %v4915 = vmul.f32 %v1109, %v3911
        %v4916 = vmul.f32 %v1114, %v3913
        %v4917 = vmul.f32 %v1117, %v3915
        %v4918 = vmul.f32 %v1122, %v3917
        %v4919 = vmul.f32 %v1125, %v3919
        %v4920 = vmul.f32 %v1130, %v3921
        %v4921 = vmul.f32 %v1133, %v3923
        %v4922 = vmul.f32 %v1138, %v3925
        %v4923 = vmul.f32 %v1141, %v3927
        %v4924 = vmul.f32 %v1146, %v3929
        %v4925 = vmul.f32 %v1149, %v3931
        %v4926 = vmul.f32 %v1154, %v3933
        %v4927 = vmul.f32 %v1157, %v3935
        %v4928 = vmul.f32 %v1162, %v3937
        %v4929 = vmul.f32 %v1165, %v3939
        %v4930 = vmul.f32 %v1170, %v3941
        %v4931 = vmul.f32 %v1173, %v3943
        %v4932 = vmul.f32 %v1178, %v3945
        %v4933 = vmul.f32 %v1181, %v3947
        %v4934 = vmul.f32 %v1186, %v3949
        %v4935 = vmul.f32 %v1189, %v3951
        %v4936 = vmul.f32 %v1194, %v3953
        %v4937 = vmul.f32 %v1197, %v3955
        %v4938 = vmul.f32 %v1202, %v3957
        %v4939 = vmul.f32 %v1205, %v3959
        %v4940 = vmul.f32 %v1210, %v3961
        %v4941 = vmul.f32 %v1213, %v3963
        %v4942 = vmul.f32 %v1218, %v3965
        %v4943 = vmul.f32 %v1221, %v3967
        %v4944 = vmul.f32 %v1226, %v3969
        %v4945 = vmul.f32 %v1229, %v3971
        %v4946 = vmul.f32 %v1234, %v3973
        %v4947 = vmul.f32 %v1237, %v3975
        %v4948 = vmul.f32 %v1242, %v3977
        %v4949 = vmul.f32 %v1245, %v3979
        %v4950 = vmul.f32 %v1250, %v3981
        %v4951 = vmul.f32 %v1253, %v3983
        %v4952 = vmul.f32 %v1258, %v3985
        %v4953 = vmul.f32 %v1261, %v3987
        %v4954 = vmul.f32 %v1266, %v3989
        %v4955 = vmul.f32 %v1269, %v3991
        %v4956 = vmul.f32 %v1274, %v3993
        %v4957 = vmul.f32 %v1277, %v3995
        %v4958 = vmul.f32 %v1282, %v3997
        %v4959 = vmul.f32 %v1285, %v3999
        %v4960 = vmul.f32 %v1290, %v4001
        %v4961 = vmul.f32 %v1293, %v4003
        %v4962 = vmul.f32 %v1298, %v4005
        %v4963 = vmul.f32 %v1301, %v4007
        %v4964 = vmul.f32 %v1306, %v4009
        %v4965 = vmul.f32 %v1309, %v4011
        %v4966 = vmul.f32 %v1314, %v4013
        %v4967 = vmul.f32 %v1317, %v4015
        %v4968 = vmul.f32 %v1322, %v4017
        %v4969 = vmul.f32 %v1325, %v4019
        %v4970 = vmul.f32 %v1330, %v4021
        %v4971 = vmul.f32 %v1333, %v4023
        %v4972 = vmul.f32 %v1338, %v4025
        %v4973 = vmul.f32 %v1341, %v4027
        %v4974 = vmul.f32 %v1346, %v4029
        %v4975 = vmul.f32 %v1349, %v4031
        %v4976 = vmul.f32 %v1354, %v4033
        %v4977 = vmul.f32 %v1357, %v4035
        %v4978 = vmul.f32 %v1362, %v4037
        %v4979 = vmul.f32 %v1365, %v4039
        %v4980 = vmul.f32 %v1370, %v4041
        %v4981 = vmul.f32 %v1373, %v4043
        %v4982 = vmul.f32 %v1378, %v4045
        %v4983 = vmul.f32 %v1381, %v4047
        %v4984 = vmul.f32 %v1386, %v4049
        %v4985 = vmul.f32 %v1389, %v4051
        %v4986 = vmul.f32 %v1394, %v4053
        %v4987 = vmul.f32 %v1397, %v4055
        %v4988 = vmul.f32 %v1402, %v4057
        %v4989 = vmul.f32 %v1405, %v4059
        %v4990 = vmul.f32 %v1410, %v4061
        %v4991 = vmul.f32 %v1413, %v4063
        %v4992 = vmul.f32 %v1418, %v4065
        %v4993 = vmul.f32 %v1421, %v4067
        %v4994 = vmul.f32 %v1426, %v4069
        %v4995 = vmul.f32 %v1429, %v4071
        %v4996 = vmul.f32 %v1434, %v4073
        %v4997 = vmul.f32 %v1437, %v4075
        %v4998 = vmul.f32 %v1442, %v4077
        %v4999 = vmul.f32 %v1445, %v4079
        %v5000 = vmul.f32 %v1450, %v4081
        %v5001 = vmul.f32 %v1453, %v4083
        %v5002 = vmul.f32 %v1458, %v4085
        %v5003 = vmul.f32 %v1461, %v4087
        %v5004 = vmul.f32 %v1466, %v4089
        %v5005 = vmul.f32 %v1469, %v4091
        %v5006 = vmul.f32 %v1474, %v4093
        %v5007 = vmul.f32 %v1477, %v4095
        %v5008 = vmul.f32 %v1482, %v4097
        %v5009 = vmul.f32 %v1485, %v4099
        %v5010 = vmul.f32 %v1490, %v4101
        %v5011 = vmul.f32 %v1493, %v4103
        %v5012 = vmul.f32 %v1498, %v4105
        %v5013 = vmul.f32 %v1501, %v4107
        %v5014 = vmul.f32 %v1506, %v4109
        %v5015 = vmul.f32 %v1509, %v4111
        %v5016 = vmul.f32 %v1514, %v4113
        %v5017 = vmul.f32 %v1517, %v4115
        %v5018 = vmul.f32 %v1522, %v4117
        %v5019 = vmul.f32 %v1525, %v4119
        %v5020 = vmul.f32 %v1530, %v4121
        %v5021 = vmul.f32 %v1533, %v4123
        %v5022 = vmul.f32 %v1538, %v4125
        %v5023 = vmul.f32 %v1541, %v4127
        %v5024 = vmul.f32 %v1672, %v4641
        %v5025 = vmul.f32 %v1673, %v4643
        %v5026 = vmul.f32 %v1674, %v4645
        %v5027 = vmul.f32 %v1675, %v4647
        %v5028 = vmul.f32 %v1676, %v4649
        %v5029 = vmul.f32 %v1677, %v4651
        %v5030 = vmul.f32 %v1678, %v4653
        %v5031 = vmul.f32 %v1679, %v4655
        %v5032 = vmul.f32 %v1680, %v4657
        %v5033 = vmul.f32 %v1681, %v4659
        %v5034 = vmul.f32 %v1682, %v4661
        %v5035 = vmul.f32 %v1683, %v4663
        %v5036 = vmul.f32 %v1684, %v4665
        %v5037 = vmul.f32 %v1685, %v4667
        %v5038 = vmul.f32 %v1686, %v4669
        %v5039 = vmul.f32 %v1687, %v4671
        %v5040 = vmul.f32 %v1688, %v4673
        %v5041 = vmul.f32 %v1689, %v4675
        %v5042 = vmul.f32 %v1690, %v4677
        %v5043 = vmul.f32 %v1691, %v4679
        %v5044 = vmul.f32 %v1692, %v4681
        %v5045 = vmul.f32 %v1693, %v4683
        %v5046 = vmul.f32 %v1694, %v4685
        %v5047 = vmul.f32 %v1695, %v4687
        %v5048 = vmul.f32 %v1696, %v4689
        %v5049 = vmul.f32 %v1697, %v4691
        %v5050 = vmul.f32 %v1698, %v4693
        %v5051 = vmul.f32 %v1699, %v4695
        %v5052 = vmul.f32 %v1700, %v4697
        %v5053 = vmul.f32 %v1701, %v4699
        %v5054 = vmul.f32 %v1702, %v4701
        %v5055 = vmul.f32 %v1703, %v4703
        %v5056 = vmul.f32 %v1704, %v4705
        %v5057 = vmul.f32 %v1705, %v4707
        %v5058 = vmul.f32 %v1706, %v4709
        %v5059 = vmul.f32 %v1707, %v4711
        %v5060 = vmul.f32 %v1708, %v4713
        %v5061 = vmul.f32 %v1709, %v4715
        %v5062 = vmul.f32 %v1710, %v4717
        %v5063 = vmul.f32 %v1711, %v4719
        %v5064 = vmul.f32 %v1712, %v4721
        %v5065 = vmul.f32 %v1713, %v4723
        %v5066 = vmul.f32 %v1714, %v4725
        %v5067 = vmul.f32 %v1715, %v4727
        %v5068 = vmul.f32 %v1716, %v4729
        %v5069 = vmul.f32 %v1717, %v4731
        %v5070 = vmul.f32 %v1718, %v4733
        %v5071 = vmul.f32 %v1719, %v4735
        %v5072 = vmul.f32 %v1720, %v4737
        %v5073 = vmul.f32 %v1721, %v4739
        %v5074 = vmul.f32 %v1722, %v4741
        %v5075 = vmul.f32 %v1723, %v4743
        %v5076 = vmul.f32 %v1724, %v4745
        %v5077 = vmul.f32 %v1725, %v4747
        %v5078 = vmul.f32 %v1726, %v4749
        %v5079 = vmul.f32 %v1727, %v4751
        %v5080 = vmul.f32 %v1728, %v4753
        %v5081 = vmul.f32 %v1729, %v4755
        %v5082 = vmul.f32 %v1730, %v4757
        %v5083 = vmul.f32 %v1731, %v4759
        %v5084 = vmul.f32 %v1732, %v4761
        %v5085 = vmul.f32 %v1733, %v4763
        %v5086 = vmul.f32 %v1734, %v4765
        %v5087 = vmul.f32 %v1735, %v4767
        %v5088 = vmul.f32 %v1736, %v4769
        %v5089 = vmul.f32 %v1737, %v4771
        %v5090 = vmul.f32 %v1738, %v4773
        %v5091 = vmul.f32 %v1739, %v4775
        %v5092 = vmul.f32 %v1740, %v4777
        %v5093 = vmul.f32 %v1741, %v4779
        %v5094 = vmul.f32 %v1742, %v4781
        %v5095 = vmul.f32 %v1743, %v4783
        %v5096 = vmul.f32 %v1744, %v4785
        %v5097 = vmul.f32 %v1745, %v4787
        %v5098 = vmul.f32 %v1746, %v4789
        %v5099 = vmul.f32 %v1747, %v4791
        %v5100 = vmul.f32 %v1748, %v4793
        %v5101 = vmul.f32 %v1749, %v4795
        %v5102 = vmul.f32 %v1750, %v4797
        %v5103 = vmul.f32 %v1751, %v4799
        %v5104 = vmul.f32 %v1752, %v4801
        %v5105 = vmul.f32 %v1753, %v4803
        %v5106 = vmul.f32 %v1754, %v4805
        %v5107 = vmul.f32 %v1755, %v4807
        %v5108 = vmul.f32 %v1756, %v4809
        %v5109 = vmul.f32 %v1757, %v4811
        %v5110 = vmul.f32 %v1758, %v4813
        %v5111 = vmul.f32 %v1759, %v4815
        %v5112 = vmul.f32 %v1760, %v4817
        %v5113 = vmul.f32 %v1761, %v4819
        %v5114 = vmul.f32 %v1762, %v4821
        %v5115 = vmul.f32 %v1763, %v4823
        %v5116 = vmul.f32 %v1764, %v4825
        %v5117 = vmul.f32 %v1765, %v4827
        %v5118 = vmul.f32 %v1766, %v4829
        %v5119 = vmul.f32 %v1767, %v4831
        %v5120 = vmul.f32 %v1768, %v4833
        %v5121 = vmul.f32 %v1769, %v4835
        %v5122 = vmul.f32 %v1770, %v4837
        %v5123 = vmul.f32 %v1771, %v4839
        %v5124 = vmul.f32 %v1772, %v4841
        %v5125 = vmul.f32 %v1773, %v4843
        %v5126 = vmul.f32 %v1774, %v4845
        %v5127 = vmul.f32 %v1775, %v4847
        %v5128 = vmul.f32 %v1776, %v4849
        %v5129 = vmul.f32 %v1777, %v4851
        %v5130 = vmul.f32 %v1778, %v4853
        %v5131 = vmul.f32 %v1779, %v4855
        %v5132 = vmul.f32 %v1780, %v4857
        %v5133 = vmul.f32 %v1781, %v4859
        %v5134 = vmul.f32 %v1782, %v4861
        %v5135 = vmul.f32 %v1783, %v4863
        %v5136 = vmul.f32 %v1784, %v4865
        %v5137 = vmul.f32 %v1785, %v4867
        %v5138 = vmul.f32 %v1786, %v4869
        %v5139 = vmul.f32 %v1787, %v4871
        %v5140 = vmul.f32 %v1788, %v4873
        %v5141 = vmul.f32 %v1789, %v4875
        %v5142 = vmul.f32 %v1790, %v4877
        %v5143 = vmul.f32 %v1791, %v4879
        %v5144 = vmul.f32 %v1792, %v4881
        %v5145 = vmul.f32 %v1793, %v4883
        %v5146 = vmul.f32 %v1794, %v4885
        %v5147 = vmul.f32 %v1795, %v4887
        %v5148 = vmul.f32 %v1796, %v4889
        %v5149 = vmul.f32 %v1797, %v4891
        %v5150 = vmul.f32 %v1798, %v4893
        %v5151 = vmul.f32 %v1799, %v4895
        %v5152 = vadd.f32 %v4896, %v5024
        %v5153 = vadd.f32 %v4897, %v5025
        %v5154 = vadd.f32 %v4898, %v5026
        %v5155 = vadd.f32 %v4899, %v5027
        %v5156 = vadd.f32 %v4900, %v5028
        %v5157 = vadd.f32 %v4901, %v5029
        %v5158 = vadd.f32 %v4902, %v5030
        %v5159 = vadd.f32 %v4903, %v5031
        %v5160 = vadd.f32 %v4904, %v5032
        %v5161 = vadd.f32 %v4905, %v5033
        %v5162 = vadd.f32 %v4906, %v5034
        %v5163 = vadd.f32 %v4907, %v5035
        %v5164 = vadd.f32 %v4908, %v5036
        %v5165 = vadd.f32 %v4909, %v5037
        %v5166 = vadd.f32 %v4910, %v5038
        %v5167 = vadd.f32 %v4911, %v5039
        %v5168 = vadd.f32 %v4912, %v5040
        %v5169 = vadd.f32 %v4913, %v5041
        %v5170 = vadd.f32 %v4914, %v5042
        %v5171 = vadd.f32 %v4915, %v5043
        %v5172 = vadd.f32 %v4916, %v5044
        %v5173 = vadd.f32 %v4917, %v5045
        %v5174 = vadd.f32 %v4918, %v5046
        %v5175 = vadd.f32 %v4919, %v5047
        %v5176 = vadd.f32 %v4920, %v5048
        %v5177 = vadd.f32 %v4921, %v5049
        %v5178 = vadd.f32 %v4922, %v5050
        %v5179 = vadd.f32 %v4923, %v5051
        %v5180 = vadd.f32 %v4924, %v5052
        %v5181 = vadd.f32 %v4925, %v5053
        %v5182 = vadd.f32 %v4926, %v5054
        %v5183 = vadd.f32 %v4927, %v5055
        %v5184 = vadd.f32 %v4928, %v5056
        %v5185 = vadd.f32 %v4929, %v5057
        %v5186 = vadd.f32 %v4930, %v5058
        %v5187 = vadd.f32 %v4931, %v5059
        %v5188 = vadd.f32 %v4932, %v5060
        %v5189 = vadd.f32 %v4933, %v5061
        %v5190 = vadd.f32 %v4934, %v5062
        %v5191 = vadd.f32 %v4935, %v5063
        %v5192 = vadd.f32 %v4936, %v5064
        %v5193 = vadd.f32 %v4937, %v5065
        %v5194 = vadd.f32 %v4938, %v5066
        %v5195 = vadd.f32 %v4939, %v5067
        %v5196 = vadd.f32 %v4940, %v5068
        %v5197 = vadd.f32 %v4941, %v5069
        %v5198 = vadd.f32 %v4942, %v5070
        %v5199 = vadd.f32 %v4943, %v5071
        %v5200 = vadd.f32 %v4944, %v5072
        %v5201 = vadd.f32 %v4945, %v5073
        %v5202 = vadd.f32 %v4946, %v5074
        %v5203 = vadd.f32 %v4947, %v5075
        %v5204 = vadd.f32 %v4948, %v5076
        %v5205 = vadd.f32 %v4949, %v5077
        %v5206 = vadd.f32 %v4950, %v5078
        %v5207 = vadd.f32 %v4951, %v5079
        %v5208 = vadd.f32 %v4952, %v5080
        %v5209 = vadd.f32 %v4953, %v5081
        %v5210 = vadd.f32 %v4954, %v5082
        %v5211 = vadd.f32 %v4955, %v5083
        %v5212 = vadd.f32 %v4956, %v5084
        %v5213 = vadd.f32 %v4957, %v5085
        %v5214 = vadd.f32 %v4958, %v5086
        %v5215 = vadd.f32 %v4959, %v5087
        %v5216 = vadd.f32 %v4960, %v5088
        %v5217 = vadd.f32 %v4961, %v5089
        %v5218 = vadd.f32 %v4962, %v5090
        %v5219 = vadd.f32 %v4963, %v5091
        %v5220 = vadd.f32 %v4964, %v5092
        %v5221 = vadd.f32 %v4965, %v5093
        %v5222 = vadd.f32 %v4966, %v5094
        %v5223 = vadd.f32 %v4967, %v5095
        %v5224 = vadd.f32 %v4968, %v5096
        %v5225 = vadd.f32 %v4969, %v5097
        %v5226 = vadd.f32 %v4970, %v5098
        %v5227 = vadd.f32 %v4971, %v5099
        %v5228 = vadd.f32 %v4972, %v5100
        %v5229 = vadd.f32 %v4973, %v5101
        %v5230 = vadd.f32 %v4974, %v5102
        %v5231 = vadd.f32 %v4975, %v5103
        %v5232 = vadd.f32 %v4976, %v5104
        %v5233 = vadd.f32 %v4977, %v5105
        %v5234 = vadd.f32 %v4978, %v5106
        %v5235 = vadd.f32 %v4979, %v5107
        %v5236 = vadd.f32 %v4980, %v5108
        %v5237 = vadd.f32 %v4981, %v5109
        %v5238 = vadd.f32 %v4982, %v5110
        %v5239 = vadd.f32 %v4983, %v5111
        %v5240 = vadd.f32 %v4984, %v5112
        %v5241 = vadd.f32 %v4985, %v5113
        %v5242 = vadd.f32 %v4986, %v5114
        %v5243 = vadd.f32 %v4987, %v5115
        %v5244 = vadd.f32 %v4988, %v5116
        %v5245 = vadd.f32 %v4989, %v5117
        %v5246 = vadd.f32 %v4990, %v5118
        %v5247 = vadd.f32 %v4991, %v5119
        %v5248 = vadd.f32 %v4992, %v5120
        %v5249 = vadd.f32 %v4993, %v5121
        %v5250 = vadd.f32 %v4994, %v5122
        %v5251 = vadd.f32 %v4995, %v5123
        %v5252 = vadd.f32 %v4996, %v5124
        %v5253 = vadd.f32 %v4997, %v5125
        %v5254 = vadd.f32 %v4998, %v5126
        %v5255 = vadd.f32 %v4999, %v5127
        %v5256 = vadd.f32 %v5000, %v5128
        %v5257 = vadd.f32 %v5001, %v5129
        %v5258 = vadd.f32 %v5002, %v5130
        %v5259 = vadd.f32 %v5003, %v5131
        %v5260 = vadd.f32 %v5004, %v5132
        %v5261 = vadd.f32 %v5005, %v5133
        %v5262 = vadd.f32 %v5006, %v5134
        %v5263 = vadd.f32 %v5007, %v5135
        %v5264 = vadd.f32 %v5008, %v5136
        %v5265 = vadd.f32 %v5009, %v5137
        %v5266 = vadd.f32 %v5010, %v5138
        %v5267 = vadd.f32 %v5011, %v5139
        %v5268 = vadd.f32 %v5012, %v5140
        %v5269 = vadd.f32 %v5013, %v5141
        %v5270 = vadd.f32 %v5014, %v5142
        %v5271 = vadd.f32 %v5015, %v5143
        %v5272 = vadd.f32 %v5016, %v5144
        %v5273 = vadd.f32 %v5017, %v5145
        %v5274 = vadd.f32 %v5018, %v5146
        %v5275 = vadd.f32 %v5019, %v5147
        %v5276 = vadd.f32 %v5020, %v5148
        %v5277 = vadd.f32 %v5021, %v5149
        %v5278 = vadd.f32 %v5022, %v5150
        %v5279 = vadd.f32 %v5023, %v5151
        %v5280 = vpack.c.bf16 %v5153, %v5152
        %v5281 = vpack.c.bf16 %v5155, %v5154
        %v5282 = vpack.c.bf16 %v5157, %v5156
        %v5283 = vpack.c.bf16 %v5159, %v5158
        %v5284 = vpack.c.bf16 %v5161, %v5160
        %v5285 = vpack.c.bf16 %v5163, %v5162
        %v5286 = vpack.c.bf16 %v5165, %v5164
        %v5287 = vpack.c.bf16 %v5167, %v5166
        %v5288 = vpack.c.bf16 %v5169, %v5168
        %v5289 = vpack.c.bf16 %v5171, %v5170
        %v5290 = vpack.c.bf16 %v5173, %v5172
        %v5291 = vpack.c.bf16 %v5175, %v5174
        %v5292 = vpack.c.bf16 %v5177, %v5176
        %v5293 = vpack.c.bf16 %v5179, %v5178
        %v5294 = vpack.c.bf16 %v5181, %v5180
        %v5295 = vpack.c.bf16 %v5183, %v5182
        %v5296 = vpack.c.bf16 %v5185, %v5184
        %v5297 = vpack.c.bf16 %v5187, %v5186
        %v5298 = vpack.c.bf16 %v5189, %v5188
        %v5299 = vpack.c.bf16 %v5191, %v5190
        %v5300 = vpack.c.bf16 %v5193, %v5192
        %v5301 = vpack.c.bf16 %v5195, %v5194
        %v5302 = vpack.c.bf16 %v5197, %v5196
        %v5303 = vpack.c.bf16 %v5199, %v5198
        %v5304 = vpack.c.bf16 %v5201, %v5200
        %v5305 = vpack.c.bf16 %v5203, %v5202
        %v5306 = vpack.c.bf16 %v5205, %v5204
        %v5307 = vpack.c.bf16 %v5207, %v5206
        %v5308 = vpack.c.bf16 %v5209, %v5208
        %v5309 = vpack.c.bf16 %v5211, %v5210
        %v5310 = vpack.c.bf16 %v5213, %v5212
        %v5311 = vpack.c.bf16 %v5215, %v5214
        %v5312 = vpack.c.bf16 %v5217, %v5216
        %v5313 = vpack.c.bf16 %v5219, %v5218
        %v5314 = vpack.c.bf16 %v5221, %v5220
        %v5315 = vpack.c.bf16 %v5223, %v5222
        %v5316 = vpack.c.bf16 %v5225, %v5224
        %v5317 = vpack.c.bf16 %v5227, %v5226
        %v5318 = vpack.c.bf16 %v5229, %v5228
        %v5319 = vpack.c.bf16 %v5231, %v5230
        %v5320 = vpack.c.bf16 %v5233, %v5232
        %v5321 = vpack.c.bf16 %v5235, %v5234
        %v5322 = vpack.c.bf16 %v5237, %v5236
        %v5323 = vpack.c.bf16 %v5239, %v5238
        %v5324 = vpack.c.bf16 %v5241, %v5240
        %v5325 = vpack.c.bf16 %v5243, %v5242
        %v5326 = vpack.c.bf16 %v5245, %v5244
        %v5327 = vpack.c.bf16 %v5247, %v5246
        %v5328 = vpack.c.bf16 %v5249, %v5248
        %v5329 = vpack.c.bf16 %v5251, %v5250
        %v5330 = vpack.c.bf16 %v5253, %v5252
        %v5331 = vpack.c.bf16 %v5255, %v5254
        %v5332 = vpack.c.bf16 %v5257, %v5256
        %v5333 = vpack.c.bf16 %v5259, %v5258
        %v5334 = vpack.c.bf16 %v5261, %v5260
        %v5335 = vpack.c.bf16 %v5263, %v5262
        %v5336 = vpack.c.bf16 %v5265, %v5264
        %v5337 = vpack.c.bf16 %v5267, %v5266
        %v5338 = vpack.c.bf16 %v5269, %v5268
        %v5339 = vpack.c.bf16 %v5271, %v5270
        %v5340 = vpack.c.bf16 %v5273, %v5272
        %v5341 = vpack.c.bf16 %v5275, %v5274
        %v5342 = vpack.c.bf16 %v5277, %v5276
        %v5343 = vpack.c.bf16 %v5279, %v5278
        %v5408 = vunpack.c.l.b16 %v5280
        %v5409 = vunpack.c.h.b16 %v5280
        %v5410 = vunpack.c.l.b16 %v5281
        %v5411 = vunpack.c.h.b16 %v5281
        %v5412 = vunpack.c.l.b16 %v5282
        %v5413 = vunpack.c.h.b16 %v5282
        %v5414 = vunpack.c.l.b16 %v5283
        %v5415 = vunpack.c.h.b16 %v5283
        %v5416 = vunpack.c.l.b16 %v5284
        %v5417 = vunpack.c.h.b16 %v5284
        %v5418 = vunpack.c.l.b16 %v5285
        %v5419 = vunpack.c.h.b16 %v5285
        %v5420 = vunpack.c.l.b16 %v5286
        %v5421 = vunpack.c.h.b16 %v5286
        %v5422 = vunpack.c.l.b16 %v5287
        %v5423 = vunpack.c.h.b16 %v5287
        %v5424 = vunpack.c.l.b16 %v5288
        %v5425 = vunpack.c.h.b16 %v5288
        %v5426 = vunpack.c.l.b16 %v5289
        %v5427 = vunpack.c.h.b16 %v5289
        %v5428 = vunpack.c.l.b16 %v5290
        %v5429 = vunpack.c.h.b16 %v5290
        %v5430 = vunpack.c.l.b16 %v5291
        %v5431 = vunpack.c.h.b16 %v5291
        %v5432 = vunpack.c.l.b16 %v5292
        %v5433 = vunpack.c.h.b16 %v5292
        %v5434 = vunpack.c.l.b16 %v5293
        %v5435 = vunpack.c.h.b16 %v5293
        %v5436 = vunpack.c.l.b16 %v5294
        %v5437 = vunpack.c.h.b16 %v5294
        %v5438 = vunpack.c.l.b16 %v5295
        %v5439 = vunpack.c.h.b16 %v5295
        %v5440 = vunpack.c.l.b16 %v5296
        %v5441 = vunpack.c.h.b16 %v5296
        %v5442 = vunpack.c.l.b16 %v5297
        %v5443 = vunpack.c.h.b16 %v5297
        %v5444 = vunpack.c.l.b16 %v5298
        %v5445 = vunpack.c.h.b16 %v5298
        %v5446 = vunpack.c.l.b16 %v5299
        %v5447 = vunpack.c.h.b16 %v5299
        %v5448 = vunpack.c.l.b16 %v5300
        %v5449 = vunpack.c.h.b16 %v5300
        %v5450 = vunpack.c.l.b16 %v5301
        %v5451 = vunpack.c.h.b16 %v5301
        %v5452 = vunpack.c.l.b16 %v5302
        %v5453 = vunpack.c.h.b16 %v5302
        %v5454 = vunpack.c.l.b16 %v5303
        %v5455 = vunpack.c.h.b16 %v5303
        %v5456 = vunpack.c.l.b16 %v5304
        %v5457 = vunpack.c.h.b16 %v5304
        %v5458 = vunpack.c.l.b16 %v5305
        %v5459 = vunpack.c.h.b16 %v5305
        %v5460 = vunpack.c.l.b16 %v5306
        %v5461 = vunpack.c.h.b16 %v5306
        %v5462 = vunpack.c.l.b16 %v5307
        %v5463 = vunpack.c.h.b16 %v5307
        %v5464 = vunpack.c.l.b16 %v5308
        %v5465 = vunpack.c.h.b16 %v5308
        %v5466 = vunpack.c.l.b16 %v5309
        %v5467 = vunpack.c.h.b16 %v5309
        %v5468 = vunpack.c.l.b16 %v5310
        %v5469 = vunpack.c.h.b16 %v5310
        %v5470 = vunpack.c.l.b16 %v5311
        %v5471 = vunpack.c.h.b16 %v5311
        %v5472 = vunpack.c.l.b16 %v5312
        %v5473 = vunpack.c.h.b16 %v5312
        %v5474 = vunpack.c.l.b16 %v5313
        %v5475 = vunpack.c.h.b16 %v5313
        %v5476 = vunpack.c.l.b16 %v5314
        %v5477 = vunpack.c.h.b16 %v5314
        %v5478 = vunpack.c.l.b16 %v5315
        %v5479 = vunpack.c.h.b16 %v5315
        %v5480 = vunpack.c.l.b16 %v5316
        %v5481 = vunpack.c.h.b16 %v5316
        %v5482 = vunpack.c.l.b16 %v5317
        %v5483 = vunpack.c.h.b16 %v5317
        %v5484 = vunpack.c.l.b16 %v5318
        %v5485 = vunpack.c.h.b16 %v5318
        %v5486 = vunpack.c.l.b16 %v5319
        %v5487 = vunpack.c.h.b16 %v5319
        %v5488 = vunpack.c.l.b16 %v5320
        %v5489 = vunpack.c.h.b16 %v5320
        %v5490 = vunpack.c.l.b16 %v5321
        %v5491 = vunpack.c.h.b16 %v5321
        %v5492 = vunpack.c.l.b16 %v5322
        %v5493 = vunpack.c.h.b16 %v5322
        %v5494 = vunpack.c.l.b16 %v5323
        %v5495 = vunpack.c.h.b16 %v5323
        %v5496 = vunpack.c.l.b16 %v5324
        %v5497 = vunpack.c.h.b16 %v5324
        %v5498 = vunpack.c.l.b16 %v5325
        %v5499 = vunpack.c.h.b16 %v5325
        %v5500 = vunpack.c.l.b16 %v5326
        %v5501 = vunpack.c.h.b16 %v5326
        %v5502 = vunpack.c.l.b16 %v5327
        %v5503 = vunpack.c.h.b16 %v5327
        %v5504 = vunpack.c.l.b16 %v5328
        %v5505 = vunpack.c.h.b16 %v5328
        %v5506 = vunpack.c.l.b16 %v5329
        %v5507 = vunpack.c.h.b16 %v5329
        %v5508 = vunpack.c.l.b16 %v5330
        %v5509 = vunpack.c.h.b16 %v5330
        %v5510 = vunpack.c.l.b16 %v5331
        %v5511 = vunpack.c.h.b16 %v5331
        %v5512 = vunpack.c.l.b16 %v5332
        %v5513 = vunpack.c.h.b16 %v5332
        %v5514 = vunpack.c.l.b16 %v5333
        %v5515 = vunpack.c.h.b16 %v5333
        %v5516 = vunpack.c.l.b16 %v5334
        %v5517 = vunpack.c.h.b16 %v5334
        %v5518 = vunpack.c.l.b16 %v5335
        %v5519 = vunpack.c.h.b16 %v5335
        %v5520 = vunpack.c.l.b16 %v5336
        %v5521 = vunpack.c.h.b16 %v5336
        %v5522 = vunpack.c.l.b16 %v5337
        %v5523 = vunpack.c.h.b16 %v5337
        %v5524 = vunpack.c.l.b16 %v5338
        %v5525 = vunpack.c.h.b16 %v5338
        %v5526 = vunpack.c.l.b16 %v5339
        %v5527 = vunpack.c.h.b16 %v5339
        %v5528 = vunpack.c.l.b16 %v5340
        %v5529 = vunpack.c.h.b16 %v5340
        %v5530 = vunpack.c.l.b16 %v5341
        %v5531 = vunpack.c.h.b16 %v5341
        %v5532 = vunpack.c.l.b16 %v5342
        %v5533 = vunpack.c.h.b16 %v5342
        %v5534 = vunpack.c.l.b16 %v5343
        %v5535 = vunpack.c.h.b16 %v5343
        %v5536 = vpack.c.b16 %v5408, %v5408
        %v5537 = vpack.c.b16 %v5409, %v5409
        %v5538 = vpack.c.b16 %v5410, %v5410
        %v5539 = vpack.c.b16 %v5411, %v5411
        %v5540 = vpack.c.b16 %v5412, %v5412
        %v5541 = vpack.c.b16 %v5413, %v5413
        %v5542 = vpack.c.b16 %v5414, %v5414
        %v5543 = vpack.c.b16 %v5415, %v5415
        %v5544 = vpack.c.b16 %v5416, %v5416
        %v5545 = vpack.c.b16 %v5417, %v5417
        %v5546 = vpack.c.b16 %v5418, %v5418
        %v5547 = vpack.c.b16 %v5419, %v5419
        %v5548 = vpack.c.b16 %v5420, %v5420
        %v5549 = vpack.c.b16 %v5421, %v5421
        %v5550 = vpack.c.b16 %v5422, %v5422
        %v5551 = vpack.c.b16 %v5423, %v5423
        %v5552 = vpack.c.b16 %v5424, %v5424
        %v5553 = vpack.c.b16 %v5425, %v5425
        %v5554 = vpack.c.b16 %v5426, %v5426
        %v5555 = vpack.c.b16 %v5427, %v5427
        %v5556 = vpack.c.b16 %v5428, %v5428
        %v5557 = vpack.c.b16 %v5429, %v5429
        %v5558 = vpack.c.b16 %v5430, %v5430
        %v5559 = vpack.c.b16 %v5431, %v5431
        %v5560 = vpack.c.b16 %v5432, %v5432
        %v5561 = vpack.c.b16 %v5433, %v5433
        %v5562 = vpack.c.b16 %v5434, %v5434
        %v5563 = vpack.c.b16 %v5435, %v5435
        %v5564 = vpack.c.b16 %v5436, %v5436
        %v5565 = vpack.c.b16 %v5437, %v5437
        %v5566 = vpack.c.b16 %v5438, %v5438
        %v5567 = vpack.c.b16 %v5439, %v5439
        %v5568 = vpack.c.b16 %v5440, %v5440
        %v5569 = vpack.c.b16 %v5441, %v5441
        %v5570 = vpack.c.b16 %v5442, %v5442
        %v5571 = vpack.c.b16 %v5443, %v5443
        %v5572 = vpack.c.b16 %v5444, %v5444
        %v5573 = vpack.c.b16 %v5445, %v5445
        %v5574 = vpack.c.b16 %v5446, %v5446
        %v5575 = vpack.c.b16 %v5447, %v5447
        %v5576 = vpack.c.b16 %v5448, %v5448
        %v5577 = vpack.c.b16 %v5449, %v5449
        %v5578 = vpack.c.b16 %v5450, %v5450
        %v5579 = vpack.c.b16 %v5451, %v5451
        %v5580 = vpack.c.b16 %v5452, %v5452
        %v5581 = vpack.c.b16 %v5453, %v5453
        %v5582 = vpack.c.b16 %v5454, %v5454
        %v5583 = vpack.c.b16 %v5455, %v5455
        %v5584 = vpack.c.b16 %v5456, %v5456
        %v5585 = vpack.c.b16 %v5457, %v5457
        %v5586 = vpack.c.b16 %v5458, %v5458
        %v5587 = vpack.c.b16 %v5459, %v5459
        %v5588 = vpack.c.b16 %v5460, %v5460
        %v5589 = vpack.c.b16 %v5461, %v5461
        %v5590 = vpack.c.b16 %v5462, %v5462
        %v5591 = vpack.c.b16 %v5463, %v5463
        %v5592 = vpack.c.b16 %v5464, %v5464
        %v5593 = vpack.c.b16 %v5465, %v5465
        %v5594 = vpack.c.b16 %v5466, %v5466
        %v5595 = vpack.c.b16 %v5467, %v5467
        %v5596 = vpack.c.b16 %v5468, %v5468
        %v5597 = vpack.c.b16 %v5469, %v5469
        %v5598 = vpack.c.b16 %v5470, %v5470
        %v5599 = vpack.c.b16 %v5471, %v5471
        %v5600 = vpack.c.b16 %v5472, %v5472
        %v5601 = vpack.c.b16 %v5473, %v5473
        %v5602 = vpack.c.b16 %v5474, %v5474
        %v5603 = vpack.c.b16 %v5475, %v5475
        %v5604 = vpack.c.b16 %v5476, %v5476
        %v5605 = vpack.c.b16 %v5477, %v5477
        %v5606 = vpack.c.b16 %v5478, %v5478
        %v5607 = vpack.c.b16 %v5479, %v5479
        %v5608 = vpack.c.b16 %v5480, %v5480
        %v5609 = vpack.c.b16 %v5481, %v5481
        %v5610 = vpack.c.b16 %v5482, %v5482
        %v5611 = vpack.c.b16 %v5483, %v5483
        %v5612 = vpack.c.b16 %v5484, %v5484
        %v5613 = vpack.c.b16 %v5485, %v5485
        %v5614 = vpack.c.b16 %v5486, %v5486
        %v5615 = vpack.c.b16 %v5487, %v5487
        %v5616 = vpack.c.b16 %v5488, %v5488
        %v5617 = vpack.c.b16 %v5489, %v5489
        %v5618 = vpack.c.b16 %v5490, %v5490
        %v5619 = vpack.c.b16 %v5491, %v5491
        %v5620 = vpack.c.b16 %v5492, %v5492
        %v5621 = vpack.c.b16 %v5493, %v5493
        %v5622 = vpack.c.b16 %v5494, %v5494
        %v5623 = vpack.c.b16 %v5495, %v5495
        %v5624 = vpack.c.b16 %v5496, %v5496
        %v5625 = vpack.c.b16 %v5497, %v5497
        %v5626 = vpack.c.b16 %v5498, %v5498
        %v5627 = vpack.c.b16 %v5499, %v5499
        %v5628 = vpack.c.b16 %v5500, %v5500
        %v5629 = vpack.c.b16 %v5501, %v5501
        %v5630 = vpack.c.b16 %v5502, %v5502
        %v5631 = vpack.c.b16 %v5503, %v5503
        %v5632 = vpack.c.b16 %v5504, %v5504
        %v5633 = vpack.c.b16 %v5505, %v5505
        %v5634 = vpack.c.b16 %v5506, %v5506
        %v5635 = vpack.c.b16 %v5507, %v5507
        %v5636 = vpack.c.b16 %v5508, %v5508
        %v5637 = vpack.c.b16 %v5509, %v5509
        %v5638 = vpack.c.b16 %v5510, %v5510
        %v5639 = vpack.c.b16 %v5511, %v5511
        %v5640 = vpack.c.b16 %v5512, %v5512
        %v5641 = vpack.c.b16 %v5513, %v5513
        %v5642 = vpack.c.b16 %v5514, %v5514
        %v5643 = vpack.c.b16 %v5515, %v5515
        %v5644 = vpack.c.b16 %v5516, %v5516
        %v5645 = vpack.c.b16 %v5517, %v5517
        %v5646 = vpack.c.b16 %v5518, %v5518
        %v5647 = vpack.c.b16 %v5519, %v5519
        %v5648 = vpack.c.b16 %v5520, %v5520
        %v5649 = vpack.c.b16 %v5521, %v5521
        %v5650 = vpack.c.b16 %v5522, %v5522
        %v5651 = vpack.c.b16 %v5523, %v5523
        %v5652 = vpack.c.b16 %v5524, %v5524
        %v5653 = vpack.c.b16 %v5525, %v5525
        %v5654 = vpack.c.b16 %v5526, %v5526
        %v5655 = vpack.c.b16 %v5527, %v5527
        %v5656 = vpack.c.b16 %v5528, %v5528
        %v5657 = vpack.c.b16 %v5529, %v5529
        %v5658 = vpack.c.b16 %v5530, %v5530
        %v5659 = vpack.c.b16 %v5531, %v5531
        %v5660 = vpack.c.b16 %v5532, %v5532
        %v5661 = vpack.c.b16 %v5533, %v5533
        %v5662 = vpack.c.b16 %v5534, %v5534
        %v5663 = vpack.c.b16 %v5535, %v5535
        %5792 = vst [vmem:[%s316] sm:$0xf] %v5536
        %5793 = vst [vmem:[%s316 + $0x4] sm:$0xf] %v5537
        %5794 = vst [vmem:[%s316 + $0x8] sm:$0xf] %v5538
        %5795 = vst [vmem:[%s316 + $0xc] sm:$0xf] %v5539
        %5796 = vst [vmem:[%s316 + $0x10] sm:$0xf] %v5540
        %5797 = vst [vmem:[%s316 + $0x14] sm:$0xf] %v5541
        %5798 = vst [vmem:[%s316 + $0x18] sm:$0xf] %v5542
        %5799 = vst [vmem:[%s316 + $0x1c] sm:$0xf] %v5543
        %5800 = vst [vmem:[%s316 + $0x20] sm:$0xf] %v5544
        %5801 = vst [vmem:[%s316 + $0x24] sm:$0xf] %v5545
        %5802 = vst [vmem:[%s316 + $0x28] sm:$0xf] %v5546
        %5803 = vst [vmem:[%s316 + $0x2c] sm:$0xf] %v5547
        %5804 = vst [vmem:[%s316 + $0x30] sm:$0xf] %v5548
        %5805 = vst [vmem:[%s316 + $0x34] sm:$0xf] %v5549
        %5806 = vst [vmem:[%s316 + $0x38] sm:$0xf] %v5550
        %5807 = vst [vmem:[%s316 + $0x3c] sm:$0xf] %v5551
        %5808 = vst [vmem:[%s316 + $0x40] sm:$0xf] %v5552
        %5809 = vst [vmem:[%s316 + $0x44] sm:$0xf] %v5553
        %5810 = vst [vmem:[%s316 + $0x48] sm:$0xf] %v5554
        %5811 = vst [vmem:[%s316 + $0x4c] sm:$0xf] %v5555
        %5812 = vst [vmem:[%s316 + $0x50] sm:$0xf] %v5556
        %5813 = vst [vmem:[%s316 + $0x54] sm:$0xf] %v5557
        %5814 = vst [vmem:[%s316 + $0x58] sm:$0xf] %v5558
        %5815 = vst [vmem:[%s316 + $0x5c] sm:$0xf] %v5559
        %5816 = vst [vmem:[%s316 + $0x60] sm:$0xf] %v5560
        %5817 = vst [vmem:[%s316 + $0x64] sm:$0xf] %v5561
        %5818 = vst [vmem:[%s316 + $0x68] sm:$0xf] %v5562
        %5819 = vst [vmem:[%s316 + $0x6c] sm:$0xf] %v5563
        %5820 = vst [vmem:[%s316 + $0x70] sm:$0xf] %v5564
        %5821 = vst [vmem:[%s316 + $0x74] sm:$0xf] %v5565
        %5822 = vst [vmem:[%s316 + $0x78] sm:$0xf] %v5566
        %5823 = vst [vmem:[%s316 + $0x7c] sm:$0xf] %v5567
        %5824 = vst [vmem:[%s316 + $0x80] sm:$0xf] %v5568
        %5825 = vst [vmem:[%s316 + $0x84] sm:$0xf] %v5569
        %5826 = vst [vmem:[%s316 + $0x88] sm:$0xf] %v5570
        %5827 = vst [vmem:[%s316 + $0x8c] sm:$0xf] %v5571
        %5828 = vst [vmem:[%s316 + $0x90] sm:$0xf] %v5572
        %5829 = vst [vmem:[%s316 + $0x94] sm:$0xf] %v5573
        %5830 = vst [vmem:[%s316 + $0x98] sm:$0xf] %v5574
        %5831 = vst [vmem:[%s316 + $0x9c] sm:$0xf] %v5575
        %5832 = vst [vmem:[%s316 + $0xa0] sm:$0xf] %v5576
        %5833 = vst [vmem:[%s316 + $0xa4] sm:$0xf] %v5577
        %5834 = vst [vmem:[%s316 + $0xa8] sm:$0xf] %v5578
        %5835 = vst [vmem:[%s316 + $0xac] sm:$0xf] %v5579
        %5836 = vst [vmem:[%s316 + $0xb0] sm:$0xf] %v5580
        %5837 = vst [vmem:[%s316 + $0xb4] sm:$0xf] %v5581
        %5838 = vst [vmem:[%s316 + $0xb8] sm:$0xf] %v5582
        %5839 = vst [vmem:[%s316 + $0xbc] sm:$0xf] %v5583
        %5840 = vst [vmem:[%s316 + $0xc0] sm:$0xf] %v5584
        %5841 = vst [vmem:[%s316 + $0xc4] sm:$0xf] %v5585
        %5842 = vst [vmem:[%s316 + $0xc8] sm:$0xf] %v5586
        %5843 = vst [vmem:[%s316 + $0xcc] sm:$0xf] %v5587
        %5844 = vst [vmem:[%s316 + $0xd0] sm:$0xf] %v5588
        %5845 = vst [vmem:[%s316 + $0xd4] sm:$0xf] %v5589
        %5846 = vst [vmem:[%s316 + $0xd8] sm:$0xf] %v5590
        %5847 = vst [vmem:[%s316 + $0xdc] sm:$0xf] %v5591
        %5848 = vst [vmem:[%s316 + $0xe0] sm:$0xf] %v5592
        %5849 = vst [vmem:[%s316 + $0xe4] sm:$0xf] %v5593
        %5850 = vst [vmem:[%s316 + $0xe8] sm:$0xf] %v5594
        %5851 = vst [vmem:[%s316 + $0xec] sm:$0xf] %v5595
        %5852 = vst [vmem:[%s316 + $0xf0] sm:$0xf] %v5596
        %5853 = vst [vmem:[%s316 + $0xf4] sm:$0xf] %v5597
        %5854 = vst [vmem:[%s316 + $0xf8] sm:$0xf] %v5598
        %5855 = vst [vmem:[%s316 + $0xfc] sm:$0xf] %v5599
        %5856 = vst [vmem:[%s316 + $0x100] sm:$0xf] %v5600
        %5857 = vst [vmem:[%s316 + $0x104] sm:$0xf] %v5601
        %5858 = vst [vmem:[%s316 + $0x108] sm:$0xf] %v5602
        %5859 = vst [vmem:[%s316 + $0x10c] sm:$0xf] %v5603
        %5860 = vst [vmem:[%s316 + $0x110] sm:$0xf] %v5604
        %5861 = vst [vmem:[%s316 + $0x114] sm:$0xf] %v5605
        %5862 = vst [vmem:[%s316 + $0x118] sm:$0xf] %v5606
        %5863 = vst [vmem:[%s316 + $0x11c] sm:$0xf] %v5607
        %5864 = vst [vmem:[%s316 + $0x120] sm:$0xf] %v5608
        %5865 = vst [vmem:[%s316 + $0x124] sm:$0xf] %v5609
        %5866 = vst [vmem:[%s316 + $0x128] sm:$0xf] %v5610
        %5867 = vst [vmem:[%s316 + $0x12c] sm:$0xf] %v5611
        %5868 = vst [vmem:[%s316 + $0x130] sm:$0xf] %v5612
        %5869 = vst [vmem:[%s316 + $0x134] sm:$0xf] %v5613
        %5870 = vst [vmem:[%s316 + $0x138] sm:$0xf] %v5614
        %5871 = vst [vmem:[%s316 + $0x13c] sm:$0xf] %v5615
        %5872 = vst [vmem:[%s316 + $0x140] sm:$0xf] %v5616
        %5873 = vst [vmem:[%s316 + $0x144] sm:$0xf] %v5617
        %5874 = vst [vmem:[%s316 + $0x148] sm:$0xf] %v5618
        %5875 = vst [vmem:[%s316 + $0x14c] sm:$0xf] %v5619
        %5876 = vst [vmem:[%s316 + $0x150] sm:$0xf] %v5620
        %5877 = vst [vmem:[%s316 + $0x154] sm:$0xf] %v5621
        %5878 = vst [vmem:[%s316 + $0x158] sm:$0xf] %v5622
        %5879 = vst [vmem:[%s316 + $0x15c] sm:$0xf] %v5623
        %5880 = vst [vmem:[%s316 + $0x160] sm:$0xf] %v5624
        %5881 = vst [vmem:[%s316 + $0x164] sm:$0xf] %v5625
        %5882 = vst [vmem:[%s316 + $0x168] sm:$0xf] %v5626
        %5883 = vst [vmem:[%s316 + $0x16c] sm:$0xf] %v5627
        %5884 = vst [vmem:[%s316 + $0x170] sm:$0xf] %v5628
        %5885 = vst [vmem:[%s316 + $0x174] sm:$0xf] %v5629
        %5886 = vst [vmem:[%s316 + $0x178] sm:$0xf] %v5630
        %5887 = vst [vmem:[%s316 + $0x17c] sm:$0xf] %v5631
        %5888 = vst [vmem:[%s316 + $0x180] sm:$0xf] %v5632
        %5889 = vst [vmem:[%s316 + $0x184] sm:$0xf] %v5633
        %5890 = vst [vmem:[%s316 + $0x188] sm:$0xf] %v5634
        %5891 = vst [vmem:[%s316 + $0x18c] sm:$0xf] %v5635
        %5892 = vst [vmem:[%s316 + $0x190] sm:$0xf] %v5636
        %5893 = vst [vmem:[%s316 + $0x194] sm:$0xf] %v5637
        %5894 = vst [vmem:[%s316 + $0x198] sm:$0xf] %v5638
        %5895 = vst [vmem:[%s316 + $0x19c] sm:$0xf] %v5639
        %5896 = vst [vmem:[%s316 + $0x1a0] sm:$0xf] %v5640
        %5897 = vst [vmem:[%s316 + $0x1a4] sm:$0xf] %v5641
        %5898 = vst [vmem:[%s316 + $0x1a8] sm:$0xf] %v5642
        %5899 = vst [vmem:[%s316 + $0x1ac] sm:$0xf] %v5643
        %5900 = vst [vmem:[%s316 + $0x1b0] sm:$0xf] %v5644
        %5901 = vst [vmem:[%s316 + $0x1b4] sm:$0xf] %v5645
        %5902 = vst [vmem:[%s316 + $0x1b8] sm:$0xf] %v5646
        %5903 = vst [vmem:[%s316 + $0x1bc] sm:$0xf] %v5647
        %5904 = vst [vmem:[%s316 + $0x1c0] sm:$0xf] %v5648
        %5905 = vst [vmem:[%s316 + $0x1c4] sm:$0xf] %v5649
        %5906 = vst [vmem:[%s316 + $0x1c8] sm:$0xf] %v5650
        %5907 = vst [vmem:[%s316 + $0x1cc] sm:$0xf] %v5651
        %5908 = vst [vmem:[%s316 + $0x1d0] sm:$0xf] %v5652
        %5909 = vst [vmem:[%s316 + $0x1d4] sm:$0xf] %v5653
        %5910 = vst [vmem:[%s316 + $0x1d8] sm:$0xf] %v5654
        %5911 = vst [vmem:[%s316 + $0x1dc] sm:$0xf] %v5655
        %5912 = vst [vmem:[%s316 + $0x1e0] sm:$0xf] %v5656
        %5913 = vst [vmem:[%s316 + $0x1e4] sm:$0xf] %v5657
        %5914 = vst [vmem:[%s316 + $0x1e8] sm:$0xf] %v5658
        %5915 = vst [vmem:[%s316 + $0x1ec] sm:$0xf] %v5659
        %5916 = vst [vmem:[%s316 + $0x1f0] sm:$0xf] %v5660
        %5917 = vst [vmem:[%s316 + $0x1f4] sm:$0xf] %v5661
        %5918 = vst [vmem:[%s316 + $0x1f8] sm:$0xf] %v5662
        %5919 = vst [vmem:[%s316 + $0x1fc] sm:$0xf] %v5663
        %s5920 = smul.u32 128, %s19
        %p5921 = scmp.lt.s32.totalorder %s5920, 255
        %s5922 = scalar_select %p5921, %s5920, 255
        %s5923 = smul.addr %s5922, 4
        %s5924 = scalar_lea.vmem %s7, %s5923
        // Predicated region
        $region53: #{abf_forward.2} parent=47 // pred_check
          %p5925 = pneg %p194
        $region54: #{abf_forward.2} parent=47 // pred_check_branch
          %5927 = sbr.rel (%p5925) target = $region56
        $region55: #{abf_forward.2} parent=47 // pred_region
          %s5928 = smul.u32 128, %s19
        $region56: #{abf_forward.2} parent=47 // pred_fallthru
          _
      $region48: #{abf_forward.2} parent=5 // pred_fallthru
        _
      %p5929 = scmp.le.s32.totalorder 2, %s14
      // Predicated region
      $region57: #{abf_forward.2} parent=5 // pred_check
        %p5930 = pneg %p5929
      $region58: #{abf_forward.2} parent=5 // pred_check_branch
        %5932 = sbr.rel (%p5930) target = $region60
      $region59: #{abf_forward.2} parent=5 // pred_region
        %s5933 = ssub.s32 %s14, 2
        // Predicated region
        $region61: #{abf_forward.2} parent=59 // pred_check
          %p5934 = pneg %p200
        $region62: #{abf_forward.2} parent=59 // pred_check_branch
          %5936 = sbr.rel (%p5934) target = $region64
        $region63: #{abf_forward.2} parent=59 // pred_region
          %s5937 = smul.u32 128, %s20
          %p5938 = scmp.lt.s32.totalorder %s5937, 255
          %s5939 = scalar_select %p5938, %s5937, 255
          %s5940 = smul.addr %s5939, 4
          %s5941 = scalar_lea.vmem %s7, %s5940
        $region64: #{abf_forward.2} parent=59 // pred_fallthru
          _
      $region60: #{abf_forward.2} parent=5 // pred_fallthru
        _
    $region6: #{abf_forward.2} parent=1 // loop_footer
      %s18 = sadd.s32 1, %s14
    $region7: #{abf_forward.2} parent=1 // loop_footer_branch
      %13 = sbr.rel target = $region3
    $region8: #{abf_forward.2} parent=1 // loop_exit
      _
    %5942 = vsyncpa [#allocation3], 1
    %s5943 = scalar_lea.sflag [#allocation3], 1
    %5944 = vsyncpa %s5943, 1

// kernel: abf_forward.3
$region0: #{abf_forward.3}
  #allocation0 [shape = 'u32[]', space=smem, size = 0x4, offset = 0x4, fixed_abs, tag = 'smem constant byte address 0x4 - core index']
  #allocation1 [shape = 'u32[144,128]{1,0:T(1,128)}', space=vmem, size = 0x12000, scoped, tag = 'internal scratch']
  #allocation2 [shape = 'bf16[10,41,128]{2,1,0:T(8,128)(2,1)}', space=vmem, size = 0x1e000, scoped, tag = 'scratch operand']
  %s0 = inlined_call_operand.vmem [shape: bf16[2,32,32,128], index: 0, kind: input, shape index: {}, may-alias: {0,1,2}]
  %s1 = inlined_call_operand.vmem [shape: bf16[2,32,32,128], index: 1, kind: input, shape index: {}, may-alias: {0,1,2}]
  %s2 = inlined_call_operand.vmem [shape: bf16[2,32,32,128], index: 2, kind: input, shape index: {}, may-alias: {0,1,2}]
  %s3 = inlined_call_operand.vmem [shape: bf16[3,3,128,128], index: 3, kind: input, shape index: {}]
  %s4 = inlined_call_operand.vmem [shape: f32[1,128], index: 4, kind: input, shape index: {}]
  %s5 = inlined_call_operand.hbm [shape: f32[2,32,32,128], index: 5, kind: output, shape index: {}]
  %s6 = sld [smem:[#allocation0]]
  $region53: #{abf_forward.3} parent=0
    _
  %s8 = ssub.s32 1, %s6
  %s9 = scalar_select 0, %s8, %s6
  $region1: #{abf_forward.3} parent=0
    #allocation3 [shape = 'u8[262144]{0}', space=vmem, size = 0x40000, scoped, tag = 'output window, operand 0']
    #allocation4 [shape = 's32[2]{0}', space=sflag, size = 0x8, scoped, tag = 'scoped memory for abf_forward.3']
    %10 = vsyncpa [#allocation4], 0
    %s11 = scalar_lea.sflag [#allocation4], 1
    %12 = vsyncpa %s11, 0
    loop: start=0, step=1, limit=10
    $region2: #{abf_forward.3} parent=1 // loop_pre_header
      _
    $region3: #{abf_forward.3} parent=1 // loop_header
      %s14 = sphi 0, %s18
      %p15 = scmp.ge.s32.totalorder %s14, 10
      %s21 = sphi 0, %s33
      %s22 = sphi 0, %s29
      %s23 = sphi 0, %s21
      %s24 = sphi 0, %s22
      %s25 = sphi 0, %s23
      %s26 = sphi 0, %s24
      %s38 = sphi 0, %s40
      %s41 = sphi 0, %s38
      %s42 = sphi 0, %s41
      %s58 = sphi 0, %s42
      %s74 = sphi 0, %s76
      %s77 = sphi 0, %s74
      %s78 = sphi 0, %s77
      %s94 = sphi 0, %s78
      %s110 = sphi 0, %s112
      %s113 = sphi 0, %s110
      %s114 = sphi 0, %s113
      %s130 = sphi 0, %s114
      %s134 = sphi 0, %s134
      %s136 = sphi 0, %s134
      %s137 = sphi 0, %s136
      %s151 = sphi 0, %s137
      %s155 = sphi 0, %s155
      %s157 = sphi 0, %s155
      %s158 = sphi 0, %s157
      %s172 = sphi 0, %s158
      %s180 = sphi 0, %s182
      %s183 = sphi 0, %s180
      %s184 = sphi 0, %s183
      %s200 = sphi 0, %s184
    $region4: #{abf_forward.3} parent=1 // loop_header_branch
      %17 = sbr.rel (%p15) target = $region8
    $region5: #{abf_forward.3} parent=1 // loop_body
      %s19 = ssub.s32 %s14, 1
      %s20 = ssub.s32 %s14, 2
      %s27 = sadd.s32 1, %s22
      %p28 = scmp.ge.s32.totalorder %s27, 4
      %s29 = scalar_select %p28, 0, %s27
      %s30 = sadd.s32 1, %s21
      %s31 = scalar_select %p28, %s30, %s21
      %p32 = scmp.ge.s32.totalorder %s31, 2
      %s33 = scalar_select %p32, 0, %s31
      %s34 = ssub.s32 %s21, %s33
      %s35 = ssub.s32 %s22, %s29
      %s36 = sor.u32 %s34, %s35
      %p37 = scmp.eq.s32.totalorder %s36, 0
      %s39 = sadd.s32 %s38, 1
      %s40 = scalar_select %p37, %s38, %s39
      %p43 = pneg %p37
      %p44 = scmp.eq.s32.totalorder %s14, 7
      %p45 = por %p43, %p44
      %p46 = scmp.ne.s32.totalorder %s38, %s41
      %p47 = scmp.eq.s32.totalorder %s14, 0
      %p48 = por %p46, %p47
      %p49 = scmp.ne.s32.totalorder %s38, %s41
      %p50 = scmp.eq.s32.totalorder %s19, 7
      %p51 = por %p49, %p50
      %p52 = scmp.ne.s32.totalorder %s41, %s42
      %p53 = scmp.eq.s32.totalorder %s19, 0
      %p54 = por %p52, %p53
      %p55 = scmp.ne.s32.totalorder %s41, %s42
      %p56 = scmp.eq.s32.totalorder %s20, 7
      %p57 = por %p55, %p56
      %p59 = scmp.ne.s32.totalorder %s42, %s58
      %p60 = scmp.eq.s32.totalorder %s20, 0
      %p61 = por %p59, %p60
      %s62 = smul.u32 %s22, 8
      %s63 = ssub.s32 %s62, 1
      %p64 = scmp.gt.s32.totalorder %s63, 0
      %s65 = scalar_select %p64, %s63, 0
      %s66 = smul.u32 %s29, 8
      %s67 = ssub.s32 %s66, 1
      %p68 = scmp.gt.s32.totalorder %s67, 0
      %s69 = scalar_select %p68, %s67, 0
      %s70 = ssub.s32 %s21, %s33
      %s71 = ssub.s32 %s65, %s69
      %s72 = sor.u32 %s70, %s71
      %p73 = scmp.eq.s32.totalorder %s72, 0
      %s75 = sadd.s32 %s74, 1
      %s76 = scalar_select %p73, %s74, %s75
      %p79 = pneg %p73
      %p80 = scmp.eq.s32.totalorder %s14, 7
      %p81 = por %p79, %p80
      %p82 = scmp.ne.s32.totalorder %s74, %s77
      %p83 = scmp.eq.s32.totalorder %s14, 0
      %p84 = por %p82, %p83
      %p85 = scmp.ne.s32.totalorder %s74, %s77
      %p86 = scmp.eq.s32.totalorder %s19, 7
      %p87 = por %p85, %p86
      %p88 = scmp.ne.s32.totalorder %s77, %s78
      %p89 = scmp.eq.s32.totalorder %s19, 0
      %p90 = por %p88, %p89
      %p91 = scmp.ne.s32.totalorder %s77, %s78
      %p92 = scmp.eq.s32.totalorder %s20, 7
      %p93 = por %p91, %p92
      %p95 = scmp.ne.s32.totalorder %s78, %s94
      %p96 = scmp.eq.s32.totalorder %s20, 0
      %p97 = por %p95, %p96
      %s98 = smul.u32 %s22, 8
      %s99 = sadd.s32 %s98, 8
      %p100 = scmp.lt.s32.totalorder %s99, 31
      %s101 = scalar_select %p100, %s99, 31
      %s102 = smul.u32 %s29, 8
      %s103 = sadd.s32 %s102, 8
      %p104 = scmp.lt.s32.totalorder %s103, 31
      %s105 = scalar_select %p104, %s103, 31
      %s106 = ssub.s32 %s21, %s33
      %s107 = ssub.s32 %s101, %s105
      %s108 = sor.u32 %s106, %s107
      %p109 = scmp.eq.s32.totalorder %s108, 0
      %s111 = sadd.s32 %s110, 1
      %s112 = scalar_select %p109, %s110, %s111
      %p115 = pneg %p109
      %p116 = scmp.eq.s32.totalorder %s14, 7
      %p117 = por %p115, %p116
      %p118 = scmp.ne.s32.totalorder %s110, %s113
      %p119 = scmp.eq.s32.totalorder %s14, 0
      %p120 = por %p118, %p119
      %p121 = scmp.ne.s32.totalorder %s110, %s113
      %p122 = scmp.eq.s32.totalorder %s19, 7
      %p123 = por %p121, %p122
      %p124 = scmp.ne.s32.totalorder %s113, %s114
      %p125 = scmp.eq.s32.totalorder %s19, 0
      %p126 = por %p124, %p125
      %p127 = scmp.ne.s32.totalorder %s113, %s114
      %p128 = scmp.eq.s32.totalorder %s20, 7
      %p129 = por %p127, %p128
      %p131 = scmp.ne.s32.totalorder %s114, %s130
      %p132 = scmp.eq.s32.totalorder %s20, 0
      %p133 = por %p131, %p132
      %s135 = sadd.s32 %s134, 1
      %p138 = scmp.eq.s32.totalorder %s14, 7
      %p139 = scmp.ne.s32.totalorder %s134, %s136
      %p140 = scmp.eq.s32.totalorder %s14, 0
      %p141 = por %p139, %p140
      %p142 = scmp.ne.s32.totalorder %s134, %s136
      %p143 = scmp.eq.s32.totalorder %s19, 7
      %p144 = por %p142, %p143
      %p145 = scmp.ne.s32.totalorder %s136, %s137
      %p146 = scmp.eq.s32.totalorder %s19, 0
      %p147 = por %p145, %p146
      %p148 = scmp.ne.s32.totalorder %s136, %s137
      %p149 = scmp.eq.s32.totalorder %s20, 7
      %p150 = por %p148, %p149
      %p152 = scmp.ne.s32.totalorder %s137, %s151
      %p153 = scmp.eq.s32.totalorder %s20, 0
      %p154 = por %p152, %p153
      %s156 = sadd.s32 %s155, 1
      %p159 = scmp.eq.s32.totalorder %s14, 7
      %p160 = scmp.ne.s32.totalorder %s155, %s157
      %p161 = scmp.eq.s32.totalorder %s14, 0
      %p162 = por %p160, %p161
      %p163 = scmp.ne.s32.totalorder %s155, %s157
      %p164 = scmp.eq.s32.totalorder %s19, 7
      %p165 = por %p163, %p164
      %p166 = scmp.ne.s32.totalorder %s157, %s158
      %p167 = scmp.eq.s32.totalorder %s19, 0
      %p168 = por %p166, %p167
      %p169 = scmp.ne.s32.totalorder %s157, %s158
      %p170 = scmp.eq.s32.totalorder %s20, 7
      %p171 = por %p169, %p170
      %p173 = scmp.ne.s32.totalorder %s158, %s172
      %p174 = scmp.eq.s32.totalorder %s20, 0
      %p175 = por %p173, %p174
      %s176 = ssub.s32 %s21, %s33
      %s177 = ssub.s32 %s22, %s29
      %s178 = sor.u32 %s176, %s177
      %p179 = scmp.eq.s32.totalorder %s178, 0
      %s181 = sadd.s32 %s180, 1
      %s182 = scalar_select %p179, %s180, %s181
      %p185 = pneg %p179
      %p186 = scmp.eq.s32.totalorder %s14, 7
      %p187 = por %p185, %p186
      %p188 = scmp.ne.s32.totalorder %s180, %s183
      %p189 = scmp.eq.s32.totalorder %s14, 0
      %p190 = por %p188, %p189
      %p191 = scmp.ne.s32.totalorder %s180, %s183
      %p192 = scmp.eq.s32.totalorder %s19, 7
      %p193 = por %p191, %p192
      %p194 = scmp.ne.s32.totalorder %s183, %s184
      %p195 = scmp.eq.s32.totalorder %s19, 0
      %p196 = por %p194, %p195
      %p197 = scmp.ne.s32.totalorder %s183, %s184
      %p198 = scmp.eq.s32.totalorder %s20, 7
      %p199 = por %p197, %p198
      %p201 = scmp.ne.s32.totalorder %s184, %s200
      %p202 = scmp.eq.s32.totalorder %s20, 0
      %p203 = por %p201, %p202
      %p204 = scmp.le.s32.totalorder 1, %s14
      %p205 = scmp.lt.s32.totalorder %s14, 9
      %p206 = pnand %p204, %p205
      %p207 = pneg %p206
      // Predicated region
      $region9: #{abf_forward.3} parent=5 // pred_check
        _
      $region10: #{abf_forward.3} parent=5 // pred_check_branch
        %209 = sbr.rel (%p206) target = $region12
      $region11: #{abf_forward.3} parent=5 // pred_region
        %s210 = ssub.s32 %s14, 1
        // Predicated region
        $region13: #{abf_forward.3} parent=11 // pred_check
          %p211 = pneg %p147
        $region14: #{abf_forward.3} parent=11 // pred_check_branch
          %213 = sbr.rel (%p211) target = $region16
        $region15: #{abf_forward.3} parent=11 // pred_region
          _
        $region16: #{abf_forward.3} parent=11 // pred_fallthru
          _
        // Predicated region
        $region17: #{abf_forward.3} parent=11 // pred_check
          %p214 = pneg %p168
        $region18: #{abf_forward.3} parent=11 // pred_check_branch
          %216 = sbr.rel (%p214) target = $region20
        $region19: #{abf_forward.3} parent=11 // pred_region
          _
        $region20: #{abf_forward.3} parent=11 // pred_fallthru
          _
      $region12: #{abf_forward.3} parent=5 // pred_fallthru
        _
      %p217 = scmp.lt.s32.totalorder %s14, 8
      // Predicated region
      $region21: #{abf_forward.3} parent=5 // pred_check
        %p218 = pneg %p217
      $region22: #{abf_forward.3} parent=5 // pred_check_branch
        %220 = sbr.rel (%p218) target = $region24
      $region23: #{abf_forward.3} parent=5 // pred_region
        // Predicated region
        $region25: #{abf_forward.3} parent=23 // pred_check
          %p221 = pneg %p48
        $region26: #{abf_forward.3} parent=23 // pred_check_branch
          %223 = sbr.rel (%p221) target = $region28
        $region27: #{abf_forward.3} parent=23 // pred_region
          %s224 = smul.u32 8, %s22
          %p225 = scmp.lt.s32.totalorder %s21, 1
          %s226 = scalar_select %p225, %s21, 1
          %p227 = scmp.lt.s32.totalorder %s224, 31
          %s228 = scalar_select %p227, %s224, 31
          %s229 = smul.addr %s228, 4
          %s230 = smul.addr %s226, 128
          %s231 = sadd.s32 %s229, %s230
          %s232 = smul.addr %s231, 4
          %s233 = scalar_lea.vmem %s0, %s232
          %s234 = smul.u32 8, %s22
        $region28: #{abf_forward.3} parent=23 // pred_fallthru
          _
        // Predicated region
        $region29: #{abf_forward.3} parent=23 // pred_check
          %p235 = pneg %p84
        $region30: #{abf_forward.3} parent=23 // pred_check_branch
          %237 = sbr.rel (%p235) target = $region32
        $region31: #{abf_forward.3} parent=23 // pred_region
          %s238 = smul.u32 %s22, 8
          %s239 = ssub.s32 %s238, 1
          %p240 = scmp.gt.s32.totalorder %s239, 0
          %s241 = scalar_select %p240, %s239, 0
          %p242 = scmp.lt.s32.totalorder %s21, 1
          %s243 = scalar_select %p242, %s21, 1
          %p244 = scmp.lt.s32.totalorder %s241, 31
          %s245 = scalar_select %p244, %s241, 31
          %s246 = smul.addr %s245, 4
          %s247 = smul.addr %s243, 128
          %s248 = sadd.s32 %s246, %s247
          %s249 = smul.addr %s248, 4
          %s250 = scalar_lea.vmem %s1, %s249
          %s251 = smul.u32 %s22, 8
          %s252 = ssub.s32 %s251, 1
          %p253 = scmp.gt.s32.totalorder %s252, 0
          %s254 = scalar_select %p253, %s252, 0
        $region32: #{abf_forward.3} parent=23 // pred_fallthru
          _
        // Predicated region
        $region33: #{abf_forward.3} parent=23 // pred_check
          %p255 = pneg %p120
        $region34: #{abf_forward.3} parent=23 // pred_check_branch
          %257 = sbr.rel (%p255) target = $region36
        $region35: #{abf_forward.3} parent=23 // pred_region
          %s258 = smul.u32 %s22, 8
          %s259 = sadd.s32 %s258, 8
          %p260 = scmp.lt.s32.totalorder %s259, 31
          %s261 = scalar_select %p260, %s259, 31
          %p262 = scmp.lt.s32.totalorder %s21, 1
          %s263 = scalar_select %p262, %s21, 1
          %p264 = scmp.lt.s32.totalorder %s261, 31
          %s265 = scalar_select %p264, %s261, 31
          %s266 = smul.addr %s265, 4
          %s267 = smul.addr %s263, 128
          %s268 = sadd.s32 %s266, %s267
          %s269 = smul.addr %s268, 4
          %s270 = scalar_lea.vmem %s2, %s269
          %s271 = smul.u32 %s22, 8
          %s272 = sadd.s32 %s271, 8
          %p273 = scmp.lt.s32.totalorder %s272, 31
          %s274 = scalar_select %p273, %s272, 31
        $region36: #{abf_forward.3} parent=23 // pred_fallthru
          _
      $region24: #{abf_forward.3} parent=5 // pred_fallthru
        _
      %p275 = scmp.le.s32.totalorder 1, %s14
      %p276 = scmp.lt.s32.totalorder %s14, 9
      %p277 = pnand %p275, %p276
      %p278 = pneg %p277
      // Predicated region
      $region37: #{abf_forward.3} parent=5 // pred_check
        _
      $region38: #{abf_forward.3} parent=5 // pred_check_branch
        %280 = sbr.rel (%p277) target = $region40
      $region39: #{abf_forward.3} parent=5 // pred_region
        %s281 = ssub.s32 %s14, 1
        %s282 = smul.u32 8, %s24
        %p283 = scmp.lt.s32.totalorder %s23, 1
        %s284 = scalar_select %p283, %s23, 1
        %p285 = scmp.lt.s32.totalorder %s282, 31
        %s286 = scalar_select %p285, %s282, 31
        %s287 = smul.addr %s286, 4
        %s288 = smul.addr %s284, 128
        %s289 = sadd.s32 %s287, %s288
        %s290 = smul.addr %s289, 4
        %s291 = scalar_lea.vmem %s0, %s290
        %p292 = pneg %p54
        %p293 = pneg %p51
        %s294 = smul.u32 %s24, 8
        %s295 = ssub.s32 %s294, 1
        %p296 = scmp.gt.s32.totalorder %s295, 0
        %s297 = scalar_select %p296, %s295, 0
        %p298 = scmp.lt.s32.totalorder %s23, 1
        %s299 = scalar_select %p298, %s23, 1
        %p300 = scmp.lt.s32.totalorder %s297, 31
        %s301 = scalar_select %p300, %s297, 31
        %s302 = smul.addr %s301, 4
        %s303 = smul.addr %s299, 128
        %s304 = sadd.s32 %s302, %s303
        %s305 = smul.addr %s304, 4
        %s306 = scalar_lea.vmem %s1, %s305
        %p307 = pneg %p90
        %p308 = pneg %p87
        %s309 = smul.u32 %s24, 8
        %s310 = sadd.s32 %s309, 8
        %p311 = scmp.lt.s32.totalorder %s310, 31
        %s312 = scalar_select %p311, %s310, 31
        %p313 = scmp.lt.s32.totalorder %s23, 1
        %s314 = scalar_select %p313, %s23, 1
        %p315 = scmp.lt.s32.totalorder %s312, 31
        %s316 = scalar_select %p315, %s312, 31
        %s317 = smul.addr %s316, 4
        %s318 = smul.addr %s314, 128
        %s319 = sadd.s32 %s317, %s318
        %s320 = smul.addr %s319, 4
        %s321 = scalar_lea.vmem %s2, %s320
        %p322 = pneg %p126
        %p323 = pneg %p123
        %p324 = pneg %p147
        %p325 = pneg %p144
        %p326 = pneg %p168
        %p327 = pneg %p165
        %p328 = pneg %p196
        %p329 = pneg %p193
        %s330 = sand.u32 %s183, 1
        %s331 = scalar_lea.sflag [#allocation4], %s330
        %s332 = sand.u32 %s183, 1
        %s333 = smul.addr %s332, 256
        %s334 = scalar_lea.vmem [#allocation3], %s333
        %s335 = smul.u32 8, %s24
        %p336 = scmp.lt.s32.totalorder %s23, 1
        %s337 = scalar_select %p336, %s23, 1
        %p338 = scmp.lt.s32.totalorder %s335, 31
        %s339 = scalar_select %p338, %s335, 31
        %s340 = smul.addr %s339, 4
        %s341 = smul.addr %s337, 128
        %s342 = sadd.s32 %s340, %s341
        %s343 = smul.addr %s342, 4
        %s344 = scalar_lea.vmem %s0, %s343
        %s345 = smul.u32 8, %s24
        %s346 = smul.u32 %s24, 8
        %s347 = ssub.s32 %s346, 1
        %p348 = scmp.gt.s32.totalorder %s347, 0
        %s349 = scalar_select %p348, %s347, 0
        %p350 = scmp.lt.s32.totalorder %s23, 1
        %s351 = scalar_select %p350, %s23, 1
        %p352 = scmp.lt.s32.totalorder %s349, 31
        %s353 = scalar_select %p352, %s349, 31
        %s354 = smul.addr %s353, 4
        %s355 = smul.addr %s351, 128
        %s356 = sadd.s32 %s354, %s355
        %s357 = smul.addr %s356, 4
        %s358 = scalar_lea.vmem %s1, %s357
        %s359 = smul.u32 %s24, 8
        %s360 = ssub.s32 %s359, 1
        %p361 = scmp.gt.s32.totalorder %s360, 0
        %s362 = scalar_select %p361, %s360, 0
        %s363 = smul.u32 %s24, 8
        %s364 = sadd.s32 %s363, 8
        %p365 = scmp.lt.s32.totalorder %s364, 31
        %s366 = scalar_select %p365, %s364, 31
        %p367 = scmp.lt.s32.totalorder %s23, 1
        %s368 = scalar_select %p367, %s23, 1
        %p369 = scmp.lt.s32.totalorder %s366, 31
        %s370 = scalar_select %p369, %s366, 31
        %s371 = smul.addr %s370, 4
        %s372 = smul.addr %s368, 128
        %s373 = sadd.s32 %s371, %s372
        %s374 = smul.addr %s373, 4
        %s375 = scalar_lea.vmem %s2, %s374
        %s376 = smul.u32 %s24, 8
        %s377 = sadd.s32 %s376, 8
        %p378 = scmp.lt.s32.totalorder %s377, 31
        %s379 = scalar_select %p378, %s377, 31
        %s380 = smul.u32 8, %s24
        %p382 = scmp.gt.s32.totalorder %s24, 0
        %s383 = scalar_select %p382, 1, 0
        %s384 = scvt.s32.f32 %s383
        %p386 = scmp.ne.f32.partialorder %s384, %s384
        %s387 = sshrl.u32 %s384, 16
        %s388 = sand.u32 %s387, 1
        %s389 = sadd.s32 32767, %s388
        %s390 = sadd.s32 %s384, %s389
        %s391 = sand.u32 %s390, 4294901760
        %s392 = scalar_select %p386, 2143289344, %s391
        %s394 = sshrl.u32 %s392, 16
        %p395 = scmp.lt.s32.totalorder %s24, 3
        %s396 = scalar_select %p395, 1, 0
        %s397 = scvt.s32.f32 %s396
        %p399 = scmp.ne.f32.partialorder %s397, %s397
        %s400 = sshrl.u32 %s397, 16
        %s401 = sand.u32 %s400, 1
        %s402 = sadd.s32 32767, %s401
        %s403 = sadd.s32 %s397, %s402
        %s404 = sand.u32 %s403, 4294901760
        %s405 = scalar_select %p399, 2143289344, %s404
        %s407 = sshrl.u32 %s405, 16
        %vm408 = vcmask 1043459
        %vm409 = vsmask.f32 7950
        %vm410 = vmand %vm408, %vm409
        %v411 = vld [vmem:[#allocation2] sm:$0x8]
        %v412 = vsel %vm410, 0, %v411
        %413 = vst [vmem:[#allocation2] sm:$0x8] %v412
        %v414 = vld [vmem:[#allocation2 + $0x18] sm:$0x8]
        %v415 = vsel %vm410, 0, %v414
        %416 = vst [vmem:[#allocation2 + $0x18] sm:$0x8] %v415
        %v417 = vld [vmem:[#allocation2 + $0x30] sm:$0x8]
        %v418 = vsel %vm410, 0, %v417
        %419 = vst [vmem:[#allocation2 + $0x30] sm:$0x8] %v418
        %v420 = vld [vmem:[#allocation2 + $0x48] sm:$0x8]
        %v421 = vsel %vm410, 0, %v420
        %422 = vst [vmem:[#allocation2 + $0x48] sm:$0x8] %v421
        %v423 = vld [vmem:[#allocation2 + $0x60] sm:$0x8]
        %v424 = vsel %vm410, 0, %v423
        %425 = vst [vmem:[#allocation2 + $0x60] sm:$0x8] %v424
        %v426 = vld [vmem:[#allocation2 + $0x78] sm:$0x8]
        %v427 = vsel %vm410, 0, %v426
        %428 = vst [vmem:[#allocation2 + $0x78] sm:$0x8] %v427
        %v429 = vld [vmem:[#allocation2 + $0x90] sm:$0x8]
        %v430 = vsel %vm410, 0, %v429
        %431 = vst [vmem:[#allocation2 + $0x90] sm:$0x8] %v430
        %v432 = vld [vmem:[#allocation2 + $0xa8] sm:$0x8]
        %v433 = vsel %vm410, 0, %v432
        %434 = vst [vmem:[#allocation2 + $0xa8] sm:$0x8] %v433
        %v435 = vld [vmem:[#allocation2 + $0xc0] sm:$0x8]
        %v436 = vsel %vm410, 0, %v435
        %437 = vst [vmem:[#allocation2 + $0xc0] sm:$0x8] %v436
        %v438 = vld [vmem:[#allocation2 + $0xd8] sm:$0x8]
        %v439 = vsel %vm410, 0, %v438
        %440 = vst [vmem:[#allocation2 + $0xd8] sm:$0x8] %v439
        %vm441 = vcmask 1040384
        %vm442 = vsmask.f32 256
        %vm443 = vmand %vm441, %vm442
        %v444 = vld [vmem:[#allocation2 + $0x14] sm:$0x1]
        %v445 = vsel %vm443, 0, %v444
        %446 = vst [vmem:[#allocation2 + $0x14] sm:$0x1] %v445
        %v447 = vld [vmem:[#allocation2 + $0x2c] sm:$0x1]
        %v448 = vsel %vm443, 0, %v447
        %449 = vst [vmem:[#allocation2 + $0x2c] sm:$0x1] %v448
        %v450 = vld [vmem:[#allocation2 + $0x44] sm:$0x1]
        %v451 = vsel %vm443, 0, %v450
        %452 = vst [vmem:[#allocation2 + $0x44] sm:$0x1] %v451
        %v453 = vld [vmem:[#allocation2 + $0x5c] sm:$0x1]
        %v454 = vsel %vm443, 0, %v453
        %455 = vst [vmem:[#allocation2 + $0x5c] sm:$0x1] %v454
        %v456 = vld [vmem:[#allocation2 + $0x74] sm:$0x1]
        %v457 = vsel %vm443, 0, %v456
        %458 = vst [vmem:[#allocation2 + $0x74] sm:$0x1] %v457
        %v459 = vld [vmem:[#allocation2 + $0x8c] sm:$0x1]
        %v460 = vsel %vm443, 0, %v459
        %461 = vst [vmem:[#allocation2 + $0x8c] sm:$0x1] %v460
        %v462 = vld [vmem:[#allocation2 + $0xa4] sm:$0x1]
        %v463 = vsel %vm443, 0, %v462
        %464 = vst [vmem:[#allocation2 + $0xa4] sm:$0x1] %v463
        %v465 = vld [vmem:[#allocation2 + $0xbc] sm:$0x1]
        %v466 = vsel %vm443, 0, %v465
        %467 = vst [vmem:[#allocation2 + $0xbc] sm:$0x1] %v466
        %v468 = vld [vmem:[#allocation2 + $0xd4] sm:$0x1]
        %v469 = vsel %vm443, 0, %v468
        %470 = vst [vmem:[#allocation2 + $0xd4] sm:$0x1] %v469
        %v471 = vld [vmem:[#allocation2 + $0xec] sm:$0x1]
        %v472 = vsel %vm443, 0, %v471
        %473 = vst [vmem:[#allocation2 + $0xec] sm:$0x1] %v472
        %v474 = vld [vmem:[%s358] sm:$0xf]
        %v475 = vld [vmem:[%s358 + $0x4] sm:$0xf]
        %v476 = vld [vmem:[%s358 + $0x8] sm:$0xf]
        %v477 = vld [vmem:[%s358 + $0xc] sm:$0xf]
        %s478 = sshll.u32 %s394, 16
        %s479 = sor.u32 %s394, %s478
        %v480 = vstv %s479
        %v482 = vmul.bf16 %v474, %v480
        %v483 = vmul.bf16 %v475, %v480
        %v484 = vmul.bf16 %v476, %v480
        %v485 = vmul.bf16 %v477, %v480
        %486 = vst [vmem:[#allocation2 + $0x4] sm:$0xf] %v482
        %487 = vst [vmem:[#allocation2 + $0x8] sm:$0xf] %v483
        %488 = vst [vmem:[#allocation2 + $0xc] sm:$0xf] %v484
        %489 = vst [vmem:[#allocation2 + $0x10] sm:$0xf] %v485
        %v490 = vld [vmem:[%s375] sm:$0xf]
        %v491 = vld [vmem:[%s375 + $0x4] sm:$0xf]
        %v492 = vld [vmem:[%s375 + $0x8] sm:$0xf]
        %v493 = vld [vmem:[%s375 + $0xc] sm:$0xf]
        %s494 = sshll.u32 %s407, 16
        %s495 = sor.u32 %s407, %s494
        %v496 = vstv %s495
        %v498 = vmul.bf16 %v490, %v496
        %v499 = vmul.bf16 %v491, %v496
        %v500 = vmul.bf16 %v492, %v496
        %v501 = vmul.bf16 %v493, %v496
        %s502 = scalar_lea.vmem [#allocation2], 216
        %503 = vst [vmem:[%s502 + $0x4] sm:$0xf] %v498
        %504 = vst [vmem:[%s502 + $0x8] sm:$0xf] %v499
        %505 = vst [vmem:[%s502 + $0xc] sm:$0xf] %v500
        %506 = vst [vmem:[%s502 + $0x10] sm:$0xf] %v501
        %v507 = vld [vmem:[%s344] sm:$0xf]
        %v508 = vld [vmem:[%s344 + $0x4] sm:$0xf]
        %v509 = vld [vmem:[%s344 + $0x8] sm:$0xf]
        %v510 = vld [vmem:[%s344 + $0xc] sm:$0xf]
        %v511 = vld [vmem:[%s344 + $0x10] sm:$0xf]
        %v512 = vld [vmem:[%s344 + $0x14] sm:$0xf]
        %v513 = vld [vmem:[%s344 + $0x18] sm:$0xf]
        %v514 = vld [vmem:[%s344 + $0x1c] sm:$0xf]
        %v515 = vld [vmem:[%s344 + $0x20] sm:$0xf]
        %v516 = vld [vmem:[%s344 + $0x24] sm:$0xf]
        %v517 = vld [vmem:[%s344 + $0x28] sm:$0xf]
        %v518 = vld [vmem:[%s344 + $0x2c] sm:$0xf]
        %v519 = vld [vmem:[%s344 + $0x30] sm:$0xf]
        %v520 = vld [vmem:[%s344 + $0x34] sm:$0xf]
        %v521 = vld [vmem:[%s344 + $0x38] sm:$0xf]
        %v522 = vld [vmem:[%s344 + $0x3c] sm:$0xf]
        %v523 = vld [vmem:[%s344 + $0x40] sm:$0xf]
        %v524 = vld [vmem:[%s344 + $0x44] sm:$0xf]
        %v525 = vld [vmem:[%s344 + $0x48] sm:$0xf]
        %v526 = vld [vmem:[%s344 + $0x4c] sm:$0xf]
        %v527 = vld [vmem:[%s344 + $0x50] sm:$0xf]
        %v528 = vld [vmem:[%s344 + $0x54] sm:$0xf]
        %v529 = vld [vmem:[%s344 + $0x58] sm:$0xf]
        %v530 = vld [vmem:[%s344 + $0x5c] sm:$0xf]
        %v531 = vld [vmem:[%s344 + $0x60] sm:$0xf]
        %v532 = vld [vmem:[%s344 + $0x64] sm:$0xf]
        %v533 = vld [vmem:[%s344 + $0x68] sm:$0xf]
        %v534 = vld [vmem:[%s344 + $0x6c] sm:$0xf]
        %v535 = vld [vmem:[%s344 + $0x70] sm:$0xf]
        %v536 = vld [vmem:[%s344 + $0x74] sm:$0xf]
        %v537 = vld [vmem:[%s344 + $0x78] sm:$0xf]
        %v538 = vld [vmem:[%s344 + $0x7c] sm:$0xf]
        %s539 = scalar_lea.vmem [#allocation2], 24
        %540 = vst [vmem:[%s539 + $0x4] sm:$0xf] %v507
        %541 = vst [vmem:[%s539 + $0x8] sm:$0xf] %v508
        %542 = vst [vmem:[%s539 + $0xc] sm:$0xf] %v509
        %543 = vst [vmem:[%s539 + $0x10] sm:$0xf] %v510
        %544 = vst [vmem:[%s539 + $0x1c] sm:$0xf] %v511
        %545 = vst [vmem:[%s539 + $0x20] sm:$0xf] %v512
        %546 = vst [vmem:[%s539 + $0x24] sm:$0xf] %v513
        %547 = vst [vmem:[%s539 + $0x28] sm:$0xf] %v514
        %548 = vst [vmem:[%s539 + $0x34] sm:$0xf] %v515
        %549 = vst [vmem:[%s539 + $0x38] sm:$0xf] %v516
        %550 = vst [vmem:[%s539 + $0x3c] sm:$0xf] %v517
        %551 = vst [vmem:[%s539 + $0x40] sm:$0xf] %v518
        %552 = vst [vmem:[%s539 + $0x4c] sm:$0xf] %v519
        %553 = vst [vmem:[%s539 + $0x50] sm:$0xf] %v520
        %554 = vst [vmem:[%s539 + $0x54] sm:$0xf] %v521
        %555 = vst [vmem:[%s539 + $0x58] sm:$0xf] %v522
        %556 = vst [vmem:[%s539 + $0x64] sm:$0xf] %v523
        %557 = vst [vmem:[%s539 + $0x68] sm:$0xf] %v524
        %558 = vst [vmem:[%s539 + $0x6c] sm:$0xf] %v525
        %559 = vst [vmem:[%s539 + $0x70] sm:$0xf] %v526
        %560 = vst [vmem:[%s539 + $0x7c] sm:$0xf] %v527
        %561 = vst [vmem:[%s539 + $0x80] sm:$0xf] %v528
        %562 = vst [vmem:[%s539 + $0x84] sm:$0xf] %v529
        %563 = vst [vmem:[%s539 + $0x88] sm:$0xf] %v530
        %564 = vst [vmem:[%s539 + $0x94] sm:$0xf] %v531
        %565 = vst [vmem:[%s539 + $0x98] sm:$0xf] %v532
        %566 = vst [vmem:[%s539 + $0x9c] sm:$0xf] %v533
        %567 = vst [vmem:[%s539 + $0xa0] sm:$0xf] %v534
        %568 = vst [vmem:[%s539 + $0xac] sm:$0xf] %v535
        %569 = vst [vmem:[%s539 + $0xb0] sm:$0xf] %v536
        %570 = vst [vmem:[%s539 + $0xb4] sm:$0xf] %v537
        %571 = vst [vmem:[%s539 + $0xb8] sm:$0xf] %v538
        %v572 = vld [vmem:[#allocation2] sm:$0x8]
        %v573 = vld [vmem:[#allocation2 + $0x4] sm:$0xf]
        %v574 = vld [vmem:[#allocation2 + $0x8] sm:$0xf]
        %v575 = vld [vmem:[#allocation2 + $0xc] sm:$0xf]
        %v576 = vld [vmem:[#allocation2 + $0x10] sm:$0xf]
        %v577 = vld [vmem:[#allocation2 + $0x18] sm:$0x8]
        %v578 = vld [vmem:[#allocation2 + $0x1c] sm:$0xf]
        %v579 = vld [vmem:[#allocation2 + $0x20] sm:$0xf]
        %v580 = vld [vmem:[#allocation2 + $0x24] sm:$0xf]
        %v581 = vld [vmem:[#allocation2 + $0x28] sm:$0xf]
        %v582 = vld [vmem:[#allocation2 + $0x30] sm:$0x8]
        %v583 = vld [vmem:[#allocation2 + $0x34] sm:$0xf]
        %v584 = vld [vmem:[#allocation2 + $0x38] sm:$0xf]
        %v585 = vld [vmem:[#allocation2 + $0x3c] sm:$0xf]
        %v586 = vld [vmem:[#allocation2 + $0x40] sm:$0xf]
        %v587 = vld [vmem:[#allocation2 + $0x48] sm:$0x8]
        %v588 = vld [vmem:[#allocation2 + $0x4c] sm:$0xf]
        %v589 = vld [vmem:[#allocation2 + $0x50] sm:$0xf]
        %v590 = vld [vmem:[#allocation2 + $0x54] sm:$0xf]
        %v591 = vld [vmem:[#allocation2 + $0x58] sm:$0xf]
        %v592 = vld [vmem:[#allocation2 + $0x60] sm:$0x8]
        %v593 = vld [vmem:[#allocation2 + $0x64] sm:$0xf]
        %v594 = vld [vmem:[#allocation2 + $0x68] sm:$0xf]
        %v595 = vld [vmem:[#allocation2 + $0x6c] sm:$0xf]
        %v596 = vld [vmem:[#allocation2 + $0x70] sm:$0xf]
        %v597 = vld [vmem:[#allocation2 + $0x78] sm:$0x8]
        %v598 = vld [vmem:[#allocation2 + $0x7c] sm:$0xf]
        %v599 = vld [vmem:[#allocation2 + $0x80] sm:$0xf]
        %v600 = vld [vmem:[#allocation2 + $0x84] sm:$0xf]
        %v601 = vld [vmem:[#allocation2 + $0x88] sm:$0xf]
        %v602 = vld [vmem:[#allocation2 + $0x90] sm:$0x8]
        %v603 = vld [vmem:[#allocation2 + $0x94] sm:$0xf]
        %v604 = vld [vmem:[#allocation2 + $0x98] sm:$0xf]
        %v605 = vld [vmem:[#allocation2 + $0x9c] sm:$0xf]
        %v606 = vld [vmem:[#allocation2 + $0xa0] sm:$0xf]
        %v607 = vld [vmem:[#allocation2 + $0xa8] sm:$0x8]
        %v608 = vld [vmem:[#allocation2 + $0xac] sm:$0xf]
        %v609 = vld [vmem:[#allocation2 + $0xb0] sm:$0xf]
        %v610 = vld [vmem:[#allocation2 + $0xb4] sm:$0xf]
        %v611 = vld [vmem:[#allocation2 + $0xb8] sm:$0xf]
        %v612 = vld [vmem:[#allocation2 + $0xc0] sm:$0x8]
        %v613 = vld [vmem:[#allocation2 + $0xc4] sm:$0xf]
        %v614 = vld [vmem:[#allocation2 + $0xc8] sm:$0xf]
        %v615 = vld [vmem:[#allocation2 + $0xcc] sm:$0xf]
        %v616 = vld [vmem:[#allocation2 + $0xd0] sm:$0xf]
        %v617 = vld [vmem:[#allocation2 + $0xd8] sm:$0x8]
        %v618 = vld [vmem:[#allocation2 + $0xdc] sm:$0xf]
        %v619 = vld [vmem:[#allocation2 + $0xe0] sm:$0xf]
        %v620 = vld [vmem:[#allocation2 + $0xe4] sm:$0xf]
        %v621 = vld [vmem:[#allocation2 + $0xe8] sm:$0xf]
        %vm622 = vsmask.f32 4368
        %vm623 = vmor %vm442, %vm622
        %v625 = vshrl.u32 %v572, 16
        %v627 = vrot.slane %v625, 7
        %v628 = vrot.slane %v627, 4
        %v630 = vshrl.u32 %v573, 16
        %v632 = vrot.slane %v630, 7
        %v633 = vshll.u32 %v573, 16
        %v635 = vor.u32 %v632, %v633
        %v636 = vsel %vm623, %v628, %v635
        %v637 = vrot.slane %v632, 4
        %v639 = vshrl.u32 %v574, 16
        %v641 = vrot.slane %v639, 7
        %v642 = vshll.u32 %v574, 16
        %v644 = vor.u32 %v641, %v642
        %v645 = vsel %vm623, %v637, %v644
        %v646 = vrot.slane %v641, 4
        %v648 = vshrl.u32 %v575, 16
        %v650 = vrot.slane %v648, 7
        %v651 = vshll.u32 %v575, 16
        %v653 = vor.u32 %v650, %v651
        %v654 = vsel %vm623, %v646, %v653
        %v655 = vrot.slane %v650, 4
        %v657 = vshrl.u32 %v576, 16
        %v659 = vrot.slane %v657, 7
        %v660 = vshll.u32 %v576, 16
        %v662 = vor.u32 %v659, %v660
        %v663 = vsel %vm623, %v655, %v662
        %v665 = vshrl.u32 %v577, 16
        %v667 = vrot.slane %v665, 7
        %v668 = vrot.slane %v667, 4
        %v670 = vshrl.u32 %v578, 16
        %v672 = vrot.slane %v670, 7
        %v673 = vshll.u32 %v578, 16
        %v675 = vor.u32 %v672, %v673
        %v676 = vsel %vm623, %v668, %v675
        %v677 = vrot.slane %v672, 4
        %v679 = vshrl.u32 %v579, 16
        %v681 = vrot.slane %v679, 7
        %v682 = vshll.u32 %v579, 16
        %v684 = vor.u32 %v681, %v682
        %v685 = vsel %vm623, %v677, %v684
        %v686 = vrot.slane %v681, 4
        %v688 = vshrl.u32 %v580, 16
        %v690 = vrot.slane %v688, 7
        %v691 = vshll.u32 %v580, 16
        %v693 = vor.u32 %v690, %v691
        %v694 = vsel %vm623, %v686, %v693
        %v695 = vrot.slane %v690, 4
        %v697 = vshrl.u32 %v581, 16
        %v699 = vrot.slane %v697, 7
        %v700 = vshll.u32 %v581, 16
        %v702 = vor.u32 %v699, %v700
        %v703 = vsel %vm623, %v695, %v702
        %v705 = vshrl.u32 %v582, 16
        %v707 = vrot.slane %v705, 7
        %v708 = vrot.slane %v707, 4
        %v710 = vshrl.u32 %v583, 16
        %v712 = vrot.slane %v710, 7
        %v713 = vshll.u32 %v583, 16
        %v715 = vor.u32 %v712, %v713
        %v716 = vsel %vm623, %v708, %v715
        %v717 = vrot.slane %v712, 4
        %v719 = vshrl.u32 %v584, 16
        %v721 = vrot.slane %v719, 7
        %v722 = vshll.u32 %v584, 16
        %v724 = vor.u32 %v721, %v722
        %v725 = vsel %vm623, %v717, %v724
        %v726 = vrot.slane %v721, 4
        %v728 = vshrl.u32 %v585, 16
        %v730 = vrot.slane %v728, 7
        %v731 = vshll.u32 %v585, 16
        %v733 = vor.u32 %v730, %v731
        %v734 = vsel %vm623, %v726, %v733
        %v735 = vrot.slane %v730, 4
        %v737 = vshrl.u32 %v586, 16
        %v739 = vrot.slane %v737, 7
        %v740 = vshll.u32 %v586, 16
        %v742 = vor.u32 %v739, %v740
        %v743 = vsel %vm623, %v735, %v742
        %v745 = vshrl.u32 %v587, 16
        %v747 = vrot.slane %v745, 7
        %v748 = vrot.slane %v747, 4
        %v750 = vshrl.u32 %v588, 16
        %v752 = vrot.slane %v750, 7
        %v753 = vshll.u32 %v588, 16
        %v755 = vor.u32 %v752, %v753
        %v756 = vsel %vm623, %v748, %v755
        %v757 = vrot.slane %v752, 4
        %v759 = vshrl.u32 %v589, 16
        %v761 = vrot.slane %v759, 7
        %v762 = vshll.u32 %v589, 16
        %v764 = vor.u32 %v761, %v762
        %v765 = vsel %vm623, %v757, %v764
        %v766 = vrot.slane %v761, 4
        %v768 = vshrl.u32 %v590, 16
        %v770 = vrot.slane %v768, 7
        %v771 = vshll.u32 %v590, 16
        %v773 = vor.u32 %v770, %v771
        %v774 = vsel %vm623, %v766, %v773
        %v775 = vrot.slane %v770, 4
        %v777 = vshrl.u32 %v591, 16
        %v779 = vrot.slane %v777, 7
        %v780 = vshll.u32 %v591, 16
        %v782 = vor.u32 %v779, %v780
        %v783 = vsel %vm623, %v775, %v782
        %v785 = vshrl.u32 %v592, 16
        %v787 = vrot.slane %v785, 7
        %v788 = vrot.slane %v787, 4
        %v790 = vshrl.u32 %v593, 16
        %v792 = vrot.slane %v790, 7
        %v793 = vshll.u32 %v593, 16
        %v795 = vor.u32 %v792, %v793
        %v796 = vsel %vm623, %v788, %v795
        %v797 = vrot.slane %v792, 4
        %v799 = vshrl.u32 %v594, 16
        %v801 = vrot.slane %v799, 7
        %v802 = vshll.u32 %v594, 16
        %v804 = vor.u32 %v801, %v802
        %v805 = vsel %vm623, %v797, %v804
        %v806 = vrot.slane %v801, 4
        %v808 = vshrl.u32 %v595, 16
        %v810 = vrot.slane %v808, 7
        %v811 = vshll.u32 %v595, 16
        %v813 = vor.u32 %v810, %v811
        %v814 = vsel %vm623, %v806, %v813
        %v815 = vrot.slane %v810, 4
        %v817 = vshrl.u32 %v596, 16
        %v819 = vrot.slane %v817, 7
        %v820 = vshll.u32 %v596, 16
        %v822 = vor.u32 %v819, %v820
        %v823 = vsel %vm623, %v815, %v822
        %v825 = vshrl.u32 %v597, 16
        %v827 = vrot.slane %v825, 7
        %v828 = vrot.slane %v827, 4
        %v830 = vshrl.u32 %v598, 16
        %v832 = vrot.slane %v830, 7
        %v833 = vshll.u32 %v598, 16
        %v835 = vor.u32 %v832, %v833
        %v836 = vsel %vm623, %v828, %v835
        %v837 = vrot.slane %v832, 4
        %v839 = vshrl.u32 %v599, 16
        %v841 = vrot.slane %v839, 7
        %v842 = vshll.u32 %v599, 16
        %v844 = vor.u32 %v841, %v842
        %v845 = vsel %vm623, %v837, %v844
        %v846 = vrot.slane %v841, 4
        %v848 = vshrl.u32 %v600, 16
        %v850 = vrot.slane %v848, 7
        %v851 = vshll.u32 %v600, 16
        %v853 = vor.u32 %v850, %v851
        %v854 = vsel %vm623, %v846, %v853
        %v855 = vrot.slane %v850, 4
        %v857 = vshrl.u32 %v601, 16
        %v859 = vrot.slane %v857, 7
        %v860 = vshll.u32 %v601, 16
        %v862 = vor.u32 %v859, %v860
        %v863 = vsel %vm623, %v855, %v862
        %v865 = vshrl.u32 %v602, 16
        %v867 = vrot.slane %v865, 7
        %v868 = vrot.slane %v867, 4
        %v870 = vshrl.u32 %v603, 16
        %v872 = vrot.slane %v870, 7
        %v873 = vshll.u32 %v603, 16
        %v875 = vor.u32 %v872, %v873
        %v876 = vsel %vm623, %v868, %v875
        %v877 = vrot.slane %v872, 4
        %v879 = vshrl.u32 %v604, 16
        %v881 = vrot.slane %v879, 7
        %v882 = vshll.u32 %v604, 16
        %v884 = vor.u32 %v881, %v882
        %v885 = vsel %vm623, %v877, %v884
        %v886 = vrot.slane %v881, 4
        %v888 = vshrl.u32 %v605, 16
        %v890 = vrot.slane %v888, 7
        %v891 = vshll.u32 %v605, 16
        %v893 = vor.u32 %v890, %v891
        %v894 = vsel %vm623, %v886, %v893
        %v895 = vrot.slane %v890, 4
        %v897 = vshrl.u32 %v606, 16
        %v899 = vrot.slane %v897, 7
        %v900 = vshll.u32 %v606, 16
        %v902 = vor.u32 %v899, %v900
        %v903 = vsel %vm623, %v895, %v902
        %v905 = vshrl.u32 %v607, 16
        %v907 = vrot.slane %v905, 7
        %v908 = vrot.slane %v907, 4
        %v910 = vshrl.u32 %v608, 16
        %v912 = vrot.slane %v910, 7
        %v913 = vshll.u32 %v608, 16
        %v915 = vor.u32 %v912, %v913
        %v916 = vsel %vm623, %v908, %v915
        %v917 = vrot.slane %v912, 4
        %v919 = vshrl.u32 %v609, 16
        %v921 = vrot.slane %v919, 7
        %v922 = vshll.u32 %v609, 16
        %v924 = vor.u32 %v921, %v922
        %v925 = vsel %vm623, %v917, %v924
        %v926 = vrot.slane %v921, 4
        %v928 = vshrl.u32 %v610, 16
        %v930 = vrot.slane %v928, 7
        %v931 = vshll.u32 %v610, 16
        %v933 = vor.u32 %v930, %v931
        %v934 = vsel %vm623, %v926, %v933
        %v935 = vrot.slane %v930, 4
        %v937 = vshrl.u32 %v611, 16
        %v939 = vrot.slane %v937, 7
        %v940 = vshll.u32 %v611, 16
        %v942 = vor.u32 %v939, %v940
        %v943 = vsel %vm623, %v935, %v942
        %v944 = vld [vmem:[%s3] sm:$0xf]
        %v945 = vld [vmem:[%s3 + $0x4] sm:$0xf]
        %v946 = vld [vmem:[%s3 + $0x8] sm:$0xf]
        %v947 = vld [vmem:[%s3 + $0xc] sm:$0xf]
        %v948 = vld [vmem:[%s3 + $0x10] sm:$0xf]
        %v949 = vld [vmem:[%s3 + $0x14] sm:$0xf]
        %v950 = vld [vmem:[%s3 + $0x18] sm:$0xf]
        %v951 = vld [vmem:[%s3 + $0x1c] sm:$0xf]
        %v952 = vld [vmem:[%s3 + $0x20] sm:$0xf]
        %v953 = vld [vmem:[%s3 + $0x24] sm:$0xf]
        %v954 = vld [vmem:[%s3 + $0x28] sm:$0xf]
        %v955 = vld [vmem:[%s3 + $0x2c] sm:$0xf]
        %v956 = vld [vmem:[%s3 + $0x30] sm:$0xf]
        %v957 = vld [vmem:[%s3 + $0x34] sm:$0xf]
        %v958 = vld [vmem:[%s3 + $0x38] sm:$0xf]
        %v959 = vld [vmem:[%s3 + $0x3c] sm:$0xf]
        %v961 = vshrl.u32 %v612, 16
        %v963 = vrot.slane %v961, 7
        %v964 = vrot.slane %v963, 4
        %v966 = vshrl.u32 %v613, 16
        %v968 = vrot.slane %v966, 7
        %v969 = vshll.u32 %v613, 16
        %v971 = vor.u32 %v968, %v969
        %v972 = vsel %vm623, %v964, %v971
        %v973 = vrot.slane %v968, 4
        %v975 = vshrl.u32 %v614, 16
        %v977 = vrot.slane %v975, 7
        %v978 = vshll.u32 %v614, 16
        %v980 = vor.u32 %v977, %v978
        %v981 = vsel %vm623, %v973, %v980
        %v982 = vrot.slane %v977, 4
        %v984 = vshrl.u32 %v615, 16
        %v986 = vrot.slane %v984, 7
        %v987 = vshll.u32 %v615, 16
        %v989 = vor.u32 %v986, %v987
        %v990 = vsel %vm623, %v982, %v989
        %v991 = vrot.slane %v986, 4
        %v993 = vshrl.u32 %v616, 16
        %v995 = vrot.slane %v993, 7
        %v996 = vshll.u32 %v616, 16
        %v998 = vor.u32 %v995, %v996
        %v999 = vsel %vm623, %v991, %v998
        %s1000 = scalar_lea.vmem %s3, 192
        %v1001 = vld [vmem:[%s1000] sm:$0xf]
        %v1002 = vld [vmem:[%s1000 + $0x4] sm:$0xf]
        %v1003 = vld [vmem:[%s1000 + $0x8] sm:$0xf]
        %v1004 = vld [vmem:[%s1000 + $0xc] sm:$0xf]
        %v1005 = vld [vmem:[%s1000 + $0x10] sm:$0xf]
        %v1006 = vld [vmem:[%s1000 + $0x14] sm:$0xf]
        %v1007 = vld [vmem:[%s1000 + $0x18] sm:$0xf]
        %v1008 = vld [vmem:[%s1000 + $0x1c] sm:$0xf]
        %v1009 = vld [vmem:[%s1000 + $0x20] sm:$0xf]
        %v1010 = vld [vmem:[%s1000 + $0x24] sm:$0xf]
        %v1011 = vld [vmem:[%s1000 + $0x28] sm:$0xf]
        %v1012 = vld [vmem:[%s1000 + $0x2c] sm:$0xf]
        %v1013 = vld [vmem:[%s1000 + $0x30] sm:$0xf]
        %v1014 = vld [vmem:[%s1000 + $0x34] sm:$0xf]
        %v1015 = vld [vmem:[%s1000 + $0x38] sm:$0xf]
        %v1016 = vld [vmem:[%s1000 + $0x3c] sm:$0xf]
        %v1017 = vunpack.c.l.b16 %v676
        %v1018 = vunpack.c.l.b16 %v685
        %v1019 = vunpack.c.l.b16 %v694
        %v1020 = vunpack.c.l.b16 %v703
        %v1021 = vunpack.c.l.b16 %v716
        %v1022 = vunpack.c.l.b16 %v725
        %v1023 = vunpack.c.l.b16 %v734
        %v1024 = vunpack.c.l.b16 %v743
        %v1025 = vunpack.c.l.b16 %v756
        %v1026 = vunpack.c.l.b16 %v765
        %v1027 = vunpack.c.l.b16 %v774
        %v1028 = vunpack.c.l.b16 %v783
        %v1029 = vunpack.c.l.b16 %v796
        %v1030 = vunpack.c.l.b16 %v805
        %v1031 = vunpack.c.l.b16 %v814
        %v1032 = vunpack.c.l.b16 %v823
        %v1033 = vunpack.c.l.b16 %v836
        %v1034 = vunpack.c.l.b16 %v845
        %v1035 = vunpack.c.l.b16 %v854
        %v1036 = vunpack.c.l.b16 %v863
        %v1037 = vunpack.c.l.b16 %v876
        %v1038 = vunpack.c.l.b16 %v885
        %v1039 = vunpack.c.l.b16 %v894
        %v1040 = vunpack.c.l.b16 %v903
        %v1041 = vunpack.c.l.b16 %v916
        %v1042 = vunpack.c.l.b16 %v925
        %v1043 = vunpack.c.l.b16 %v934
        %v1044 = vunpack.c.l.b16 %v943
        %v1045 = vunpack.c.l.b16 %v972
        %v1046 = vunpack.c.l.b16 %v981
        %v1047 = vunpack.c.l.b16 %v990
        %v1048 = vunpack.c.l.b16 %v999
        %v1049 = vpack.c.b16 %v1018, %v1017
        %v1050 = vpack.c.b16 %v1020, %v1019
        %v1051 = vpack.c.b16 %v1022, %v1021
        %v1052 = vpack.c.b16 %v1024, %v1023
        %v1053 = vpack.c.b16 %v1026, %v1025
        %v1054 = vpack.c.b16 %v1028, %v1027
        %v1055 = vpack.c.b16 %v1030, %v1029
        %v1056 = vpack.c.b16 %v1032, %v1031
        %v1057 = vpack.c.b16 %v1034, %v1033
        %v1058 = vpack.c.b16 %v1036, %v1035
        %v1059 = vpack.c.b16 %v1038, %v1037
        %v1060 = vpack.c.b16 %v1040, %v1039
        %v1061 = vpack.c.b16 %v1042, %v1041
        %v1062 = vpack.c.b16 %v1044, %v1043
        %v1063 = vpack.c.b16 %v1046, %v1045
        %v1064 = vpack.c.b16 %v1048, %v1047
        %v1097 = vunpack.c.l.b16 %v1001
        %v1098 = vunpack.c.l.b16 %v1002
        %v1099 = vunpack.c.l.b16 %v1003
        %v1100 = vunpack.c.l.b16 %v1004
        %v1101 = vunpack.c.l.b16 %v1005
        %v1102 = vunpack.c.l.b16 %v1006
        %v1103 = vunpack.c.l.b16 %v1007
        %v1104 = vunpack.c.l.b16 %v1008
        %v1105 = vunpack.c.l.b16 %v1009
        %v1106 = vunpack.c.l.b16 %v1010
        %v1107 = vunpack.c.l.b16 %v1011
        %v1108 = vunpack.c.l.b16 %v1012
        %v1109 = vunpack.c.l.b16 %v1013
        %v1110 = vunpack.c.l.b16 %v1014
        %v1111 = vunpack.c.l.b16 %v1015
        %v1112 = vunpack.c.l.b16 %v1016
        %v1113 = vpack.c.b16 %v1098, %v1097
        %v1114 = vpack.c.b16 %v1100, %v1099
        %v1115 = vpack.c.b16 %v1102, %v1101
        %v1116 = vpack.c.b16 %v1104, %v1103
        %v1117 = vpack.c.b16 %v1106, %v1105
        %v1118 = vpack.c.b16 %v1108, %v1107
        %v1119 = vpack.c.b16 %v1110, %v1109
        %v1120 = vpack.c.b16 %v1112, %v1111
        %1129 = vmatprep.subr.bf16.mxu0 0
        %1130 = vmatpush1.bf16.msra.mxu0 %v1120
        %1131 = vmatprep.subr.bf16.mxu0 0
        %1132 = vmatpush1.bf16.msra.mxu0 %v1119
        %1133 = vmatprep.subr.bf16.mxu0 0
        %1134 = vmatpush1.bf16.msra.mxu0 %v1118
        %1135 = vmatprep.subr.bf16.mxu0 0
        %1136 = vmatpush1.bf16.msra.mxu0 %v1117
        %1137 = vmatprep.subr.bf16.mxu0 0
        %1138 = vmatpush1.bf16.msra.mxu0 %v1116
        %1139 = vmatprep.subr.bf16.mxu0 0
        %1140 = vmatpush1.bf16.msra.mxu0 %v1115
        %1141 = vmatprep.subr.bf16.mxu0 0
        %1142 = vmatpush1.bf16.msra.mxu0 %v1114
        %1143 = vmatprep.subr.bf16.mxu0 0
        %1144 = vmatpush1.bf16.msra.mxu0 %v1113
        %1145 = vmatprep.subr.bf16.mxu0 0
        %1146 = vmatpush2.bf16.msra.mxu0 0
        %1147 = vmatprep.subr.bf16.mxu0 0
        %1148 = vmatpush2.bf16.msra.mxu0 0
        %1149 = vmatprep.subr.bf16.mxu0 0
        %1150 = vmatpush2.bf16.msra.mxu0 0
        %1151 = vmatprep.subr.bf16.mxu0 0
        %1152 = vmatpush2.bf16.msra.mxu0 0
        %1153 = vmatprep.subr.bf16.mxu0 0
        %1154 = vmatpush2.bf16.msra.mxu0 0
        %1155 = vmatprep.subr.bf16.mxu0 0
        %1156 = vmatpush2.bf16.msra.mxu0 0
        %1157 = vmatprep.subr.bf16.mxu0 0
        %1158 = vmatpush2.bf16.msra.mxu0 0
        %1159 = vmatprep.subr.bf16.mxu0 0
        %1160 = vmatpush2.bf16.msra.mxu0 0
        %1161 = vmatprep.mubr.bf16.mxu0 0
        %1162 = vmatmul.mubr.bf16.gmra.mxu0 %v1049
        %v1163 = vpop.f32.mrf.mxu0
        %v1164 = vadd.f32 0.0, %v1163
        %v1165 = vpop.f32.mrf.mxu0
        %v1166 = vpop.f32.mrf.mxu0
        %v1167 = vadd.f32 0.0, %v1166
        %v1168 = vpop.f32.mrf.mxu0
        %1169 = vmatprep.mubr.bf16.mxu0 0
        %1170 = vmatmul.mubr.bf16.gmra.mxu0 %v1050
        %v1171 = vpop.f32.mrf.mxu0
        %v1172 = vadd.f32 0.0, %v1171
        %v1173 = vpop.f32.mrf.mxu0
        %v1174 = vpop.f32.mrf.mxu0
        %v1175 = vadd.f32 0.0, %v1174
        %v1176 = vpop.f32.mrf.mxu0
        %1177 = vmatprep.mubr.bf16.mxu0 0
        %1178 = vmatmul.mubr.bf16.gmra.mxu0 %v1051
        %v1179 = vpop.f32.mrf.mxu0
        %v1180 = vadd.f32 0.0, %v1179
        %v1181 = vpop.f32.mrf.mxu0
        %v1182 = vpop.f32.mrf.mxu0
        %v1183 = vadd.f32 0.0, %v1182
        %v1184 = vpop.f32.mrf.mxu0
        %1185 = vmatprep.mubr.bf16.mxu0 0
        %1186 = vmatmul.mubr.bf16.gmra.mxu0 %v1052
        %v1187 = vpop.f32.mrf.mxu0
        %v1188 = vadd.f32 0.0, %v1187
        %v1189 = vpop.f32.mrf.mxu0
        %v1190 = vpop.f32.mrf.mxu0
        %v1191 = vadd.f32 0.0, %v1190
        %v1192 = vpop.f32.mrf.mxu0
        %1193 = vmatprep.mubr.bf16.mxu0 0
        %1194 = vmatmul.mubr.bf16.gmra.mxu0 %v1053
        %v1195 = vpop.f32.mrf.mxu0
        %v1196 = vadd.f32 0.0, %v1195
        %v1197 = vpop.f32.mrf.mxu0
        %v1198 = vpop.f32.mrf.mxu0
        %v1199 = vadd.f32 0.0, %v1198
        %v1200 = vpop.f32.mrf.mxu0
        %1201 = vmatprep.mubr.bf16.mxu0 0
        %1202 = vmatmul.mubr.bf16.gmra.mxu0 %v1054
        %v1203 = vpop.f32.mrf.mxu0
        %v1204 = vadd.f32 0.0, %v1203
        %v1205 = vpop.f32.mrf.mxu0
        %v1206 = vpop.f32.mrf.mxu0
        %v1207 = vadd.f32 0.0, %v1206
        %v1208 = vpop.f32.mrf.mxu0
        %1209 = vmatprep.mubr.bf16.mxu0 0
        %1210 = vmatmul.mubr.bf16.gmra.mxu0 %v1055
        %v1211 = vpop.f32.mrf.mxu0
        %v1212 = vadd.f32 0.0, %v1211
        %v1213 = vpop.f32.mrf.mxu0
        %v1214 = vpop.f32.mrf.mxu0
        %v1215 = vadd.f32 0.0, %v1214
        %v1216 = vpop.f32.mrf.mxu0
        %1217 = vmatprep.mubr.bf16.mxu0 0
        %1218 = vmatmul.mubr.bf16.gmra.mxu0 %v1056
        %v1219 = vpop.f32.mrf.mxu0
        %v1220 = vadd.f32 0.0, %v1219
        %v1221 = vpop.f32.mrf.mxu0
        %v1222 = vpop.f32.mrf.mxu0
        %v1223 = vadd.f32 0.0, %v1222
        %v1224 = vpop.f32.mrf.mxu0
        %1225 = vmatprep.mubr.bf16.mxu0 0
        %1226 = vmatmul.mubr.bf16.gmra.mxu0 %v1057
        %v1227 = vpop.f32.mrf.mxu0
        %v1228 = vadd.f32 0.0, %v1227
        %v1229 = vpop.f32.mrf.mxu0
        %v1230 = vpop.f32.mrf.mxu0
        %v1231 = vadd.f32 0.0, %v1230
        %v1232 = vpop.f32.mrf.mxu0
        %1233 = vmatprep.mubr.bf16.mxu0 0
        %1234 = vmatmul.mubr.bf16.gmra.mxu0 %v1058
        %v1235 = vpop.f32.mrf.mxu0
        %v1236 = vadd.f32 0.0, %v1235
        %v1237 = vpop.f32.mrf.mxu0
        %v1238 = vpop.f32.mrf.mxu0
        %v1239 = vadd.f32 0.0, %v1238
        %v1240 = vpop.f32.mrf.mxu0
        %1241 = vmatprep.mubr.bf16.mxu0 0
        %1242 = vmatmul.mubr.bf16.gmra.mxu0 %v1059
        %v1243 = vpop.f32.mrf.mxu0
        %v1244 = vadd.f32 0.0, %v1243
        %v1245 = vpop.f32.mrf.mxu0
        %v1246 = vpop.f32.mrf.mxu0
        %v1247 = vadd.f32 0.0, %v1246
        %v1248 = vpop.f32.mrf.mxu0
        %1249 = vmatprep.mubr.bf16.mxu0 0
        %1250 = vmatmul.mubr.bf16.gmra.mxu0 %v1060
        %v1251 = vpop.f32.mrf.mxu0
        %v1252 = vadd.f32 0.0, %v1251
        %v1253 = vpop.f32.mrf.mxu0
        %v1254 = vpop.f32.mrf.mxu0
        %v1255 = vadd.f32 0.0, %v1254
        %v1256 = vpop.f32.mrf.mxu0
        %1257 = vmatprep.mubr.bf16.mxu0 0
        %1258 = vmatmul.mubr.bf16.gmra.mxu0 %v1061
        %v1259 = vpop.f32.mrf.mxu0
        %v1260 = vadd.f32 0.0, %v1259
        %v1261 = vpop.f32.mrf.mxu0
        %v1262 = vpop.f32.mrf.mxu0
        %v1263 = vadd.f32 0.0, %v1262
        %v1264 = vpop.f32.mrf.mxu0
        %1265 = vmatprep.mubr.bf16.mxu0 0
        %1266 = vmatmul.mubr.bf16.gmra.mxu0 %v1062
        %v1267 = vpop.f32.mrf.mxu0
        %v1268 = vadd.f32 0.0, %v1267
        %v1269 = vpop.f32.mrf.mxu0
        %v1270 = vpop.f32.mrf.mxu0
        %v1271 = vadd.f32 0.0, %v1270
        %v1272 = vpop.f32.mrf.mxu0
        %1273 = vmatprep.mubr.bf16.mxu0 0
        %1274 = vmatmul.mubr.bf16.gmra.mxu0 %v1063
        %v1275 = vpop.f32.mrf.mxu0
        %v1276 = vadd.f32 0.0, %v1275
        %v1277 = vpop.f32.mrf.mxu0
        %v1278 = vpop.f32.mrf.mxu0
        %v1279 = vadd.f32 0.0, %v1278
        %v1280 = vpop.f32.mrf.mxu0
        %1281 = vmatprep.mubr.bf16.mxu0 0
        %1282 = vmatmul.mubr.bf16.gmra.mxu0 %v1064
        %v1283 = vpop.f32.mrf.mxu0
        %v1284 = vadd.f32 0.0, %v1283
        %v1285 = vpop.f32.mrf.mxu0
        %v1286 = vpop.f32.mrf.mxu0
        %v1287 = vadd.f32 0.0, %v1286
        %v1288 = vpop.f32.mrf.mxu0
        %1289 = vdwg.mxu0
        %v1290 = vunpack.c.l.b16 %v636
        %v1291 = vunpack.c.l.b16 %v645
        %v1292 = vunpack.c.l.b16 %v654
        %v1293 = vunpack.c.l.b16 %v663
        %v1294 = vpack.c.b16 %v1291, %v1290
        %v1295 = vpack.c.b16 %v1293, %v1292
        %v1314 = vunpack.c.l.b16 %v944
        %v1315 = vunpack.c.l.b16 %v945
        %v1316 = vunpack.c.l.b16 %v946
        %v1317 = vunpack.c.l.b16 %v947
        %v1318 = vunpack.c.l.b16 %v948
        %v1319 = vunpack.c.l.b16 %v949
        %v1320 = vunpack.c.l.b16 %v950
        %v1321 = vunpack.c.l.b16 %v951
        %v1322 = vunpack.c.l.b16 %v952
        %v1323 = vunpack.c.l.b16 %v953
        %v1324 = vunpack.c.l.b16 %v954
        %v1325 = vunpack.c.l.b16 %v955
        %v1326 = vunpack.c.l.b16 %v956
        %v1327 = vunpack.c.l.b16 %v957
        %v1328 = vunpack.c.l.b16 %v958
        %v1329 = vunpack.c.l.b16 %v959
        %v1330 = vpack.c.b16 %v1315, %v1314
        %v1331 = vpack.c.b16 %v1317, %v1316
        %v1332 = vpack.c.b16 %v1319, %v1318
        %v1333 = vpack.c.b16 %v1321, %v1320
        %v1334 = vpack.c.b16 %v1323, %v1322
        %v1335 = vpack.c.b16 %v1325, %v1324
        %v1336 = vpack.c.b16 %v1327, %v1326
        %v1337 = vpack.c.b16 %v1329, %v1328
        %1346 = vmatprep.subr.bf16.mxu0 0
        %1347 = vmatpush1.bf16.msra.mxu0 %v1337
        %1348 = vmatprep.subr.bf16.mxu0 0
        %1349 = vmatpush1.bf16.msra.mxu0 %v1336
        %1350 = vmatprep.subr.bf16.mxu0 0
        %1351 = vmatpush1.bf16.msra.mxu0 %v1335
        %1352 = vmatprep.subr.bf16.mxu0 0
        %1353 = vmatpush1.bf16.msra.mxu0 %v1334
        %1354 = vmatprep.subr.bf16.mxu0 0
        %1355 = vmatpush1.bf16.msra.mxu0 %v1333
        %1356 = vmatprep.subr.bf16.mxu0 0
        %1357 = vmatpush1.bf16.msra.mxu0 %v1332
        %1358 = vmatprep.subr.bf16.mxu0 0
        %1359 = vmatpush1.bf16.msra.mxu0 %v1331
        %1360 = vmatprep.subr.bf16.mxu0 0
        %1361 = vmatpush1.bf16.msra.mxu0 %v1330
        %1362 = vmatprep.subr.bf16.mxu0 0
        %1363 = vmatpush2.bf16.msra.mxu0 0
        %1364 = vmatprep.subr.bf16.mxu0 0
        %1365 = vmatpush2.bf16.msra.mxu0 0
        %1366 = vmatprep.subr.bf16.mxu0 0
        %1367 = vmatpush2.bf16.msra.mxu0 0
        %1368 = vmatprep.subr.bf16.mxu0 0
        %1369 = vmatpush2.bf16.msra.mxu0 0
        %1370 = vmatprep.subr.bf16.mxu0 0
        %1371 = vmatpush2.bf16.msra.mxu0 0
        %1372 = vmatprep.subr.bf16.mxu0 0
        %1373 = vmatpush2.bf16.msra.mxu0 0
        %1374 = vmatprep.subr.bf16.mxu0 0
        %1375 = vmatpush2.bf16.msra.mxu0 0
        %1376 = vmatprep.subr.bf16.mxu0 0
        %1377 = vmatpush2.bf16.msra.mxu0 0
        %1378 = vmatprep.mubr.bf16.mxu0 0
        %1379 = vmatmul.mubr.bf16.gmra.mxu0 %v1294
        %v1380 = vpop.f32.mrf.mxu0
        %v1381 = vadd.f32 %v1164, %v1380
        %v1382 = vpop.f32.mrf.mxu0
        %v1383 = vpop.f32.mrf.mxu0
        %v1384 = vadd.f32 %v1167, %v1383
        %v1385 = vpop.f32.mrf.mxu0
        %1386 = vmatprep.mubr.bf16.mxu0 0
        %1387 = vmatmul.mubr.bf16.gmra.mxu0 %v1295
        %v1388 = vpop.f32.mrf.mxu0
        %v1389 = vadd.f32 %v1172, %v1388
        %v1390 = vpop.f32.mrf.mxu0
        %v1391 = vpop.f32.mrf.mxu0
        %v1392 = vadd.f32 %v1175, %v1391
        %v1393 = vpop.f32.mrf.mxu0
        %1394 = vmatprep.mubr.bf16.mxu0 0
        %1395 = vmatmul.mubr.bf16.gmra.mxu0 %v1049
        %v1396 = vpop.f32.mrf.mxu0
        %v1397 = vadd.f32 %v1180, %v1396
        %v1398 = vpop.f32.mrf.mxu0
        %v1399 = vpop.f32.mrf.mxu0
        %v1400 = vadd.f32 %v1183, %v1399
        %v1401 = vpop.f32.mrf.mxu0
        %1402 = vmatprep.mubr.bf16.mxu0 0
        %1403 = vmatmul.mubr.bf16.gmra.mxu0 %v1050
        %v1404 = vpop.f32.mrf.mxu0
        %v1405 = vadd.f32 %v1188, %v1404
        %v1406 = vpop.f32.mrf.mxu0
        %v1407 = vpop.f32.mrf.mxu0
        %v1408 = vadd.f32 %v1191, %v1407
        %v1409 = vpop.f32.mrf.mxu0
        %1410 = vmatprep.mubr.bf16.mxu0 0
        %1411 = vmatmul.mubr.bf16.gmra.mxu0 %v1051
        %v1412 = vpop.f32.mrf.mxu0
        %v1413 = vadd.f32 %v1196, %v1412
        %v1414 = vpop.f32.mrf.mxu0
        %v1415 = vpop.f32.mrf.mxu0
        %v1416 = vadd.f32 %v1199, %v1415
        %v1417 = vpop.f32.mrf.mxu0
        %1418 = vmatprep.mubr.bf16.mxu0 0
        %1419 = vmatmul.mubr.bf16.gmra.mxu0 %v1052
        %v1420 = vpop.f32.mrf.mxu0
        %v1421 = vadd.f32 %v1204, %v1420
        %v1422 = vpop.f32.mrf.mxu0
        %v1423 = vpop.f32.mrf.mxu0
        %v1424 = vadd.f32 %v1207, %v1423
        %v1425 = vpop.f32.mrf.mxu0
        %1426 = vmatprep.mubr.bf16.mxu0 0
        %1427 = vmatmul.mubr.bf16.gmra.mxu0 %v1053
        %v1428 = vpop.f32.mrf.mxu0
        %v1429 = vadd.f32 %v1212, %v1428
        %v1430 = vpop.f32.mrf.mxu0
        %v1431 = vpop.f32.mrf.mxu0
        %v1432 = vadd.f32 %v1215, %v1431
        %v1433 = vpop.f32.mrf.mxu0
        %1434 = vmatprep.mubr.bf16.mxu0 0
        %1435 = vmatmul.mubr.bf16.gmra.mxu0 %v1054
        %v1436 = vpop.f32.mrf.mxu0
        %v1437 = vadd.f32 %v1220, %v1436
        %v1438 = vpop.f32.mrf.mxu0
        %v1439 = vpop.f32.mrf.mxu0
        %v1440 = vadd.f32 %v1223, %v1439
        %v1441 = vpop.f32.mrf.mxu0
        %1442 = vmatprep.mubr.bf16.mxu0 0
        %1443 = vmatmul.mubr.bf16.gmra.mxu0 %v1055
        %v1444 = vpop.f32.mrf.mxu0
        %v1445 = vadd.f32 %v1228, %v1444
        %v1446 = vpop.f32.mrf.mxu0
        %v1447 = vpop.f32.mrf.mxu0
        %v1448 = vadd.f32 %v1231, %v1447
        %v1449 = vpop.f32.mrf.mxu0
        %1450 = vmatprep.mubr.bf16.mxu0 0
        %1451 = vmatmul.mubr.bf16.gmra.mxu0 %v1056
        %v1452 = vpop.f32.mrf.mxu0
        %v1453 = vadd.f32 %v1236, %v1452
        %v1454 = vpop.f32.mrf.mxu0
        %v1455 = vpop.f32.mrf.mxu0
        %v1456 = vadd.f32 %v1239, %v1455
        %v1457 = vpop.f32.mrf.mxu0
        %1458 = vmatprep.mubr.bf16.mxu0 0
        %1459 = vmatmul.mubr.bf16.gmra.mxu0 %v1057
        %v1460 = vpop.f32.mrf.mxu0
        %v1461 = vadd.f32 %v1244, %v1460
        %v1462 = vpop.f32.mrf.mxu0
        %v1463 = vpop.f32.mrf.mxu0
        %v1464 = vadd.f32 %v1247, %v1463
        %v1465 = vpop.f32.mrf.mxu0
        %1466 = vmatprep.mubr.bf16.mxu0 0
        %1467 = vmatmul.mubr.bf16.gmra.mxu0 %v1058
        %v1468 = vpop.f32.mrf.mxu0
        %v1469 = vadd.f32 %v1252, %v1468
        %v1470 = vpop.f32.mrf.mxu0
        %v1471 = vpop.f32.mrf.mxu0
        %v1472 = vadd.f32 %v1255, %v1471
        %v1473 = vpop.f32.mrf.mxu0
        %1474 = vmatprep.mubr.bf16.mxu0 0
        %1475 = vmatmul.mubr.bf16.gmra.mxu0 %v1059
        %v1476 = vpop.f32.mrf.mxu0
        %v1477 = vadd.f32 %v1260, %v1476
        %v1478 = vpop.f32.mrf.mxu0
        %v1479 = vpop.f32.mrf.mxu0
        %v1480 = vadd.f32 %v1263, %v1479
        %v1481 = vpop.f32.mrf.mxu0
        %1482 = vmatprep.mubr.bf16.mxu0 0
        %1483 = vmatmul.mubr.bf16.gmra.mxu0 %v1060
        %v1484 = vpop.f32.mrf.mxu0
        %v1485 = vadd.f32 %v1268, %v1484
        %v1486 = vpop.f32.mrf.mxu0
        %v1487 = vpop.f32.mrf.mxu0
        %v1488 = vadd.f32 %v1271, %v1487
        %v1489 = vpop.f32.mrf.mxu0
        %1490 = vmatprep.mubr.bf16.mxu0 0
        %1491 = vmatmul.mubr.bf16.gmra.mxu0 %v1061
        %v1492 = vpop.f32.mrf.mxu0
        %v1493 = vadd.f32 %v1276, %v1492
        %v1494 = vpop.f32.mrf.mxu0
        %v1495 = vpop.f32.mrf.mxu0
        %v1496 = vadd.f32 %v1279, %v1495
        %v1497 = vpop.f32.mrf.mxu0
        %1498 = vmatprep.mubr.bf16.mxu0 0
        %1499 = vmatmul.mubr.bf16.gmra.mxu0 %v1062
        %v1500 = vpop.f32.mrf.mxu0
        %v1501 = vadd.f32 %v1284, %v1500
        %v1502 = vpop.f32.mrf.mxu0
        %v1503 = vpop.f32.mrf.mxu0
        %v1504 = vadd.f32 %v1287, %v1503
        %v1505 = vpop.f32.mrf.mxu0
        %1506 = vdwg.mxu0
        %v1508 = vshrl.u32 %v617, 16
        %v1510 = vrot.slane %v1508, 7
        %v1511 = vrot.slane %v1510, 4
        %v1513 = vshrl.u32 %v618, 16
        %v1515 = vrot.slane %v1513, 7
        %v1516 = vshll.u32 %v618, 16
        %v1518 = vor.u32 %v1515, %v1516
        %v1519 = vsel %vm623, %v1511, %v1518
        %v1520 = vrot.slane %v1515, 4
        %v1522 = vshrl.u32 %v619, 16
        %v1524 = vrot.slane %v1522, 7
        %v1525 = vshll.u32 %v619, 16
        %v1527 = vor.u32 %v1524, %v1525
        %v1528 = vsel %vm623, %v1520, %v1527
        %v1529 = vrot.slane %v1524, 4
        %v1531 = vshrl.u32 %v620, 16
        %v1533 = vrot.slane %v1531, 7
        %v1534 = vshll.u32 %v620, 16
        %v1536 = vor.u32 %v1533, %v1534
        %v1537 = vsel %vm623, %v1529, %v1536
        %v1538 = vrot.slane %v1533, 4
        %v1540 = vshrl.u32 %v621, 16
        %v1542 = vrot.slane %v1540, 7
        %v1543 = vshll.u32 %v621, 16
        %v1545 = vor.u32 %v1542, %v1543
        %v1546 = vsel %vm623, %v1538, %v1545
        %s1547 = scalar_lea.vmem %s3, 384
        %v1548 = vld [vmem:[%s1547] sm:$0xf]
        %v1549 = vld [vmem:[%s1547 + $0x4] sm:$0xf]
        %v1550 = vld [vmem:[%s1547 + $0x8] sm:$0xf]
        %v1551 = vld [vmem:[%s1547 + $0xc] sm:$0xf]
        %v1552 = vld [vmem:[%s1547 + $0x10] sm:$0xf]
        %v1553 = vld [vmem:[%s1547 + $0x14] sm:$0xf]
        %v1554 = vld [vmem:[%s1547 + $0x18] sm:$0xf]
        %v1555 = vld [vmem:[%s1547 + $0x1c] sm:$0xf]
        %v1556 = vld [vmem:[%s1547 + $0x20] sm:$0xf]
        %v1557 = vld [vmem:[%s1547 + $0x24] sm:$0xf]
        %v1558 = vld [vmem:[%s1547 + $0x28] sm:$0xf]
        %v1559 = vld [vmem:[%s1547 + $0x2c] sm:$0xf]
        %v1560 = vld [vmem:[%s1547 + $0x30] sm:$0xf]
        %v1561 = vld [vmem:[%s1547 + $0x34] sm:$0xf]
        %v1562 = vld [vmem:[%s1547 + $0x38] sm:$0xf]
        %v1563 = vld [vmem:[%s1547 + $0x3c] sm:$0xf]
        %v1564 = vunpack.c.l.b16 %v1519
        %v1565 = vunpack.c.l.b16 %v1528
        %v1566 = vunpack.c.l.b16 %v1537
        %v1567 = vunpack.c.l.b16 %v1546
        %v1568 = vpack.c.b16 %v1565, %v1564
        %v1569 = vpack.c.b16 %v1567, %v1566
        %v1588 = vunpack.c.l.b16 %v1548
        %v1589 = vunpack.c.l.b16 %v1549
        %v1590 = vunpack.c.l.b16 %v1550
        %v1591 = vunpack.c.l.b16 %v1551
        %v1592 = vunpack.c.l.b16 %v1552
        %v1593 = vunpack.c.l.b16 %v1553
        %v1594 = vunpack.c.l.b16 %v1554
        %v1595 = vunpack.c.l.b16 %v1555
        %v1596 = vunpack.c.l.b16 %v1556
        %v1597 = vunpack.c.l.b16 %v1557
        %v1598 = vunpack.c.l.b16 %v1558
        %v1599 = vunpack.c.l.b16 %v1559
        %v1600 = vunpack.c.l.b16 %v1560
        %v1601 = vunpack.c.l.b16 %v1561
        %v1602 = vunpack.c.l.b16 %v1562
        %v1603 = vunpack.c.l.b16 %v1563
        %v1604 = vpack.c.b16 %v1589, %v1588
        %v1605 = vpack.c.b16 %v1591, %v1590
        %v1606 = vpack.c.b16 %v1593, %v1592
        %v1607 = vpack.c.b16 %v1595, %v1594
        %v1608 = vpack.c.b16 %v1597, %v1596
        %v1609 = vpack.c.b16 %v1599, %v1598
        %v1610 = vpack.c.b16 %v1601, %v1600
        %v1611 = vpack.c.b16 %v1603, %v1602
        %1620 = vmatprep.subr.bf16.mxu0 0
        %1621 = vmatpush1.bf16.msra.mxu0 %v1611
        %1622 = vmatprep.subr.bf16.mxu0 0
        %1623 = vmatpush1.bf16.msra.mxu0 %v1610
        %1624 = vmatprep.subr.bf16.mxu0 0
        %1625 = vmatpush1.bf16.msra.mxu0 %v1609
        %1626 = vmatprep.subr.bf16.mxu0 0
        %1627 = vmatpush1.bf16.msra.mxu0 %v1608
        %1628 = vmatprep.subr.bf16.mxu0 0
        %1629 = vmatpush1.bf16.msra.mxu0 %v1607
        %1630 = vmatprep.subr.bf16.mxu0 0
        %1631 = vmatpush1.bf16.msra.mxu0 %v1606
        %1632 = vmatprep.subr.bf16.mxu0 0
        %1633 = vmatpush1.bf16.msra.mxu0 %v1605
        %1634 = vmatprep.subr.bf16.mxu0 0
        %1635 = vmatpush1.bf16.msra.mxu0 %v1604
        %1636 = vmatprep.subr.bf16.mxu0 0
        %1637 = vmatpush2.bf16.msra.mxu0 0
        %1638 = vmatprep.subr.bf16.mxu0 0
        %1639 = vmatpush2.bf16.msra.mxu0 0
        %1640 = vmatprep.subr.bf16.mxu0 0
        %1641 = vmatpush2.bf16.msra.mxu0 0
        %1642 = vmatprep.subr.bf16.mxu0 0
        %1643 = vmatpush2.bf16.msra.mxu0 0
        %1644 = vmatprep.subr.bf16.mxu0 0
        %1645 = vmatpush2.bf16.msra.mxu0 0
        %1646 = vmatprep.subr.bf16.mxu0 0
        %1647 = vmatpush2.bf16.msra.mxu0 0
        %1648 = vmatprep.subr.bf16.mxu0 0
        %1649 = vmatpush2.bf16.msra.mxu0 0
        %1650 = vmatprep.subr.bf16.mxu0 0
        %1651 = vmatpush2.bf16.msra.mxu0 0
        %1652 = vmatprep.mubr.bf16.mxu0 0
        %1653 = vmatmul.mubr.bf16.gmra.mxu0 %v1051
        %v1654 = vpop.f32.mrf.mxu0
        %v1655 = vadd.f32 0.0, %v1654
        %v1656 = vpop.f32.mrf.mxu0
        %v1657 = vpop.f32.mrf.mxu0
        %v1658 = vadd.f32 0.0, %v1657
        %v1659 = vpop.f32.mrf.mxu0
        %1660 = vmatprep.mubr.bf16.mxu0 0
        %1661 = vmatmul.mubr.bf16.gmra.mxu0 %v1052
        %v1662 = vpop.f32.mrf.mxu0
        %v1663 = vadd.f32 0.0, %v1662
        %v1664 = vpop.f32.mrf.mxu0
        %v1665 = vpop.f32.mrf.mxu0
        %v1666 = vadd.f32 0.0, %v1665
        %v1667 = vpop.f32.mrf.mxu0
        %1668 = vmatprep.mubr.bf16.mxu0 0
        %1669 = vmatmul.mubr.bf16.gmra.mxu0 %v1053
        %v1670 = vpop.f32.mrf.mxu0
        %v1671 = vadd.f32 0.0, %v1670
        %v1672 = vpop.f32.mrf.mxu0
        %v1673 = vpop.f32.mrf.mxu0
        %v1674 = vadd.f32 0.0, %v1673
        %v1675 = vpop.f32.mrf.mxu0
        %1676 = vmatprep.mubr.bf16.mxu0 0
        %1677 = vmatmul.mubr.bf16.gmra.mxu0 %v1054
        %v1678 = vpop.f32.mrf.mxu0
        %v1679 = vadd.f32 0.0, %v1678
        %v1680 = vpop.f32.mrf.mxu0
        %v1681 = vpop.f32.mrf.mxu0
        %v1682 = vadd.f32 0.0, %v1681
        %v1683 = vpop.f32.mrf.mxu0
        %1684 = vmatprep.mubr.bf16.mxu0 0
        %1685 = vmatmul.mubr.bf16.gmra.mxu0 %v1055
        %v1686 = vpop.f32.mrf.mxu0
        %v1687 = vadd.f32 0.0, %v1686
        %v1688 = vpop.f32.mrf.mxu0
        %v1689 = vpop.f32.mrf.mxu0
        %v1690 = vadd.f32 0.0, %v1689
        %v1691 = vpop.f32.mrf.mxu0
        %1692 = vmatprep.mubr.bf16.mxu0 0
        %1693 = vmatmul.mubr.bf16.gmra.mxu0 %v1056
        %v1694 = vpop.f32.mrf.mxu0
        %v1695 = vadd.f32 0.0, %v1694
        %v1696 = vpop.f32.mrf.mxu0
        %v1697 = vpop.f32.mrf.mxu0
        %v1698 = vadd.f32 0.0, %v1697
        %v1699 = vpop.f32.mrf.mxu0
        %1700 = vmatprep.mubr.bf16.mxu0 0
        %1701 = vmatmul.mubr.bf16.gmra.mxu0 %v1057
        %v1702 = vpop.f32.mrf.mxu0
        %v1703 = vadd.f32 0.0, %v1702
        %v1704 = vpop.f32.mrf.mxu0
        %v1705 = vpop.f32.mrf.mxu0
        %v1706 = vadd.f32 0.0, %v1705
        %v1707 = vpop.f32.mrf.mxu0
        %1708 = vmatprep.mubr.bf16.mxu0 0
        %1709 = vmatmul.mubr.bf16.gmra.mxu0 %v1058
        %v1710 = vpop.f32.mrf.mxu0
        %v1711 = vadd.f32 0.0, %v1710
        %v1712 = vpop.f32.mrf.mxu0
        %v1713 = vpop.f32.mrf.mxu0
        %v1714 = vadd.f32 0.0, %v1713
        %v1715 = vpop.f32.mrf.mxu0
        %1716 = vmatprep.mubr.bf16.mxu0 0
        %1717 = vmatmul.mubr.bf16.gmra.mxu0 %v1059
        %v1718 = vpop.f32.mrf.mxu0
        %v1719 = vadd.f32 0.0, %v1718
        %v1720 = vpop.f32.mrf.mxu0
        %v1721 = vpop.f32.mrf.mxu0
        %v1722 = vadd.f32 0.0, %v1721
        %v1723 = vpop.f32.mrf.mxu0
        %1724 = vmatprep.mubr.bf16.mxu0 0
        %1725 = vmatmul.mubr.bf16.gmra.mxu0 %v1060
        %v1726 = vpop.f32.mrf.mxu0
        %v1727 = vadd.f32 0.0, %v1726
        %v1728 = vpop.f32.mrf.mxu0
        %v1729 = vpop.f32.mrf.mxu0
        %v1730 = vadd.f32 0.0, %v1729
        %v1731 = vpop.f32.mrf.mxu0
        %1732 = vmatprep.mubr.bf16.mxu0 0
        %1733 = vmatmul.mubr.bf16.gmra.mxu0 %v1061
        %v1734 = vpop.f32.mrf.mxu0
        %v1735 = vadd.f32 0.0, %v1734
        %v1736 = vpop.f32.mrf.mxu0
        %v1737 = vpop.f32.mrf.mxu0
        %v1738 = vadd.f32 0.0, %v1737
        %v1739 = vpop.f32.mrf.mxu0
        %1740 = vmatprep.mubr.bf16.mxu0 0
        %1741 = vmatmul.mubr.bf16.gmra.mxu0 %v1062
        %v1742 = vpop.f32.mrf.mxu0
        %v1743 = vadd.f32 0.0, %v1742
        %v1744 = vpop.f32.mrf.mxu0
        %v1745 = vpop.f32.mrf.mxu0
        %v1746 = vadd.f32 0.0, %v1745
        %v1747 = vpop.f32.mrf.mxu0
        %1748 = vmatprep.mubr.bf16.mxu0 0
        %1749 = vmatmul.mubr.bf16.gmra.mxu0 %v1063
        %v1750 = vpop.f32.mrf.mxu0
        %v1751 = vadd.f32 0.0, %v1750
        %v1752 = vpop.f32.mrf.mxu0
        %v1753 = vpop.f32.mrf.mxu0
        %v1754 = vadd.f32 0.0, %v1753
        %v1755 = vpop.f32.mrf.mxu0
        %1756 = vmatprep.mubr.bf16.mxu0 0
        %1757 = vmatmul.mubr.bf16.gmra.mxu0 %v1064
        %v1758 = vpop.f32.mrf.mxu0
        %v1759 = vadd.f32 0.0, %v1758
        %v1760 = vpop.f32.mrf.mxu0
        %v1761 = vpop.f32.mrf.mxu0
        %v1762 = vadd.f32 0.0, %v1761
        %v1763 = vpop.f32.mrf.mxu0
        %1764 = vmatprep.mubr.bf16.mxu0 0
        %1765 = vmatmul.mubr.bf16.gmra.mxu0 %v1568
        %v1766 = vpop.f32.mrf.mxu0
        %v1767 = vadd.f32 0.0, %v1766
        %v1768 = vpop.f32.mrf.mxu0
        %v1769 = vpop.f32.mrf.mxu0
        %v1770 = vadd.f32 0.0, %v1769
        %v1771 = vpop.f32.mrf.mxu0
        %1772 = vmatprep.mubr.bf16.mxu0 0
        %1773 = vmatmul.mubr.bf16.gmra.mxu0 %v1569
        %v1774 = vpop.f32.mrf.mxu0
        %v1775 = vadd.f32 0.0, %v1774
        %v1776 = vpop.f32.mrf.mxu0
        %v1777 = vpop.f32.mrf.mxu0
        %v1778 = vadd.f32 0.0, %v1777
        %v1779 = vpop.f32.mrf.mxu0
        %1780 = vdwg.mxu0
        %v1781 = vadd.f32 %v1381, %v1655
        %v1782 = vadd.f32 %v1384, %v1658
        %v1783 = vadd.f32 %v1389, %v1663
        %v1784 = vadd.f32 %v1392, %v1666
        %v1785 = vadd.f32 %v1397, %v1671
        %v1786 = vadd.f32 %v1400, %v1674
        %v1787 = vadd.f32 %v1405, %v1679
        %v1788 = vadd.f32 %v1408, %v1682
        %v1789 = vadd.f32 %v1413, %v1687
        %v1790 = vadd.f32 %v1416, %v1690
        %v1791 = vadd.f32 %v1421, %v1695
        %v1792 = vadd.f32 %v1424, %v1698
        %v1793 = vadd.f32 %v1429, %v1703
        %v1794 = vadd.f32 %v1432, %v1706
        %v1795 = vadd.f32 %v1437, %v1711
        %v1796 = vadd.f32 %v1440, %v1714
        %v1797 = vadd.f32 %v1445, %v1719
        %v1798 = vadd.f32 %v1448, %v1722
        %v1799 = vadd.f32 %v1453, %v1727
        %v1800 = vadd.f32 %v1456, %v1730
        %v1801 = vadd.f32 %v1461, %v1735
        %v1802 = vadd.f32 %v1464, %v1738
        %v1803 = vadd.f32 %v1469, %v1743
        %v1804 = vadd.f32 %v1472, %v1746
        %v1805 = vadd.f32 %v1477, %v1751
        %v1806 = vadd.f32 %v1480, %v1754
        %v1807 = vadd.f32 %v1485, %v1759
        %v1808 = vadd.f32 %v1488, %v1762
        %v1809 = vadd.f32 %v1493, %v1767
        %v1810 = vadd.f32 %v1496, %v1770
        %v1811 = vadd.f32 %v1501, %v1775
        %v1812 = vadd.f32 %v1504, %v1778
        %s1813 = scalar_lea.vmem %s3, 64
        %v1814 = vld [vmem:[%s1813] sm:$0xf]
        %v1815 = vld [vmem:[%s1813 + $0x4] sm:$0xf]
        %v1816 = vld [vmem:[%s1813 + $0x8] sm:$0xf]
        %v1817 = vld [vmem:[%s1813 + $0xc] sm:$0xf]
        %v1818 = vld [vmem:[%s1813 + $0x10] sm:$0xf]
        %v1819 = vld [vmem:[%s1813 + $0x14] sm:$0xf]
        %v1820 = vld [vmem:[%s1813 + $0x18] sm:$0xf]
        %v1821 = vld [vmem:[%s1813 + $0x1c] sm:$0xf]
        %v1822 = vld [vmem:[%s1813 + $0x20] sm:$0xf]
        %v1823 = vld [vmem:[%s1813 + $0x24] sm:$0xf]
        %v1824 = vld [vmem:[%s1813 + $0x28] sm:$0xf]
        %v1825 = vld [vmem:[%s1813 + $0x2c] sm:$0xf]
        %v1826 = vld [vmem:[%s1813 + $0x30] sm:$0xf]
        %v1827 = vld [vmem:[%s1813 + $0x34] sm:$0xf]
        %v1828 = vld [vmem:[%s1813 + $0x38] sm:$0xf]
        %v1829 = vld [vmem:[%s1813 + $0x3c] sm:$0xf]
        %v1862 = vunpack.c.l.b16 %v573
        %v1863 = vunpack.c.l.b16 %v574
        %v1864 = vunpack.c.l.b16 %v575
        %v1865 = vunpack.c.l.b16 %v576
        %v1866 = vunpack.c.l.b16 %v578
        %v1867 = vunpack.c.l.b16 %v579
        %v1868 = vunpack.c.l.b16 %v580
        %v1869 = vunpack.c.l.b16 %v581
        %v1870 = vunpack.c.l.b16 %v583
        %v1871 = vunpack.c.l.b16 %v584
        %v1872 = vunpack.c.l.b16 %v585
        %v1873 = vunpack.c.l.b16 %v586
        %v1874 = vunpack.c.l.b16 %v588
        %v1875 = vunpack.c.l.b16 %v589
        %v1876 = vunpack.c.l.b16 %v590
        %v1877 = vunpack.c.l.b16 %v591
        %v1878 = vunpack.c.l.b16 %v593
        %v1879 = vunpack.c.l.b16 %v594
        %v1880 = vunpack.c.l.b16 %v595
        %v1881 = vunpack.c.l.b16 %v596
        %v1882 = vunpack.c.l.b16 %v598
        %v1883 = vunpack.c.l.b16 %v599
        %v1884 = vunpack.c.l.b16 %v600
        %v1885 = vunpack.c.l.b16 %v601
        %v1886 = vunpack.c.l.b16 %v603
        %v1887 = vunpack.c.l.b16 %v604
        %v1888 = vunpack.c.l.b16 %v605
        %v1889 = vunpack.c.l.b16 %v606
        %v1890 = vunpack.c.l.b16 %v608
        %v1891 = vunpack.c.l.b16 %v609
        %v1892 = vunpack.c.l.b16 %v610
        %v1893 = vunpack.c.l.b16 %v611
        %v1894 = vpack.c.b16 %v1863, %v1862
        %v1895 = vpack.c.b16 %v1865, %v1864
        %v1896 = vpack.c.b16 %v1867, %v1866
        %v1897 = vpack.c.b16 %v1869, %v1868
        %v1898 = vpack.c.b16 %v1871, %v1870
        %v1899 = vpack.c.b16 %v1873, %v1872
        %v1900 = vpack.c.b16 %v1875, %v1874
        %v1901 = vpack.c.b16 %v1877, %v1876
        %v1902 = vpack.c.b16 %v1879, %v1878
        %v1903 = vpack.c.b16 %v1881, %v1880
        %v1904 = vpack.c.b16 %v1883, %v1882
        %v1905 = vpack.c.b16 %v1885, %v1884
        %v1906 = vpack.c.b16 %v1887, %v1886
        %v1907 = vpack.c.b16 %v1889, %v1888
        %v1908 = vpack.c.b16 %v1891, %v1890
        %v1909 = vpack.c.b16 %v1893, %v1892
        %v1942 = vunpack.c.l.b16 %v1814
        %v1943 = vunpack.c.l.b16 %v1815
        %v1944 = vunpack.c.l.b16 %v1816
        %v1945 = vunpack.c.l.b16 %v1817
        %v1946 = vunpack.c.l.b16 %v1818
        %v1947 = vunpack.c.l.b16 %v1819
        %v1948 = vunpack.c.l.b16 %v1820
        %v1949 = vunpack.c.l.b16 %v1821
        %v1950 = vunpack.c.l.b16 %v1822
        %v1951 = vunpack.c.l.b16 %v1823
        %v1952 = vunpack.c.l.b16 %v1824
        %v1953 = vunpack.c.l.b16 %v1825
        %v1954 = vunpack.c.l.b16 %v1826
        %v1955 = vunpack.c.l.b16 %v1827
        %v1956 = vunpack.c.l.b16 %v1828
        %v1957 = vunpack.c.l.b16 %v1829
        %v1958 = vpack.c.b16 %v1943, %v1942
        %v1959 = vpack.c.b16 %v1945, %v1944
        %v1960 = vpack.c.b16 %v1947, %v1946
        %v1961 = vpack.c.b16 %v1949, %v1948
        %v1962 = vpack.c.b16 %v1951, %v1950
        %v1963 = vpack.c.b16 %v1953, %v1952
        %v1964 = vpack.c.b16 %v1955, %v1954
        %v1965 = vpack.c.b16 %v1957, %v1956
        %1974 = vmatprep.subr.bf16.mxu0 0
        %1975 = vmatpush1.bf16.msra.mxu0 %v1965
        %1976 = vmatprep.subr.bf16.mxu0 0
        %1977 = vmatpush1.bf16.msra.mxu0 %v1964
        %1978 = vmatprep.subr.bf16.mxu0 0
        %1979 = vmatpush1.bf16.msra.mxu0 %v1963
        %1980 = vmatprep.subr.bf16.mxu0 0
        %1981 = vmatpush1.bf16.msra.mxu0 %v1962
        %1982 = vmatprep.subr.bf16.mxu0 0
        %1983 = vmatpush1.bf16.msra.mxu0 %v1961
        %1984 = vmatprep.subr.bf16.mxu0 0
        %1985 = vmatpush1.bf16.msra.mxu0 %v1960
        %1986 = vmatprep.subr.bf16.mxu0 0
        %1987 = vmatpush1.bf16.msra.mxu0 %v1959
        %1988 = vmatprep.subr.bf16.mxu0 0
        %1989 = vmatpush1.bf16.msra.mxu0 %v1958
        %1990 = vmatprep.subr.bf16.mxu0 0
        %1991 = vmatpush2.bf16.msra.mxu0 0
        %1992 = vmatprep.subr.bf16.mxu0 0
        %1993 = vmatpush2.bf16.msra.mxu0 0
        %1994 = vmatprep.subr.bf16.mxu0 0
        %1995 = vmatpush2.bf16.msra.mxu0 0
        %1996 = vmatprep.subr.bf16.mxu0 0
        %1997 = vmatpush2.bf16.msra.mxu0 0
        %1998 = vmatprep.subr.bf16.mxu0 0
        %1999 = vmatpush2.bf16.msra.mxu0 0
        %2000 = vmatprep.subr.bf16.mxu0 0
        %2001 = vmatpush2.bf16.msra.mxu0 0
        %2002 = vmatprep.subr.bf16.mxu0 0
        %2003 = vmatpush2.bf16.msra.mxu0 0
        %2004 = vmatprep.subr.bf16.mxu0 0
        %2005 = vmatpush2.bf16.msra.mxu0 0
        %2006 = vmatprep.mubr.bf16.mxu0 0
        %2007 = vmatmul.mubr.bf16.gmra.mxu0 %v1894
        %v2008 = vpop.f32.mrf.mxu0
        %v2009 = vadd.f32 0.0, %v2008
        %v2010 = vpop.f32.mrf.mxu0
        %v2011 = vpop.f32.mrf.mxu0
        %v2012 = vadd.f32 0.0, %v2011
        %v2013 = vpop.f32.mrf.mxu0
        %2014 = vmatprep.mubr.bf16.mxu0 0
        %2015 = vmatmul.mubr.bf16.gmra.mxu0 %v1895
        %v2016 = vpop.f32.mrf.mxu0
        %v2017 = vadd.f32 0.0, %v2016
        %v2018 = vpop.f32.mrf.mxu0
        %v2019 = vpop.f32.mrf.mxu0
        %v2020 = vadd.f32 0.0, %v2019
        %v2021 = vpop.f32.mrf.mxu0
        %2022 = vmatprep.mubr.bf16.mxu0 0
        %2023 = vmatmul.mubr.bf16.gmra.mxu0 %v1896
        %v2024 = vpop.f32.mrf.mxu0
        %v2025 = vadd.f32 0.0, %v2024
        %v2026 = vpop.f32.mrf.mxu0
        %v2027 = vpop.f32.mrf.mxu0
        %v2028 = vadd.f32 0.0, %v2027
        %v2029 = vpop.f32.mrf.mxu0
        %2030 = vmatprep.mubr.bf16.mxu0 0
        %2031 = vmatmul.mubr.bf16.gmra.mxu0 %v1897
        %v2032 = vpop.f32.mrf.mxu0
        %v2033 = vadd.f32 0.0, %v2032
        %v2034 = vpop.f32.mrf.mxu0
        %v2035 = vpop.f32.mrf.mxu0
        %v2036 = vadd.f32 0.0, %v2035
        %v2037 = vpop.f32.mrf.mxu0
        %2038 = vmatprep.mubr.bf16.mxu0 0
        %2039 = vmatmul.mubr.bf16.gmra.mxu0 %v1898
        %v2040 = vpop.f32.mrf.mxu0
        %v2041 = vadd.f32 0.0, %v2040
        %v2042 = vpop.f32.mrf.mxu0
        %v2043 = vpop.f32.mrf.mxu0
        %v2044 = vadd.f32 0.0, %v2043
        %v2045 = vpop.f32.mrf.mxu0
        %2046 = vmatprep.mubr.bf16.mxu0 0
        %2047 = vmatmul.mubr.bf16.gmra.mxu0 %v1899
        %v2048 = vpop.f32.mrf.mxu0
        %v2049 = vadd.f32 0.0, %v2048
        %v2050 = vpop.f32.mrf.mxu0
        %v2051 = vpop.f32.mrf.mxu0
        %v2052 = vadd.f32 0.0, %v2051
        %v2053 = vpop.f32.mrf.mxu0
        %2054 = vmatprep.mubr.bf16.mxu0 0
        %2055 = vmatmul.mubr.bf16.gmra.mxu0 %v1900
        %v2056 = vpop.f32.mrf.mxu0
        %v2057 = vadd.f32 0.0, %v2056
        %v2058 = vpop.f32.mrf.mxu0
        %v2059 = vpop.f32.mrf.mxu0
        %v2060 = vadd.f32 0.0, %v2059
        %v2061 = vpop.f32.mrf.mxu0
        %2062 = vmatprep.mubr.bf16.mxu0 0
        %2063 = vmatmul.mubr.bf16.gmra.mxu0 %v1901
        %v2064 = vpop.f32.mrf.mxu0
        %v2065 = vadd.f32 0.0, %v2064
        %v2066 = vpop.f32.mrf.mxu0
        %v2067 = vpop.f32.mrf.mxu0
        %v2068 = vadd.f32 0.0, %v2067
        %v2069 = vpop.f32.mrf.mxu0
        %2070 = vmatprep.mubr.bf16.mxu0 0
        %2071 = vmatmul.mubr.bf16.gmra.mxu0 %v1902
        %v2072 = vpop.f32.mrf.mxu0
        %v2073 = vadd.f32 0.0, %v2072
        %v2074 = vpop.f32.mrf.mxu0
        %v2075 = vpop.f32.mrf.mxu0
        %v2076 = vadd.f32 0.0, %v2075
        %v2077 = vpop.f32.mrf.mxu0
        %2078 = vmatprep.mubr.bf16.mxu0 0
        %2079 = vmatmul.mubr.bf16.gmra.mxu0 %v1903
        %v2080 = vpop.f32.mrf.mxu0
        %v2081 = vadd.f32 0.0, %v2080
        %v2082 = vpop.f32.mrf.mxu0
        %v2083 = vpop.f32.mrf.mxu0
        %v2084 = vadd.f32 0.0, %v2083
        %v2085 = vpop.f32.mrf.mxu0
        %2086 = vmatprep.mubr.bf16.mxu0 0
        %2087 = vmatmul.mubr.bf16.gmra.mxu0 %v1904
        %v2088 = vpop.f32.mrf.mxu0
        %v2089 = vadd.f32 0.0, %v2088
        %v2090 = vpop.f32.mrf.mxu0
        %v2091 = vpop.f32.mrf.mxu0
        %v2092 = vadd.f32 0.0, %v2091
        %v2093 = vpop.f32.mrf.mxu0
        %2094 = vmatprep.mubr.bf16.mxu0 0
        %2095 = vmatmul.mubr.bf16.gmra.mxu0 %v1905
        %v2096 = vpop.f32.mrf.mxu0
        %v2097 = vadd.f32 0.0, %v2096
        %v2098 = vpop.f32.mrf.mxu0
        %v2099 = vpop.f32.mrf.mxu0
        %v2100 = vadd.f32 0.0, %v2099
        %v2101 = vpop.f32.mrf.mxu0
        %2102 = vmatprep.mubr.bf16.mxu0 0
        %2103 = vmatmul.mubr.bf16.gmra.mxu0 %v1906
        %v2104 = vpop.f32.mrf.mxu0
        %v2105 = vadd.f32 0.0, %v2104
        %v2106 = vpop.f32.mrf.mxu0
        %v2107 = vpop.f32.mrf.mxu0
        %v2108 = vadd.f32 0.0, %v2107
        %v2109 = vpop.f32.mrf.mxu0
        %2110 = vmatprep.mubr.bf16.mxu0 0
        %2111 = vmatmul.mubr.bf16.gmra.mxu0 %v1907
        %v2112 = vpop.f32.mrf.mxu0
        %v2113 = vadd.f32 0.0, %v2112
        %v2114 = vpop.f32.mrf.mxu0
        %v2115 = vpop.f32.mrf.mxu0
        %v2116 = vadd.f32 0.0, %v2115
        %v2117 = vpop.f32.mrf.mxu0
        %2118 = vmatprep.mubr.bf16.mxu0 0
        %2119 = vmatmul.mubr.bf16.gmra.mxu0 %v1908
        %v2120 = vpop.f32.mrf.mxu0
        %v2121 = vadd.f32 0.0, %v2120
        %v2122 = vpop.f32.mrf.mxu0
        %v2123 = vpop.f32.mrf.mxu0
        %v2124 = vadd.f32 0.0, %v2123
        %v2125 = vpop.f32.mrf.mxu0
        %2126 = vmatprep.mubr.bf16.mxu0 0
        %2127 = vmatmul.mubr.bf16.gmra.mxu0 %v1909
        %v2128 = vpop.f32.mrf.mxu0
        %v2129 = vadd.f32 0.0, %v2128
        %v2130 = vpop.f32.mrf.mxu0
        %v2131 = vpop.f32.mrf.mxu0
        %v2132 = vadd.f32 0.0, %v2131
        %v2133 = vpop.f32.mrf.mxu0
        %2134 = vdwg.mxu0
        %v2135 = vadd.f32 %v1781, %v2009
        %v2136 = vadd.f32 %v1782, %v2012
        %v2137 = vadd.f32 %v1783, %v2017
        %v2138 = vadd.f32 %v1784, %v2020
        %v2139 = vadd.f32 %v1785, %v2025
        %v2140 = vadd.f32 %v1786, %v2028
        %v2141 = vadd.f32 %v1787, %v2033
        %v2142 = vadd.f32 %v1788, %v2036
        %v2143 = vadd.f32 %v1789, %v2041
        %v2144 = vadd.f32 %v1790, %v2044
        %v2145 = vadd.f32 %v1791, %v2049
        %v2146 = vadd.f32 %v1792, %v2052
        %v2147 = vadd.f32 %v1793, %v2057
        %v2148 = vadd.f32 %v1794, %v2060
        %v2149 = vadd.f32 %v1795, %v2065
        %v2150 = vadd.f32 %v1796, %v2068
        %v2151 = vadd.f32 %v1797, %v2073
        %v2152 = vadd.f32 %v1798, %v2076
        %v2153 = vadd.f32 %v1799, %v2081
        %v2154 = vadd.f32 %v1800, %v2084
        %v2155 = vadd.f32 %v1801, %v2089
        %v2156 = vadd.f32 %v1802, %v2092
        %v2157 = vadd.f32 %v1803, %v2097
        %v2158 = vadd.f32 %v1804, %v2100
        %v2159 = vadd.f32 %v1805, %v2105
        %v2160 = vadd.f32 %v1806, %v2108
        %v2161 = vadd.f32 %v1807, %v2113
        %v2162 = vadd.f32 %v1808, %v2116
        %v2163 = vadd.f32 %v1809, %v2121
        %v2164 = vadd.f32 %v1810, %v2124
        %v2165 = vadd.f32 %v1811, %v2129
        %v2166 = vadd.f32 %v1812, %v2132
        %s2167 = scalar_lea.vmem %s3, 256
        %v2168 = vld [vmem:[%s2167] sm:$0xf]
        %v2169 = vld [vmem:[%s2167 + $0x4] sm:$0xf]
        %v2170 = vld [vmem:[%s2167 + $0x8] sm:$0xf]
        %v2171 = vld [vmem:[%s2167 + $0xc] sm:$0xf]
        %v2172 = vld [vmem:[%s2167 + $0x10] sm:$0xf]
        %v2173 = vld [vmem:[%s2167 + $0x14] sm:$0xf]
        %v2174 = vld [vmem:[%s2167 + $0x18] sm:$0xf]
        %v2175 = vld [vmem:[%s2167 + $0x1c] sm:$0xf]
        %v2176 = vld [vmem:[%s2167 + $0x20] sm:$0xf]
        %v2177 = vld [vmem:[%s2167 + $0x24] sm:$0xf]
        %v2178 = vld [vmem:[%s2167 + $0x28] sm:$0xf]
        %v2179 = vld [vmem:[%s2167 + $0x2c] sm:$0xf]
        %v2180 = vld [vmem:[%s2167 + $0x30] sm:$0xf]
        %v2181 = vld [vmem:[%s2167 + $0x34] sm:$0xf]
        %v2182 = vld [vmem:[%s2167 + $0x38] sm:$0xf]
        %v2183 = vld [vmem:[%s2167 + $0x3c] sm:$0xf]
        %v2188 = vunpack.c.l.b16 %v613
        %v2189 = vunpack.c.l.b16 %v614
        %v2190 = vunpack.c.l.b16 %v615
        %v2191 = vunpack.c.l.b16 %v616
        %v2192 = vpack.c.b16 %v2189, %v2188
        %v2193 = vpack.c.b16 %v2191, %v2190
        %v2212 = vunpack.c.l.b16 %v2168
        %v2213 = vunpack.c.l.b16 %v2169
        %v2214 = vunpack.c.l.b16 %v2170
        %v2215 = vunpack.c.l.b16 %v2171
        %v2216 = vunpack.c.l.b16 %v2172
        %v2217 = vunpack.c.l.b16 %v2173
        %v2218 = vunpack.c.l.b16 %v2174
        %v2219 = vunpack.c.l.b16 %v2175
        %v2220 = vunpack.c.l.b16 %v2176
        %v2221 = vunpack.c.l.b16 %v2177
        %v2222 = vunpack.c.l.b16 %v2178
        %v2223 = vunpack.c.l.b16 %v2179
        %v2224 = vunpack.c.l.b16 %v2180
        %v2225 = vunpack.c.l.b16 %v2181
        %v2226 = vunpack.c.l.b16 %v2182
        %v2227 = vunpack.c.l.b16 %v2183
        %v2228 = vpack.c.b16 %v2213, %v2212
        %v2229 = vpack.c.b16 %v2215, %v2214
        %v2230 = vpack.c.b16 %v2217, %v2216
        %v2231 = vpack.c.b16 %v2219, %v2218
        %v2232 = vpack.c.b16 %v2221, %v2220
        %v2233 = vpack.c.b16 %v2223, %v2222
        %v2234 = vpack.c.b16 %v2225, %v2224
        %v2235 = vpack.c.b16 %v2227, %v2226
        %2244 = vmatprep.subr.bf16.mxu0 0
        %2245 = vmatpush1.bf16.msra.mxu0 %v2235
        %2246 = vmatprep.subr.bf16.mxu0 0
        %2247 = vmatpush1.bf16.msra.mxu0 %v2234
        %2248 = vmatprep.subr.bf16.mxu0 0
        %2249 = vmatpush1.bf16.msra.mxu0 %v2233
        %2250 = vmatprep.subr.bf16.mxu0 0
        %2251 = vmatpush1.bf16.msra.mxu0 %v2232
        %2252 = vmatprep.subr.bf16.mxu0 0
        %2253 = vmatpush1.bf16.msra.mxu0 %v2231
        %2254 = vmatprep.subr.bf16.mxu0 0
        %2255 = vmatpush1.bf16.msra.mxu0 %v2230
        %2256 = vmatprep.subr.bf16.mxu0 0
        %2257 = vmatpush1.bf16.msra.mxu0 %v2229
        %2258 = vmatprep.subr.bf16.mxu0 0
        %2259 = vmatpush1.bf16.msra.mxu0 %v2228
        %2260 = vmatprep.subr.bf16.mxu0 0
        %2261 = vmatpush2.bf16.msra.mxu0 0
        %2262 = vmatprep.subr.bf16.mxu0 0
        %2263 = vmatpush2.bf16.msra.mxu0 0
        %2264 = vmatprep.subr.bf16.mxu0 0
        %2265 = vmatpush2.bf16.msra.mxu0 0
        %2266 = vmatprep.subr.bf16.mxu0 0
        %2267 = vmatpush2.bf16.msra.mxu0 0
        %2268 = vmatprep.subr.bf16.mxu0 0
        %2269 = vmatpush2.bf16.msra.mxu0 0
        %2270 = vmatprep.subr.bf16.mxu0 0
        %2271 = vmatpush2.bf16.msra.mxu0 0
        %2272 = vmatprep.subr.bf16.mxu0 0
        %2273 = vmatpush2.bf16.msra.mxu0 0
        %2274 = vmatprep.subr.bf16.mxu0 0
        %2275 = vmatpush2.bf16.msra.mxu0 0
        %2276 = vmatprep.mubr.bf16.mxu0 0
        %2277 = vmatmul.mubr.bf16.gmra.mxu0 %v1896
        %v2278 = vpop.f32.mrf.mxu0
        %v2279 = vadd.f32 0.0, %v2278
        %v2280 = vpop.f32.mrf.mxu0
        %v2281 = vpop.f32.mrf.mxu0
        %v2282 = vadd.f32 0.0, %v2281
        %v2283 = vpop.f32.mrf.mxu0
        %2284 = vmatprep.mubr.bf16.mxu0 0
        %2285 = vmatmul.mubr.bf16.gmra.mxu0 %v1897
        %v2286 = vpop.f32.mrf.mxu0
        %v2287 = vadd.f32 0.0, %v2286
        %v2288 = vpop.f32.mrf.mxu0
        %v2289 = vpop.f32.mrf.mxu0
        %v2290 = vadd.f32 0.0, %v2289
        %v2291 = vpop.f32.mrf.mxu0
        %2292 = vmatprep.mubr.bf16.mxu0 0
        %2293 = vmatmul.mubr.bf16.gmra.mxu0 %v1898
        %v2294 = vpop.f32.mrf.mxu0
        %v2295 = vadd.f32 0.0, %v2294
        %v2296 = vpop.f32.mrf.mxu0
        %v2297 = vpop.f32.mrf.mxu0
        %v2298 = vadd.f32 0.0, %v2297
        %v2299 = vpop.f32.mrf.mxu0
        %2300 = vmatprep.mubr.bf16.mxu0 0
        %2301 = vmatmul.mubr.bf16.gmra.mxu0 %v1899
        %v2302 = vpop.f32.mrf.mxu0
        %v2303 = vadd.f32 0.0, %v2302
        %v2304 = vpop.f32.mrf.mxu0
        %v2305 = vpop.f32.mrf.mxu0
        %v2306 = vadd.f32 0.0, %v2305
        %v2307 = vpop.f32.mrf.mxu0
        %2308 = vmatprep.mubr.bf16.mxu0 0
        %2309 = vmatmul.mubr.bf16.gmra.mxu0 %v1900
        %v2310 = vpop.f32.mrf.mxu0
        %v2311 = vadd.f32 0.0, %v2310
        %v2312 = vpop.f32.mrf.mxu0
        %v2313 = vpop.f32.mrf.mxu0
        %v2314 = vadd.f32 0.0, %v2313
        %v2315 = vpop.f32.mrf.mxu0
        %2316 = vmatprep.mubr.bf16.mxu0 0
        %2317 = vmatmul.mubr.bf16.gmra.mxu0 %v1901
        %v2318 = vpop.f32.mrf.mxu0
        %v2319 = vadd.f32 0.0, %v2318
        %v2320 = vpop.f32.mrf.mxu0
        %v2321 = vpop.f32.mrf.mxu0
        %v2322 = vadd.f32 0.0, %v2321
        %v2323 = vpop.f32.mrf.mxu0
        %2324 = vmatprep.mubr.bf16.mxu0 0
        %2325 = vmatmul.mubr.bf16.gmra.mxu0 %v1902
        %v2326 = vpop.f32.mrf.mxu0
        %v2327 = vadd.f32 0.0, %v2326
        %v2328 = vpop.f32.mrf.mxu0
        %v2329 = vpop.f32.mrf.mxu0
        %v2330 = vadd.f32 0.0, %v2329
        %v2331 = vpop.f32.mrf.mxu0
        %2332 = vmatprep.mubr.bf16.mxu0 0
        %2333 = vmatmul.mubr.bf16.gmra.mxu0 %v1903
        %v2334 = vpop.f32.mrf.mxu0
        %v2335 = vadd.f32 0.0, %v2334
        %v2336 = vpop.f32.mrf.mxu0
        %v2337 = vpop.f32.mrf.mxu0
        %v2338 = vadd.f32 0.0, %v2337
        %v2339 = vpop.f32.mrf.mxu0
        %2340 = vmatprep.mubr.bf16.mxu0 0
        %2341 = vmatmul.mubr.bf16.gmra.mxu0 %v1904
        %v2342 = vpop.f32.mrf.mxu0
        %v2343 = vadd.f32 0.0, %v2342
        %v2344 = vpop.f32.mrf.mxu0
        %v2345 = vpop.f32.mrf.mxu0
        %v2346 = vadd.f32 0.0, %v2345
        %v2347 = vpop.f32.mrf.mxu0
        %2348 = vmatprep.mubr.bf16.mxu0 0
        %2349 = vmatmul.mubr.bf16.gmra.mxu0 %v1905
        %v2350 = vpop.f32.mrf.mxu0
        %v2351 = vadd.f32 0.0, %v2350
        %v2352 = vpop.f32.mrf.mxu0
        %v2353 = vpop.f32.mrf.mxu0
        %v2354 = vadd.f32 0.0, %v2353
        %v2355 = vpop.f32.mrf.mxu0
        %2356 = vmatprep.mubr.bf16.mxu0 0
        %2357 = vmatmul.mubr.bf16.gmra.mxu0 %v1906
        %v2358 = vpop.f32.mrf.mxu0
        %v2359 = vadd.f32 0.0, %v2358
        %v2360 = vpop.f32.mrf.mxu0
        %v2361 = vpop.f32.mrf.mxu0
        %v2362 = vadd.f32 0.0, %v2361
        %v2363 = vpop.f32.mrf.mxu0
        %2364 = vmatprep.mubr.bf16.mxu0 0
        %2365 = vmatmul.mubr.bf16.gmra.mxu0 %v1907
        %v2366 = vpop.f32.mrf.mxu0
        %v2367 = vadd.f32 0.0, %v2366
        %v2368 = vpop.f32.mrf.mxu0
        %v2369 = vpop.f32.mrf.mxu0
        %v2370 = vadd.f32 0.0, %v2369
        %v2371 = vpop.f32.mrf.mxu0
        %2372 = vmatprep.mubr.bf16.mxu0 0
        %2373 = vmatmul.mubr.bf16.gmra.mxu0 %v1908
        %v2374 = vpop.f32.mrf.mxu0
        %v2375 = vadd.f32 0.0, %v2374
        %v2376 = vpop.f32.mrf.mxu0
        %v2377 = vpop.f32.mrf.mxu0
        %v2378 = vadd.f32 0.0, %v2377
        %v2379 = vpop.f32.mrf.mxu0
        %2380 = vmatprep.mubr.bf16.mxu0 0
        %2381 = vmatmul.mubr.bf16.gmra.mxu0 %v1909
        %v2382 = vpop.f32.mrf.mxu0
        %v2383 = vadd.f32 0.0, %v2382
        %v2384 = vpop.f32.mrf.mxu0
        %v2385 = vpop.f32.mrf.mxu0
        %v2386 = vadd.f32 0.0, %v2385
        %v2387 = vpop.f32.mrf.mxu0
        %2388 = vmatprep.mubr.bf16.mxu0 0
        %2389 = vmatmul.mubr.bf16.gmra.mxu0 %v2192
        %v2390 = vpop.f32.mrf.mxu0
        %v2391 = vadd.f32 0.0, %v2390
        %v2392 = vpop.f32.mrf.mxu0
        %v2393 = vpop.f32.mrf.mxu0
        %v2394 = vadd.f32 0.0, %v2393
        %v2395 = vpop.f32.mrf.mxu0
        %2396 = vmatprep.mubr.bf16.mxu0 0
        %2397 = vmatmul.mubr.bf16.gmra.mxu0 %v2193
        %v2398 = vpop.f32.mrf.mxu0
        %v2399 = vadd.f32 0.0, %v2398
        %v2400 = vpop.f32.mrf.mxu0
        %v2401 = vpop.f32.mrf.mxu0
        %v2402 = vadd.f32 0.0, %v2401
        %v2403 = vpop.f32.mrf.mxu0
        %2404 = vdwg.mxu0
        %v2405 = vadd.f32 %v2135, %v2279
        %v2406 = vadd.f32 %v2136, %v2282
        %v2407 = vadd.f32 %v2137, %v2287
        %v2408 = vadd.f32 %v2138, %v2290
        %v2409 = vadd.f32 %v2139, %v2295
        %v2410 = vadd.f32 %v2140, %v2298
        %v2411 = vadd.f32 %v2141, %v2303
        %v2412 = vadd.f32 %v2142, %v2306
        %v2413 = vadd.f32 %v2143, %v2311
        %v2414 = vadd.f32 %v2144, %v2314
        %v2415 = vadd.f32 %v2145, %v2319
        %v2416 = vadd.f32 %v2146, %v2322
        %v2417 = vadd.f32 %v2147, %v2327
        %v2418 = vadd.f32 %v2148, %v2330
        %v2419 = vadd.f32 %v2149, %v2335
        %v2420 = vadd.f32 %v2150, %v2338
        %v2421 = vadd.f32 %v2151, %v2343
        %v2422 = vadd.f32 %v2152, %v2346
        %v2423 = vadd.f32 %v2153, %v2351
        %v2424 = vadd.f32 %v2154, %v2354
        %v2425 = vadd.f32 %v2155, %v2359
        %v2426 = vadd.f32 %v2156, %v2362
        %v2427 = vadd.f32 %v2157, %v2367
        %v2428 = vadd.f32 %v2158, %v2370
        %v2429 = vadd.f32 %v2159, %v2375
        %v2430 = vadd.f32 %v2160, %v2378
        %v2431 = vadd.f32 %v2161, %v2383
        %v2432 = vadd.f32 %v2162, %v2386
        %v2433 = vadd.f32 %v2163, %v2391
        %v2434 = vadd.f32 %v2164, %v2394
        %v2435 = vadd.f32 %v2165, %v2399
        %v2436 = vadd.f32 %v2166, %v2402
        %s2437 = scalar_lea.vmem %s3, 448
        %v2438 = vld [vmem:[%s2437] sm:$0xf]
        %v2439 = vld [vmem:[%s2437 + $0x4] sm:$0xf]
        %v2440 = vld [vmem:[%s2437 + $0x8] sm:$0xf]
        %v2441 = vld [vmem:[%s2437 + $0xc] sm:$0xf]
        %v2442 = vld [vmem:[%s2437 + $0x10] sm:$0xf]
        %v2443 = vld [vmem:[%s2437 + $0x14] sm:$0xf]
        %v2444 = vld [vmem:[%s2437 + $0x18] sm:$0xf]
        %v2445 = vld [vmem:[%s2437 + $0x1c] sm:$0xf]
        %v2446 = vld [vmem:[%s2437 + $0x20] sm:$0xf]
        %v2447 = vld [vmem:[%s2437 + $0x24] sm:$0xf]
        %v2448 = vld [vmem:[%s2437 + $0x28] sm:$0xf]
        %v2449 = vld [vmem:[%s2437 + $0x2c] sm:$0xf]
        %v2450 = vld [vmem:[%s2437 + $0x30] sm:$0xf]
        %v2451 = vld [vmem:[%s2437 + $0x34] sm:$0xf]
        %v2452 = vld [vmem:[%s2437 + $0x38] sm:$0xf]
        %v2453 = vld [vmem:[%s2437 + $0x3c] sm:$0xf]
        %v2458 = vunpack.c.l.b16 %v618
        %v2459 = vunpack.c.l.b16 %v619
        %v2460 = vunpack.c.l.b16 %v620
        %v2461 = vunpack.c.l.b16 %v621
        %v2462 = vpack.c.b16 %v2459, %v2458
        %v2463 = vpack.c.b16 %v2461, %v2460
        %v2482 = vunpack.c.l.b16 %v2438
        %v2483 = vunpack.c.l.b16 %v2439
        %v2484 = vunpack.c.l.b16 %v2440
        %v2485 = vunpack.c.l.b16 %v2441
        %v2486 = vunpack.c.l.b16 %v2442
        %v2487 = vunpack.c.l.b16 %v2443
        %v2488 = vunpack.c.l.b16 %v2444
        %v2489 = vunpack.c.l.b16 %v2445
        %v2490 = vunpack.c.l.b16 %v2446
        %v2491 = vunpack.c.l.b16 %v2447
        %v2492 = vunpack.c.l.b16 %v2448
        %v2493 = vunpack.c.l.b16 %v2449
        %v2494 = vunpack.c.l.b16 %v2450
        %v2495 = vunpack.c.l.b16 %v2451
        %v2496 = vunpack.c.l.b16 %v2452
        %v2497 = vunpack.c.l.b16 %v2453
        %v2498 = vpack.c.b16 %v2483, %v2482
        %v2499 = vpack.c.b16 %v2485, %v2484
        %v2500 = vpack.c.b16 %v2487, %v2486
        %v2501 = vpack.c.b16 %v2489, %v2488
        %v2502 = vpack.c.b16 %v2491, %v2490
        %v2503 = vpack.c.b16 %v2493, %v2492
        %v2504 = vpack.c.b16 %v2495, %v2494
        %v2505 = vpack.c.b16 %v2497, %v2496
        %2514 = vmatprep.subr.bf16.mxu0 0
        %2515 = vmatpush1.bf16.msra.mxu0 %v2505
        %2516 = vmatprep.subr.bf16.mxu0 0
        %2517 = vmatpush1.bf16.msra.mxu0 %v2504
        %2518 = vmatprep.subr.bf16.mxu0 0
        %2519 = vmatpush1.bf16.msra.mxu0 %v2503
        %2520 = vmatprep.subr.bf16.mxu0 0
        %2521 = vmatpush1.bf16.msra.mxu0 %v2502
        %2522 = vmatprep.subr.bf16.mxu0 0
        %2523 = vmatpush1.bf16.msra.mxu0 %v2501
        %2524 = vmatprep.subr.bf16.mxu0 0
        %2525 = vmatpush1.bf16.msra.mxu0 %v2500
        %2526 = vmatprep.subr.bf16.mxu0 0
        %2527 = vmatpush1.bf16.msra.mxu0 %v2499
        %2528 = vmatprep.subr.bf16.mxu0 0
        %2529 = vmatpush1.bf16.msra.mxu0 %v2498
        %2530 = vmatprep.subr.bf16.mxu0 0
        %2531 = vmatpush2.bf16.msra.mxu0 0
        %2532 = vmatprep.subr.bf16.mxu0 0
        %2533 = vmatpush2.bf16.msra.mxu0 0
        %2534 = vmatprep.subr.bf16.mxu0 0
        %2535 = vmatpush2.bf16.msra.mxu0 0
        %2536 = vmatprep.subr.bf16.mxu0 0
        %2537 = vmatpush2.bf16.msra.mxu0 0
        %2538 = vmatprep.subr.bf16.mxu0 0
        %2539 = vmatpush2.bf16.msra.mxu0 0
        %2540 = vmatprep.subr.bf16.mxu0 0
        %2541 = vmatpush2.bf16.msra.mxu0 0
        %2542 = vmatprep.subr.bf16.mxu0 0
        %2543 = vmatpush2.bf16.msra.mxu0 0
        %2544 = vmatprep.subr.bf16.mxu0 0
        %2545 = vmatpush2.bf16.msra.mxu0 0
        %2546 = vmatprep.mubr.bf16.mxu0 0
        %2547 = vmatmul.mubr.bf16.gmra.mxu0 %v1898
        %v2548 = vpop.f32.mrf.mxu0
        %v2549 = vadd.f32 0.0, %v2548
        %v2550 = vpop.f32.mrf.mxu0
        %v2551 = vpop.f32.mrf.mxu0
        %v2552 = vadd.f32 0.0, %v2551
        %v2553 = vpop.f32.mrf.mxu0
        %2554 = vmatprep.mubr.bf16.mxu0 0
        %2555 = vmatmul.mubr.bf16.gmra.mxu0 %v1899
        %v2556 = vpop.f32.mrf.mxu0
        %v2557 = vadd.f32 0.0, %v2556
        %v2558 = vpop.f32.mrf.mxu0
        %v2559 = vpop.f32.mrf.mxu0
        %v2560 = vadd.f32 0.0, %v2559
        %v2561 = vpop.f32.mrf.mxu0
        %2562 = vmatprep.mubr.bf16.mxu0 0
        %2563 = vmatmul.mubr.bf16.gmra.mxu0 %v1900
        %v2564 = vpop.f32.mrf.mxu0
        %v2565 = vadd.f32 0.0, %v2564
        %v2566 = vpop.f32.mrf.mxu0
        %v2567 = vpop.f32.mrf.mxu0
        %v2568 = vadd.f32 0.0, %v2567
        %v2569 = vpop.f32.mrf.mxu0
        %2570 = vmatprep.mubr.bf16.mxu0 0
        %2571 = vmatmul.mubr.bf16.gmra.mxu0 %v1901
        %v2572 = vpop.f32.mrf.mxu0
        %v2573 = vadd.f32 0.0, %v2572
        %v2574 = vpop.f32.mrf.mxu0
        %v2575 = vpop.f32.mrf.mxu0
        %v2576 = vadd.f32 0.0, %v2575
        %v2577 = vpop.f32.mrf.mxu0
        %2578 = vmatprep.mubr.bf16.mxu0 0
        %2579 = vmatmul.mubr.bf16.gmra.mxu0 %v1902
        %v2580 = vpop.f32.mrf.mxu0
        %v2581 = vadd.f32 0.0, %v2580
        %v2582 = vpop.f32.mrf.mxu0
        %v2583 = vpop.f32.mrf.mxu0
        %v2584 = vadd.f32 0.0, %v2583
        %v2585 = vpop.f32.mrf.mxu0
        %2586 = vmatprep.mubr.bf16.mxu0 0
        %2587 = vmatmul.mubr.bf16.gmra.mxu0 %v1903
        %v2588 = vpop.f32.mrf.mxu0
        %v2589 = vadd.f32 0.0, %v2588
        %v2590 = vpop.f32.mrf.mxu0
        %v2591 = vpop.f32.mrf.mxu0
        %v2592 = vadd.f32 0.0, %v2591
        %v2593 = vpop.f32.mrf.mxu0
        %2594 = vmatprep.mubr.bf16.mxu0 0
        %2595 = vmatmul.mubr.bf16.gmra.mxu0 %v1904
        %v2596 = vpop.f32.mrf.mxu0
        %v2597 = vadd.f32 0.0, %v2596
        %v2598 = vpop.f32.mrf.mxu0
        %v2599 = vpop.f32.mrf.mxu0
        %v2600 = vadd.f32 0.0, %v2599
        %v2601 = vpop.f32.mrf.mxu0
        %2602 = vmatprep.mubr.bf16.mxu0 0
        %2603 = vmatmul.mubr.bf16.gmra.mxu0 %v1905
        %v2604 = vpop.f32.mrf.mxu0
        %v2605 = vadd.f32 0.0, %v2604
        %v2606 = vpop.f32.mrf.mxu0
        %v2607 = vpop.f32.mrf.mxu0
        %v2608 = vadd.f32 0.0, %v2607
        %v2609 = vpop.f32.mrf.mxu0
        %2610 = vmatprep.mubr.bf16.mxu0 0
        %2611 = vmatmul.mubr.bf16.gmra.mxu0 %v1906
        %v2612 = vpop.f32.mrf.mxu0
        %v2613 = vadd.f32 0.0, %v2612
        %v2614 = vpop.f32.mrf.mxu0
        %v2615 = vpop.f32.mrf.mxu0
        %v2616 = vadd.f32 0.0, %v2615
        %v2617 = vpop.f32.mrf.mxu0
        %2618 = vmatprep.mubr.bf16.mxu0 0
        %2619 = vmatmul.mubr.bf16.gmra.mxu0 %v1907
        %v2620 = vpop.f32.mrf.mxu0
        %v2621 = vadd.f32 0.0, %v2620
        %v2622 = vpop.f32.mrf.mxu0
        %v2623 = vpop.f32.mrf.mxu0
        %v2624 = vadd.f32 0.0, %v2623
        %v2625 = vpop.f32.mrf.mxu0
        %2626 = vmatprep.mubr.bf16.mxu0 0
        %2627 = vmatmul.mubr.bf16.gmra.mxu0 %v1908
        %v2628 = vpop.f32.mrf.mxu0
        %v2629 = vadd.f32 0.0, %v2628
        %v2630 = vpop.f32.mrf.mxu0
        %v2631 = vpop.f32.mrf.mxu0
        %v2632 = vadd.f32 0.0, %v2631
        %v2633 = vpop.f32.mrf.mxu0
        %2634 = vmatprep.mubr.bf16.mxu0 0
        %2635 = vmatmul.mubr.bf16.gmra.mxu0 %v1909
        %v2636 = vpop.f32.mrf.mxu0
        %v2637 = vadd.f32 0.0, %v2636
        %v2638 = vpop.f32.mrf.mxu0
        %v2639 = vpop.f32.mrf.mxu0
        %v2640 = vadd.f32 0.0, %v2639
        %v2641 = vpop.f32.mrf.mxu0
        %2642 = vmatprep.mubr.bf16.mxu0 0
        %2643 = vmatmul.mubr.bf16.gmra.mxu0 %v2192
        %v2644 = vpop.f32.mrf.mxu0
        %v2645 = vadd.f32 0.0, %v2644
        %v2646 = vpop.f32.mrf.mxu0
        %v2647 = vpop.f32.mrf.mxu0
        %v2648 = vadd.f32 0.0, %v2647
        %v2649 = vpop.f32.mrf.mxu0
        %2650 = vmatprep.mubr.bf16.mxu0 0
        %2651 = vmatmul.mubr.bf16.gmra.mxu0 %v2193
        %v2652 = vpop.f32.mrf.mxu0
        %v2653 = vadd.f32 0.0, %v2652
        %v2654 = vpop.f32.mrf.mxu0
        %v2655 = vpop.f32.mrf.mxu0
        %v2656 = vadd.f32 0.0, %v2655
        %v2657 = vpop.f32.mrf.mxu0
        %2658 = vmatprep.mubr.bf16.mxu0 0
        %2659 = vmatmul.mubr.bf16.gmra.mxu0 %v2462
        %v2660 = vpop.f32.mrf.mxu0
        %v2661 = vadd.f32 0.0, %v2660
        %v2662 = vpop.f32.mrf.mxu0
        %v2663 = vpop.f32.mrf.mxu0
        %v2664 = vadd.f32 0.0, %v2663
        %v2665 = vpop.f32.mrf.mxu0
        %2666 = vmatprep.mubr.bf16.mxu0 0
        %2667 = vmatmul.mubr.bf16.gmra.mxu0 %v2463
        %v2668 = vpop.f32.mrf.mxu0
        %v2669 = vadd.f32 0.0, %v2668
        %v2670 = vpop.f32.mrf.mxu0
        %v2671 = vpop.f32.mrf.mxu0
        %v2672 = vadd.f32 0.0, %v2671
        %v2673 = vpop.f32.mrf.mxu0
        %2674 = vdwg.mxu0
        %v2675 = vadd.f32 %v2405, %v2549
        %v2676 = vadd.f32 %v2406, %v2552
        %v2677 = vadd.f32 %v2407, %v2557
        %v2678 = vadd.f32 %v2408, %v2560
        %v2679 = vadd.f32 %v2409, %v2565
        %v2680 = vadd.f32 %v2410, %v2568
        %v2681 = vadd.f32 %v2411, %v2573
        %v2682 = vadd.f32 %v2412, %v2576
        %v2683 = vadd.f32 %v2413, %v2581
        %v2684 = vadd.f32 %v2414, %v2584
        %v2685 = vadd.f32 %v2415, %v2589
        %v2686 = vadd.f32 %v2416, %v2592
        %v2687 = vadd.f32 %v2417, %v2597
        %v2688 = vadd.f32 %v2418, %v2600
        %v2689 = vadd.f32 %v2419, %v2605
        %v2690 = vadd.f32 %v2420, %v2608
        %v2691 = vadd.f32 %v2421, %v2613
        %v2692 = vadd.f32 %v2422, %v2616
        %v2693 = vadd.f32 %v2423, %v2621
        %v2694 = vadd.f32 %v2424, %v2624
        %v2695 = vadd.f32 %v2425, %v2629
        %v2696 = vadd.f32 %v2426, %v2632
        %v2697 = vadd.f32 %v2427, %v2637
        %v2698 = vadd.f32 %v2428, %v2640
        %v2699 = vadd.f32 %v2429, %v2645
        %v2700 = vadd.f32 %v2430, %v2648
        %v2701 = vadd.f32 %v2431, %v2653
        %v2702 = vadd.f32 %v2432, %v2656
        %v2703 = vadd.f32 %v2433, %v2661
        %v2704 = vadd.f32 %v2434, %v2664
        %v2705 = vadd.f32 %v2435, %v2669
        %v2706 = vadd.f32 %v2436, %v2672
        %v2707 = vld [vmem:[#allocation2 + $0x4] sm:$0xf]
        %v2708 = vld [vmem:[#allocation2 + $0x8] sm:$0xf]
        %v2709 = vld [vmem:[#allocation2 + $0xc] sm:$0xf]
        %v2710 = vld [vmem:[#allocation2 + $0x10] sm:$0xf]
        %v2711 = vld [vmem:[#allocation2 + $0x14] sm:$0x1]
        %v2712 = vld [vmem:[#allocation2 + $0x1c] sm:$0xf]
        %v2713 = vld [vmem:[#allocation2 + $0x20] sm:$0xf]
        %v2714 = vld [vmem:[#allocation2 + $0x24] sm:$0xf]
        %v2715 = vld [vmem:[#allocation2 + $0x28] sm:$0xf]
        %v2716 = vld [vmem:[#allocation2 + $0x2c] sm:$0x1]
        %v2717 = vld [vmem:[#allocation2 + $0x34] sm:$0xf]
        %v2718 = vld [vmem:[#allocation2 + $0x38] sm:$0xf]
        %v2719 = vld [vmem:[#allocation2 + $0x3c] sm:$0xf]
        %v2720 = vld [vmem:[#allocation2 + $0x40] sm:$0xf]
        %v2721 = vld [vmem:[#allocation2 + $0x44] sm:$0x1]
        %v2722 = vld [vmem:[#allocation2 + $0x4c] sm:$0xf]
        %v2723 = vld [vmem:[#allocation2 + $0x50] sm:$0xf]
        %v2724 = vld [vmem:[#allocation2 + $0x54] sm:$0xf]
        %v2725 = vld [vmem:[#allocation2 + $0x58] sm:$0xf]
        %v2726 = vld [vmem:[#allocation2 + $0x5c] sm:$0x1]
        %v2727 = vld [vmem:[#allocation2 + $0x64] sm:$0xf]
        %v2728 = vld [vmem:[#allocation2 + $0x68] sm:$0xf]
        %v2729 = vld [vmem:[#allocation2 + $0x6c] sm:$0xf]
        %v2730 = vld [vmem:[#allocation2 + $0x70] sm:$0xf]
        %v2731 = vld [vmem:[#allocation2 + $0x74] sm:$0x1]
        %v2732 = vld [vmem:[#allocation2 + $0x7c] sm:$0xf]
        %v2733 = vld [vmem:[#allocation2 + $0x80] sm:$0xf]
        %v2734 = vld [vmem:[#allocation2 + $0x84] sm:$0xf]
        %v2735 = vld [vmem:[#allocation2 + $0x88] sm:$0xf]
        %v2736 = vld [vmem:[#allocation2 + $0x8c] sm:$0x1]
        %v2737 = vld [vmem:[#allocation2 + $0x94] sm:$0xf]
        %v2738 = vld [vmem:[#allocation2 + $0x98] sm:$0xf]
        %v2739 = vld [vmem:[#allocation2 + $0x9c] sm:$0xf]
        %v2740 = vld [vmem:[#allocation2 + $0xa0] sm:$0xf]
        %v2741 = vld [vmem:[#allocation2 + $0xa4] sm:$0x1]
        %v2742 = vld [vmem:[#allocation2 + $0xac] sm:$0xf]
        %v2743 = vld [vmem:[#allocation2 + $0xb0] sm:$0xf]
        %v2744 = vld [vmem:[#allocation2 + $0xb4] sm:$0xf]
        %v2745 = vld [vmem:[#allocation2 + $0xb8] sm:$0xf]
        %v2746 = vld [vmem:[#allocation2 + $0xbc] sm:$0x1]
        %v2747 = vld [vmem:[#allocation2 + $0xc4] sm:$0xf]
        %v2748 = vld [vmem:[#allocation2 + $0xc8] sm:$0xf]
        %v2749 = vld [vmem:[#allocation2 + $0xcc] sm:$0xf]
        %v2750 = vld [vmem:[#allocation2 + $0xd0] sm:$0xf]
        %v2751 = vld [vmem:[#allocation2 + $0xd4] sm:$0x1]
        %v2752 = vld [vmem:[#allocation2 + $0xdc] sm:$0xf]
        %v2753 = vld [vmem:[#allocation2 + $0xe0] sm:$0xf]
        %v2754 = vld [vmem:[#allocation2 + $0xe4] sm:$0xf]
        %v2755 = vld [vmem:[#allocation2 + $0xe8] sm:$0xf]
        %v2756 = vld [vmem:[#allocation2 + $0xec] sm:$0x1]
        %vm2757 = vsmask.f32 3328
        %vm2758 = vsmask.f32 7440
        %vm2759 = vmor %vm2757, %vm2758
        %v2761 = vshrl.u32 %v2707, 16
        %v2763 = vrot.slane %v2761, 4
        %v2764 = vshll.u32 %v2707, 16
        %v2766 = vrot.slane %v2764, 5
        %v2767 = vor.u32 %v2763, %v2766
        %v2768 = vrot.slane %v2767, 4
        %v2770 = vshll.u32 %v2708, 16
        %v2772 = vrot.slane %v2770, 5
        %v2773 = vsel %vm2759, %v2768, %v2772
        %v2774 = vshrl.u32 %v2708, 16
        %v2776 = vrot.slane %v2774, 4
        %v2777 = vor.u32 %v2776, %v2772
        %v2778 = vrot.slane %v2777, 4
        %v2780 = vshll.u32 %v2709, 16
        %v2782 = vrot.slane %v2780, 5
        %v2783 = vsel %vm2759, %v2778, %v2782
        %v2784 = vshrl.u32 %v2709, 16
        %v2786 = vrot.slane %v2784, 4
        %v2787 = vor.u32 %v2786, %v2782
        %v2788 = vrot.slane %v2787, 4
        %v2790 = vshll.u32 %v2710, 16
        %v2792 = vrot.slane %v2790, 5
        %v2793 = vsel %vm2759, %v2788, %v2792
        %v2794 = vshrl.u32 %v2710, 16
        %v2796 = vrot.slane %v2794, 4
        %v2797 = vor.u32 %v2796, %v2792
        %v2798 = vrot.slane %v2797, 4
        %v2800 = vshll.u32 %v2711, 16
        %v2802 = vrot.slane %v2800, 5
        %v2803 = vsel %vm2759, %v2798, %v2802
        %v2805 = vshrl.u32 %v2712, 16
        %v2807 = vrot.slane %v2805, 4
        %v2808 = vshll.u32 %v2712, 16
        %v2810 = vrot.slane %v2808, 5
        %v2811 = vor.u32 %v2807, %v2810
        %v2812 = vrot.slane %v2811, 4
        %v2814 = vshll.u32 %v2713, 16
        %v2816 = vrot.slane %v2814, 5
        %v2817 = vsel %vm2759, %v2812, %v2816
        %v2818 = vshrl.u32 %v2713, 16
        %v2820 = vrot.slane %v2818, 4
        %v2821 = vor.u32 %v2820, %v2816
        %v2822 = vrot.slane %v2821, 4
        %v2824 = vshll.u32 %v2714, 16
        %v2826 = vrot.slane %v2824, 5
        %v2827 = vsel %vm2759, %v2822, %v2826
        %v2828 = vshrl.u32 %v2714, 16
        %v2830 = vrot.slane %v2828, 4
        %v2831 = vor.u32 %v2830, %v2826
        %v2832 = vrot.slane %v2831, 4
        %v2834 = vshll.u32 %v2715, 16
        %v2836 = vrot.slane %v2834, 5
        %v2837 = vsel %vm2759, %v2832, %v2836
        %v2838 = vshrl.u32 %v2715, 16
        %v2840 = vrot.slane %v2838, 4
        %v2841 = vor.u32 %v2840, %v2836
        %v2842 = vrot.slane %v2841, 4
        %v2844 = vshll.u32 %v2716, 16
        %v2846 = vrot.slane %v2844, 5
        %v2847 = vsel %vm2759, %v2842, %v2846
        %v2849 = vshrl.u32 %v2717, 16
        %v2851 = vrot.slane %v2849, 4
        %v2852 = vshll.u32 %v2717, 16
        %v2854 = vrot.slane %v2852, 5
        %v2855 = vor.u32 %v2851, %v2854
        %v2856 = vrot.slane %v2855, 4
        %v2858 = vshll.u32 %v2718, 16
        %v2860 = vrot.slane %v2858, 5
        %v2861 = vsel %vm2759, %v2856, %v2860
        %v2862 = vshrl.u32 %v2718, 16
        %v2864 = vrot.slane %v2862, 4
        %v2865 = vor.u32 %v2864, %v2860
        %v2866 = vrot.slane %v2865, 4
        %v2868 = vshll.u32 %v2719, 16
        %v2870 = vrot.slane %v2868, 5
        %v2871 = vsel %vm2759, %v2866, %v2870
        %v2872 = vshrl.u32 %v2719, 16
        %v2874 = vrot.slane %v2872, 4
        %v2875 = vor.u32 %v2874, %v2870
        %v2876 = vrot.slane %v2875, 4
        %v2878 = vshll.u32 %v2720, 16
        %v2880 = vrot.slane %v2878, 5
        %v2881 = vsel %vm2759, %v2876, %v2880
        %v2882 = vshrl.u32 %v2720, 16
        %v2884 = vrot.slane %v2882, 4
        %v2885 = vor.u32 %v2884, %v2880
        %v2886 = vrot.slane %v2885, 4
        %v2888 = vshll.u32 %v2721, 16
        %v2890 = vrot.slane %v2888, 5
        %v2891 = vsel %vm2759, %v2886, %v2890
        %v2893 = vshrl.u32 %v2722, 16
        %v2895 = vrot.slane %v2893, 4
        %v2896 = vshll.u32 %v2722, 16
        %v2898 = vrot.slane %v2896, 5
        %v2899 = vor.u32 %v2895, %v2898
        %v2900 = vrot.slane %v2899, 4
        %v2902 = vshll.u32 %v2723, 16
        %v2904 = vrot.slane %v2902, 5
        %v2905 = vsel %vm2759, %v2900, %v2904
        %v2906 = vshrl.u32 %v2723, 16
        %v2908 = vrot.slane %v2906, 4
        %v2909 = vor.u32 %v2908, %v2904
        %v2910 = vrot.slane %v2909, 4
        %v2912 = vshll.u32 %v2724, 16
        %v2914 = vrot.slane %v2912, 5
        %v2915 = vsel %vm2759, %v2910, %v2914
        %v2916 = vshrl.u32 %v2724, 16
        %v2918 = vrot.slane %v2916, 4
        %v2919 = vor.u32 %v2918, %v2914
        %v2920 = vrot.slane %v2919, 4
        %v2922 = vshll.u32 %v2725, 16
        %v2924 = vrot.slane %v2922, 5
        %v2925 = vsel %vm2759, %v2920, %v2924
        %v2926 = vshrl.u32 %v2725, 16
        %v2928 = vrot.slane %v2926, 4
        %v2929 = vor.u32 %v2928, %v2924
        %v2930 = vrot.slane %v2929, 4
        %v2932 = vshll.u32 %v2726, 16
        %v2934 = vrot.slane %v2932, 5
        %v2935 = vsel %vm2759, %v2930, %v2934
        %v2937 = vshrl.u32 %v2727, 16
        %v2939 = vrot.slane %v2937, 4
        %v2940 = vshll.u32 %v2727, 16
        %v2942 = vrot.slane %v2940, 5
        %v2943 = vor.u32 %v2939, %v2942
        %v2944 = vrot.slane %v2943, 4
        %v2946 = vshll.u32 %v2728, 16
        %v2948 = vrot.slane %v2946, 5
        %v2949 = vsel %vm2759, %v2944, %v2948
        %v2950 = vshrl.u32 %v2728, 16
        %v2952 = vrot.slane %v2950, 4
        %v2953 = vor.u32 %v2952, %v2948
        %v2954 = vrot.slane %v2953, 4
        %v2956 = vshll.u32 %v2729, 16
        %v2958 = vrot.slane %v2956, 5
        %v2959 = vsel %vm2759, %v2954, %v2958
        %v2960 = vshrl.u32 %v2729, 16
        %v2962 = vrot.slane %v2960, 4
        %v2963 = vor.u32 %v2962, %v2958
        %v2964 = vrot.slane %v2963, 4
        %v2966 = vshll.u32 %v2730, 16
        %v2968 = vrot.slane %v2966, 5
        %v2969 = vsel %vm2759, %v2964, %v2968
        %v2970 = vshrl.u32 %v2730, 16
        %v2972 = vrot.slane %v2970, 4
        %v2973 = vor.u32 %v2972, %v2968
        %v2974 = vrot.slane %v2973, 4
        %v2976 = vshll.u32 %v2731, 16
        %v2978 = vrot.slane %v2976, 5
        %v2979 = vsel %vm2759, %v2974, %v2978
        %v2981 = vshrl.u32 %v2732, 16
        %v2983 = vrot.slane %v2981, 4
        %v2984 = vshll.u32 %v2732, 16
        %v2986 = vrot.slane %v2984, 5
        %v2987 = vor.u32 %v2983, %v2986
        %v2988 = vrot.slane %v2987, 4
        %v2990 = vshll.u32 %v2733, 16
        %v2992 = vrot.slane %v2990, 5
        %v2993 = vsel %vm2759, %v2988, %v2992
        %v2994 = vshrl.u32 %v2733, 16
        %v2996 = vrot.slane %v2994, 4
        %v2997 = vor.u32 %v2996, %v2992
        %v2998 = vrot.slane %v2997, 4
        %v3000 = vshll.u32 %v2734, 16
        %v3002 = vrot.slane %v3000, 5
        %v3003 = vsel %vm2759, %v2998, %v3002
        %v3004 = vshrl.u32 %v2734, 16
        %v3006 = vrot.slane %v3004, 4
        %v3007 = vor.u32 %v3006, %v3002
        %v3008 = vrot.slane %v3007, 4
        %v3010 = vshll.u32 %v2735, 16
        %v3012 = vrot.slane %v3010, 5
        %v3013 = vsel %vm2759, %v3008, %v3012
        %v3014 = vshrl.u32 %v2735, 16
        %v3016 = vrot.slane %v3014, 4
        %v3017 = vor.u32 %v3016, %v3012
        %v3018 = vrot.slane %v3017, 4
        %v3020 = vshll.u32 %v2736, 16
        %v3022 = vrot.slane %v3020, 5
        %v3023 = vsel %vm2759, %v3018, %v3022
        %v3025 = vshrl.u32 %v2737, 16
        %v3027 = vrot.slane %v3025, 4
        %v3028 = vshll.u32 %v2737, 16
        %v3030 = vrot.slane %v3028, 5
        %v3031 = vor.u32 %v3027, %v3030
        %v3032 = vrot.slane %v3031, 4
        %v3034 = vshll.u32 %v2738, 16
        %v3036 = vrot.slane %v3034, 5
        %v3037 = vsel %vm2759, %v3032, %v3036
        %v3038 = vshrl.u32 %v2738, 16
        %v3040 = vrot.slane %v3038, 4
        %v3041 = vor.u32 %v3040, %v3036
        %v3042 = vrot.slane %v3041, 4
        %v3044 = vshll.u32 %v2739, 16
        %v3046 = vrot.slane %v3044, 5
        %v3047 = vsel %vm2759, %v3042, %v3046
        %v3048 = vshrl.u32 %v2739, 16
        %v3050 = vrot.slane %v3048, 4
        %v3051 = vor.u32 %v3050, %v3046
        %v3052 = vrot.slane %v3051, 4
        %v3054 = vshll.u32 %v2740, 16
        %v3056 = vrot.slane %v3054, 5
        %v3057 = vsel %vm2759, %v3052, %v3056
        %v3058 = vshrl.u32 %v2740, 16
        %v3060 = vrot.slane %v3058, 4
        %v3061 = vor.u32 %v3060, %v3056
        %v3062 = vrot.slane %v3061, 4
        %v3064 = vshll.u32 %v2741, 16
        %v3066 = vrot.slane %v3064, 5
        %v3067 = vsel %vm2759, %v3062, %v3066
        %v3069 = vshrl.u32 %v2742, 16
        %v3071 = vrot.slane %v3069, 4
        %v3072 = vshll.u32 %v2742, 16
        %v3074 = vrot.slane %v3072, 5
        %v3075 = vor.u32 %v3071, %v3074
        %v3076 = vrot.slane %v3075, 4
        %v3078 = vshll.u32 %v2743, 16
        %v3080 = vrot.slane %v3078, 5
        %v3081 = vsel %vm2759, %v3076, %v3080
        %v3082 = vshrl.u32 %v2743, 16
        %v3084 = vrot.slane %v3082, 4
        %v3085 = vor.u32 %v3084, %v3080
        %v3086 = vrot.slane %v3085, 4
        %v3088 = vshll.u32 %v2744, 16
        %v3090 = vrot.slane %v3088, 5
        %v3091 = vsel %vm2759, %v3086, %v3090
        %v3092 = vshrl.u32 %v2744, 16
        %v3094 = vrot.slane %v3092, 4
        %v3095 = vor.u32 %v3094, %v3090
        %v3096 = vrot.slane %v3095, 4
        %v3098 = vshll.u32 %v2745, 16
        %v3100 = vrot.slane %v3098, 5
        %v3101 = vsel %vm2759, %v3096, %v3100
        %v3102 = vshrl.u32 %v2745, 16
        %v3104 = vrot.slane %v3102, 4
        %v3105 = vor.u32 %v3104, %v3100
        %v3106 = vrot.slane %v3105, 4
        %v3108 = vshll.u32 %v2746, 16
        %v3110 = vrot.slane %v3108, 5
        %v3111 = vsel %vm2759, %v3106, %v3110
        %s3112 = scalar_lea.vmem %s3, 128
        %v3113 = vld [vmem:[%s3112] sm:$0xf]
        %v3114 = vld [vmem:[%s3112 + $0x4] sm:$0xf]
        %v3115 = vld [vmem:[%s3112 + $0x8] sm:$0xf]
        %v3116 = vld [vmem:[%s3112 + $0xc] sm:$0xf]
        %v3117 = vld [vmem:[%s3112 + $0x10] sm:$0xf]
        %v3118 = vld [vmem:[%s3112 + $0x14] sm:$0xf]
        %v3119 = vld [vmem:[%s3112 + $0x18] sm:$0xf]
        %v3120 = vld [vmem:[%s3112 + $0x1c] sm:$0xf]
        %v3121 = vld [vmem:[%s3112 + $0x20] sm:$0xf]
        %v3122 = vld [vmem:[%s3112 + $0x24] sm:$0xf]
        %v3123 = vld [vmem:[%s3112 + $0x28] sm:$0xf]
        %v3124 = vld [vmem:[%s3112 + $0x2c] sm:$0xf]
        %v3125 = vld [vmem:[%s3112 + $0x30] sm:$0xf]
        %v3126 = vld [vmem:[%s3112 + $0x34] sm:$0xf]
        %v3127 = vld [vmem:[%s3112 + $0x38] sm:$0xf]
        %v3128 = vld [vmem:[%s3112 + $0x3c] sm:$0xf]
        %v3129 = vunpack.c.l.b16 %v2773
        %v3130 = vunpack.c.l.b16 %v2783
        %v3131 = vunpack.c.l.b16 %v2793
        %v3132 = vunpack.c.l.b16 %v2803
        %v3133 = vunpack.c.l.b16 %v2817
        %v3134 = vunpack.c.l.b16 %v2827
        %v3135 = vunpack.c.l.b16 %v2837
        %v3136 = vunpack.c.l.b16 %v2847
        %v3137 = vunpack.c.l.b16 %v2861
        %v3138 = vunpack.c.l.b16 %v2871
        %v3139 = vunpack.c.l.b16 %v2881
        %v3140 = vunpack.c.l.b16 %v2891
        %v3141 = vunpack.c.l.b16 %v2905
        %v3142 = vunpack.c.l.b16 %v2915
        %v3143 = vunpack.c.l.b16 %v2925
        %v3144 = vunpack.c.l.b16 %v2935
        %v3145 = vunpack.c.l.b16 %v2949
        %v3146 = vunpack.c.l.b16 %v2959
        %v3147 = vunpack.c.l.b16 %v2969
        %v3148 = vunpack.c.l.b16 %v2979
        %v3149 = vunpack.c.l.b16 %v2993
        %v3150 = vunpack.c.l.b16 %v3003
        %v3151 = vunpack.c.l.b16 %v3013
        %v3152 = vunpack.c.l.b16 %v3023
        %v3153 = vunpack.c.l.b16 %v3037
        %v3154 = vunpack.c.l.b16 %v3047
        %v3155 = vunpack.c.l.b16 %v3057
        %v3156 = vunpack.c.l.b16 %v3067
        %v3157 = vunpack.c.l.b16 %v3081
        %v3158 = vunpack.c.l.b16 %v3091
        %v3159 = vunpack.c.l.b16 %v3101
        %v3160 = vunpack.c.l.b16 %v3111
        %v3161 = vpack.c.b16 %v3130, %v3129
        %v3162 = vpack.c.b16 %v3132, %v3131
        %v3163 = vpack.c.b16 %v3134, %v3133
        %v3164 = vpack.c.b16 %v3136, %v3135
        %v3165 = vpack.c.b16 %v3138, %v3137
        %v3166 = vpack.c.b16 %v3140, %v3139
        %v3167 = vpack.c.b16 %v3142, %v3141
        %v3168 = vpack.c.b16 %v3144, %v3143
        %v3169 = vpack.c.b16 %v3146, %v3145
        %v3170 = vpack.c.b16 %v3148, %v3147
        %v3171 = vpack.c.b16 %v3150, %v3149
        %v3172 = vpack.c.b16 %v3152, %v3151
        %v3173 = vpack.c.b16 %v3154, %v3153
        %v3174 = vpack.c.b16 %v3156, %v3155
        %v3175 = vpack.c.b16 %v3158, %v3157
        %v3176 = vpack.c.b16 %v3160, %v3159
        %v3209 = vunpack.c.l.b16 %v3113
        %v3210 = vunpack.c.l.b16 %v3114
        %v3211 = vunpack.c.l.b16 %v3115
        %v3212 = vunpack.c.l.b16 %v3116
        %v3213 = vunpack.c.l.b16 %v3117
        %v3214 = vunpack.c.l.b16 %v3118
        %v3215 = vunpack.c.l.b16 %v3119
        %v3216 = vunpack.c.l.b16 %v3120
        %v3217 = vunpack.c.l.b16 %v3121
        %v3218 = vunpack.c.l.b16 %v3122
        %v3219 = vunpack.c.l.b16 %v3123
        %v3220 = vunpack.c.l.b16 %v3124
        %v3221 = vunpack.c.l.b16 %v3125
        %v3222 = vunpack.c.l.b16 %v3126
        %v3223 = vunpack.c.l.b16 %v3127
        %v3224 = vunpack.c.l.b16 %v3128
        %v3225 = vpack.c.b16 %v3210, %v3209
        %v3226 = vpack.c.b16 %v3212, %v3211
        %v3227 = vpack.c.b16 %v3214, %v3213
        %v3228 = vpack.c.b16 %v3216, %v3215
        %v3229 = vpack.c.b16 %v3218, %v3217
        %v3230 = vpack.c.b16 %v3220, %v3219
        %v3231 = vpack.c.b16 %v3222, %v3221
        %v3232 = vpack.c.b16 %v3224, %v3223
        %3241 = vmatprep.subr.bf16.mxu0 0
        %3242 = vmatpush1.bf16.msra.mxu0 %v3232
        %3243 = vmatprep.subr.bf16.mxu0 0
        %3244 = vmatpush1.bf16.msra.mxu0 %v3231
        %3245 = vmatprep.subr.bf16.mxu0 0
        %3246 = vmatpush1.bf16.msra.mxu0 %v3230
        %3247 = vmatprep.subr.bf16.mxu0 0
        %3248 = vmatpush1.bf16.msra.mxu0 %v3229
        %3249 = vmatprep.subr.bf16.mxu0 0
        %3250 = vmatpush1.bf16.msra.mxu0 %v3228
        %3251 = vmatprep.subr.bf16.mxu0 0
        %3252 = vmatpush1.bf16.msra.mxu0 %v3227
        %3253 = vmatprep.subr.bf16.mxu0 0
        %3254 = vmatpush1.bf16.msra.mxu0 %v3226
        %3255 = vmatprep.subr.bf16.mxu0 0
        %3256 = vmatpush1.bf16.msra.mxu0 %v3225
        %3257 = vmatprep.subr.bf16.mxu0 0
        %3258 = vmatpush2.bf16.msra.mxu0 0
        %3259 = vmatprep.subr.bf16.mxu0 0
        %3260 = vmatpush2.bf16.msra.mxu0 0
        %3261 = vmatprep.subr.bf16.mxu0 0
        %3262 = vmatpush2.bf16.msra.mxu0 0
        %3263 = vmatprep.subr.bf16.mxu0 0
        %3264 = vmatpush2.bf16.msra.mxu0 0
        %3265 = vmatprep.subr.bf16.mxu0 0
        %3266 = vmatpush2.bf16.msra.mxu0 0
        %3267 = vmatprep.subr.bf16.mxu0 0
        %3268 = vmatpush2.bf16.msra.mxu0 0
        %3269 = vmatprep.subr.bf16.mxu0 0
        %3270 = vmatpush2.bf16.msra.mxu0 0
        %3271 = vmatprep.subr.bf16.mxu0 0
        %3272 = vmatpush2.bf16.msra.mxu0 0
        %3273 = vmatprep.mubr.bf16.mxu0 0
        %3274 = vmatmul.mubr.bf16.gmra.mxu0 %v3161
        %v3275 = vpop.f32.mrf.mxu0
        %v3276 = vadd.f32 0.0, %v3275
        %v3277 = vpop.f32.mrf.mxu0
        %v3278 = vpop.f32.mrf.mxu0
        %v3279 = vadd.f32 0.0, %v3278
        %v3280 = vpop.f32.mrf.mxu0
        %3281 = vmatprep.mubr.bf16.mxu0 0
        %3282 = vmatmul.mubr.bf16.gmra.mxu0 %v3162
        %v3283 = vpop.f32.mrf.mxu0
        %v3284 = vadd.f32 0.0, %v3283
        %v3285 = vpop.f32.mrf.mxu0
        %v3286 = vpop.f32.mrf.mxu0
        %v3287 = vadd.f32 0.0, %v3286
        %v3288 = vpop.f32.mrf.mxu0
        %3289 = vmatprep.mubr.bf16.mxu0 0
        %3290 = vmatmul.mubr.bf16.gmra.mxu0 %v3163
        %v3291 = vpop.f32.mrf.mxu0
        %v3292 = vadd.f32 0.0, %v3291
        %v3293 = vpop.f32.mrf.mxu0
        %v3294 = vpop.f32.mrf.mxu0
        %v3295 = vadd.f32 0.0, %v3294
        %v3296 = vpop.f32.mrf.mxu0
        %3297 = vmatprep.mubr.bf16.mxu0 0
        %3298 = vmatmul.mubr.bf16.gmra.mxu0 %v3164
        %v3299 = vpop.f32.mrf.mxu0
        %v3300 = vadd.f32 0.0, %v3299
        %v3301 = vpop.f32.mrf.mxu0
        %v3302 = vpop.f32.mrf.mxu0
        %v3303 = vadd.f32 0.0, %v3302
        %v3304 = vpop.f32.mrf.mxu0
        %3305 = vmatprep.mubr.bf16.mxu0 0
        %3306 = vmatmul.mubr.bf16.gmra.mxu0 %v3165
        %v3307 = vpop.f32.mrf.mxu0
        %v3308 = vadd.f32 0.0, %v3307
        %v3309 = vpop.f32.mrf.mxu0
        %v3310 = vpop.f32.mrf.mxu0
        %v3311 = vadd.f32 0.0, %v3310
        %v3312 = vpop.f32.mrf.mxu0
        %3313 = vmatprep.mubr.bf16.mxu0 0
        %3314 = vmatmul.mubr.bf16.gmra.mxu0 %v3166
        %v3315 = vpop.f32.mrf.mxu0
        %v3316 = vadd.f32 0.0, %v3315
        %v3317 = vpop.f32.mrf.mxu0
        %v3318 = vpop.f32.mrf.mxu0
        %v3319 = vadd.f32 0.0, %v3318
        %v3320 = vpop.f32.mrf.mxu0
        %3321 = vmatprep.mubr.bf16.mxu0 0
        %3322 = vmatmul.mubr.bf16.gmra.mxu0 %v3167
        %v3323 = vpop.f32.mrf.mxu0
        %v3324 = vadd.f32 0.0, %v3323
        %v3325 = vpop.f32.mrf.mxu0
        %v3326 = vpop.f32.mrf.mxu0
        %v3327 = vadd.f32 0.0, %v3326
        %v3328 = vpop.f32.mrf.mxu0
        %3329 = vmatprep.mubr.bf16.mxu0 0
        %3330 = vmatmul.mubr.bf16.gmra.mxu0 %v3168
        %v3331 = vpop.f32.mrf.mxu0
        %v3332 = vadd.f32 0.0, %v3331
        %v3333 = vpop.f32.mrf.mxu0
        %v3334 = vpop.f32.mrf.mxu0
        %v3335 = vadd.f32 0.0, %v3334
        %v3336 = vpop.f32.mrf.mxu0
        %3337 = vmatprep.mubr.bf16.mxu0 0
        %3338 = vmatmul.mubr.bf16.gmra.mxu0 %v3169
        %v3339 = vpop.f32.mrf.mxu0
        %v3340 = vadd.f32 0.0, %v3339
        %v3341 = vpop.f32.mrf.mxu0
        %v3342 = vpop.f32.mrf.mxu0
        %v3343 = vadd.f32 0.0, %v3342
        %v3344 = vpop.f32.mrf.mxu0
        %3345 = vmatprep.mubr.bf16.mxu0 0
        %3346 = vmatmul.mubr.bf16.gmra.mxu0 %v3170
        %v3347 = vpop.f32.mrf.mxu0
        %v3348 = vadd.f32 0.0, %v3347
        %v3349 = vpop.f32.mrf.mxu0
        %v3350 = vpop.f32.mrf.mxu0
        %v3351 = vadd.f32 0.0, %v3350
        %v3352 = vpop.f32.mrf.mxu0
        %3353 = vmatprep.mubr.bf16.mxu0 0
        %3354 = vmatmul.mubr.bf16.gmra.mxu0 %v3171
        %v3355 = vpop.f32.mrf.mxu0
        %v3356 = vadd.f32 0.0, %v3355
        %v3357 = vpop.f32.mrf.mxu0
        %v3358 = vpop.f32.mrf.mxu0
        %v3359 = vadd.f32 0.0, %v3358
        %v3360 = vpop.f32.mrf.mxu0
        %3361 = vmatprep.mubr.bf16.mxu0 0
        %3362 = vmatmul.mubr.bf16.gmra.mxu0 %v3172
        %v3363 = vpop.f32.mrf.mxu0
        %v3364 = vadd.f32 0.0, %v3363
        %v3365 = vpop.f32.mrf.mxu0
        %v3366 = vpop.f32.mrf.mxu0
        %v3367 = vadd.f32 0.0, %v3366
        %v3368 = vpop.f32.mrf.mxu0
        %3369 = vmatprep.mubr.bf16.mxu0 0
        %3370 = vmatmul.mubr.bf16.gmra.mxu0 %v3173
        %v3371 = vpop.f32.mrf.mxu0
        %v3372 = vadd.f32 0.0, %v3371
        %v3373 = vpop.f32.mrf.mxu0
        %v3374 = vpop.f32.mrf.mxu0
        %v3375 = vadd.f32 0.0, %v3374
        %v3376 = vpop.f32.mrf.mxu0
        %3377 = vmatprep.mubr.bf16.mxu0 0
        %3378 = vmatmul.mubr.bf16.gmra.mxu0 %v3174
        %v3379 = vpop.f32.mrf.mxu0
        %v3380 = vadd.f32 0.0, %v3379
        %v3381 = vpop.f32.mrf.mxu0
        %v3382 = vpop.f32.mrf.mxu0
        %v3383 = vadd.f32 0.0, %v3382
        %v3384 = vpop.f32.mrf.mxu0
        %3385 = vmatprep.mubr.bf16.mxu0 0
        %3386 = vmatmul.mubr.bf16.gmra.mxu0 %v3175
        %v3387 = vpop.f32.mrf.mxu0
        %v3388 = vadd.f32 0.0, %v3387
        %v3389 = vpop.f32.mrf.mxu0
        %v3390 = vpop.f32.mrf.mxu0
        %v3391 = vadd.f32 0.0, %v3390
        %v3392 = vpop.f32.mrf.mxu0
        %3393 = vmatprep.mubr.bf16.mxu0 0
        %3394 = vmatmul.mubr.bf16.gmra.mxu0 %v3176
        %v3395 = vpop.f32.mrf.mxu0
        %v3396 = vadd.f32 0.0, %v3395
        %v3397 = vpop.f32.mrf.mxu0
        %v3398 = vpop.f32.mrf.mxu0
        %v3399 = vadd.f32 0.0, %v3398
        %v3400 = vpop.f32.mrf.mxu0
        %3401 = vdwg.mxu0
        %v3402 = vadd.f32 %v2675, %v3276
        %v3403 = vadd.f32 %v2676, %v3279
        %v3404 = vadd.f32 %v2677, %v3284
        %v3405 = vadd.f32 %v2678, %v3287
        %v3406 = vadd.f32 %v2679, %v3292
        %v3407 = vadd.f32 %v2680, %v3295
        %v3408 = vadd.f32 %v2681, %v3300
        %v3409 = vadd.f32 %v2682, %v3303
        %v3410 = vadd.f32 %v2683, %v3308
        %v3411 = vadd.f32 %v2684, %v3311
        %v3412 = vadd.f32 %v2685, %v3316
        %v3413 = vadd.f32 %v2686, %v3319
        %v3414 = vadd.f32 %v2687, %v3324
        %v3415 = vadd.f32 %v2688, %v3327
        %v3416 = vadd.f32 %v2689, %v3332
        %v3417 = vadd.f32 %v2690, %v3335
        %v3418 = vadd.f32 %v2691, %v3340
        %v3419 = vadd.f32 %v2692, %v3343
        %v3420 = vadd.f32 %v2693, %v3348
        %v3421 = vadd.f32 %v2694, %v3351
        %v3422 = vadd.f32 %v2695, %v3356
        %v3423 = vadd.f32 %v2696, %v3359
        %v3424 = vadd.f32 %v2697, %v3364
        %v3425 = vadd.f32 %v2698, %v3367
        %v3426 = vadd.f32 %v2699, %v3372
        %v3427 = vadd.f32 %v2700, %v3375
        %v3428 = vadd.f32 %v2701, %v3380
        %v3429 = vadd.f32 %v2702, %v3383
        %v3430 = vadd.f32 %v2703, %v3388
        %v3431 = vadd.f32 %v2704, %v3391
        %v3432 = vadd.f32 %v2705, %v3396
        %v3433 = vadd.f32 %v2706, %v3399
        %v3435 = vshrl.u32 %v2747, 16
        %v3437 = vrot.slane %v3435, 4
        %v3438 = vshll.u32 %v2747, 16
        %v3440 = vrot.slane %v3438, 5
        %v3441 = vor.u32 %v3437, %v3440
        %v3442 = vrot.slane %v3441, 4
        %v3444 = vshll.u32 %v2748, 16
        %v3446 = vrot.slane %v3444, 5
        %v3447 = vsel %vm2759, %v3442, %v3446
        %v3448 = vshrl.u32 %v2748, 16
        %v3450 = vrot.slane %v3448, 4
        %v3451 = vor.u32 %v3450, %v3446
        %v3452 = vrot.slane %v3451, 4
        %v3454 = vshll.u32 %v2749, 16
        %v3456 = vrot.slane %v3454, 5
        %v3457 = vsel %vm2759, %v3452, %v3456
        %v3458 = vshrl.u32 %v2749, 16
        %v3460 = vrot.slane %v3458, 4
        %v3461 = vor.u32 %v3460, %v3456
        %v3462 = vrot.slane %v3461, 4
        %v3464 = vshll.u32 %v2750, 16
        %v3466 = vrot.slane %v3464, 5
        %v3467 = vsel %vm2759, %v3462, %v3466
        %v3468 = vshrl.u32 %v2750, 16
        %v3470 = vrot.slane %v3468, 4
        %v3471 = vor.u32 %v3470, %v3466
        %v3472 = vrot.slane %v3471, 4
        %v3474 = vshll.u32 %v2751, 16
        %v3476 = vrot.slane %v3474, 5
        %v3477 = vsel %vm2759, %v3472, %v3476
        %s3478 = scalar_lea.vmem %s3, 320
        %v3479 = vld [vmem:[%s3478] sm:$0xf]
        %v3480 = vld [vmem:[%s3478 + $0x4] sm:$0xf]
        %v3481 = vld [vmem:[%s3478 + $0x8] sm:$0xf]
        %v3482 = vld [vmem:[%s3478 + $0xc] sm:$0xf]
        %v3483 = vld [vmem:[%s3478 + $0x10] sm:$0xf]
        %v3484 = vld [vmem:[%s3478 + $0x14] sm:$0xf]
        %v3485 = vld [vmem:[%s3478 + $0x18] sm:$0xf]
        %v3486 = vld [vmem:[%s3478 + $0x1c] sm:$0xf]
        %v3487 = vld [vmem:[%s3478 + $0x20] sm:$0xf]
        %v3488 = vld [vmem:[%s3478 + $0x24] sm:$0xf]
        %v3489 = vld [vmem:[%s3478 + $0x28] sm:$0xf]
        %v3490 = vld [vmem:[%s3478 + $0x2c] sm:$0xf]
        %v3491 = vld [vmem:[%s3478 + $0x30] sm:$0xf]
        %v3492 = vld [vmem:[%s3478 + $0x34] sm:$0xf]
        %v3493 = vld [vmem:[%s3478 + $0x38] sm:$0xf]
        %v3494 = vld [vmem:[%s3478 + $0x3c] sm:$0xf]
        %v3495 = vunpack.c.l.b16 %v3447
        %v3496 = vunpack.c.l.b16 %v3457
        %v3497 = vunpack.c.l.b16 %v3467
        %v3498 = vunpack.c.l.b16 %v3477
        %v3499 = vpack.c.b16 %v3496, %v3495
        %v3500 = vpack.c.b16 %v3498, %v3497
        %v3519 = vunpack.c.l.b16 %v3479
        %v3520 = vunpack.c.l.b16 %v3480
        %v3521 = vunpack.c.l.b16 %v3481
        %v3522 = vunpack.c.l.b16 %v3482
        %v3523 = vunpack.c.l.b16 %v3483
        %v3524 = vunpack.c.l.b16 %v3484
        %v3525 = vunpack.c.l.b16 %v3485
        %v3526 = vunpack.c.l.b16 %v3486
        %v3527 = vunpack.c.l.b16 %v3487
        %v3528 = vunpack.c.l.b16 %v3488
        %v3529 = vunpack.c.l.b16 %v3489
        %v3530 = vunpack.c.l.b16 %v3490
        %v3531 = vunpack.c.l.b16 %v3491
        %v3532 = vunpack.c.l.b16 %v3492
        %v3533 = vunpack.c.l.b16 %v3493
        %v3534 = vunpack.c.l.b16 %v3494
        %v3535 = vpack.c.b16 %v3520, %v3519
        %v3536 = vpack.c.b16 %v3522, %v3521
        %v3537 = vpack.c.b16 %v3524, %v3523
        %v3538 = vpack.c.b16 %v3526, %v3525
        %v3539 = vpack.c.b16 %v3528, %v3527
        %v3540 = vpack.c.b16 %v3530, %v3529
        %v3541 = vpack.c.b16 %v3532, %v3531
        %v3542 = vpack.c.b16 %v3534, %v3533
        %3551 = vmatprep.subr.bf16.mxu0 0
        %3552 = vmatpush1.bf16.msra.mxu0 %v3542
        %3553 = vmatprep.subr.bf16.mxu0 0
        %3554 = vmatpush1.bf16.msra.mxu0 %v3541
        %3555 = vmatprep.subr.bf16.mxu0 0
        %3556 = vmatpush1.bf16.msra.mxu0 %v3540
        %3557 = vmatprep.subr.bf16.mxu0 0
        %3558 = vmatpush1.bf16.msra.mxu0 %v3539
        %3559 = vmatprep.subr.bf16.mxu0 0
        %3560 = vmatpush1.bf16.msra.mxu0 %v3538
        %3561 = vmatprep.subr.bf16.mxu0 0
        %3562 = vmatpush1.bf16.msra.mxu0 %v3537
        %3563 = vmatprep.subr.bf16.mxu0 0
        %3564 = vmatpush1.bf16.msra.mxu0 %v3536
        %3565 = vmatprep.subr.bf16.mxu0 0
        %3566 = vmatpush1.bf16.msra.mxu0 %v3535
        %3567 = vmatprep.subr.bf16.mxu0 0
        %3568 = vmatpush2.bf16.msra.mxu0 0
        %3569 = vmatprep.subr.bf16.mxu0 0
        %3570 = vmatpush2.bf16.msra.mxu0 0
        %3571 = vmatprep.subr.bf16.mxu0 0
        %3572 = vmatpush2.bf16.msra.mxu0 0
        %3573 = vmatprep.subr.bf16.mxu0 0
        %3574 = vmatpush2.bf16.msra.mxu0 0
        %3575 = vmatprep.subr.bf16.mxu0 0
        %3576 = vmatpush2.bf16.msra.mxu0 0
        %3577 = vmatprep.subr.bf16.mxu0 0
        %3578 = vmatpush2.bf16.msra.mxu0 0
        %3579 = vmatprep.subr.bf16.mxu0 0
        %3580 = vmatpush2.bf16.msra.mxu0 0
        %3581 = vmatprep.subr.bf16.mxu0 0
        %3582 = vmatpush2.bf16.msra.mxu0 0
        %3583 = vmatprep.mubr.bf16.mxu0 0
        %3584 = vmatmul.mubr.bf16.gmra.mxu0 %v3163
        %v3585 = vpop.f32.mrf.mxu0
        %v3586 = vadd.f32 0.0, %v3585
        %v3587 = vpop.f32.mrf.mxu0
        %v3588 = vpop.f32.mrf.mxu0
        %v3589 = vadd.f32 0.0, %v3588
        %v3590 = vpop.f32.mrf.mxu0
        %3591 = vmatprep.mubr.bf16.mxu0 0
        %3592 = vmatmul.mubr.bf16.gmra.mxu0 %v3164
        %v3593 = vpop.f32.mrf.mxu0
        %v3594 = vadd.f32 0.0, %v3593
        %v3595 = vpop.f32.mrf.mxu0
        %v3596 = vpop.f32.mrf.mxu0
        %v3597 = vadd.f32 0.0, %v3596
        %v3598 = vpop.f32.mrf.mxu0
        %3599 = vmatprep.mubr.bf16.mxu0 0
        %3600 = vmatmul.mubr.bf16.gmra.mxu0 %v3165
        %v3601 = vpop.f32.mrf.mxu0
        %v3602 = vadd.f32 0.0, %v3601
        %v3603 = vpop.f32.mrf.mxu0
        %v3604 = vpop.f32.mrf.mxu0
        %v3605 = vadd.f32 0.0, %v3604
        %v3606 = vpop.f32.mrf.mxu0
        %3607 = vmatprep.mubr.bf16.mxu0 0
        %3608 = vmatmul.mubr.bf16.gmra.mxu0 %v3166
        %v3609 = vpop.f32.mrf.mxu0
        %v3610 = vadd.f32 0.0, %v3609
        %v3611 = vpop.f32.mrf.mxu0
        %v3612 = vpop.f32.mrf.mxu0
        %v3613 = vadd.f32 0.0, %v3612
        %v3614 = vpop.f32.mrf.mxu0
        %3615 = vmatprep.mubr.bf16.mxu0 0
        %3616 = vmatmul.mubr.bf16.gmra.mxu0 %v3167
        %v3617 = vpop.f32.mrf.mxu0
        %v3618 = vadd.f32 0.0, %v3617
        %v3619 = vpop.f32.mrf.mxu0
        %v3620 = vpop.f32.mrf.mxu0
        %v3621 = vadd.f32 0.0, %v3620
        %v3622 = vpop.f32.mrf.mxu0
        %3623 = vmatprep.mubr.bf16.mxu0 0
        %3624 = vmatmul.mubr.bf16.gmra.mxu0 %v3168
        %v3625 = vpop.f32.mrf.mxu0
        %v3626 = vadd.f32 0.0, %v3625
        %v3627 = vpop.f32.mrf.mxu0
        %v3628 = vpop.f32.mrf.mxu0
        %v3629 = vadd.f32 0.0, %v3628
        %v3630 = vpop.f32.mrf.mxu0
        %3631 = vmatprep.mubr.bf16.mxu0 0
        %3632 = vmatmul.mubr.bf16.gmra.mxu0 %v3169
        %v3633 = vpop.f32.mrf.mxu0
        %v3634 = vadd.f32 0.0, %v3633
        %v3635 = vpop.f32.mrf.mxu0
        %v3636 = vpop.f32.mrf.mxu0
        %v3637 = vadd.f32 0.0, %v3636
        %v3638 = vpop.f32.mrf.mxu0
        %3639 = vmatprep.mubr.bf16.mxu0 0
        %3640 = vmatmul.mubr.bf16.gmra.mxu0 %v3170
        %v3641 = vpop.f32.mrf.mxu0
        %v3642 = vadd.f32 0.0, %v3641
        %v3643 = vpop.f32.mrf.mxu0
        %v3644 = vpop.f32.mrf.mxu0
        %v3645 = vadd.f32 0.0, %v3644
        %v3646 = vpop.f32.mrf.mxu0
        %3647 = vmatprep.mubr.bf16.mxu0 0
        %3648 = vmatmul.mubr.bf16.gmra.mxu0 %v3171
        %v3649 = vpop.f32.mrf.mxu0
        %v3650 = vadd.f32 0.0, %v3649
        %v3651 = vpop.f32.mrf.mxu0
        %v3652 = vpop.f32.mrf.mxu0
        %v3653 = vadd.f32 0.0, %v3652
        %v3654 = vpop.f32.mrf.mxu0
        %3655 = vmatprep.mubr.bf16.mxu0 0
        %3656 = vmatmul.mubr.bf16.gmra.mxu0 %v3172
        %v3657 = vpop.f32.mrf.mxu0
        %v3658 = vadd.f32 0.0, %v3657
        %v3659 = vpop.f32.mrf.mxu0
        %v3660 = vpop.f32.mrf.mxu0
        %v3661 = vadd.f32 0.0, %v3660
        %v3662 = vpop.f32.mrf.mxu0
        %3663 = vmatprep.mubr.bf16.mxu0 0
        %3664 = vmatmul.mubr.bf16.gmra.mxu0 %v3173
        %v3665 = vpop.f32.mrf.mxu0
        %v3666 = vadd.f32 0.0, %v3665
        %v3667 = vpop.f32.mrf.mxu0
        %v3668 = vpop.f32.mrf.mxu0
        %v3669 = vadd.f32 0.0, %v3668
        %v3670 = vpop.f32.mrf.mxu0
        %3671 = vmatprep.mubr.bf16.mxu0 0
        %3672 = vmatmul.mubr.bf16.gmra.mxu0 %v3174
        %v3673 = vpop.f32.mrf.mxu0
        %v3674 = vadd.f32 0.0, %v3673
        %v3675 = vpop.f32.mrf.mxu0
        %v3676 = vpop.f32.mrf.mxu0
        %v3677 = vadd.f32 0.0, %v3676
        %v3678 = vpop.f32.mrf.mxu0
        %3679 = vmatprep.mubr.bf16.mxu0 0
        %3680 = vmatmul.mubr.bf16.gmra.mxu0 %v3175
        %v3681 = vpop.f32.mrf.mxu0
        %v3682 = vadd.f32 0.0, %v3681
        %v3683 = vpop.f32.mrf.mxu0
        %v3684 = vpop.f32.mrf.mxu0
        %v3685 = vadd.f32 0.0, %v3684
        %v3686 = vpop.f32.mrf.mxu0
        %3687 = vmatprep.mubr.bf16.mxu0 0
        %3688 = vmatmul.mubr.bf16.gmra.mxu0 %v3176
        %v3689 = vpop.f32.mrf.mxu0
        %v3690 = vadd.f32 0.0, %v3689
        %v3691 = vpop.f32.mrf.mxu0
        %v3692 = vpop.f32.mrf.mxu0
        %v3693 = vadd.f32 0.0, %v3692
        %v3694 = vpop.f32.mrf.mxu0
        %3695 = vmatprep.mubr.bf16.mxu0 0
        %3696 = vmatmul.mubr.bf16.gmra.mxu0 %v3499
        %v3697 = vpop.f32.mrf.mxu0
        %v3698 = vadd.f32 0.0, %v3697
        %v3699 = vpop.f32.mrf.mxu0
        %v3700 = vpop.f32.mrf.mxu0
        %v3701 = vadd.f32 0.0, %v3700
        %v3702 = vpop.f32.mrf.mxu0
        %3703 = vmatprep.mubr.bf16.mxu0 0
        %3704 = vmatmul.mubr.bf16.gmra.mxu0 %v3500
        %v3705 = vpop.f32.mrf.mxu0
        %v3706 = vadd.f32 0.0, %v3705
        %v3707 = vpop.f32.mrf.mxu0
        %v3708 = vpop.f32.mrf.mxu0
        %v3709 = vadd.f32 0.0, %v3708
        %v3710 = vpop.f32.mrf.mxu0
        %3711 = vdwg.mxu0
        %v3712 = vadd.f32 %v3402, %v3586
        %v3713 = vadd.f32 %v3403, %v3589
        %v3714 = vadd.f32 %v3404, %v3594
        %v3715 = vadd.f32 %v3405, %v3597
        %v3716 = vadd.f32 %v3406, %v3602
        %v3717 = vadd.f32 %v3407, %v3605
        %v3718 = vadd.f32 %v3408, %v3610
        %v3719 = vadd.f32 %v3409, %v3613
        %v3720 = vadd.f32 %v3410, %v3618
        %v3721 = vadd.f32 %v3411, %v3621
        %v3722 = vadd.f32 %v3412, %v3626
        %v3723 = vadd.f32 %v3413, %v3629
        %v3724 = vadd.f32 %v3414, %v3634
        %v3725 = vadd.f32 %v3415, %v3637
        %v3726 = vadd.f32 %v3416, %v3642
        %v3727 = vadd.f32 %v3417, %v3645
        %v3728 = vadd.f32 %v3418, %v3650
        %v3729 = vadd.f32 %v3419, %v3653
        %v3730 = vadd.f32 %v3420, %v3658
        %v3731 = vadd.f32 %v3421, %v3661
        %v3732 = vadd.f32 %v3422, %v3666
        %v3733 = vadd.f32 %v3423, %v3669
        %v3734 = vadd.f32 %v3424, %v3674
        %v3735 = vadd.f32 %v3425, %v3677
        %v3736 = vadd.f32 %v3426, %v3682
        %v3737 = vadd.f32 %v3427, %v3685
        %v3738 = vadd.f32 %v3428, %v3690
        %v3739 = vadd.f32 %v3429, %v3693
        %v3740 = vadd.f32 %v3430, %v3698
        %v3741 = vadd.f32 %v3431, %v3701
        %v3742 = vadd.f32 %v3432, %v3706
        %v3743 = vadd.f32 %v3433, %v3709
        %v3745 = vshrl.u32 %v2752, 16
        %v3747 = vrot.slane %v3745, 4
        %v3748 = vshll.u32 %v2752, 16
        %v3750 = vrot.slane %v3748, 5
        %v3751 = vor.u32 %v3747, %v3750
        %v3752 = vrot.slane %v3751, 4
        %v3754 = vshll.u32 %v2753, 16
        %v3756 = vrot.slane %v3754, 5
        %v3757 = vsel %vm2759, %v3752, %v3756
        %v3758 = vshrl.u32 %v2753, 16
        %v3760 = vrot.slane %v3758, 4
        %v3761 = vor.u32 %v3760, %v3756
        %v3762 = vrot.slane %v3761, 4
        %v3764 = vshll.u32 %v2754, 16
        %v3766 = vrot.slane %v3764, 5
        %v3767 = vsel %vm2759, %v3762, %v3766
        %v3768 = vshrl.u32 %v2754, 16
        %v3770 = vrot.slane %v3768, 4
        %v3771 = vor.u32 %v3770, %v3766
        %v3772 = vrot.slane %v3771, 4
        %v3774 = vshll.u32 %v2755, 16
        %v3776 = vrot.slane %v3774, 5
        %v3777 = vsel %vm2759, %v3772, %v3776
        %v3778 = vshrl.u32 %v2755, 16
        %v3780 = vrot.slane %v3778, 4
        %v3781 = vor.u32 %v3780, %v3776
        %v3782 = vrot.slane %v3781, 4
        %v3784 = vshll.u32 %v2756, 16
        %v3786 = vrot.slane %v3784, 5
        %v3787 = vsel %vm2759, %v3782, %v3786
        %s3788 = scalar_lea.vmem %s3, 512
        %v3789 = vld [vmem:[%s3788] sm:$0xf]
        %v3790 = vld [vmem:[%s3788 + $0x4] sm:$0xf]
        %v3791 = vld [vmem:[%s3788 + $0x8] sm:$0xf]
        %v3792 = vld [vmem:[%s3788 + $0xc] sm:$0xf]
        %v3793 = vld [vmem:[%s3788 + $0x10] sm:$0xf]
        %v3794 = vld [vmem:[%s3788 + $0x14] sm:$0xf]
        %v3795 = vld [vmem:[%s3788 + $0x18] sm:$0xf]
        %v3796 = vld [vmem:[%s3788 + $0x1c] sm:$0xf]
        %v3797 = vld [vmem:[%s3788 + $0x20] sm:$0xf]
        %v3798 = vld [vmem:[%s3788 + $0x24] sm:$0xf]
        %v3799 = vld [vmem:[%s3788 + $0x28] sm:$0xf]
        %v3800 = vld [vmem:[%s3788 + $0x2c] sm:$0xf]
        %v3801 = vld [vmem:[%s3788 + $0x30] sm:$0xf]
        %v3802 = vld [vmem:[%s3788 + $0x34] sm:$0xf]
        %v3803 = vld [vmem:[%s3788 + $0x38] sm:$0xf]
        %v3804 = vld [vmem:[%s3788 + $0x3c] sm:$0xf]
        %v3805 = vunpack.c.l.b16 %v3757
        %v3806 = vunpack.c.l.b16 %v3767
        %v3807 = vunpack.c.l.b16 %v3777
        %v3808 = vunpack.c.l.b16 %v3787
        %v3809 = vpack.c.b16 %v3806, %v3805
        %v3810 = vpack.c.b16 %v3808, %v3807
        %v3829 = vunpack.c.l.b16 %v3789
        %v3830 = vunpack.c.l.b16 %v3790
        %v3831 = vunpack.c.l.b16 %v3791
        %v3832 = vunpack.c.l.b16 %v3792
        %v3833 = vunpack.c.l.b16 %v3793
        %v3834 = vunpack.c.l.b16 %v3794
        %v3835 = vunpack.c.l.b16 %v3795
        %v3836 = vunpack.c.l.b16 %v3796
        %v3837 = vunpack.c.l.b16 %v3797
        %v3838 = vunpack.c.l.b16 %v3798
        %v3839 = vunpack.c.l.b16 %v3799
        %v3840 = vunpack.c.l.b16 %v3800
        %v3841 = vunpack.c.l.b16 %v3801
        %v3842 = vunpack.c.l.b16 %v3802
        %v3843 = vunpack.c.l.b16 %v3803
        %v3844 = vunpack.c.l.b16 %v3804
        %v3845 = vpack.c.b16 %v3830, %v3829
        %v3846 = vpack.c.b16 %v3832, %v3831
        %v3847 = vpack.c.b16 %v3834, %v3833
        %v3848 = vpack.c.b16 %v3836, %v3835
        %v3849 = vpack.c.b16 %v3838, %v3837
        %v3850 = vpack.c.b16 %v3840, %v3839
        %v3851 = vpack.c.b16 %v3842, %v3841
        %v3852 = vpack.c.b16 %v3844, %v3843
        %3861 = vmatprep.subr.bf16.mxu0 0
        %3862 = vmatpush1.bf16.msra.mxu0 %v3852
        %3863 = vmatprep.subr.bf16.mxu0 0
        %3864 = vmatpush1.bf16.msra.mxu0 %v3851
        %3865 = vmatprep.subr.bf16.mxu0 0
        %3866 = vmatpush1.bf16.msra.mxu0 %v3850
        %3867 = vmatprep.subr.bf16.mxu0 0
        %3868 = vmatpush1.bf16.msra.mxu0 %v3849
        %3869 = vmatprep.subr.bf16.mxu0 0
        %3870 = vmatpush1.bf16.msra.mxu0 %v3848
        %3871 = vmatprep.subr.bf16.mxu0 0
        %3872 = vmatpush1.bf16.msra.mxu0 %v3847
        %3873 = vmatprep.subr.bf16.mxu0 0
        %3874 = vmatpush1.bf16.msra.mxu0 %v3846
        %3875 = vmatprep.subr.bf16.mxu0 0
        %3876 = vmatpush1.bf16.msra.mxu0 %v3845
        %3877 = vmatprep.subr.bf16.mxu0 0
        %3878 = vmatpush2.bf16.msra.mxu0 0
        %3879 = vmatprep.subr.bf16.mxu0 0
        %3880 = vmatpush2.bf16.msra.mxu0 0
        %3881 = vmatprep.subr.bf16.mxu0 0
        %3882 = vmatpush2.bf16.msra.mxu0 0
        %3883 = vmatprep.subr.bf16.mxu0 0
        %3884 = vmatpush2.bf16.msra.mxu0 0
        %3885 = vmatprep.subr.bf16.mxu0 0
        %3886 = vmatpush2.bf16.msra.mxu0 0
        %3887 = vmatprep.subr.bf16.mxu0 0
        %3888 = vmatpush2.bf16.msra.mxu0 0
        %3889 = vmatprep.subr.bf16.mxu0 0
        %3890 = vmatpush2.bf16.msra.mxu0 0
        %3891 = vmatprep.subr.bf16.mxu0 0
        %3892 = vmatpush2.bf16.msra.mxu0 0
        %3893 = vmatprep.mubr.bf16.mxu0 0
        %3894 = vmatmul.mubr.bf16.gmra.mxu0 %v3165
        %v3895 = vpop.f32.mrf.mxu0
        %v3896 = vadd.f32 0.0, %v3895
        %v3897 = vpop.f32.mrf.mxu0
        %v3898 = vpop.f32.mrf.mxu0
        %v3899 = vadd.f32 0.0, %v3898
        %v3900 = vpop.f32.mrf.mxu0
        %3901 = vmatprep.mubr.bf16.mxu0 0
        %3902 = vmatmul.mubr.bf16.gmra.mxu0 %v3166
        %v3903 = vpop.f32.mrf.mxu0
        %v3904 = vadd.f32 0.0, %v3903
        %v3905 = vpop.f32.mrf.mxu0
        %v3906 = vpop.f32.mrf.mxu0
        %v3907 = vadd.f32 0.0, %v3906
        %v3908 = vpop.f32.mrf.mxu0
        %3909 = vmatprep.mubr.bf16.mxu0 0
        %3910 = vmatmul.mubr.bf16.gmra.mxu0 %v3167
        %v3911 = vpop.f32.mrf.mxu0
        %v3912 = vadd.f32 0.0, %v3911
        %v3913 = vpop.f32.mrf.mxu0
        %v3914 = vpop.f32.mrf.mxu0
        %v3915 = vadd.f32 0.0, %v3914
        %v3916 = vpop.f32.mrf.mxu0
        %3917 = vmatprep.mubr.bf16.mxu0 0
        %3918 = vmatmul.mubr.bf16.gmra.mxu0 %v3168
        %v3919 = vpop.f32.mrf.mxu0
        %v3920 = vadd.f32 0.0, %v3919
        %v3921 = vpop.f32.mrf.mxu0
        %v3922 = vpop.f32.mrf.mxu0
        %v3923 = vadd.f32 0.0, %v3922
        %v3924 = vpop.f32.mrf.mxu0
        %3925 = vmatprep.mubr.bf16.mxu0 0
        %3926 = vmatmul.mubr.bf16.gmra.mxu0 %v3169
        %v3927 = vpop.f32.mrf.mxu0
        %v3928 = vadd.f32 0.0, %v3927
        %v3929 = vpop.f32.mrf.mxu0
        %v3930 = vpop.f32.mrf.mxu0
        %v3931 = vadd.f32 0.0, %v3930
        %v3932 = vpop.f32.mrf.mxu0
        %3933 = vmatprep.mubr.bf16.mxu0 0
        %3934 = vmatmul.mubr.bf16.gmra.mxu0 %v3170
        %v3935 = vpop.f32.mrf.mxu0
        %v3936 = vadd.f32 0.0, %v3935
        %v3937 = vpop.f32.mrf.mxu0
        %v3938 = vpop.f32.mrf.mxu0
        %v3939 = vadd.f32 0.0, %v3938
        %v3940 = vpop.f32.mrf.mxu0
        %3941 = vmatprep.mubr.bf16.mxu0 0
        %3942 = vmatmul.mubr.bf16.gmra.mxu0 %v3171
        %v3943 = vpop.f32.mrf.mxu0
        %v3944 = vadd.f32 0.0, %v3943
        %v3945 = vpop.f32.mrf.mxu0
        %v3946 = vpop.f32.mrf.mxu0
        %v3947 = vadd.f32 0.0, %v3946
        %v3948 = vpop.f32.mrf.mxu0
        %3949 = vmatprep.mubr.bf16.mxu0 0
        %3950 = vmatmul.mubr.bf16.gmra.mxu0 %v3172
        %v3951 = vpop.f32.mrf.mxu0
        %v3952 = vadd.f32 0.0, %v3951
        %v3953 = vpop.f32.mrf.mxu0
        %v3954 = vpop.f32.mrf.mxu0
        %v3955 = vadd.f32 0.0, %v3954
        %v3956 = vpop.f32.mrf.mxu0
        %3957 = vmatprep.mubr.bf16.mxu0 0
        %3958 = vmatmul.mubr.bf16.gmra.mxu0 %v3173
        %v3959 = vpop.f32.mrf.mxu0
        %v3960 = vadd.f32 0.0, %v3959
        %v3961 = vpop.f32.mrf.mxu0
        %v3962 = vpop.f32.mrf.mxu0
        %v3963 = vadd.f32 0.0, %v3962
        %v3964 = vpop.f32.mrf.mxu0
        %3965 = vmatprep.mubr.bf16.mxu0 0
        %3966 = vmatmul.mubr.bf16.gmra.mxu0 %v3174
        %v3967 = vpop.f32.mrf.mxu0
        %v3968 = vadd.f32 0.0, %v3967
        %v3969 = vpop.f32.mrf.mxu0
        %v3970 = vpop.f32.mrf.mxu0
        %v3971 = vadd.f32 0.0, %v3970
        %v3972 = vpop.f32.mrf.mxu0
        %3973 = vmatprep.mubr.bf16.mxu0 0
        %3974 = vmatmul.mubr.bf16.gmra.mxu0 %v3175
        %v3975 = vpop.f32.mrf.mxu0
        %v3976 = vadd.f32 0.0, %v3975
        %v3977 = vpop.f32.mrf.mxu0
        %v3978 = vpop.f32.mrf.mxu0
        %v3979 = vadd.f32 0.0, %v3978
        %v3980 = vpop.f32.mrf.mxu0
        %3981 = vmatprep.mubr.bf16.mxu0 0
        %3982 = vmatmul.mubr.bf16.gmra.mxu0 %v3176
        %v3983 = vpop.f32.mrf.mxu0
        %v3984 = vadd.f32 0.0, %v3983
        %v3985 = vpop.f32.mrf.mxu0
        %v3986 = vpop.f32.mrf.mxu0
        %v3987 = vadd.f32 0.0, %v3986
        %v3988 = vpop.f32.mrf.mxu0
        %3989 = vmatprep.mubr.bf16.mxu0 0
        %3990 = vmatmul.mubr.bf16.gmra.mxu0 %v3499
        %v3991 = vpop.f32.mrf.mxu0
        %v3992 = vadd.f32 0.0, %v3991
        %v3993 = vpop.f32.mrf.mxu0
        %v3994 = vpop.f32.mrf.mxu0
        %v3995 = vadd.f32 0.0, %v3994
        %v3996 = vpop.f32.mrf.mxu0
        %3997 = vmatprep.mubr.bf16.mxu0 0
        %3998 = vmatmul.mubr.bf16.gmra.mxu0 %v3500
        %v3999 = vpop.f32.mrf.mxu0
        %v4000 = vadd.f32 0.0, %v3999
        %v4001 = vpop.f32.mrf.mxu0
        %v4002 = vpop.f32.mrf.mxu0
        %v4003 = vadd.f32 0.0, %v4002
        %v4004 = vpop.f32.mrf.mxu0
        %4005 = vmatprep.mubr.bf16.mxu0 0
        %4006 = vmatmul.mubr.bf16.gmra.mxu0 %v3809
        %v4007 = vpop.f32.mrf.mxu0
        %v4008 = vadd.f32 0.0, %v4007
        %v4009 = vpop.f32.mrf.mxu0
        %v4010 = vpop.f32.mrf.mxu0
        %v4011 = vadd.f32 0.0, %v4010
        %v4012 = vpop.f32.mrf.mxu0
        %4013 = vmatprep.mubr.bf16.mxu0 0
        %4014 = vmatmul.mubr.bf16.gmra.mxu0 %v3810
        %v4015 = vpop.f32.mrf.mxu0
        %v4016 = vadd.f32 0.0, %v4015
        %v4017 = vpop.f32.mrf.mxu0
        %v4018 = vpop.f32.mrf.mxu0
        %v4019 = vadd.f32 0.0, %v4018
        %v4020 = vpop.f32.mrf.mxu0
        %4021 = vdwg.mxu0
        %v4022 = vadd.f32 %v3712, %v3896
        %v4023 = vadd.f32 %v3713, %v3899
        %v4024 = vadd.f32 %v3714, %v3904
        %v4025 = vadd.f32 %v3715, %v3907
        %v4026 = vadd.f32 %v3716, %v3912
        %v4027 = vadd.f32 %v3717, %v3915
        %v4028 = vadd.f32 %v3718, %v3920
        %v4029 = vadd.f32 %v3719, %v3923
        %v4030 = vadd.f32 %v3720, %v3928
        %v4031 = vadd.f32 %v3721, %v3931
        %v4032 = vadd.f32 %v3722, %v3936
        %v4033 = vadd.f32 %v3723, %v3939
        %v4034 = vadd.f32 %v3724, %v3944
        %v4035 = vadd.f32 %v3725, %v3947
        %v4036 = vadd.f32 %v3726, %v3952
        %v4037 = vadd.f32 %v3727, %v3955
        %v4038 = vadd.f32 %v3728, %v3960
        %v4039 = vadd.f32 %v3729, %v3963
        %v4040 = vadd.f32 %v3730, %v3968
        %v4041 = vadd.f32 %v3731, %v3971
        %v4042 = vadd.f32 %v3732, %v3976
        %v4043 = vadd.f32 %v3733, %v3979
        %v4044 = vadd.f32 %v3734, %v3984
        %v4045 = vadd.f32 %v3735, %v3987
        %v4046 = vadd.f32 %v3736, %v3992
        %v4047 = vadd.f32 %v3737, %v3995
        %v4048 = vadd.f32 %v3738, %v4000
        %v4049 = vadd.f32 %v3739, %v4003
        %v4050 = vadd.f32 %v3740, %v4008
        %v4051 = vadd.f32 %v3741, %v4011
        %v4052 = vadd.f32 %v3742, %v4016
        %v4053 = vadd.f32 %v3743, %v4019
        %v4054 = vld [vmem:[%s4] sm:$0x1]
        %v4056 = vlaneseq
        %v4057 = vshrl.u32 %v4056, 7
        %v4058 = vsub.s32 0, %v4057
        %v4059 = vrot.slane %v4054, %v4058
        %v4061 = vadd.f32 %v4022, %v4059
        %v4062 = vadd.f32 %v4023, %v4059
        %v4063 = vadd.f32 %v4024, %v4059
        %v4064 = vadd.f32 %v4025, %v4059
        %v4065 = vadd.f32 %v4026, %v4059
        %v4066 = vadd.f32 %v4027, %v4059
        %v4067 = vadd.f32 %v4028, %v4059
        %v4068 = vadd.f32 %v4029, %v4059
        %v4069 = vadd.f32 %v4030, %v4059
        %v4070 = vadd.f32 %v4031, %v4059
        %v4071 = vadd.f32 %v4032, %v4059
        %v4072 = vadd.f32 %v4033, %v4059
        %v4073 = vadd.f32 %v4034, %v4059
        %v4074 = vadd.f32 %v4035, %v4059
        %v4075 = vadd.f32 %v4036, %v4059
        %v4076 = vadd.f32 %v4037, %v4059
        %v4077 = vadd.f32 %v4038, %v4059
        %v4078 = vadd.f32 %v4039, %v4059
        %v4079 = vadd.f32 %v4040, %v4059
        %v4080 = vadd.f32 %v4041, %v4059
        %v4081 = vadd.f32 %v4042, %v4059
        %v4082 = vadd.f32 %v4043, %v4059
        %v4083 = vadd.f32 %v4044, %v4059
        %v4084 = vadd.f32 %v4045, %v4059
        %v4085 = vadd.f32 %v4046, %v4059
        %v4086 = vadd.f32 %v4047, %v4059
        %v4087 = vadd.f32 %v4048, %v4059
        %v4088 = vadd.f32 %v4049, %v4059
        %v4089 = vadd.f32 %v4050, %v4059
        %v4090 = vadd.f32 %v4051, %v4059
        %v4091 = vadd.f32 %v4052, %v4059
        %v4092 = vadd.f32 %v4053, %v4059
        %4093 = vst [vmem:[%s334] sm:$0xff] %v4061
        %4094 = vst [vmem:[%s334 + $0x8] sm:$0xff] %v4062
        %4095 = vst [vmem:[%s334 + $0x10] sm:$0xff] %v4063
        %4096 = vst [vmem:[%s334 + $0x18] sm:$0xff] %v4064
        %4097 = vst [vmem:[%s334 + $0x20] sm:$0xff] %v4065
        %4098 = vst [vmem:[%s334 + $0x28] sm:$0xff] %v4066
        %4099 = vst [vmem:[%s334 + $0x30] sm:$0xff] %v4067
        %4100 = vst [vmem:[%s334 + $0x38] sm:$0xff] %v4068
        %4101 = vst [vmem:[%s334 + $0x40] sm:$0xff] %v4069
        %4102 = vst [vmem:[%s334 + $0x48] sm:$0xff] %v4070
        %4103 = vst [vmem:[%s334 + $0x50] sm:$0xff] %v4071
        %4104 = vst [vmem:[%s334 + $0x58] sm:$0xff] %v4072
        %4105 = vst [vmem:[%s334 + $0x60] sm:$0xff] %v4073
        %4106 = vst [vmem:[%s334 + $0x68] sm:$0xff] %v4074
        %4107 = vst [vmem:[%s334 + $0x70] sm:$0xff] %v4075
        %4108 = vst [vmem:[%s334 + $0x78] sm:$0xff] %v4076
        %4109 = vst [vmem:[%s334 + $0x80] sm:$0xff] %v4077
        %4110 = vst [vmem:[%s334 + $0x88] sm:$0xff] %v4078
        %4111 = vst [vmem:[%s334 + $0x90] sm:$0xff] %v4079
        %4112 = vst [vmem:[%s334 + $0x98] sm:$0xff] %v4080
        %4113 = vst [vmem:[%s334 + $0xa0] sm:$0xff] %v4081
        %4114 = vst [vmem:[%s334 + $0xa8] sm:$0xff] %v4082
        %4115 = vst [vmem:[%s334 + $0xb0] sm:$0xff] %v4083
        %4116 = vst [vmem:[%s334 + $0xb8] sm:$0xff] %v4084
        %4117 = vst [vmem:[%s334 + $0xc0] sm:$0xff] %v4085
        %4118 = vst [vmem:[%s334 + $0xc8] sm:$0xff] %v4086
        %4119 = vst [vmem:[%s334 + $0xd0] sm:$0xff] %v4087
        %4120 = vst [vmem:[%s334 + $0xd8] sm:$0xff] %v4088
        %4121 = vst [vmem:[%s334 + $0xe0] sm:$0xff] %v4089
        %4122 = vst [vmem:[%s334 + $0xe8] sm:$0xff] %v4090
        %4123 = vst [vmem:[%s334 + $0xf0] sm:$0xff] %v4091
        %4124 = vst [vmem:[%s334 + $0xf8] sm:$0xff] %v4092
        %s4125 = sand.u32 %s183, 1
        %s4126 = scalar_lea.sflag [#allocation4], %s4125
        %s4127 = sand.u32 %s183, 1
        %s4128 = smul.addr %s4127, 256
        %s4129 = scalar_lea.vmem [#allocation3], %s4128
        // Predicated region
        $region41: #{abf_forward.3} parent=39 // pred_check
          %p4130 = pneg %p193
        $region42: #{abf_forward.3} parent=39 // pred_check_branch
          %4132 = sbr.rel (%p4130) target = $region44
        $region43: #{abf_forward.3} parent=39 // pred_region
          %s4133 = smul.u32 8, %s24
          %s4135 = ssub.s32 4096, 4096
          %4136 = vsyncadd %s4126, %s4135
          %s4137 = smul.addr %s4133, 4
          %s4138 = smul.addr %s23, 128
          %s4139 = sadd.s32 %s4137, %s4138
          %s4140 = smul.addr %s4139, 128
          %s4141 = scalar_lea.hbm %s5, %s4140
          %s4142 = sshll.u32 %s4129, 4
          %s4143 = int_to_ptr.vmem [resolvable:$true] %s4142
          %4148 = dma.vmem_to_hbm [thread:$0]  %s4143, 4096, %s4141, %s4126, 128, 128, 8
        $region44: #{abf_forward.3} parent=39 // pred_fallthru
          _
      $region40: #{abf_forward.3} parent=5 // pred_fallthru
        _
      %p4149 = scmp.le.s32.totalorder 2, %s14
      // Predicated region
      $region45: #{abf_forward.3} parent=5 // pred_check
        %p4150 = pneg %p4149
      $region46: #{abf_forward.3} parent=5 // pred_check_branch
        %4152 = sbr.rel (%p4150) target = $region48
      $region47: #{abf_forward.3} parent=5 // pred_region
        %s4153 = ssub.s32 %s14, 2
        // Predicated region
        $region49: #{abf_forward.3} parent=47 // pred_check
          %p4154 = pneg %p199
        $region50: #{abf_forward.3} parent=47 // pred_check_branch
          %4156 = sbr.rel (%p4154) target = $region52
        $region51: #{abf_forward.3} parent=47 // pred_region
          %s4157 = sand.u32 %s184, 1
          %s4158 = scalar_lea.sflag [#allocation4], %s4157
          %s4159 = sand.u32 %s184, 1
          %s4160 = smul.addr %s4159, 256
          %s4161 = scalar_lea.vmem [#allocation3], %s4160
          %4162 = dma.done %s4158, 4096
        $region52: #{abf_forward.3} parent=47 // pred_fallthru
          _
      $region48: #{abf_forward.3} parent=5 // pred_fallthru
        _
    $region6: #{abf_forward.3} parent=1 // loop_footer
      %s18 = sadd.s32 1, %s14
    $region7: #{abf_forward.3} parent=1 // loop_footer_branch
      %13 = sbr.rel target = $region3
    $region8: #{abf_forward.3} parent=1 // loop_exit
      _
    %4163 = vsyncpa [#allocation4], 1
    %s4164 = scalar_lea.sflag [#allocation4], 1
    %4165 = vsyncpa %s4164, 1

</llo_original>
